<compile_context>
chip_gen: v5e
topology: v5e:2x2
jax: 0.10.0
libtpu: 0.0.40
codegen_flags: <defaults>
</compile_context>

<pallas_src>
import functools

import jax
import jax.numpy as jnp
from jax.experimental import pallas as pl
from jax.experimental.pallas import tpu as pltpu


# ----------------------------------------------------------------------------
# helpers
# ----------------------------------------------------------------------------
def _round_up(x, m):
    return ((x + m - 1) // m) * m


def _choose_block(n_rows, max_blk=256):
    """Row-block size: as large as possible (<= max_blk), multiple of 8."""
    return min(max_blk, _round_up(n_rows, 8))


def _pad_rows(x, n_pad):
    if n_pad == x.shape[0]:
        return x
    widths = [(0, n_pad - x.shape[0])] + [(0, 0)] * (x.ndim - 1)
    return jnp.pad(x, widths)


# ----------------------------------------------------------------------------
# 1) Bidirectional GRU recurrence (both directions in one unrolled loop)
# ----------------------------------------------------------------------------
def _gru_kernel(xp_ref, mask_ref, whh_ref, bhh_ref, out_ref):
    # xp:   [nb, T, 6G]  gate-interleaved input projections
    #       lanes = [r_f | r_b | z_f | z_b | n_f | n_b]; *_f columns hold the
    #       forward projection of timestep t, *_b columns the backward
    #       projection of timestep T-1-t (time-reversed in the wrapper).
    # mask: [nb, T]  float {0,1} validity mask (t < length)
    # whh:  [2G, 6G] fused block-diagonal hidden weights (rows = [h_f | h_b])
    # bhh:  [1, 6G]
    # out:  [nb, T, 2G]  lanes = [fwd | bwd]
    nb, T, six_g = xp_ref.shape
    G = six_g // 6

    whh = whh_ref[...]
    bhh = jnp.broadcast_to(bhh_ref[...], (nb, six_g))          # hoisted broadcast
    lane = jax.lax.broadcasted_iota(jnp.int32, (1, 2 * G), 1)  # lane < G -> fwd half

    h = jnp.zeros((nb, 2 * G), jnp.float32)                    # [h_f | h_b]
    fwd_parts = [None] * T
    bwd_parts = [None] * T

    # Single unrolled loop: one fused MXU matmul + one set of 2G-wide gate ops
    # per step advances both recurrences.
    for i in range(T):
        xp_t = xp_ref[:, i, :]                                 # [nb, 6G]
        hp = jnp.dot(h, whh, preferred_element_type=jnp.float32) + bhh
        r = jax.nn.sigmoid(xp_t[:, 0:2 * G] + hp[:, 0:2 * G])
        z = jax.nn.sigmoid(xp_t[:, 2 * G:4 * G] + hp[:, 2 * G:4 * G])
        n = jnp.tanh(xp_t[:, 4 * G:6 * G] + r * hp[:, 4 * G:6 * G])
        h_new = (1.0 - z) * n + z * h

        mf = mask_ref[:, i:i + 1]                              # fwd timestep i
        mb = mask_ref[:, T - 1 - i:T - i]                      # bwd timestep T-1-i
        fwd_parts[i] = h_new[:, 0:G] * mf                      # padded steps -> 0
        bwd_parts[T - 1 - i] = h_new[:, G:2 * G] * mb

        m_cat = jnp.where(lane < G, mf, mb)                    # [nb, 2G]
        h = h + m_cat * (h_new - h)                            # carry frozen on pads

    # T full-width row stores (instead of 2T half-width masked stores).
    for t in range(T):
        out_ref[:, t, :] = jnp.concatenate([fwd_parts[t], bwd_parts[t]], axis=-1)


# ----------------------------------------------------------------------------
# 2) CNet head: Conv1d(same) + ReLU + max-over-time + Linear + Sigmoid + threshold
# ----------------------------------------------------------------------------
def _cnet_head_kernel(xpad_ref, wconv_ref, bconv_ref, wlin_ref, blin_ref,
                      out_ref, *, seq_len, k_size, threshold):
    # xpad: [nb, L + 2p, D] zero-padded GRU rows; wconv: [ks, D, K]
    nb = xpad_ref.shape[0]
    D = xpad_ref.shape[2]
    K = wconv_ref.shape[2]

    # Conv1d as k_size wide matmuls over all L positions at once (M = nb*L).
    acc = jnp.zeros((nb * seq_len, K), jnp.float32)
    for j in range(k_size):
        xj = xpad_ref[:, j:j + seq_len, :].reshape(nb * seq_len, D)
        acc = acc + jnp.dot(xj, wconv_ref[j], preferred_element_type=jnp.float32)
    acc = acc + bconv_ref[...]
    act = jnp.maximum(acc, 0.0).reshape(nb, seq_len, K)
    pooled = jnp.max(act, axis=1)                              # max over time [nb, K]

    logits = (jnp.dot(pooled, wlin_ref[...], preferred_element_type=jnp.float32)
              + blin_ref[...])
    vp = jax.nn.sigmoid(logits)
    out_ref[...] = jnp.where(vp < threshold, 0.0, vp)          # [nb, V]


# ----------------------------------------------------------------------------
# 3) SNet self-attention (only the self_atte output ControlNet consumes)
# ----------------------------------------------------------------------------
def _snet_kernel(g_ref, ms_t_ref, ws_ref, atte_ref):
    # g: [nb, L, D]; ms_t: [D, A] (= Ms^T); ws: [1, A]; atte: [nb, D]
    nb, L, D = g_ref.shape
    A = ms_t_ref.shape[1]

    g = g_ref[...]
    # All scores with ONE matmul (M = nb*L), then a lane-reduce against Ws.
    h = jnp.tanh(jnp.dot(g.reshape(nb * L, D), ms_t_ref[...],
                         preferred_element_type=jnp.float32))
    h3 = h.reshape(nb, L, A)
    s = jnp.sum(h3 * ws_ref[...], axis=-1, keepdims=True)      # [nb, L, 1]

    # Softmax over L (matches reference: no length masking — padded rows of g
    # are zero so they score exactly 0, like the PyTorch module).
    m = jnp.max(s, axis=1, keepdims=True)
    e = jnp.exp(s - m)
    denom = jnp.sum(e, axis=1, keepdims=True)
    w = e * pl.reciprocal(denom, approx=True)                  # [nb, L, 1]

    atte_ref[...] = jnp.sum(w * g, axis=1)                     # [nb, D]


# ----------------------------------------------------------------------------
# Parameter packing (GRU fused / gate-interleaved forms)
# ----------------------------------------------------------------------------
def _pack_gru_params(p, G):
    """Per-direction GRU weights -> gate-interleaved / block-diagonal forms."""
    def gates(w):                                              # split [.., 3G] -> r,z,n
        return w[..., 0:G], w[..., G:2 * G], w[..., 2 * G:3 * G]

    rf, zf, nf = gates(p['wih_f']); rb, zb, nb_ = gates(p['wih_b'])
    wih = jnp.concatenate([rf, rb, zf, zb, nf, nb_], axis=1)            # [E, 6G]
    rf, zf, nf = gates(p['bih_f']); rb, zb, nb_ = gates(p['bih_b'])
    bih = jnp.concatenate([rf, rb, zf, zb, nf, nb_], axis=1)            # [1, 6G]

    zero = jnp.zeros((G, G), jnp.float32)
    rf, zf, nf = gates(p['whh_f']); rb, zb, nb_ = gates(p['whh_b'])
    row_f = jnp.concatenate([rf, zero, zf, zero, nf, zero], axis=1)     # [G, 6G]
    row_b = jnp.concatenate([zero, rb, zero, zb, zero, nb_], axis=1)    # [G, 6G]
    whh = jnp.concatenate([row_f, row_b], axis=0)                       # [2G, 6G]
    rf, zf, nf = gates(p['bhh_f']); rb, zb, nb_ = gates(p['bhh_b'])
    bhh = jnp.concatenate([rf, rb, zf, zb, nf, nb_], axis=1)            # [1, 6G]
    return wih, bih, whh, bhh


# ----------------------------------------------------------------------------
# Wrappers
# ----------------------------------------------------------------------------
def cnet_rows_forward(x_rows, len_rows, params, threshold, max_blk=256):
    """Shared CNet body over stacked rows: [N,L,E] -> (gru_rows [N,L,D], view_rows [N,V])."""
    N, L, E = x_rows.shape
    G = params['whh_f'].shape[0]
    D = 2 * G
    n_blk = _choose_block(N, max_blk)
    N_pad = _round_up(N, n_blk)

    x = _pad_rows(x_rows, N_pad)
    lens = _pad_rows(len_rows.astype(jnp.int32), N_pad)

    # Hoisted input projection: ONE big MXU matmul for both directions (XLA).
    wih, bih, whh, bhh = _pack_gru_params(params, G)
    xp_all = jnp.einsum('nle,eg->nlg', x, wih) + bih            # [N_pad, L, 6G]
    # Backward-direction columns get the time-reversed projection so the kernel
    # advances both recurrences from the same time index.
    col_is_fwd = ((jnp.arange(6 * G) // G) % 2) == 0            # [6G]
    xp = jnp.where(col_is_fwd, xp_all, jnp.flip(xp_all, axis=1))
    mask = (jnp.arange(L)[None, :] < lens[:, None]).astype(jnp.float32)   # [N_pad, L]

    grid = (N_pad // n_blk,)
    gru_out = pl.pallas_call(
        _gru_kernel,
        grid=grid,
        in_specs=[pl.BlockSpec((n_blk, L, 6 * G), lambda i: (i, 0, 0)),
                  pl.BlockSpec((n_blk, L), lambda i: (i, 0)),
                  pl.BlockSpec((2 * G, 6 * G), lambda i: (0, 0)),
                  pl.BlockSpec((1, 6 * G), lambda i: (0, 0))],
        out_specs=pl.BlockSpec((n_blk, L, D), lambda i: (i, 0, 0)),
        out_shape=jax.ShapeDtypeStruct((N_pad, L, D), jnp.float32),
        compiler_params=pltpu.CompilerParams(dimension_semantics=("parallel",)),
    )(xp, mask, whh, bhh)

    # Conv1d "same" zero padding along time (tiny XLA glue).
    ks = params['wconv'].shape[0]
    pad = (ks - 1) // 2
    K = params['wconv'].shape[2]
    V = params['wlin'].shape[1]
    xpad = jnp.pad(gru_out, ((0, 0), (pad, pad), (0, 0)))       # [N_pad, L+2p, D]

    view_rows = pl.pallas_call(
        functools.partial(_cnet_head_kernel, seq_len=L, k_size=ks,
                          threshold=threshold),
        grid=grid,
        in_specs=[pl.BlockSpec((n_blk, L + 2 * pad, D), lambda i: (i, 0, 0)),
                  pl.BlockSpec((ks, D, K), lambda i: (0, 0, 0)),
                  pl.BlockSpec((1, K), lambda i: (0, 0)),
                  pl.BlockSpec((K, V), lambda i: (0, 0)),
                  pl.BlockSpec((1, V), lambda i: (0, 0))],
        out_specs=pl.BlockSpec((n_blk, V), lambda i: (i, 0)),
        out_shape=jax.ShapeDtypeStruct((N_pad, V), jnp.float32),
        compiler_params=pltpu.CompilerParams(dimension_semantics=("parallel",)),
    )(xpad, params['wconv'], params['bconv'], params['wlin'], params['blin'])

    return gru_out[:N], view_rows[:N]


def snet_forward(gru_rows, params, max_blk=256):
    """SNet self-attention over rows: [N, L, D] -> self_atte [N, D]."""
    N, L, D = gru_rows.shape
    A = params['ms_t'].shape[1]
    n_blk = _choose_block(N, max_blk)
    N_pad = _round_up(N, n_blk)
    g = _pad_rows(gru_rows, N_pad)

    atte = pl.pallas_call(
        _snet_kernel,
        grid=(N_pad // n_blk,),
        in_specs=[pl.BlockSpec((n_blk, L, D), lambda i: (i, 0, 0)),
                  pl.BlockSpec((D, A), lambda i: (0, 0)),
                  pl.BlockSpec((1, A), lambda i: (0, 0))],
        out_specs=pl.BlockSpec((n_blk, D), lambda i: (i, 0)),
        out_shape=jax.ShapeDtypeStruct((N_pad, D), jnp.float32),
        compiler_params=pltpu.CompilerParams(dimension_semantics=("parallel",)),
    )(g, params['ms_t'], params['ws'])
    return atte[:N]


def controlnet_forward(params, user_emb, item_emb, ui_emb,
                       u_lengths, i_lengths, ui_lengths, *, threshold=0.35):
    """ControlNet.forward -> (c_u, c_i, prefer_pos, prefer_neg)."""
    B, S, L, E = ui_emb.shape
    BS = B * S

    # Batch the three CNet passes (ui first, then user, item) into ONE set of
    # kernels over N = 3*B*S rows.
    emb_all = jnp.concatenate(
        [ui_emb.reshape(BS, L, E), user_emb.reshape(BS, L, E),
         item_emb.reshape(BS, L, E)], axis=0)                  # [3*BS, L, E]
    len_all = jnp.concatenate(
        [ui_lengths.reshape(BS), u_lengths.reshape(BS),
         i_lengths.reshape(BS)], axis=0)                       # [3*BS]

    gru_rows, view_rows = cnet_rows_forward(emb_all, len_all, params, threshold)

    view_all = view_rows.reshape(3, B, S, -1)
    view_p_ui = view_all[0]                                    # [B, S, V]
    c_ui = jnp.sum(view_p_ui * view_p_ui, axis=1)              # [B, V]
    c_u = jnp.sum(view_all[1] * view_all[1], axis=1)
    c_i = jnp.sum(view_all[2] * view_all[2], axis=1)

    # SNet only needs the ui group's GRU rows.
    s = snet_forward(gru_rows[:BS], params).reshape(B, S, -1)  # [B, S, D]

    # SSNet + view_score + preference fusion: tiny [B,S,*] math -> plain XLA.
    senti = jax.nn.sigmoid(
        jnp.sum(s * params['wss'], axis=-1, keepdims=True) + params['bss'])  # [B,S,1]
    vp2 = view_p_ui * view_p_ui
    view_score = jnp.sum(senti * vp2, axis=1) / (jnp.sum(vp2, axis=1) + 1e-4)

    q_p = (view_score > 0.5).astype(jnp.float32)
    q_sq = 4.0 * (view_score - 0.5) ** 2
    q_pos = jnp.where(view_score < 0.5, 0.0, q_sq)
    q_neg = jnp.where(view_score > 0.5, 0.0, q_sq)

    prefer_pos = c_ui * q_p * q_pos
    prefer_neg = c_ui * (1.0 - q_p) * q_neg
    return c_u, c_i, prefer_pos, prefer_neg


# ----------------------------------------------------------------------------
# Deterministic synthetic parameters (shapes match the PyTorch module)
# ----------------------------------------------------------------------------
def init_params(key, E, G, K, ks, V, A):
    D = 2 * G
    keys = jax.random.split(key, 16)

    def rn(k, shape, scale=0.1):
        return (scale * jax.random.normal(k, shape)).astype(jnp.float32)

    return {
        # GRU, gate order (r, z, n), stored transposed for x @ W
        'wih_f': rn(keys[0], (E, 3 * G)), 'whh_f': rn(keys[1], (G, 3 * G)),
        'bih_f': rn(keys[2], (1, 3 * G)), 'bhh_f': rn(keys[3], (1, 3 * G)),
        'wih_b': rn(keys[4], (E, 3 * G)), 'whh_b': rn(keys[5], (G, 3 * G)),
        'bih_b': rn(keys[6], (1, 3 * G)), 'bhh_b': rn(keys[7], (1, 3 * G)),
        # CNet Conv1d (per-tap [D, K]) + Linear(K, V)
        'wconv': rn(keys[8], (ks, D, K)), 'bconv': rn(keys[9], (1, K)),
        'wlin': rn(keys[10], (K, V)), 'blin': rn(keys[11], (1, V)),
        # SNet (Ms stored pre-transposed: Ms^T [D, A]; Ws [1, A])
        'ms_t': rn(keys[12], (D, A), 1.0), 'ws': rn(keys[13], (1, A), 1.0),
        # SSNet Linear(D, 1) stored as a [1, D] row + bias
        'wss': rn(keys[14], (1, D)), 'bss': rn(keys[15], (1, 1)),
    }


if __name__ == "__main__":
    key = jax.random.PRNGKey(0)
    B, S, L, E = 2, 2, 8, 32            # batch, sentences, words, emb_size
    G, K, KS, V, A = 16, 16, 3, 8, 16   # gru_size, k_count, k_size, view_size, atte_size

    k1, k2, k3, k4, k5, k6, kp = jax.random.split(key, 7)
    user_emb = jax.random.normal(k1, (B, S, L, E), jnp.float32)
    item_emb = jax.random.normal(k2, (B, S, L, E), jnp.float32)
    ui_emb = jax.random.normal(k3, (B, S, L, E), jnp.float32)
    u_lengths = jax.random.randint(k4, (B, S), 1, L + 1)
    i_lengths = jax.random.randint(k5, (B, S), 1, L + 1)
    ui_lengths = jax.random.randint(k6, (B, S), 1, L + 1)

    params = init_params(kp, E, G, K, KS, V, A)

    fwd = jax.jit(functools.partial(controlnet_forward, threshold=0.35))
    c_u, c_i, prefer_pos, prefer_neg = fwd(params, user_emb, item_emb, ui_emb,
                                           u_lengths, i_lengths, ui_lengths)
    jax.block_until_ready((c_u, c_i, prefer_pos, prefer_neg))
    print("KERNEL_OK")
</pallas_src>

<mosaic_0001>
module attributes {stable_mosaic.version = 11 : i64} {
  func.func @_snet_kernel(%arg0: i32, %arg1: memref<8x8x32xf32, #tpu.memory_space<vmem>>, %arg2: memref<32x16xf32, #tpu.memory_space<vmem>>, %arg3: memref<1x16xf32, #tpu.memory_space<vmem>>, %arg4: memref<8x32xf32, #tpu.memory_space<vmem>>) attributes {dimension_semantics = [#tpu.dimension_semantics<parallel>], iteration_bounds = array<i64: 1>, scalar_prefetch = 0 : i64, scratch_operands = 0 : i64, tpu.core_type = #tpu.core_type<tc>, window_params = [{transform_indices = @transform_0, window_bounds = array<i64: 8, 8, 32>}, {pipeline_mode = #tpu.pipeline_mode<synchronous>, transform_indices = @transform_1, window_bounds = array<i64: 32, 16>}, {pipeline_mode = #tpu.pipeline_mode<synchronous>, transform_indices = @transform_2, window_bounds = array<i64: 1, 16>}, {transform_indices = @transform_3, window_bounds = array<i64: 8, 32>}]} {
    %c0 = arith.constant 0 : index
    %c0_0 = arith.constant 0 : index
    %c0_1 = arith.constant 0 : index
    %0 = vector.load %arg1[%c0, %c0_0, %c0_1] : memref<8x8x32xf32, #tpu.memory_space<vmem>>, vector<8x8x32xf32>
    %1 = vector.shape_cast %0 : vector<8x8x32xf32> to vector<64x32xf32>
    %c0_2 = arith.constant 0 : index
    %c0_3 = arith.constant 0 : index
    %2 = vector.load %arg2[%c0_2, %c0_3] : memref<32x16xf32, #tpu.memory_space<vmem>>, vector<32x16xf32>
    %cst = arith.constant dense<0.000000e+00> : vector<64x16xf32>
    %3 = tpu.matmul %1, %2, %cst {dimension_numbers = #tpu.dot_dimension_numbers<[1], [0], [0], [1], [0, 0, 1, 1], [], []>} : vector<64x32xf32>, vector<32x16xf32>, vector<64x16xf32> -> vector<64x16xf32>
    %4 = math.tanh %3 : vector<64x16xf32>
    %5 = vector.shape_cast %4 : vector<64x16xf32> to vector<8x8x16xf32>
    %c0_4 = arith.constant 0 : index
    %c0_5 = arith.constant 0 : index
    %6 = vector.load %arg3[%c0_4, %c0_5] : memref<1x16xf32, #tpu.memory_space<vmem>>, vector<1x16xf32>
    %7 = vector.shape_cast %6 : vector<1x16xf32> to vector<1x1x16xf32>
    %8 = vector.broadcast %7 : vector<1x1x16xf32> to vector<8x8x16xf32>
    %9 = arith.mulf %5, %8 : vector<8x8x16xf32>
    %cst_6 = arith.constant dense<0.000000e+00> : vector<8x8xf32>
    %10 = vector.multi_reduction <add>, %9, %cst_6 [2] : vector<8x8x16xf32> to vector<8x8xf32>
    %11 = vector.shape_cast %10 : vector<8x8xf32> to vector<8x8x1xf32>
    %cst_7 = arith.constant dense<0xFF800000> : vector<8x1xf32>
    %12 = vector.multi_reduction <maximumf>, %11, %cst_7 [1] : vector<8x8x1xf32> to vector<8x1xf32>
    %13 = vector.shape_cast %12 : vector<8x1xf32> to vector<8x1x1xf32>
    %14 = vector.broadcast %13 : vector<8x1x1xf32> to vector<8x8x1xf32>
    %15 = arith.subf %11, %14 : vector<8x8x1xf32>
    %16 = math.exp %15 : vector<8x8x1xf32>
    %cst_8 = arith.constant dense<0.000000e+00> : vector<8x1xf32>
    %17 = vector.multi_reduction <add>, %16, %cst_8 [1] : vector<8x8x1xf32> to vector<8x1xf32>
    %18 = vector.shape_cast %17 : vector<8x1xf32> to vector<8x1x1xf32>
    %19 = tpu.reciprocal %18 {approx = true} : vector<8x1x1xf32> -> vector<8x1x1xf32>
    %20 = vector.broadcast %19 : vector<8x1x1xf32> to vector<8x8x1xf32>
    %21 = arith.mulf %16, %20 : vector<8x8x1xf32>
    %22 = vector.broadcast %21 : vector<8x8x1xf32> to vector<8x8x32xf32>
    %23 = arith.mulf %22, %0 : vector<8x8x32xf32>
    %cst_9 = arith.constant dense<0.000000e+00> : vector<8x32xf32>
    %24 = vector.multi_reduction <add>, %23, %cst_9 [1] : vector<8x8x32xf32> to vector<8x32xf32>
    %c0_10 = arith.constant 0 : index
    %c0_11 = arith.constant 0 : index
    %25 = vector.load %arg4[%c0_10, %c0_11] : memref<8x32xf32, #tpu.memory_space<vmem>>, vector<8x32xf32>
    tpu.vector_store %arg4[%c0_10, %c0_11], %24 {strides = array<i32>} : memref<8x32xf32, #tpu.memory_space<vmem>>, vector<8x32xf32>,
    return
  }
  func.func @transform_0(%arg0: i32) -> (i32, i32, i32) {
    %c0_i32 = arith.constant 0 : i32
    %c0_i32_0 = arith.constant 0 : i32
    %c0_i32_1 = arith.constant 0 : i32
    return %arg0, %c0_i32, %c0_i32_0 : i32, i32, i32
  }
  func.func @transform_1(%arg0: i32) -> (i32, i32) {
    %c0_i32 = arith.constant 0 : i32
    %c0_i32_0 = arith.constant 0 : i32
    %c0_i32_1 = arith.constant 0 : i32
    return %c0_i32, %c0_i32_0 : i32, i32
  }
  func.func @transform_2(%arg0: i32) -> (i32, i32) {
    %c0_i32 = arith.constant 0 : i32
    %c0_i32_0 = arith.constant 0 : i32
    %c0_i32_1 = arith.constant 0 : i32
    return %c0_i32, %c0_i32_0 : i32, i32
  }
  func.func @transform_3(%arg0: i32) -> (i32, i32) {
    %c0_i32 = arith.constant 0 : i32
    %c0_i32_0 = arith.constant 0 : i32
    return %arg0, %c0_i32 : i32, i32
  }
}

module attributes {stable_mosaic.version = 11 : i64} {
  func.func @_cnet_head_kernel(%arg0: i32, %arg1: memref<16x10x32xf32, #tpu.memory_space<vmem>>, %arg2: memref<3x32x16xf32, #tpu.memory_space<vmem>>, %arg3: memref<1x16xf32, #tpu.memory_space<vmem>>, %arg4: memref<16x8xf32, #tpu.memory_space<vmem>>, %arg5: memref<1x8xf32, #tpu.memory_space<vmem>>, %arg6: memref<16x8xf32, #tpu.memory_space<vmem>>) attributes {dimension_semantics = [#tpu.dimension_semantics<parallel>], iteration_bounds = array<i64: 1>, scalar_prefetch = 0 : i64, scratch_operands = 0 : i64, tpu.core_type = #tpu.core_type<tc>, window_params = [{transform_indices = @transform_0, window_bounds = array<i64: 16, 10, 32>}, {pipeline_mode = #tpu.pipeline_mode<synchronous>, transform_indices = @transform_1, window_bounds = array<i64: 3, 32, 16>}, {pipeline_mode = #tpu.pipeline_mode<synchronous>, transform_indices = @transform_2, window_bounds = array<i64: 1, 16>}, {pipeline_mode = #tpu.pipeline_mode<synchronous>, transform_indices = @transform_3, window_bounds = array<i64: 16, 8>}, {pipeline_mode = #tpu.pipeline_mode<synchronous>, transform_indices = @transform_4, window_bounds = array<i64: 1, 8>}, {transform_indices = @transform_5, window_bounds = array<i64: 16, 8>}]} {
    %cst = arith.constant 0.000000e+00 : f32
    %0 = vector.broadcast %cst : f32 to vector<128x16xf32>
    %c0 = arith.constant 0 : index
    %c0_0 = arith.constant 0 : index
    %c0_1 = arith.constant 0 : index
    %1 = vector.load %arg1[%c0, %c0_0, %c0_1] : memref<16x10x32xf32, #tpu.memory_space<vmem>>, vector<16x8x32xf32>
    %2 = vector.shape_cast %1 : vector<16x8x32xf32> to vector<128x32xf32>
    %c0_2 = arith.constant 0 : index
    %c0_3 = arith.constant 0 : index
    %c0_4 = arith.constant 0 : index
    %3 = vector.load %arg2[%c0_2, %c0_3, %c0_4] : memref<3x32x16xf32, #tpu.memory_space<vmem>>, vector<1x32x16xf32>
    %4 = vector.shape_cast %3 : vector<1x32x16xf32> to vector<32x16xf32>
    %cst_5 = arith.constant dense<0.000000e+00> : vector<128x16xf32>
    %5 = tpu.matmul %2, %4, %cst_5 {dimension_numbers = #tpu.dot_dimension_numbers<[1], [0], [0], [1], [0, 0, 1, 1], [], []>} : vector<128x32xf32>, vector<32x16xf32>, vector<128x16xf32> -> vector<128x16xf32>
    %6 = arith.addf %0, %5 : vector<128x16xf32>
    %c0_6 = arith.constant 0 : index
    %c1 = arith.constant 1 : index
    %c0_7 = arith.constant 0 : index
    %7 = vector.load %arg1[%c0_6, %c1, %c0_7] : memref<16x10x32xf32, #tpu.memory_space<vmem>>, vector<16x8x32xf32>
    %8 = vector.shape_cast %7 : vector<16x8x32xf32> to vector<128x32xf32>
    %c1_8 = arith.constant 1 : index
    %c0_9 = arith.constant 0 : index
    %c0_10 = arith.constant 0 : index
    %9 = vector.load %arg2[%c1_8, %c0_9, %c0_10] : memref<3x32x16xf32, #tpu.memory_space<vmem>>, vector<1x32x16xf32>
    %10 = vector.shape_cast %9 : vector<1x32x16xf32> to vector<32x16xf32>
    %cst_11 = arith.constant dense<0.000000e+00> : vector<128x16xf32>
    %11 = tpu.matmul %8, %10, %cst_11 {dimension_numbers = #tpu.dot_dimension_numbers<[1], [0], [0], [1], [0, 0, 1, 1], [], []>} : vector<128x32xf32>, vector<32x16xf32>, vector<128x16xf32> -> vector<128x16xf32>
    %12 = arith.addf %6, %11 : vector<128x16xf32>
    %c0_12 = arith.constant 0 : index
    %c2 = arith.constant 2 : index
    %c0_13 = arith.constant 0 : index
    %13 = vector.load %arg1[%c0_12, %c2, %c0_13] : memref<16x10x32xf32, #tpu.memory_space<vmem>>, vector<16x8x32xf32>
    %14 = vector.shape_cast %13 : vector<16x8x32xf32> to vector<128x32xf32>
    %c2_14 = arith.constant 2 : index
    %c0_15 = arith.constant 0 : index
    %c0_16 = arith.constant 0 : index
    %15 = vector.load %arg2[%c2_14, %c0_15, %c0_16] : memref<3x32x16xf32, #tpu.memory_space<vmem>>, vector<1x32x16xf32>
    %16 = vector.shape_cast %15 : vector<1x32x16xf32> to vector<32x16xf32>
    %cst_17 = arith.constant dense<0.000000e+00> : vector<128x16xf32>
    %17 = tpu.matmul %14, %16, %cst_17 {dimension_numbers = #tpu.dot_dimension_numbers<[1], [0], [0], [1], [0, 0, 1, 1], [], []>} : vector<128x32xf32>, vector<32x16xf32>, vector<128x16xf32> -> vector<128x16xf32>
    %18 = arith.addf %12, %17 : vector<128x16xf32>
    %c0_18 = arith.constant 0 : index
    %c0_19 = arith.constant 0 : index
    %19 = vector.load %arg3[%c0_18, %c0_19] : memref<1x16xf32, #tpu.memory_space<vmem>>, vector<1x16xf32>
    %20 = vector.broadcast %19 : vector<1x16xf32> to vector<128x16xf32>
    %21 = arith.addf %18, %20 : vector<128x16xf32>
    %cst_20 = arith.constant 0.000000e+00 : f32
    %22 = vector.broadcast %cst_20 : f32 to vector<128x16xf32>
    %23 = arith.maximumf %21, %22 : vector<128x16xf32>
    %24 = vector.shape_cast %23 : vector<128x16xf32> to vector<16x8x16xf32>
    %cst_21 = arith.constant dense<0xFF800000> : vector<16x16xf32>
    %25 = vector.multi_reduction <maximumf>, %24, %cst_21 [1] : vector<16x8x16xf32> to vector<16x16xf32>
    %c0_22 = arith.constant 0 : index
    %c0_23 = arith.constant 0 : index
    %26 = vector.load %arg4[%c0_22, %c0_23] : memref<16x8xf32, #tpu.memory_space<vmem>>, vector<16x8xf32>
    %cst_24 = arith.constant dense<0.000000e+00> : vector<16x8xf32>
    %27 = tpu.matmul %25, %26, %cst_24 {dimension_numbers = #tpu.dot_dimension_numbers<[1], [0], [0], [1], [0, 0, 1, 1], [], []>} : vector<16x16xf32>, vector<16x8xf32>, vector<16x8xf32> -> vector<16x8xf32>
    %c0_25 = arith.constant 0 : index
    %c0_26 = arith.constant 0 : index
    %28 = vector.load %arg5[%c0_25, %c0_26] : memref<1x8xf32, #tpu.memory_space<vmem>>, vector<1x8xf32>
    %29 = vector.broadcast %28 : vector<1x8xf32> to vector<16x8xf32>
    %30 = arith.addf %27, %29 : vector<16x8xf32>
    %31 = arith.negf %30 : vector<16x8xf32>
    %32 = math.exp %31 : vector<16x8xf32>
    %cst_27 = arith.constant 1.000000e+00 : f32
    %33 = vector.broadcast %cst_27 : f32 to vector<16x8xf32>
    %34 = arith.addf %33, %32 : vector<16x8xf32>
    %35 = arith.divf %33, %34 : vector<16x8xf32>
    %cst_28 = arith.constant 3.500000e-01 : f32
    %36 = vector.broadcast %cst_28 : f32 to vector<16x8xf32>
    %37 = arith.cmpf olt, %35, %36 : vector<16x8xf32>
    %cst_29 = arith.constant 0.000000e+00 : f32
    %38 = vector.broadcast %cst_29 : f32 to vector<16x8xf32>
    %39 = arith.select %37, %38, %35 : vector<16x8xi1>, vector<16x8xf32>
    %c0_30 = arith.constant 0 : index
    %c0_31 = arith.constant 0 : index
    %40 = vector.load %arg6[%c0_30, %c0_31] : memref<16x8xf32, #tpu.memory_space<vmem>>, vector<16x8xf32>
    tpu.vector_store %arg6[%c0_30, %c0_31], %39 {strides = array<i32>} : memref<16x8xf32, #tpu.memory_space<vmem>>, vector<16x8xf32>,
    return
  }
  func.func @transform_0(%arg0: i32) -> (i32, i32, i32) {
    %c0_i32 = arith.constant 0 : i32
    %c0_i32_0 = arith.constant 0 : i32
    %c0_i32_1 = arith.constant 0 : i32
    return %arg0, %c0_i32, %c0_i32_0 : i32, i32, i32
  }
  func.func @transform_1(%arg0: i32) -> (i32, i32, i32) {
    %c0_i32 = arith.constant 0 : i32
    %c0_i32_0 = arith.constant 0 : i32
    %c0_i32_1 = arith.constant 0 : i32
    %c0_i32_2 = arith.constant 0 : i32
    return %c0_i32, %c0_i32_0, %c0_i32_1 : i32, i32, i32
  }
  func.func @transform_2(%arg0: i32) -> (i32, i32) {
    %c0_i32 = arith.constant 0 : i32
    %c0_i32_0 = arith.constant 0 : i32
    %c0_i32_1 = arith.constant 0 : i32
    return %c0_i32, %c0_i32_0 : i32, i32
  }
  func.func @transform_3(%arg0: i32) -> (i32, i32) {
    %c0_i32 = arith.constant 0 : i32
    %c0_i32_0 = arith.constant 0 : i32
    %c0_i32_1 = arith.constant 0 : i32
    return %c0_i32, %c0_i32_0 : i32, i32
  }
  func.func @transform_4(%arg0: i32) -> (i32, i32) {
    %c0_i32 = arith.constant 0 : i32
    %c0_i32_0 = arith.constant 0 : i32
    %c0_i32_1 = arith.constant 0 : i32
    return %c0_i32, %c0_i32_0 : i32, i32
  }
  func.func @transform_5(%arg0: i32) -> (i32, i32) {
    %c0_i32 = arith.constant 0 : i32
    %c0_i32_0 = arith.constant 0 : i32
    return %arg0, %c0_i32 : i32, i32
  }
}

module attributes {stable_mosaic.version = 11 : i64} {
  func.func @_gru_kernel(%arg0: i32, %arg1: memref<16x8x96xf32, #tpu.memory_space<vmem>>, %arg2: memref<16x8xf32, #tpu.memory_space<vmem>>, %arg3: memref<32x96xf32, #tpu.memory_space<vmem>>, %arg4: memref<1x96xf32, #tpu.memory_space<vmem>>, %arg5: memref<16x8x32xf32, #tpu.memory_space<vmem>>) attributes {dimension_semantics = [#tpu.dimension_semantics<parallel>], iteration_bounds = array<i64: 1>, scalar_prefetch = 0 : i64, scratch_operands = 0 : i64, tpu.core_type = #tpu.core_type<tc>, window_params = [{transform_indices = @transform_0, window_bounds = array<i64: 16, 8, 96>}, {transform_indices = @transform_1, window_bounds = array<i64: 16, 8>}, {pipeline_mode = #tpu.pipeline_mode<synchronous>, transform_indices = @transform_2, window_bounds = array<i64: 32, 96>}, {pipeline_mode = #tpu.pipeline_mode<synchronous>, transform_indices = @transform_3, window_bounds = array<i64: 1, 96>}, {transform_indices = @transform_4, window_bounds = array<i64: 16, 8, 32>}]} {
    %c0 = arith.constant 0 : index
    %c0_0 = arith.constant 0 : index
    %0 = vector.load %arg3[%c0, %c0_0] : memref<32x96xf32, #tpu.memory_space<vmem>>, vector<32x96xf32>
    %c0_1 = arith.constant 0 : index
    %c0_2 = arith.constant 0 : index
    %1 = vector.load %arg4[%c0_1, %c0_2] : memref<1x96xf32, #tpu.memory_space<vmem>>, vector<1x96xf32>
    %2 = vector.shape_cast %1 : vector<1x96xf32> to vector<1x96xf32>
    %3 = vector.broadcast %2 : vector<1x96xf32> to vector<16x96xf32>
    %4 = tpu.iota {dimensions = array<i32: 1>} : vector<1x32xi32>
    %cst = arith.constant 0.000000e+00 : f32
    %5 = vector.broadcast %cst : f32 to vector<16x32xf32>
    %c0_3 = arith.constant 0 : index
    %c0_4 = arith.constant 0 : index
    %c0_5 = arith.constant 0 : index
    %6 = vector.load %arg1[%c0_3, %c0_4, %c0_5] : memref<16x8x96xf32, #tpu.memory_space<vmem>>, vector<16x1x96xf32>
    %7 = vector.shape_cast %6 : vector<16x1x96xf32> to vector<16x96xf32>
    %cst_6 = arith.constant dense<0.000000e+00> : vector<16x96xf32>
    %8 = tpu.matmul %5, %0, %cst_6 {dimension_numbers = #tpu.dot_dimension_numbers<[1], [0], [0], [1], [0, 0, 1, 1], [], []>} : vector<16x32xf32>, vector<32x96xf32>, vector<16x96xf32> -> vector<16x96xf32>
    %9 = arith.addf %8, %3 : vector<16x96xf32>
    %10 = vector.extract_strided_slice %7 {offsets = [0, 0], sizes = [16, 32], strides = [1, 1]} : vector<16x96xf32> to vector<16x32xf32>
    %11 = vector.extract_strided_slice %9 {offsets = [0, 0], sizes = [16, 32], strides = [1, 1]} : vector<16x96xf32> to vector<16x32xf32>
    %12 = arith.addf %10, %11 : vector<16x32xf32>
    %13 = arith.negf %12 : vector<16x32xf32>
    %14 = math.exp %13 : vector<16x32xf32>
    %cst_7 = arith.constant 1.000000e+00 : f32
    %15 = vector.broadcast %cst_7 : f32 to vector<16x32xf32>
    %16 = arith.addf %15, %14 : vector<16x32xf32>
    %17 = arith.divf %15, %16 : vector<16x32xf32>
    %18 = vector.extract_strided_slice %7 {offsets = [0, 32], sizes = [16, 32], strides = [1, 1]} : vector<16x96xf32> to vector<16x32xf32>
    %19 = vector.extract_strided_slice %9 {offsets = [0, 32], sizes = [16, 32], strides = [1, 1]} : vector<16x96xf32> to vector<16x32xf32>
    %20 = arith.addf %18, %19 : vector<16x32xf32>
    %21 = arith.negf %20 : vector<16x32xf32>
    %22 = math.exp %21 : vector<16x32xf32>
    %cst_8 = arith.constant 1.000000e+00 : f32
    %23 = vector.broadcast %cst_8 : f32 to vector<16x32xf32>
    %24 = arith.addf %23, %22 : vector<16x32xf32>
    %25 = arith.divf %23, %24 : vector<16x32xf32>
    %26 = vector.extract_strided_slice %7 {offsets = [0, 64], sizes = [16, 32], strides = [1, 1]} : vector<16x96xf32> to vector<16x32xf32>
    %27 = vector.extract_strided_slice %9 {offsets = [0, 64], sizes = [16, 32], strides = [1, 1]} : vector<16x96xf32> to vector<16x32xf32>
    %28 = arith.mulf %17, %27 : vector<16x32xf32>
    %29 = arith.addf %26, %28 : vector<16x32xf32>
    %30 = math.tanh %29 : vector<16x32xf32>
    %cst_9 = arith.constant 1.000000e+00 : f32
    %31 = vector.broadcast %cst_9 : f32 to vector<16x32xf32>
    %32 = arith.subf %31, %25 : vector<16x32xf32>
    %33 = arith.mulf %32, %30 : vector<16x32xf32>
    %34 = arith.mulf %25, %5 : vector<16x32xf32>
    %35 = arith.addf %33, %34 : vector<16x32xf32>
    %c0_10 = arith.constant 0 : index
    %c0_11 = arith.constant 0 : index
    %36 = vector.load %arg2[%c0_10, %c0_11] : memref<16x8xf32, #tpu.memory_space<vmem>>, vector<16x1xf32>
    %c0_12 = arith.constant 0 : index
    %c7 = arith.constant 7 : index
    %37 = vector.load %arg2[%c0_12, %c7] : memref<16x8xf32, #tpu.memory_space<vmem>>, vector<16x1xf32>
    %38 = vector.extract_strided_slice %35 {offsets = [0, 0], sizes = [16, 16], strides = [1, 1]} : vector<16x32xf32> to vector<16x16xf32>
    %39 = vector.broadcast %36 : vector<16x1xf32> to vector<16x16xf32>
    %40 = arith.mulf %38, %39 : vector<16x16xf32>
    %41 = vector.extract_strided_slice %35 {offsets = [0, 16], sizes = [16, 16], strides = [1, 1]} : vector<16x32xf32> to vector<16x16xf32>
    %42 = vector.broadcast %37 : vector<16x1xf32> to vector<16x16xf32>
    %43 = arith.mulf %41, %42 : vector<16x16xf32>
    %c16_i32 = arith.constant 16 : i32
    %44 = vector.broadcast %c16_i32 : i32 to vector<1x32xi32>
    %45 = arith.cmpi slt, %4, %44 : vector<1x32xi32>
    %46 = vector.shape_cast %45 : vector<1x32xi1> to vector<1x32xi1>
    %47 = vector.broadcast %46 : vector<1x32xi1> to vector<16x32xi1>
    %48 = vector.shape_cast %36 : vector<16x1xf32> to vector<16x1xf32>
    %49 = vector.broadcast %48 : vector<16x1xf32> to vector<16x32xf32>
    %50 = vector.shape_cast %37 : vector<16x1xf32> to vector<16x1xf32>
    %51 = vector.broadcast %50 : vector<16x1xf32> to vector<16x32xf32>
    %52 = arith.select %47, %49, %51 : vector<16x32xi1>, vector<16x32xf32>
    %53 = arith.subf %35, %5 : vector<16x32xf32>
    %54 = arith.mulf %52, %53 : vector<16x32xf32>
    %55 = arith.addf %5, %54 : vector<16x32xf32>
    %c0_13 = arith.constant 0 : index
    %c1 = arith.constant 1 : index
    %c0_14 = arith.constant 0 : index
    %56 = vector.load %arg1[%c0_13, %c1, %c0_14] : memref<16x8x96xf32, #tpu.memory_space<vmem>>, vector<16x1x96xf32>
    %57 = vector.shape_cast %56 : vector<16x1x96xf32> to vector<16x96xf32>
    %cst_15 = arith.constant dense<0.000000e+00> : vector<16x96xf32>
    %58 = tpu.matmul %55, %0, %cst_15 {dimension_numbers = #tpu.dot_dimension_numbers<[1], [0], [0], [1], [0, 0, 1, 1], [], []>} : vector<16x32xf32>, vector<32x96xf32>, vector<16x96xf32> -> vector<16x96xf32>
    %59 = arith.addf %58, %3 : vector<16x96xf32>
    %60 = vector.extract_strided_slice %57 {offsets = [0, 0], sizes = [16, 32], strides = [1, 1]} : vector<16x96xf32> to vector<16x32xf32>
    %61 = vector.extract_strided_slice %59 {offsets = [0, 0], sizes = [16, 32], strides = [1, 1]} : vector<16x96xf32> to vector<16x32xf32>
    %62 = arith.addf %60, %61 : vector<16x32xf32>
    %63 = arith.negf %62 : vector<16x32xf32>
    %64 = math.exp %63 : vector<16x32xf32>
    %cst_16 = arith.constant 1.000000e+00 : f32
    %65 = vector.broadcast %cst_16 : f32 to vector<16x32xf32>
    %66 = arith.addf %65, %64 : vector<16x32xf32>
    %67 = arith.divf %65, %66 : vector<16x32xf32>
    %68 = vector.extract_strided_slice %57 {offsets = [0, 32], sizes = [16, 32], strides = [1, 1]} : vector<16x96xf32> to vector<16x32xf32>
    %69 = vector.extract_strided_slice %59 {offsets = [0, 32], sizes = [16, 32], strides = [1, 1]} : vector<16x96xf32> to vector<16x32xf32>
    %70 = arith.addf %68, %69 : vector<16x32xf32>
    %71 = arith.negf %70 : vector<16x32xf32>
    %72 = math.exp %71 : vector<16x32xf32>
    %cst_17 = arith.constant 1.000000e+00 : f32
    %73 = vector.broadcast %cst_17 : f32 to vector<16x32xf32>
    %74 = arith.addf %73, %72 : vector<16x32xf32>
    %75 = arith.divf %73, %74 : vector<16x32xf32>
    %76 = vector.extract_strided_slice %57 {offsets = [0, 64], sizes = [16, 32], strides = [1, 1]} : vector<16x96xf32> to vector<16x32xf32>
    %77 = vector.extract_strided_slice %59 {offsets = [0, 64], sizes = [16, 32], strides = [1, 1]} : vector<16x96xf32> to vector<16x32xf32>
    %78 = arith.mulf %67, %77 : vector<16x32xf32>
    %79 = arith.addf %76, %78 : vector<16x32xf32>
    %80 = math.tanh %79 : vector<16x32xf32>
    %cst_18 = arith.constant 1.000000e+00 : f32
    %81 = vector.broadcast %cst_18 : f32 to vector<16x32xf32>
    %82 = arith.subf %81, %75 : vector<16x32xf32>
    %83 = arith.mulf %82, %80 : vector<16x32xf32>
    %84 = arith.mulf %75, %55 : vector<16x32xf32>
    %85 = arith.addf %83, %84 : vector<16x32xf32>
    %c0_19 = arith.constant 0 : index
    %c1_20 = arith.constant 1 : index
    %86 = vector.load %arg2[%c0_19, %c1_20] : memref<16x8xf32, #tpu.memory_space<vmem>>, vector<16x1xf32>
    %c0_21 = arith.constant 0 : index
    %c6 = arith.constant 6 : index
    %87 = vector.load %arg2[%c0_21, %c6] : memref<16x8xf32, #tpu.memory_space<vmem>>, vector<16x1xf32>
    %88 = vector.extract_strided_slice %85 {offsets = [0, 0], sizes = [16, 16], strides = [1, 1]} : vector<16x32xf32> to vector<16x16xf32>
    %89 = vector.broadcast %86 : vector<16x1xf32> to vector<16x16xf32>
    %90 = arith.mulf %88, %89 : vector<16x16xf32>
    %91 = vector.extract_strided_slice %85 {offsets = [0, 16], sizes = [16, 16], strides = [1, 1]} : vector<16x32xf32> to vector<16x16xf32>
    %92 = vector.broadcast %87 : vector<16x1xf32> to vector<16x16xf32>
    %93 = arith.mulf %91, %92 : vector<16x16xf32>
    %c16_i32_22 = arith.constant 16 : i32
    %94 = vector.broadcast %c16_i32_22 : i32 to vector<1x32xi32>
    %95 = arith.cmpi slt, %4, %94 : vector<1x32xi32>
    %96 = vector.shape_cast %95 : vector<1x32xi1> to vector<1x32xi1>
    %97 = vector.broadcast %96 : vector<1x32xi1> to vector<16x32xi1>
    %98 = vector.shape_cast %86 : vector<16x1xf32> to vector<16x1xf32>
    %99 = vector.broadcast %98 : vector<16x1xf32> to vector<16x32xf32>
    %100 = vector.shape_cast %87 : vector<16x1xf32> to vector<16x1xf32>
    %101 = vector.broadcast %100 : vector<16x1xf32> to vector<16x32xf32>
    %102 = arith.select %97, %99, %101 : vector<16x32xi1>, vector<16x32xf32>
    %103 = arith.subf %85, %55 : vector<16x32xf32>
    %104 = arith.mulf %102, %103 : vector<16x32xf32>
    %105 = arith.addf %55, %104 : vector<16x32xf32>
    %c0_23 = arith.constant 0 : index
    %c2 = arith.constant 2 : index
    %c0_24 = arith.constant 0 : index
    %106 = vector.load %arg1[%c0_23, %c2, %c0_24] : memref<16x8x96xf32, #tpu.memory_space<vmem>>, vector<16x1x96xf32>
    %107 = vector.shape_cast %106 : vector<16x1x96xf32> to vector<16x96xf32>
    %cst_25 = arith.constant dense<0.000000e+00> : vector<16x96xf32>
    %108 = tpu.matmul %105, %0, %cst_25 {dimension_numbers = #tpu.dot_dimension_numbers<[1], [0], [0], [1], [0, 0, 1, 1], [], []>} : vector<16x32xf32>, vector<32x96xf32>, vector<16x96xf32> -> vector<16x96xf32>
    %109 = arith.addf %108, %3 : vector<16x96xf32>
    %110 = vector.extract_strided_slice %107 {offsets = [0, 0], sizes = [16, 32], strides = [1, 1]} : vector<16x96xf32> to vector<16x32xf32>
    %111 = vector.extract_strided_slice %109 {offsets = [0, 0], sizes = [16, 32], strides = [1, 1]} : vector<16x96xf32> to vector<16x32xf32>
    %112 = arith.addf %110, %111 : vector<16x32xf32>
    %113 = arith.negf %112 : vector<16x32xf32>
    %114 = math.exp %113 : vector<16x32xf32>
    %cst_26 = arith.constant 1.000000e+00 : f32
    %115 = vector.broadcast %cst_26 : f32 to vector<16x32xf32>
    %116 = arith.addf %115, %114 : vector<16x32xf32>
    %117 = arith.divf %115, %116 : vector<16x32xf32>
    %118 = vector.extract_strided_slice %107 {offsets = [0, 32], sizes = [16, 32], strides = [1, 1]} : vector<16x96xf32> to vector<16x32xf32>
    %119 = vector.extract_strided_slice %109 {offsets = [0, 32], sizes = [16, 32], strides = [1, 1]} : vector<16x96xf32> to vector<16x32xf32>
    %120 = arith.addf %118, %119 : vector<16x32xf32>
    %121 = arith.negf %120 : vector<16x32xf32>
    %122 = math.exp %121 : vector<16x32xf32>
    %cst_27 = arith.constant 1.000000e+00 : f32
    %123 = vector.broadcast %cst_27 : f32 to vector<16x32xf32>
    %124 = arith.addf %123, %122 : vector<16x32xf32>
    %125 = arith.divf %123, %124 : vector<16x32xf32>
    %126 = vector.extract_strided_slice %107 {offsets = [0, 64], sizes = [16, 32], strides = [1, 1]} : vector<16x96xf32> to vector<16x32xf32>
    %127 = vector.extract_strided_slice %109 {offsets = [0, 64], sizes = [16, 32], strides = [1, 1]} : vector<16x96xf32> to vector<16x32xf32>
    %128 = arith.mulf %117, %127 : vector<16x32xf32>
    %129 = arith.addf %126, %128 : vector<16x32xf32>
    %130 = math.tanh %129 : vector<16x32xf32>
    %cst_28 = arith.constant 1.000000e+00 : f32
    %131 = vector.broadcast %cst_28 : f32 to vector<16x32xf32>
    %132 = arith.subf %131, %125 : vector<16x32xf32>
    %133 = arith.mulf %132, %130 : vector<16x32xf32>
    %134 = arith.mulf %125, %105 : vector<16x32xf32>
    %135 = arith.addf %133, %134 : vector<16x32xf32>
    %c0_29 = arith.constant 0 : index
    %c2_30 = arith.constant 2 : index
    %136 = vector.load %arg2[%c0_29, %c2_30] : memref<16x8xf32, #tpu.memory_space<vmem>>, vector<16x1xf32>
    %c0_31 = arith.constant 0 : index
    %c5 = arith.constant 5 : index
    %137 = vector.load %arg2[%c0_31, %c5] : memref<16x8xf32, #tpu.memory_space<vmem>>, vector<16x1xf32>
    %138 = vector.extract_strided_slice %135 {offsets = [0, 0], sizes = [16, 16], strides = [1, 1]} : vector<16x32xf32> to vector<16x16xf32>
    %139 = vector.broadcast %136 : vector<16x1xf32> to vector<16x16xf32>
    %140 = arith.mulf %138, %139 : vector<16x16xf32>
    %141 = vector.extract_strided_slice %135 {offsets = [0, 16], sizes = [16, 16], strides = [1, 1]} : vector<16x32xf32> to vector<16x16xf32>
    %142 = vector.broadcast %137 : vector<16x1xf32> to vector<16x16xf32>
    %143 = arith.mulf %141, %142 : vector<16x16xf32>
    %c16_i32_32 = arith.constant 16 : i32
    %144 = vector.broadcast %c16_i32_32 : i32 to vector<1x32xi32>
    %145 = arith.cmpi slt, %4, %144 : vector<1x32xi32>
    %146 = vector.shape_cast %145 : vector<1x32xi1> to vector<1x32xi1>
    %147 = vector.broadcast %146 : vector<1x32xi1> to vector<16x32xi1>
    %148 = vector.shape_cast %136 : vector<16x1xf32> to vector<16x1xf32>
    %149 = vector.broadcast %148 : vector<16x1xf32> to vector<16x32xf32>
    %150 = vector.shape_cast %137 : vector<16x1xf32> to vector<16x1xf32>
    %151 = vector.broadcast %150 : vector<16x1xf32> to vector<16x32xf32>
    %152 = arith.select %147, %149, %151 : vector<16x32xi1>, vector<16x32xf32>
    %153 = arith.subf %135, %105 : vector<16x32xf32>
    %154 = arith.mulf %152, %153 : vector<16x32xf32>
    %155 = arith.addf %105, %154 : vector<16x32xf32>
    %c0_33 = arith.constant 0 : index
    %c3 = arith.constant 3 : index
    %c0_34 = arith.constant 0 : index
    %156 = vector.load %arg1[%c0_33, %c3, %c0_34] : memref<16x8x96xf32, #tpu.memory_space<vmem>>, vector<16x1x96xf32>
    %157 = vector.shape_cast %156 : vector<16x1x96xf32> to vector<16x96xf32>
    %cst_35 = arith.constant dense<0.000000e+00> : vector<16x96xf32>
    %158 = tpu.matmul %155, %0, %cst_35 {dimension_numbers = #tpu.dot_dimension_numbers<[1], [0], [0], [1], [0, 0, 1, 1], [], []>} : vector<16x32xf32>, vector<32x96xf32>, vector<16x96xf32> -> vector<16x96xf32>
    %159 = arith.addf %158, %3 : vector<16x96xf32>
    %160 = vector.extract_strided_slice %157 {offsets = [0, 0], sizes = [16, 32], strides = [1, 1]} : vector<16x96xf32> to vector<16x32xf32>
    %161 = vector.extract_strided_slice %159 {offsets = [0, 0], sizes = [16, 32], strides = [1, 1]} : vector<16x96xf32> to vector<16x32xf32>
    %162 = arith.addf %160, %161 : vector<16x32xf32>
    %163 = arith.negf %162 : vector<16x32xf32>
    %164 = math.exp %163 : vector<16x32xf32>
    %cst_36 = arith.constant 1.000000e+00 : f32
    %165 = vector.broadcast %cst_36 : f32 to vector<16x32xf32>
    %166 = arith.addf %165, %164 : vector<16x32xf32>
    %167 = arith.divf %165, %166 : vector<16x32xf32>
    %168 = vector.extract_strided_slice %157 {offsets = [0, 32], sizes = [16, 32], strides = [1, 1]} : vector<16x96xf32> to vector<16x32xf32>
    %169 = vector.extract_strided_slice %159 {offsets = [0, 32], sizes = [16, 32], strides = [1, 1]} : vector<16x96xf32> to vector<16x32xf32>
    %170 = arith.addf %168, %169 : vector<16x32xf32>
    %171 = arith.negf %170 : vector<16x32xf32>
    %172 = math.exp %171 : vector<16x32xf32>
    %cst_37 = arith.constant 1.000000e+00 : f32
    %173 = vector.broadcast %cst_37 : f32 to vector<16x32xf32>
    %174 = arith.addf %173, %172 : vector<16x32xf32>
    %175 = arith.divf %173, %174 : vector<16x32xf32>
    %176 = vector.extract_strided_slice %157 {offsets = [0, 64], sizes = [16, 32], strides = [1, 1]} : vector<16x96xf32> to vector<16x32xf32>
    %177 = vector.extract_strided_slice %159 {offsets = [0, 64], sizes = [16, 32], strides = [1, 1]} : vector<16x96xf32> to vector<16x32xf32>
    %178 = arith.mulf %167, %177 : vector<16x32xf32>
    %179 = arith.addf %176, %178 : vector<16x32xf32>
    %180 = math.tanh %179 : vector<16x32xf32>
    %cst_38 = arith.constant 1.000000e+00 : f32
    %181 = vector.broadcast %cst_38 : f32 to vector<16x32xf32>
    %182 = arith.subf %181, %175 : vector<16x32xf32>
    %183 = arith.mulf %182, %180 : vector<16x32xf32>
    %184 = arith.mulf %175, %155 : vector<16x32xf32>
    %185 = arith.addf %183, %184 : vector<16x32xf32>
    %c0_39 = arith.constant 0 : index
    %c3_40 = arith.constant 3 : index
    %186 = vector.load %arg2[%c0_39, %c3_40] : memref<16x8xf32, #tpu.memory_space<vmem>>, vector<16x1xf32>
    %c0_41 = arith.constant 0 : index
    %c4 = arith.constant 4 : index
    %187 = vector.load %arg2[%c0_41, %c4] : memref<16x8xf32, #tpu.memory_space<vmem>>, vector<16x1xf32>
    %188 = vector.extract_strided_slice %185 {offsets = [0, 0], sizes = [16, 16], strides = [1, 1]} : vector<16x32xf32> to vector<16x16xf32>
    %189 = vector.broadcast %186 : vector<16x1xf32> to vector<16x16xf32>
    %190 = arith.mulf %188, %189 : vector<16x16xf32>
    %191 = vector.extract_strided_slice %185 {offsets = [0, 16], sizes = [16, 16], strides = [1, 1]} : vector<16x32xf32> to vector<16x16xf32>
    %192 = vector.broadcast %187 : vector<16x1xf32> to vector<16x16xf32>
    %193 = arith.mulf %191, %192 : vector<16x16xf32>
    %c16_i32_42 = arith.constant 16 : i32
    %194 = vector.broadcast %c16_i32_42 : i32 to vector<1x32xi32>
    %195 = arith.cmpi slt, %4, %194 : vector<1x32xi32>
    %196 = vector.shape_cast %195 : vector<1x32xi1> to vector<1x32xi1>
    %197 = vector.broadcast %196 : vector<1x32xi1> to vector<16x32xi1>
    %198 = vector.shape_cast %186 : vector<16x1xf32> to vector<16x1xf32>
    %199 = vector.broadcast %198 : vector<16x1xf32> to vector<16x32xf32>
    %200 = vector.shape_cast %187 : vector<16x1xf32> to vector<16x1xf32>
    %201 = vector.broadcast %200 : vector<16x1xf32> to vector<16x32xf32>
    %202 = arith.select %197, %199, %201 : vector<16x32xi1>, vector<16x32xf32>
    %203 = arith.subf %185, %155 : vector<16x32xf32>
    %204 = arith.mulf %202, %203 : vector<16x32xf32>
    %205 = arith.addf %155, %204 : vector<16x32xf32>
    %c0_43 = arith.constant 0 : index
    %c4_44 = arith.constant 4 : index
    %c0_45 = arith.constant 0 : index
    %206 = vector.load %arg1[%c0_43, %c4_44, %c0_45] : memref<16x8x96xf32, #tpu.memory_space<vmem>>, vector<16x1x96xf32>
    %207 = vector.shape_cast %206 : vector<16x1x96xf32> to vector<16x96xf32>
    %cst_46 = arith.constant dense<0.000000e+00> : vector<16x96xf32>
    %208 = tpu.matmul %205, %0, %cst_46 {dimension_numbers = #tpu.dot_dimension_numbers<[1], [0], [0], [1], [0, 0, 1, 1], [], []>} : vector<16x32xf32>, vector<32x96xf32>, vector<16x96xf32> -> vector<16x96xf32>
    %209 = arith.addf %208, %3 : vector<16x96xf32>
    %210 = vector.extract_strided_slice %207 {offsets = [0, 0], sizes = [16, 32], strides = [1, 1]} : vector<16x96xf32> to vector<16x32xf32>
    %211 = vector.extract_strided_slice %209 {offsets = [0, 0], sizes = [16, 32], strides = [1, 1]} : vector<16x96xf32> to vector<16x32xf32>
    %212 = arith.addf %210, %211 : vector<16x32xf32>
    %213 = arith.negf %212 : vector<16x32xf32>
    %214 = math.exp %213 : vector<16x32xf32>
    %cst_47 = arith.constant 1.000000e+00 : f32
    %215 = vector.broadcast %cst_47 : f32 to vector<16x32xf32>
    %216 = arith.addf %215, %214 : vector<16x32xf32>
    %217 = arith.divf %215, %216 : vector<16x32xf32>
    %218 = vector.extract_strided_slice %207 {offsets = [0, 32], sizes = [16, 32], strides = [1, 1]} : vector<16x96xf32> to vector<16x32xf32>
    %219 = vector.extract_strided_slice %209 {offsets = [0, 32], sizes = [16, 32], strides = [1, 1]} : vector<16x96xf32> to vector<16x32xf32>
    %220 = arith.addf %218, %219 : vector<16x32xf32>
    %221 = arith.negf %220 : vector<16x32xf32>
    %222 = math.exp %221 : vector<16x32xf32>
    %cst_48 = arith.constant 1.000000e+00 : f32
    %223 = vector.broadcast %cst_48 : f32 to vector<16x32xf32>
    %224 = arith.addf %223, %222 : vector<16x32xf32>
    %225 = arith.divf %223, %224 : vector<16x32xf32>
    %226 = vector.extract_strided_slice %207 {offsets = [0, 64], sizes = [16, 32], strides = [1, 1]} : vector<16x96xf32> to vector<16x32xf32>
    %227 = vector.extract_strided_slice %209 {offsets = [0, 64], sizes = [16, 32], strides = [1, 1]} : vector<16x96xf32> to vector<16x32xf32>
    %228 = arith.mulf %217, %227 : vector<16x32xf32>
    %229 = arith.addf %226, %228 : vector<16x32xf32>
    %230 = math.tanh %229 : vector<16x32xf32>
    %cst_49 = arith.constant 1.000000e+00 : f32
    %231 = vector.broadcast %cst_49 : f32 to vector<16x32xf32>
    %232 = arith.subf %231, %225 : vector<16x32xf32>
    %233 = arith.mulf %232, %230 : vector<16x32xf32>
    %234 = arith.mulf %225, %205 : vector<16x32xf32>
    %235 = arith.addf %233, %234 : vector<16x32xf32>
    %c0_50 = arith.constant 0 : index
    %c4_51 = arith.constant 4 : index
    %236 = vector.load %arg2[%c0_50, %c4_51] : memref<16x8xf32, #tpu.memory_space<vmem>>, vector<16x1xf32>
    %c0_52 = arith.constant 0 : index
    %c3_53 = arith.constant 3 : index
    %237 = vector.load %arg2[%c0_52, %c3_53] : memref<16x8xf32, #tpu.memory_space<vmem>>, vector<16x1xf32>
    %238 = vector.extract_strided_slice %235 {offsets = [0, 0], sizes = [16, 16], strides = [1, 1]} : vector<16x32xf32> to vector<16x16xf32>
    %239 = vector.broadcast %236 : vector<16x1xf32> to vector<16x16xf32>
    %240 = arith.mulf %238, %239 : vector<16x16xf32>
    %241 = vector.extract_strided_slice %235 {offsets = [0, 16], sizes = [16, 16], strides = [1, 1]} : vector<16x32xf32> to vector<16x16xf32>
    %242 = vector.broadcast %237 : vector<16x1xf32> to vector<16x16xf32>
    %243 = arith.mulf %241, %242 : vector<16x16xf32>
    %c16_i32_54 = arith.constant 16 : i32
    %244 = vector.broadcast %c16_i32_54 : i32 to vector<1x32xi32>
    %245 = arith.cmpi slt, %4, %244 : vector<1x32xi32>
    %246 = vector.shape_cast %245 : vector<1x32xi1> to vector<1x32xi1>
    %247 = vector.broadcast %246 : vector<1x32xi1> to vector<16x32xi1>
    %248 = vector.shape_cast %236 : vector<16x1xf32> to vector<16x1xf32>
    %249 = vector.broadcast %248 : vector<16x1xf32> to vector<16x32xf32>
    %250 = vector.shape_cast %237 : vector<16x1xf32> to vector<16x1xf32>
    %251 = vector.broadcast %250 : vector<16x1xf32> to vector<16x32xf32>
    %252 = arith.select %247, %249, %251 : vector<16x32xi1>, vector<16x32xf32>
    %253 = arith.subf %235, %205 : vector<16x32xf32>
    %254 = arith.mulf %252, %253 : vector<16x32xf32>
    %255 = arith.addf %205, %254 : vector<16x32xf32>
    %c0_55 = arith.constant 0 : index
    %c5_56 = arith.constant 5 : index
    %c0_57 = arith.constant 0 : index
    %256 = vector.load %arg1[%c0_55, %c5_56, %c0_57] : memref<16x8x96xf32, #tpu.memory_space<vmem>>, vector<16x1x96xf32>
    %257 = vector.shape_cast %256 : vector<16x1x96xf32> to vector<16x96xf32>
    %cst_58 = arith.constant dense<0.000000e+00> : vector<16x96xf32>
    %258 = tpu.matmul %255, %0, %cst_58 {dimension_numbers = #tpu.dot_dimension_numbers<[1], [0], [0], [1], [0, 0, 1, 1], [], []>} : vector<16x32xf32>, vector<32x96xf32>, vector<16x96xf32> -> vector<16x96xf32>
    %259 = arith.addf %258, %3 : vector<16x96xf32>
    %260 = vector.extract_strided_slice %257 {offsets = [0, 0], sizes = [16, 32], strides = [1, 1]} : vector<16x96xf32> to vector<16x32xf32>
    %261 = vector.extract_strided_slice %259 {offsets = [0, 0], sizes = [16, 32], strides = [1, 1]} : vector<16x96xf32> to vector<16x32xf32>
    %262 = arith.addf %260, %261 : vector<16x32xf32>
    %263 = arith.negf %262 : vector<16x32xf32>
    %264 = math.exp %263 : vector<16x32xf32>
    %cst_59 = arith.constant 1.000000e+00 : f32
    %265 = vector.broadcast %cst_59 : f32 to vector<16x32xf32>
    %266 = arith.addf %265, %264 : vector<16x32xf32>
    %267 = arith.divf %265, %266 : vector<16x32xf32>
    %268 = vector.extract_strided_slice %257 {offsets = [0, 32], sizes = [16, 32], strides = [1, 1]} : vector<16x96xf32> to vector<16x32xf32>
    %269 = vector.extract_strided_slice %259 {offsets = [0, 32], sizes = [16, 32], strides = [1, 1]} : vector<16x96xf32> to vector<16x32xf32>
    %270 = arith.addf %268, %269 : vector<16x32xf32>
    %271 = arith.negf %270 : vector<16x32xf32>
    %272 = math.exp %271 : vector<16x32xf32>
    %cst_60 = arith.constant 1.000000e+00 : f32
    %273 = vector.broadcast %cst_60 : f32 to vector<16x32xf32>
    %274 = arith.addf %273, %272 : vector<16x32xf32>
    %275 = arith.divf %273, %274 : vector<16x32xf32>
    %276 = vector.extract_strided_slice %257 {offsets = [0, 64], sizes = [16, 32], strides = [1, 1]} : vector<16x96xf32> to vector<16x32xf32>
    %277 = vector.extract_strided_slice %259 {offsets = [0, 64], sizes = [16, 32], strides = [1, 1]} : vector<16x96xf32> to vector<16x32xf32>
    %278 = arith.mulf %267, %277 : vector<16x32xf32>
    %279 = arith.addf %276, %278 : vector<16x32xf32>
    %280 = math.tanh %279 : vector<16x32xf32>
    %cst_61 = arith.constant 1.000000e+00 : f32
    %281 = vector.broadcast %cst_61 : f32 to vector<16x32xf32>
    %282 = arith.subf %281, %275 : vector<16x32xf32>
    %283 = arith.mulf %282, %280 : vector<16x32xf32>
    %284 = arith.mulf %275, %255 : vector<16x32xf32>
    %285 = arith.addf %283, %284 : vector<16x32xf32>
    %c0_62 = arith.constant 0 : index
    %c5_63 = arith.constant 5 : index
    %286 = vector.load %arg2[%c0_62, %c5_63] : memref<16x8xf32, #tpu.memory_space<vmem>>, vector<16x1xf32>
    %c0_64 = arith.constant 0 : index
    %c2_65 = arith.constant 2 : index
    %287 = vector.load %arg2[%c0_64, %c2_65] : memref<16x8xf32, #tpu.memory_space<vmem>>, vector<16x1xf32>
    %288 = vector.extract_strided_slice %285 {offsets = [0, 0], sizes = [16, 16], strides = [1, 1]} : vector<16x32xf32> to vector<16x16xf32>
    %289 = vector.broadcast %286 : vector<16x1xf32> to vector<16x16xf32>
    %290 = arith.mulf %288, %289 : vector<16x16xf32>
    %291 = vector.extract_strided_slice %285 {offsets = [0, 16], sizes = [16, 16], strides = [1, 1]} : vector<16x32xf32> to vector<16x16xf32>
    %292 = vector.broadcast %287 : vector<16x1xf32> to vector<16x16xf32>
    %293 = arith.mulf %291, %292 : vector<16x16xf32>
    %c16_i32_66 = arith.constant 16 : i32
    %294 = vector.broadcast %c16_i32_66 : i32 to vector<1x32xi32>
    %295 = arith.cmpi slt, %4, %294 : vector<1x32xi32>
    %296 = vector.shape_cast %295 : vector<1x32xi1> to vector<1x32xi1>
    %297 = vector.broadcast %296 : vector<1x32xi1> to vector<16x32xi1>
    %298 = vector.shape_cast %286 : vector<16x1xf32> to vector<16x1xf32>
    %299 = vector.broadcast %298 : vector<16x1xf32> to vector<16x32xf32>
    %300 = vector.shape_cast %287 : vector<16x1xf32> to vector<16x1xf32>
    %301 = vector.broadcast %300 : vector<16x1xf32> to vector<16x32xf32>
    %302 = arith.select %297, %299, %301 : vector<16x32xi1>, vector<16x32xf32>
    %303 = arith.subf %285, %255 : vector<16x32xf32>
    %304 = arith.mulf %302, %303 : vector<16x32xf32>
    %305 = arith.addf %255, %304 : vector<16x32xf32>
    %c0_67 = arith.constant 0 : index
    %c6_68 = arith.constant 6 : index
    %c0_69 = arith.constant 0 : index
    %306 = vector.load %arg1[%c0_67, %c6_68, %c0_69] : memref<16x8x96xf32, #tpu.memory_space<vmem>>, vector<16x1x96xf32>
    %307 = vector.shape_cast %306 : vector<16x1x96xf32> to vector<16x96xf32>
    %cst_70 = arith.constant dense<0.000000e+00> : vector<16x96xf32>
    %308 = tpu.matmul %305, %0, %cst_70 {dimension_numbers = #tpu.dot_dimension_numbers<[1], [0], [0], [1], [0, 0, 1, 1], [], []>} : vector<16x32xf32>, vector<32x96xf32>, vector<16x96xf32> -> vector<16x96xf32>
    %309 = arith.addf %308, %3 : vector<16x96xf32>
    %310 = vector.extract_strided_slice %307 {offsets = [0, 0], sizes = [16, 32], strides = [1, 1]} : vector<16x96xf32> to vector<16x32xf32>
    %311 = vector.extract_strided_slice %309 {offsets = [0, 0], sizes = [16, 32], strides = [1, 1]} : vector<16x96xf32> to vector<16x32xf32>
    %312 = arith.addf %310, %311 : vector<16x32xf32>
    %313 = arith.negf %312 : vector<16x32xf32>
    %314 = math.exp %313 : vector<16x32xf32>
    %cst_71 = arith.constant 1.000000e+00 : f32
    %315 = vector.broadcast %cst_71 : f32 to vector<16x32xf32>
    %316 = arith.addf %315, %314 : vector<16x32xf32>
    %317 = arith.divf %315, %316 : vector<16x32xf32>
    %318 = vector.extract_strided_slice %307 {offsets = [0, 32], sizes = [16, 32], strides = [1, 1]} : vector<16x96xf32> to vector<16x32xf32>
    %319 = vector.extract_strided_slice %309 {offsets = [0, 32], sizes = [16, 32], strides = [1, 1]} : vector<16x96xf32> to vector<16x32xf32>
    %320 = arith.addf %318, %319 : vector<16x32xf32>
    %321 = arith.negf %320 : vector<16x32xf32>
    %322 = math.exp %321 : vector<16x32xf32>
    %cst_72 = arith.constant 1.000000e+00 : f32
    %323 = vector.broadcast %cst_72 : f32 to vector<16x32xf32>
    %324 = arith.addf %323, %322 : vector<16x32xf32>
    %325 = arith.divf %323, %324 : vector<16x32xf32>
    %326 = vector.extract_strided_slice %307 {offsets = [0, 64], sizes = [16, 32], strides = [1, 1]} : vector<16x96xf32> to vector<16x32xf32>
    %327 = vector.extract_strided_slice %309 {offsets = [0, 64], sizes = [16, 32], strides = [1, 1]} : vector<16x96xf32> to vector<16x32xf32>
    %328 = arith.mulf %317, %327 : vector<16x32xf32>
    %329 = arith.addf %326, %328 : vector<16x32xf32>
    %330 = math.tanh %329 : vector<16x32xf32>
    %cst_73 = arith.constant 1.000000e+00 : f32
    %331 = vector.broadcast %cst_73 : f32 to vector<16x32xf32>
    %332 = arith.subf %331, %325 : vector<16x32xf32>
    %333 = arith.mulf %332, %330 : vector<16x32xf32>
    %334 = arith.mulf %325, %305 : vector<16x32xf32>
    %335 = arith.addf %333, %334 : vector<16x32xf32>
    %c0_74 = arith.constant 0 : index
    %c6_75 = arith.constant 6 : index
    %336 = vector.load %arg2[%c0_74, %c6_75] : memref<16x8xf32, #tpu.memory_space<vmem>>, vector<16x1xf32>
    %c0_76 = arith.constant 0 : index
    %c1_77 = arith.constant 1 : index
    %337 = vector.load %arg2[%c0_76, %c1_77] : memref<16x8xf32, #tpu.memory_space<vmem>>, vector<16x1xf32>
    %338 = vector.extract_strided_slice %335 {offsets = [0, 0], sizes = [16, 16], strides = [1, 1]} : vector<16x32xf32> to vector<16x16xf32>
    %339 = vector.broadcast %336 : vector<16x1xf32> to vector<16x16xf32>
    %340 = arith.mulf %338, %339 : vector<16x16xf32>
    %341 = vector.extract_strided_slice %335 {offsets = [0, 16], sizes = [16, 16], strides = [1, 1]} : vector<16x32xf32> to vector<16x16xf32>
    %342 = vector.broadcast %337 : vector<16x1xf32> to vector<16x16xf32>
    %343 = arith.mulf %341, %342 : vector<16x16xf32>
    %c16_i32_78 = arith.constant 16 : i32
    %344 = vector.broadcast %c16_i32_78 : i32 to vector<1x32xi32>
    %345 = arith.cmpi slt, %4, %344 : vector<1x32xi32>
    %346 = vector.shape_cast %345 : vector<1x32xi1> to vector<1x32xi1>
    %347 = vector.broadcast %346 : vector<1x32xi1> to vector<16x32xi1>
    %348 = vector.shape_cast %336 : vector<16x1xf32> to vector<16x1xf32>
    %349 = vector.broadcast %348 : vector<16x1xf32> to vector<16x32xf32>
    %350 = vector.shape_cast %337 : vector<16x1xf32> to vector<16x1xf32>
    %351 = vector.broadcast %350 : vector<16x1xf32> to vector<16x32xf32>
    %352 = arith.select %347, %349, %351 : vector<16x32xi1>, vector<16x32xf32>
    %353 = arith.subf %335, %305 : vector<16x32xf32>
    %354 = arith.mulf %352, %353 : vector<16x32xf32>
    %355 = arith.addf %305, %354 : vector<16x32xf32>
    %c0_79 = arith.constant 0 : index
    %c7_80 = arith.constant 7 : index
    %c0_81 = arith.constant 0 : index
    %356 = vector.load %arg1[%c0_79, %c7_80, %c0_81] : memref<16x8x96xf32, #tpu.memory_space<vmem>>, vector<16x1x96xf32>
    %357 = vector.shape_cast %356 : vector<16x1x96xf32> to vector<16x96xf32>
    %cst_82 = arith.constant dense<0.000000e+00> : vector<16x96xf32>
    %358 = tpu.matmul %355, %0, %cst_82 {dimension_numbers = #tpu.dot_dimension_numbers<[1], [0], [0], [1], [0, 0, 1, 1], [], []>} : vector<16x32xf32>, vector<32x96xf32>, vector<16x96xf32> -> vector<16x96xf32>
    %359 = arith.addf %358, %3 : vector<16x96xf32>
    %360 = vector.extract_strided_slice %357 {offsets = [0, 0], sizes = [16, 32], strides = [1, 1]} : vector<16x96xf32> to vector<16x32xf32>
    %361 = vector.extract_strided_slice %359 {offsets = [0, 0], sizes = [16, 32], strides = [1, 1]} : vector<16x96xf32> to vector<16x32xf32>
    %362 = arith.addf %360, %361 : vector<16x32xf32>
    %363 = arith.negf %362 : vector<16x32xf32>
    %364 = math.exp %363 : vector<16x32xf32>
    %cst_83 = arith.constant 1.000000e+00 : f32
    %365 = vector.broadcast %cst_83 : f32 to vector<16x32xf32>
    %366 = arith.addf %365, %364 : vector<16x32xf32>
    %367 = arith.divf %365, %366 : vector<16x32xf32>
    %368 = vector.extract_strided_slice %357 {offsets = [0, 32], sizes = [16, 32], strides = [1, 1]} : vector<16x96xf32> to vector<16x32xf32>
    %369 = vector.extract_strided_slice %359 {offsets = [0, 32], sizes = [16, 32], strides = [1, 1]} : vector<16x96xf32> to vector<16x32xf32>
    %370 = arith.addf %368, %369 : vector<16x32xf32>
    %371 = arith.negf %370 : vector<16x32xf32>
    %372 = math.exp %371 : vector<16x32xf32>
    %cst_84 = arith.constant 1.000000e+00 : f32
    %373 = vector.broadcast %cst_84 : f32 to vector<16x32xf32>
    %374 = arith.addf %373, %372 : vector<16x32xf32>
    %375 = arith.divf %373, %374 : vector<16x32xf32>
    %376 = vector.extract_strided_slice %357 {offsets = [0, 64], sizes = [16, 32], strides = [1, 1]} : vector<16x96xf32> to vector<16x32xf32>
    %377 = vector.extract_strided_slice %359 {offsets = [0, 64], sizes = [16, 32], strides = [1, 1]} : vector<16x96xf32> to vector<16x32xf32>
    %378 = arith.mulf %367, %377 : vector<16x32xf32>
    %379 = arith.addf %376, %378 : vector<16x32xf32>
    %380 = math.tanh %379 : vector<16x32xf32>
    %cst_85 = arith.constant 1.000000e+00 : f32
    %381 = vector.broadcast %cst_85 : f32 to vector<16x32xf32>
    %382 = arith.subf %381, %375 : vector<16x32xf32>
    %383 = arith.mulf %382, %380 : vector<16x32xf32>
    %384 = arith.mulf %375, %355 : vector<16x32xf32>
    %385 = arith.addf %383, %384 : vector<16x32xf32>
    %c0_86 = arith.constant 0 : index
    %c7_87 = arith.constant 7 : index
    %386 = vector.load %arg2[%c0_86, %c7_87] : memref<16x8xf32, #tpu.memory_space<vmem>>, vector<16x1xf32>
    %c0_88 = arith.constant 0 : index
    %c0_89 = arith.constant 0 : index
    %387 = vector.load %arg2[%c0_88, %c0_89] : memref<16x8xf32, #tpu.memory_space<vmem>>, vector<16x1xf32>
    %388 = vector.extract_strided_slice %385 {offsets = [0, 0], sizes = [16, 16], strides = [1, 1]} : vector<16x32xf32> to vector<16x16xf32>
    %389 = vector.broadcast %386 : vector<16x1xf32> to vector<16x16xf32>
    %390 = arith.mulf %388, %389 : vector<16x16xf32>
    %391 = vector.extract_strided_slice %385 {offsets = [0, 16], sizes = [16, 16], strides = [1, 1]} : vector<16x32xf32> to vector<16x16xf32>
    %392 = vector.broadcast %387 : vector<16x1xf32> to vector<16x16xf32>
    %393 = arith.mulf %391, %392 : vector<16x16xf32>
    %394 = tpu.concatenate %40, %393 in 1 : vector<16x16xf32>, vector<16x16xf32> -> vector<16x32xf32>
    %c0_90 = arith.constant 0 : index
    %c0_91 = arith.constant 0 : index
    %c0_92 = arith.constant 0 : index
    %395 = vector.load %arg5[%c0_90, %c0_91, %c0_92] : memref<16x8x32xf32, #tpu.memory_space<vmem>>, vector<16x1x32xf32>
    %396 = vector.shape_cast %395 : vector<16x1x32xf32> to vector<16x32xf32>
    %397 = vector.shape_cast %394 : vector<16x32xf32> to vector<16x1x32xf32>
    tpu.vector_store %arg5[%c0_90, %c0_91, %c0_92], %397 {strides = array<i32>} : memref<16x8x32xf32, #tpu.memory_space<vmem>>, vector<16x1x32xf32>,
    %398 = tpu.concatenate %90, %343 in 1 : vector<16x16xf32>, vector<16x16xf32> -> vector<16x32xf32>
    %c0_93 = arith.constant 0 : index
    %c1_94 = arith.constant 1 : index
    %c0_95 = arith.constant 0 : index
    %399 = vector.load %arg5[%c0_93, %c1_94, %c0_95] : memref<16x8x32xf32, #tpu.memory_space<vmem>>, vector<16x1x32xf32>
    %400 = vector.shape_cast %399 : vector<16x1x32xf32> to vector<16x32xf32>
    %401 = vector.shape_cast %398 : vector<16x32xf32> to vector<16x1x32xf32>
    tpu.vector_store %arg5[%c0_93, %c1_94, %c0_95], %401 {strides = array<i32>} : memref<16x8x32xf32, #tpu.memory_space<vmem>>, vector<16x1x32xf32>,
    %402 = tpu.concatenate %140, %293 in 1 : vector<16x16xf32>, vector<16x16xf32> -> vector<16x32xf32>
    %c0_96 = arith.constant 0 : index
    %c2_97 = arith.constant 2 : index
    %c0_98 = arith.constant 0 : index
    %403 = vector.load %arg5[%c0_96, %c2_97, %c0_98] : memref<16x8x32xf32, #tpu.memory_space<vmem>>, vector<16x1x32xf32>
    %404 = vector.shape_cast %403 : vector<16x1x32xf32> to vector<16x32xf32>
    %405 = vector.shape_cast %402 : vector<16x32xf32> to vector<16x1x32xf32>
    tpu.vector_store %arg5[%c0_96, %c2_97, %c0_98], %405 {strides = array<i32>} : memref<16x8x32xf32, #tpu.memory_space<vmem>>, vector<16x1x32xf32>,
    %406 = tpu.concatenate %190, %243 in 1 : vector<16x16xf32>, vector<16x16xf32> -> vector<16x32xf32>
    %c0_99 = arith.constant 0 : index
    %c3_100 = arith.constant 3 : index
    %c0_101 = arith.constant 0 : index
    %407 = vector.load %arg5[%c0_99, %c3_100, %c0_101] : memref<16x8x32xf32, #tpu.memory_space<vmem>>, vector<16x1x32xf32>
    %408 = vector.shape_cast %407 : vector<16x1x32xf32> to vector<16x32xf32>
    %409 = vector.shape_cast %406 : vector<16x32xf32> to vector<16x1x32xf32>
    tpu.vector_store %arg5[%c0_99, %c3_100, %c0_101], %409 {strides = array<i32>} : memref<16x8x32xf32, #tpu.memory_space<vmem>>, vector<16x1x32xf32>,
    %410 = tpu.concatenate %240, %193 in 1 : vector<16x16xf32>, vector<16x16xf32> -> vector<16x32xf32>
    %c0_102 = arith.constant 0 : index
    %c4_103 = arith.constant 4 : index
    %c0_104 = arith.constant 0 : index
    %411 = vector.load %arg5[%c0_102, %c4_103, %c0_104] : memref<16x8x32xf32, #tpu.memory_space<vmem>>, vector<16x1x32xf32>
    %412 = vector.shape_cast %411 : vector<16x1x32xf32> to vector<16x32xf32>
    %413 = vector.shape_cast %410 : vector<16x32xf32> to vector<16x1x32xf32>
    tpu.vector_store %arg5[%c0_102, %c4_103, %c0_104], %413 {strides = array<i32>} : memref<16x8x32xf32, #tpu.memory_space<vmem>>, vector<16x1x32xf32>,
    %414 = tpu.concatenate %290, %143 in 1 : vector<16x16xf32>, vector<16x16xf32> -> vector<16x32xf32>
    %c0_105 = arith.constant 0 : index
    %c5_106 = arith.constant 5 : index
    %c0_107 = arith.constant 0 : index
    %415 = vector.load %arg5[%c0_105, %c5_106, %c0_107] : memref<16x8x32xf32, #tpu.memory_space<vmem>>, vector<16x1x32xf32>
    %416 = vector.shape_cast %415 : vector<16x1x32xf32> to vector<16x32xf32>
    %417 = vector.shape_cast %414 : vector<16x32xf32> to vector<16x1x32xf32>
    tpu.vector_store %arg5[%c0_105, %c5_106, %c0_107], %417 {strides = array<i32>} : memref<16x8x32xf32, #tpu.memory_space<vmem>>, vector<16x1x32xf32>,
    %418 = tpu.concatenate %340, %93 in 1 : vector<16x16xf32>, vector<16x16xf32> -> vector<16x32xf32>
    %c0_108 = arith.constant 0 : index
    %c6_109 = arith.constant 6 : index
    %c0_110 = arith.constant 0 : index
    %419 = vector.load %arg5[%c0_108, %c6_109, %c0_110] : memref<16x8x32xf32, #tpu.memory_space<vmem>>, vector<16x1x32xf32>
    %420 = vector.shape_cast %419 : vector<16x1x32xf32> to vector<16x32xf32>
    %421 = vector.shape_cast %418 : vector<16x32xf32> to vector<16x1x32xf32>
    tpu.vector_store %arg5[%c0_108, %c6_109, %c0_110], %421 {strides = array<i32>} : memref<16x8x32xf32, #tpu.memory_space<vmem>>, vector<16x1x32xf32>,
    %422 = tpu.concatenate %390, %43 in 1 : vector<16x16xf32>, vector<16x16xf32> -> vector<16x32xf32>
    %c0_111 = arith.constant 0 : index
    %c7_112 = arith.constant 7 : index
    %c0_113 = arith.constant 0 : index
    %423 = vector.load %arg5[%c0_111, %c7_112, %c0_113] : memref<16x8x32xf32, #tpu.memory_space<vmem>>, vector<16x1x32xf32>
    %424 = vector.shape_cast %423 : vector<16x1x32xf32> to vector<16x32xf32>
    %425 = vector.shape_cast %422 : vector<16x32xf32> to vector<16x1x32xf32>
    tpu.vector_store %arg5[%c0_111, %c7_112, %c0_113], %425 {strides = array<i32>} : memref<16x8x32xf32, #tpu.memory_space<vmem>>, vector<16x1x32xf32>,
    return
  }
  func.func @transform_0(%arg0: i32) -> (i32, i32, i32) {
    %c0_i32 = arith.constant 0 : i32
    %c0_i32_0 = arith.constant 0 : i32
    %c0_i32_1 = arith.constant 0 : i32
    return %arg0, %c0_i32, %c0_i32_0 : i32, i32, i32
  }
  func.func @transform_1(%arg0: i32) -> (i32, i32) {
    %c0_i32 = arith.constant 0 : i32
    %c0_i32_0 = arith.constant 0 : i32
    return %arg0, %c0_i32 : i32, i32
  }
  func.func @transform_2(%arg0: i32) -> (i32, i32) {
    %c0_i32 = arith.constant 0 : i32
    %c0_i32_0 = arith.constant 0 : i32
    %c0_i32_1 = arith.constant 0 : i32
    return %c0_i32, %c0_i32_0 : i32, i32
  }
  func.func @transform_3(%arg0: i32) -> (i32, i32) {
    %c0_i32 = arith.constant 0 : i32
    %c0_i32_0 = arith.constant 0 : i32
    %c0_i32_1 = arith.constant 0 : i32
    return %c0_i32, %c0_i32_0 : i32, i32
  }
  func.func @transform_4(%arg0: i32) -> (i32, i32, i32) {
    %c0_i32 = arith.constant 0 : i32
    %c0_i32_0 = arith.constant 0 : i32
    %c0_i32_1 = arith.constant 0 : i32
    return %arg0, %c0_i32, %c0_i32_0 : i32, i32, i32
  }
}

</mosaic_0001>

<llo_original>
// kernel: controlnet_forward.5
$region0: #{controlnet_forward.5}
  #allocation0 [shape = 'u32[]', space=smem, size = 0x4, offset = 0x4, fixed_abs, tag = 'smem constant byte address 0x4 - core index']
  #allocation1 [shape = 'u32[72,128]{1,0:T(1,128)}', space=vmem, size = 0x9000, scoped, tag = 'internal scratch']
  %s0 = inlined_call_operand.vmem [shape: f32[8,8,32], index: 0, kind: input, shape index: {}]
  %s1 = inlined_call_operand.vmem [shape: f32[32,16], index: 1, kind: input, shape index: {}]
  %s2 = inlined_call_operand.vmem [shape: f32[1,16], index: 2, kind: input, shape index: {}]
  %s3 = inlined_call_operand.vmem [shape: f32[8,32], index: 3, kind: output, shape index: {}]
  %s4 = sld [smem:[#allocation0]]
  $region22: #{controlnet_forward.5} parent=0
    _
  %s6 = ssub.s32 1, %s4
  %s7 = scalar_select 0, %s6, %s4
  // Predicated region
  $region2: #{controlnet_forward.5} parent=0 // pred_check
    _
  $region3: #{controlnet_forward.5} parent=0 // pred_check_branch
    %9 = sbr.rel (0) target = $region5
  $region4: #{controlnet_forward.5} parent=0 // pred_region
    _
  $region5: #{controlnet_forward.5} parent=0 // pred_fallthru
    _
  // Predicated region
  $region6: #{controlnet_forward.5} parent=0 // pred_check
    _
  $region7: #{controlnet_forward.5} parent=0 // pred_check_branch
    %11 = sbr.rel (0) target = $region9
  $region8: #{controlnet_forward.5} parent=0 // pred_region
    _
  $region9: #{controlnet_forward.5} parent=0 // pred_fallthru
    _
  // Predicated region
  $region10: #{controlnet_forward.5} parent=0 // pred_check
    _
  $region11: #{controlnet_forward.5} parent=0 // pred_check_branch
    %13 = sbr.rel (0) target = $region13
  $region12: #{controlnet_forward.5} parent=0 // pred_region
    _
  $region13: #{controlnet_forward.5} parent=0 // pred_fallthru
    _
  %v14 = vld [vmem:[%s0] sm:$0xff]
  %v15 = vld [vmem:[%s0 + $0x8] sm:$0xff]
  %v16 = vld [vmem:[%s0 + $0x10] sm:$0xff]
  %v17 = vld [vmem:[%s0 + $0x18] sm:$0xff]
  %v18 = vld [vmem:[%s0 + $0x20] sm:$0xff]
  %v19 = vld [vmem:[%s0 + $0x28] sm:$0xff]
  %v20 = vld [vmem:[%s0 + $0x30] sm:$0xff]
  %v21 = vld [vmem:[%s0 + $0x38] sm:$0xff]
  %v22 = vld [vmem:[%s1] sm:$0xff]
  %v23 = vld [vmem:[%s1 + $0x8] sm:$0xff]
  %v24 = vld [vmem:[%s1 + $0x10] sm:$0xff]
  %v25 = vld [vmem:[%s1 + $0x18] sm:$0xff]
  %vm26 = vcmask 261120
  %v28 = vsel %vm26, %v14, 0
  %v31 = vsel %vm26, %v15, 0
  %v34 = vsel %vm26, %v16, 0
  %v37 = vsel %vm26, %v17, 0
  %v40 = vsel %vm26, %v18, 0
  %v43 = vsel %vm26, %v19, 0
  %v46 = vsel %vm26, %v20, 0
  %v49 = vsel %vm26, %v21, 0
  %51 = vmatpush.msra.mxu0 0.0
  %52 = vmatpush.msra.mxu0 0.0
  %53 = vmatpush.msra.mxu0 0.0
  %54 = vmatpush.msra.mxu0 0.0
  %55 = vmatpush.msra.mxu0 0.0
  %56 = vmatpush.msra.mxu0 0.0
  %57 = vmatpush.msra.mxu0 0.0
  %58 = vmatpush.msra.mxu0 0.0
  %59 = vmatpush.msra.mxu0 0.0
  %60 = vmatpush.msra.mxu0 0.0
  %61 = vmatpush.msra.mxu0 0.0
  %62 = vmatpush.msra.mxu0 0.0
  %63 = vmatpush.msra.mxu0 %v25
  %64 = vmatpush.msra.mxu0 %v24
  %65 = vmatpush.msra.mxu0 %v23
  %66 = vmatpush.msra.mxu0 %v22
  %67 = vmatmul.f32.gmra.mxu0 %v28
  %v68 = vpop.f32.mrf.mxu0
  %v69 = vadd.f32 0.0, %v68
  %70 = vmatmul.f32.gmra.mxu0 %v31
  %v71 = vpop.f32.mrf.mxu0
  %v72 = vadd.f32 0.0, %v71
  %73 = vmatmul.f32.gmra.mxu0 %v34
  %v74 = vpop.f32.mrf.mxu0
  %v75 = vadd.f32 0.0, %v74
  %76 = vmatmul.f32.gmra.mxu0 %v37
  %v77 = vpop.f32.mrf.mxu0
  %v78 = vadd.f32 0.0, %v77
  %79 = vmatmul.f32.gmra.mxu0 %v40
  %v80 = vpop.f32.mrf.mxu0
  %v81 = vadd.f32 0.0, %v80
  %82 = vmatmul.f32.gmra.mxu0 %v43
  %v83 = vpop.f32.mrf.mxu0
  %v84 = vadd.f32 0.0, %v83
  %85 = vmatmul.f32.gmra.mxu0 %v46
  %v86 = vpop.f32.mrf.mxu0
  %v87 = vadd.f32 0.0, %v86
  %88 = vmatmul.f32.gmra.mxu0 %v49
  %v89 = vpop.f32.mrf.mxu0
  %v90 = vadd.f32 0.0, %v89
  %91 = vdwg.mxu0
  %v92 = vtanh.pop %v69
  %v93 = vtanh.pop %v72
  %v94 = vtanh.pop %v75
  %v95 = vtanh.pop %v78
  %v96 = vtanh.pop %v81
  %v97 = vtanh.pop %v84
  %v98 = vtanh.pop %v87
  %v99 = vtanh.pop %v90
  %v100 = vld [vmem:[%s2] sm:$0x1]
  %v102 = vperm.slane %v100, 0
  %v104 = vmul.f32 %v92, %v102
  %v105 = vmul.f32 %v93, %v102
  %v106 = vmul.f32 %v94, %v102
  %v107 = vmul.f32 %v95, %v102
  %v108 = vmul.f32 %v96, %v102
  %v109 = vmul.f32 %v97, %v102
  %v110 = vmul.f32 %v98, %v102
  %v111 = vmul.f32 %v99, %v102
  %vm112 = vcmask 130048
  %v113 = vsel %vm112, %v104, 0.0
  %114 = vadd.xlane.f32.xlu0 %v113
  %v115 = vpop.xlane.xlu0 %114
  %v116 = vsel %vm112, %v105, 0.0
  %117 = vadd.xlane.f32.xlu0 %v116
  %v118 = vpop.xlane.xlu0 %117
  %v119 = vsel %vm112, %v106, 0.0
  %120 = vadd.xlane.f32.xlu0 %v119
  %v121 = vpop.xlane.xlu0 %120
  %v122 = vsel %vm112, %v107, 0.0
  %123 = vadd.xlane.f32.xlu0 %v122
  %v124 = vpop.xlane.xlu0 %123
  %v125 = vsel %vm112, %v108, 0.0
  %126 = vadd.xlane.f32.xlu0 %v125
  %v127 = vpop.xlane.xlu0 %126
  %v128 = vsel %vm112, %v109, 0.0
  %129 = vadd.xlane.f32.xlu0 %v128
  %v130 = vpop.xlane.xlu0 %129
  %v131 = vsel %vm112, %v110, 0.0
  %132 = vadd.xlane.f32.xlu0 %v131
  %v133 = vpop.xlane.xlu0 %132
  %v134 = vsel %vm112, %v111, 0.0
  %135 = vadd.xlane.f32.xlu0 %v134
  %v136 = vpop.xlane.xlu0 %135
  %v137 = vrot.slane %v115, 4
  %v138 = vmax.f32 %v115, %v137
  %v139 = vrot.slane %v138, 2
  %v140 = vmax.f32 %v138, %v139
  %v141 = vrot.slane %v140, 1
  %v142 = vmax.f32 %v140, %v141
  %v143 = vrot.slane %v118, 4
  %v144 = vmax.f32 %v118, %v143
  %v145 = vrot.slane %v144, 2
  %v146 = vmax.f32 %v144, %v145
  %v147 = vrot.slane %v146, 1
  %v148 = vmax.f32 %v146, %v147
  %v149 = vrot.slane %v121, 4
  %v150 = vmax.f32 %v121, %v149
  %v151 = vrot.slane %v150, 2
  %v152 = vmax.f32 %v150, %v151
  %v153 = vrot.slane %v152, 1
  %v154 = vmax.f32 %v152, %v153
  %v155 = vrot.slane %v124, 4
  %v156 = vmax.f32 %v124, %v155
  %v157 = vrot.slane %v156, 2
  %v158 = vmax.f32 %v156, %v157
  %v159 = vrot.slane %v158, 1
  %v160 = vmax.f32 %v158, %v159
  %v161 = vrot.slane %v127, 4
  %v162 = vmax.f32 %v127, %v161
  %v163 = vrot.slane %v162, 2
  %v164 = vmax.f32 %v162, %v163
  %v165 = vrot.slane %v164, 1
  %v166 = vmax.f32 %v164, %v165
  %v167 = vrot.slane %v130, 4
  %v168 = vmax.f32 %v130, %v167
  %v169 = vrot.slane %v168, 2
  %v170 = vmax.f32 %v168, %v169
  %v171 = vrot.slane %v170, 1
  %v172 = vmax.f32 %v170, %v171
  %v173 = vrot.slane %v133, 4
  %v174 = vmax.f32 %v133, %v173
  %v175 = vrot.slane %v174, 2
  %v176 = vmax.f32 %v174, %v175
  %v177 = vrot.slane %v176, 1
  %v178 = vmax.f32 %v176, %v177
  %v179 = vrot.slane %v136, 4
  %v180 = vmax.f32 %v136, %v179
  %v181 = vrot.slane %v180, 2
  %v182 = vmax.f32 %v180, %v181
  %v183 = vrot.slane %v182, 1
  %v184 = vmax.f32 %v182, %v183
  %v185 = vsub.f32 %v115, %v142
  %v186 = vsub.f32 %v118, %v148
  %v187 = vsub.f32 %v121, %v154
  %v188 = vsub.f32 %v124, %v160
  %v189 = vsub.f32 %v127, %v166
  %v190 = vsub.f32 %v130, %v172
  %v191 = vsub.f32 %v133, %v178
  %v192 = vsub.f32 %v136, %v184
  %v193 = vmul.f32 %v185, 1.442695
  %v194 = vpow.pop %v193
  %v195 = vmul.f32 %v186, 1.442695
  %v196 = vpow.pop %v195
  %v197 = vmul.f32 %v187, 1.442695
  %v198 = vpow.pop %v197
  %v199 = vmul.f32 %v188, 1.442695
  %v200 = vpow.pop %v199
  %v201 = vmul.f32 %v189, 1.442695
  %v202 = vpow.pop %v201
  %v203 = vmul.f32 %v190, 1.442695
  %v204 = vpow.pop %v203
  %v205 = vmul.f32 %v191, 1.442695
  %v206 = vpow.pop %v205
  %v207 = vmul.f32 %v192, 1.442695
  %v208 = vpow.pop %v207
  %v209 = vrot.slane %v194, 4
  %v210 = vadd.f32 %v194, %v209
  %v211 = vrot.slane %v210, 2
  %v212 = vadd.f32 %v210, %v211
  %v213 = vrot.slane %v212, 1
  %v214 = vadd.f32 %v212, %v213
  %v215 = vrot.slane %v196, 4
  %v216 = vadd.f32 %v196, %v215
  %v217 = vrot.slane %v216, 2
  %v218 = vadd.f32 %v216, %v217
  %v219 = vrot.slane %v218, 1
  %v220 = vadd.f32 %v218, %v219
  %v221 = vrot.slane %v198, 4
  %v222 = vadd.f32 %v198, %v221
  %v223 = vrot.slane %v222, 2
  %v224 = vadd.f32 %v222, %v223
  %v225 = vrot.slane %v224, 1
  %v226 = vadd.f32 %v224, %v225
  %v227 = vrot.slane %v200, 4
  %v228 = vadd.f32 %v200, %v227
  %v229 = vrot.slane %v228, 2
  %v230 = vadd.f32 %v228, %v229
  %v231 = vrot.slane %v230, 1
  %v232 = vadd.f32 %v230, %v231
  %v233 = vrot.slane %v202, 4
  %v234 = vadd.f32 %v202, %v233
  %v235 = vrot.slane %v234, 2
  %v236 = vadd.f32 %v234, %v235
  %v237 = vrot.slane %v236, 1
  %v238 = vadd.f32 %v236, %v237
  %v239 = vrot.slane %v204, 4
  %v240 = vadd.f32 %v204, %v239
  %v241 = vrot.slane %v240, 2
  %v242 = vadd.f32 %v240, %v241
  %v243 = vrot.slane %v242, 1
  %v244 = vadd.f32 %v242, %v243
  %v245 = vrot.slane %v206, 4
  %v246 = vadd.f32 %v206, %v245
  %v247 = vrot.slane %v246, 2
  %v248 = vadd.f32 %v246, %v247
  %v249 = vrot.slane %v248, 1
  %v250 = vadd.f32 %v248, %v249
  %v251 = vrot.slane %v208, 4
  %v252 = vadd.f32 %v208, %v251
  %v253 = vrot.slane %v252, 2
  %v254 = vadd.f32 %v252, %v253
  %v255 = vrot.slane %v254, 1
  %v256 = vadd.f32 %v254, %v255
  %v257 = vrcp.pop %v214
  %v258 = vrcp.pop %v220
  %v259 = vrcp.pop %v226
  %v260 = vrcp.pop %v232
  %v261 = vrcp.pop %v238
  %v262 = vrcp.pop %v244
  %v263 = vrcp.pop %v250
  %v264 = vrcp.pop %v256
  %v265 = vmul.f32 %v194, %v257
  %v266 = vmul.f32 %v196, %v258
  %v267 = vmul.f32 %v198, %v259
  %v268 = vmul.f32 %v200, %v260
  %v269 = vmul.f32 %v202, %v261
  %v270 = vmul.f32 %v204, %v262
  %v271 = vmul.f32 %v206, %v263
  %v272 = vmul.f32 %v208, %v264
  %v273 = vmul.f32 %v265, %v14
  %v274 = vmul.f32 %v266, %v15
  %v275 = vmul.f32 %v267, %v16
  %v276 = vmul.f32 %v268, %v17
  %v277 = vmul.f32 %v269, %v18
  %v278 = vmul.f32 %v270, %v19
  %v279 = vmul.f32 %v271, %v20
  %v280 = vmul.f32 %v272, %v21
  %v281 = vsel %vm26, %v273, 0.0
  %v282 = vrot.slane %v281, 4
  %v283 = vadd.f32 %v281, %v282
  %v284 = vrot.slane %v283, 2
  %v285 = vadd.f32 %v283, %v284
  %v286 = vrot.slane %v285, 1
  %v287 = vadd.f32 %v285, %v286
  %v288 = vsel %vm26, %v274, 0.0
  %v289 = vrot.slane %v288, 4
  %v290 = vadd.f32 %v288, %v289
  %v291 = vrot.slane %v290, 2
  %v292 = vadd.f32 %v290, %v291
  %v293 = vrot.slane %v292, 1
  %v294 = vadd.f32 %v292, %v293
  %v295 = vsel %vm26, %v275, 0.0
  %v296 = vrot.slane %v295, 4
  %v297 = vadd.f32 %v295, %v296
  %v298 = vrot.slane %v297, 2
  %v299 = vadd.f32 %v297, %v298
  %v300 = vrot.slane %v299, 1
  %v301 = vadd.f32 %v299, %v300
  %v302 = vsel %vm26, %v276, 0.0
  %v303 = vrot.slane %v302, 4
  %v304 = vadd.f32 %v302, %v303
  %v305 = vrot.slane %v304, 2
  %v306 = vadd.f32 %v304, %v305
  %v307 = vrot.slane %v306, 1
  %v308 = vadd.f32 %v306, %v307
  %v309 = vsel %vm26, %v277, 0.0
  %v310 = vrot.slane %v309, 4
  %v311 = vadd.f32 %v309, %v310
  %v312 = vrot.slane %v311, 2
  %v313 = vadd.f32 %v311, %v312
  %v314 = vrot.slane %v313, 1
  %v315 = vadd.f32 %v313, %v314
  %v316 = vsel %vm26, %v278, 0.0
  %v317 = vrot.slane %v316, 4
  %v318 = vadd.f32 %v316, %v317
  %v319 = vrot.slane %v318, 2
  %v320 = vadd.f32 %v318, %v319
  %v321 = vrot.slane %v320, 1
  %v322 = vadd.f32 %v320, %v321
  %v323 = vsel %vm26, %v279, 0.0
  %v324 = vrot.slane %v323, 4
  %v325 = vadd.f32 %v323, %v324
  %v326 = vrot.slane %v325, 2
  %v327 = vadd.f32 %v325, %v326
  %v328 = vrot.slane %v327, 1
  %v329 = vadd.f32 %v327, %v328
  %v330 = vsel %vm26, %v280, 0.0
  %v331 = vrot.slane %v330, 4
  %v332 = vadd.f32 %v330, %v331
  %v333 = vrot.slane %v332, 2
  %v334 = vadd.f32 %v332, %v333
  %v335 = vrot.slane %v334, 1
  %v336 = vadd.f32 %v334, %v335
  %vm345 = vcmask 1041409
  %v346 = vsel %vm345, %v294, %v287
  %vm347 = vcmask 1042434
  %v348 = vsel %vm347, %v301, %v346
  %vm349 = vcmask 1043459
  %v350 = vsel %vm349, %v308, %v348
  %vm351 = vcmask 1044484
  %v352 = vsel %vm351, %v315, %v350
  %vm353 = vcmask 1045509
  %v354 = vsel %vm353, %v322, %v352
  %vm355 = vcmask 1046534
  %v356 = vsel %vm355, %v329, %v354
  %vm357 = vcmask 1047559
  %v358 = vsel %vm357, %v336, %v356
  %360 = vst.msk [vmem:[%s3] sm:$0xff] %vm26, %v358
  // Predicated region
  $region14: #{controlnet_forward.5} parent=0 // pred_check
    _
  $region15: #{controlnet_forward.5} parent=0 // pred_check_branch
    %362 = sbr.rel (0) target = $region17
  $region16: #{controlnet_forward.5} parent=0 // pred_region
    _
  $region17: #{controlnet_forward.5} parent=0 // pred_fallthru
    _
  // Predicated region
  $region18: #{controlnet_forward.5} parent=0 // pred_check
    _
  $region19: #{controlnet_forward.5} parent=0 // pred_check_branch
    %364 = sbr.rel (0) target = $region21
  $region20: #{controlnet_forward.5} parent=0 // pred_region
    _
  $region21: #{controlnet_forward.5} parent=0 // pred_fallthru
    _

// kernel: controlnet_forward.4
$region0: #{controlnet_forward.4}
  #allocation0 [shape = 'u32[]', space=smem, size = 0x4, offset = 0x4, fixed_abs, tag = 'smem constant byte address 0x4 - core index']
  #allocation1 [shape = 'u32[72,128]{1,0:T(1,128)}', space=vmem, size = 0x9000, scoped, tag = 'internal scratch']
  %s0 = inlined_call_operand.vmem [shape: f32[16,10,32], index: 0, kind: input, shape index: {}]
  %s1 = inlined_call_operand.vmem [shape: f32[3,32,16], index: 1, kind: input, shape index: {}]
  %s2 = inlined_call_operand.vmem [shape: f32[1,16], index: 2, kind: input, shape index: {}]
  %s3 = inlined_call_operand.vmem [shape: f32[16,8], index: 3, kind: input, shape index: {}]
  %s4 = inlined_call_operand.vmem [shape: f32[1,8], index: 4, kind: input, shape index: {}]
  %s5 = inlined_call_operand.vmem [shape: f32[16,8], index: 5, kind: output, shape index: {}]
  %s6 = sld [smem:[#allocation0]]
  $region30: #{controlnet_forward.4} parent=0
    _
  %s8 = ssub.s32 1, %s6
  %s9 = scalar_select 0, %s8, %s6
  // Predicated region
  $region2: #{controlnet_forward.4} parent=0 // pred_check
    _
  $region3: #{controlnet_forward.4} parent=0 // pred_check_branch
    %11 = sbr.rel (0) target = $region5
  $region4: #{controlnet_forward.4} parent=0 // pred_region
    _
  $region5: #{controlnet_forward.4} parent=0 // pred_fallthru
    _
  // Predicated region
  $region6: #{controlnet_forward.4} parent=0 // pred_check
    _
  $region7: #{controlnet_forward.4} parent=0 // pred_check_branch
    %13 = sbr.rel (0) target = $region9
  $region8: #{controlnet_forward.4} parent=0 // pred_region
    _
  $region9: #{controlnet_forward.4} parent=0 // pred_fallthru
    _
  // Predicated region
  $region10: #{controlnet_forward.4} parent=0 // pred_check
    _
  $region11: #{controlnet_forward.4} parent=0 // pred_check_branch
    %15 = sbr.rel (0) target = $region13
  $region12: #{controlnet_forward.4} parent=0 // pred_region
    _
  $region13: #{controlnet_forward.4} parent=0 // pred_fallthru
    _
  // Predicated region
  $region14: #{controlnet_forward.4} parent=0 // pred_check
    _
  $region15: #{controlnet_forward.4} parent=0 // pred_check_branch
    %17 = sbr.rel (0) target = $region17
  $region16: #{controlnet_forward.4} parent=0 // pred_region
    _
  $region17: #{controlnet_forward.4} parent=0 // pred_fallthru
    _
  // Predicated region
  $region18: #{controlnet_forward.4} parent=0 // pred_check
    _
  $region19: #{controlnet_forward.4} parent=0 // pred_check_branch
    %19 = sbr.rel (0) target = $region21
  $region20: #{controlnet_forward.4} parent=0 // pred_region
    _
  $region21: #{controlnet_forward.4} parent=0 // pred_fallthru
    _
  %v20 = vld [vmem:[%s0] sm:$0xff]
  %v21 = vld [vmem:[%s0 + $0x10] sm:$0xff]
  %v22 = vld [vmem:[%s0 + $0x20] sm:$0xff]
  %v23 = vld [vmem:[%s0 + $0x30] sm:$0xff]
  %v24 = vld [vmem:[%s0 + $0x40] sm:$0xff]
  %v25 = vld [vmem:[%s0 + $0x50] sm:$0xff]
  %v26 = vld [vmem:[%s0 + $0x60] sm:$0xff]
  %v27 = vld [vmem:[%s0 + $0x70] sm:$0xff]
  %v28 = vld [vmem:[%s0 + $0x80] sm:$0xff]
  %v29 = vld [vmem:[%s0 + $0x90] sm:$0xff]
  %v30 = vld [vmem:[%s0 + $0xa0] sm:$0xff]
  %v31 = vld [vmem:[%s0 + $0xb0] sm:$0xff]
  %v32 = vld [vmem:[%s0 + $0xc0] sm:$0xff]
  %v33 = vld [vmem:[%s0 + $0xd0] sm:$0xff]
  %v34 = vld [vmem:[%s0 + $0xe0] sm:$0xff]
  %v35 = vld [vmem:[%s0 + $0xf0] sm:$0xff]
  %v36 = vld [vmem:[%s1] sm:$0xff]
  %v37 = vld [vmem:[%s1 + $0x8] sm:$0xff]
  %v38 = vld [vmem:[%s1 + $0x10] sm:$0xff]
  %v39 = vld [vmem:[%s1 + $0x18] sm:$0xff]
  %v40 = vld [vmem:[%s0 + $0x1] sm:$0xff]
  %v41 = vld [vmem:[%s0 + $0x11] sm:$0xff]
  %v42 = vld [vmem:[%s0 + $0x21] sm:$0xff]
  %v43 = vld [vmem:[%s0 + $0x31] sm:$0xff]
  %v44 = vld [vmem:[%s0 + $0x41] sm:$0xff]
  %v45 = vld [vmem:[%s0 + $0x51] sm:$0xff]
  %v46 = vld [vmem:[%s0 + $0x61] sm:$0xff]
  %v47 = vld [vmem:[%s0 + $0x71] sm:$0xff]
  %v48 = vld [vmem:[%s0 + $0x81] sm:$0xff]
  %v49 = vld [vmem:[%s0 + $0x91] sm:$0xff]
  %v50 = vld [vmem:[%s0 + $0xa1] sm:$0xff]
  %v51 = vld [vmem:[%s0 + $0xb1] sm:$0xff]
  %v52 = vld [vmem:[%s0 + $0xc1] sm:$0xff]
  %v53 = vld [vmem:[%s0 + $0xd1] sm:$0xff]
  %v54 = vld [vmem:[%s0 + $0xe1] sm:$0xff]
  %v55 = vld [vmem:[%s0 + $0xf1] sm:$0xff]
  %s56 = scalar_lea.vmem %s1, 32
  %v57 = vld [vmem:[%s56] sm:$0xff]
  %v58 = vld [vmem:[%s56 + $0x8] sm:$0xff]
  %v59 = vld [vmem:[%s56 + $0x10] sm:$0xff]
  %v60 = vld [vmem:[%s56 + $0x18] sm:$0xff]
  %vm61 = vcmask 261120
  %v63 = vsel %vm61, %v40, 0
  %v66 = vsel %vm61, %v41, 0
  %v69 = vsel %vm61, %v42, 0
  %v72 = vsel %vm61, %v43, 0
  %v75 = vsel %vm61, %v44, 0
  %v78 = vsel %vm61, %v45, 0
  %v81 = vsel %vm61, %v46, 0
  %v84 = vsel %vm61, %v47, 0
  %v87 = vsel %vm61, %v48, 0
  %v90 = vsel %vm61, %v49, 0
  %v93 = vsel %vm61, %v50, 0
  %v96 = vsel %vm61, %v51, 0
  %v99 = vsel %vm61, %v52, 0
  %v102 = vsel %vm61, %v53, 0
  %v105 = vsel %vm61, %v54, 0
  %v108 = vsel %vm61, %v55, 0
  %110 = vmatpush.msra.mxu0 0.0
  %111 = vmatpush.msra.mxu0 0.0
  %112 = vmatpush.msra.mxu0 0.0
  %113 = vmatpush.msra.mxu0 0.0
  %114 = vmatpush.msra.mxu0 0.0
  %115 = vmatpush.msra.mxu0 0.0
  %116 = vmatpush.msra.mxu0 0.0
  %117 = vmatpush.msra.mxu0 0.0
  %118 = vmatpush.msra.mxu0 0.0
  %119 = vmatpush.msra.mxu0 0.0
  %120 = vmatpush.msra.mxu0 0.0
  %121 = vmatpush.msra.mxu0 0.0
  %122 = vmatpush.msra.mxu0 %v60
  %123 = vmatpush.msra.mxu0 %v59
  %124 = vmatpush.msra.mxu0 %v58
  %125 = vmatpush.msra.mxu0 %v57
  %126 = vmatmul.f32.gmra.mxu0 %v63
  %v127 = vpop.f32.mrf.mxu0
  %v128 = vadd.f32 0.0, %v127
  %129 = vmatmul.f32.gmra.mxu0 %v66
  %v130 = vpop.f32.mrf.mxu0
  %v131 = vadd.f32 0.0, %v130
  %132 = vmatmul.f32.gmra.mxu0 %v69
  %v133 = vpop.f32.mrf.mxu0
  %v134 = vadd.f32 0.0, %v133
  %135 = vmatmul.f32.gmra.mxu0 %v72
  %v136 = vpop.f32.mrf.mxu0
  %v137 = vadd.f32 0.0, %v136
  %138 = vmatmul.f32.gmra.mxu0 %v75
  %v139 = vpop.f32.mrf.mxu0
  %v140 = vadd.f32 0.0, %v139
  %141 = vmatmul.f32.gmra.mxu0 %v78
  %v142 = vpop.f32.mrf.mxu0
  %v143 = vadd.f32 0.0, %v142
  %144 = vmatmul.f32.gmra.mxu0 %v81
  %v145 = vpop.f32.mrf.mxu0
  %v146 = vadd.f32 0.0, %v145
  %147 = vmatmul.f32.gmra.mxu0 %v84
  %v148 = vpop.f32.mrf.mxu0
  %v149 = vadd.f32 0.0, %v148
  %150 = vmatmul.f32.gmra.mxu0 %v87
  %v151 = vpop.f32.mrf.mxu0
  %v152 = vadd.f32 0.0, %v151
  %153 = vmatmul.f32.gmra.mxu0 %v90
  %v154 = vpop.f32.mrf.mxu0
  %v155 = vadd.f32 0.0, %v154
  %156 = vmatmul.f32.gmra.mxu0 %v93
  %v157 = vpop.f32.mrf.mxu0
  %v158 = vadd.f32 0.0, %v157
  %159 = vmatmul.f32.gmra.mxu0 %v96
  %v160 = vpop.f32.mrf.mxu0
  %v161 = vadd.f32 0.0, %v160
  %162 = vmatmul.f32.gmra.mxu0 %v99
  %v163 = vpop.f32.mrf.mxu0
  %v164 = vadd.f32 0.0, %v163
  %165 = vmatmul.f32.gmra.mxu0 %v102
  %v166 = vpop.f32.mrf.mxu0
  %v167 = vadd.f32 0.0, %v166
  %168 = vmatmul.f32.gmra.mxu0 %v105
  %v169 = vpop.f32.mrf.mxu0
  %v170 = vadd.f32 0.0, %v169
  %171 = vmatmul.f32.gmra.mxu0 %v108
  %v172 = vpop.f32.mrf.mxu0
  %v173 = vadd.f32 0.0, %v172
  %174 = vdwg.mxu0
  %v176 = vsel %vm61, %v20, 0
  %v179 = vsel %vm61, %v21, 0
  %v182 = vsel %vm61, %v22, 0
  %v185 = vsel %vm61, %v23, 0
  %v188 = vsel %vm61, %v24, 0
  %v191 = vsel %vm61, %v25, 0
  %v194 = vsel %vm61, %v26, 0
  %v197 = vsel %vm61, %v27, 0
  %v200 = vsel %vm61, %v28, 0
  %v203 = vsel %vm61, %v29, 0
  %v206 = vsel %vm61, %v30, 0
  %v209 = vsel %vm61, %v31, 0
  %v212 = vsel %vm61, %v32, 0
  %v215 = vsel %vm61, %v33, 0
  %v218 = vsel %vm61, %v34, 0
  %v221 = vsel %vm61, %v35, 0
  %223 = vmatpush.msra.mxu0 0.0
  %224 = vmatpush.msra.mxu0 0.0
  %225 = vmatpush.msra.mxu0 0.0
  %226 = vmatpush.msra.mxu0 0.0
  %227 = vmatpush.msra.mxu0 0.0
  %228 = vmatpush.msra.mxu0 0.0
  %229 = vmatpush.msra.mxu0 0.0
  %230 = vmatpush.msra.mxu0 0.0
  %231 = vmatpush.msra.mxu0 0.0
  %232 = vmatpush.msra.mxu0 0.0
  %233 = vmatpush.msra.mxu0 0.0
  %234 = vmatpush.msra.mxu0 0.0
  %235 = vmatpush.msra.mxu0 %v39
  %236 = vmatpush.msra.mxu0 %v38
  %237 = vmatpush.msra.mxu0 %v37
  %238 = vmatpush.msra.mxu0 %v36
  %239 = vmatmul.f32.gmra.mxu0 %v176
  %v240 = vpop.f32.mrf.mxu0
  %v241 = vadd.f32 %v128, %v240
  %242 = vmatmul.f32.gmra.mxu0 %v179
  %v243 = vpop.f32.mrf.mxu0
  %v244 = vadd.f32 %v131, %v243
  %245 = vmatmul.f32.gmra.mxu0 %v182
  %v246 = vpop.f32.mrf.mxu0
  %v247 = vadd.f32 %v134, %v246
  %248 = vmatmul.f32.gmra.mxu0 %v185
  %v249 = vpop.f32.mrf.mxu0
  %v250 = vadd.f32 %v137, %v249
  %251 = vmatmul.f32.gmra.mxu0 %v188
  %v252 = vpop.f32.mrf.mxu0
  %v253 = vadd.f32 %v140, %v252
  %254 = vmatmul.f32.gmra.mxu0 %v191
  %v255 = vpop.f32.mrf.mxu0
  %v256 = vadd.f32 %v143, %v255
  %257 = vmatmul.f32.gmra.mxu0 %v194
  %v258 = vpop.f32.mrf.mxu0
  %v259 = vadd.f32 %v146, %v258
  %260 = vmatmul.f32.gmra.mxu0 %v197
  %v261 = vpop.f32.mrf.mxu0
  %v262 = vadd.f32 %v149, %v261
  %263 = vmatmul.f32.gmra.mxu0 %v200
  %v264 = vpop.f32.mrf.mxu0
  %v265 = vadd.f32 %v152, %v264
  %266 = vmatmul.f32.gmra.mxu0 %v203
  %v267 = vpop.f32.mrf.mxu0
  %v268 = vadd.f32 %v155, %v267
  %269 = vmatmul.f32.gmra.mxu0 %v206
  %v270 = vpop.f32.mrf.mxu0
  %v271 = vadd.f32 %v158, %v270
  %272 = vmatmul.f32.gmra.mxu0 %v209
  %v273 = vpop.f32.mrf.mxu0
  %v274 = vadd.f32 %v161, %v273
  %275 = vmatmul.f32.gmra.mxu0 %v212
  %v276 = vpop.f32.mrf.mxu0
  %v277 = vadd.f32 %v164, %v276
  %278 = vmatmul.f32.gmra.mxu0 %v215
  %v279 = vpop.f32.mrf.mxu0
  %v280 = vadd.f32 %v167, %v279
  %281 = vmatmul.f32.gmra.mxu0 %v218
  %v282 = vpop.f32.mrf.mxu0
  %v283 = vadd.f32 %v170, %v282
  %284 = vmatmul.f32.gmra.mxu0 %v221
  %v285 = vpop.f32.mrf.mxu0
  %v286 = vadd.f32 %v173, %v285
  %287 = vdwg.mxu0
  %v288 = vld [vmem:[%s0 + $0x2] sm:$0xff]
  %v289 = vld [vmem:[%s0 + $0x12] sm:$0xff]
  %v290 = vld [vmem:[%s0 + $0x22] sm:$0xff]
  %v291 = vld [vmem:[%s0 + $0x32] sm:$0xff]
  %v292 = vld [vmem:[%s0 + $0x42] sm:$0xff]
  %v293 = vld [vmem:[%s0 + $0x52] sm:$0xff]
  %v294 = vld [vmem:[%s0 + $0x62] sm:$0xff]
  %v295 = vld [vmem:[%s0 + $0x72] sm:$0xff]
  %v296 = vld [vmem:[%s0 + $0x82] sm:$0xff]
  %v297 = vld [vmem:[%s0 + $0x92] sm:$0xff]
  %v298 = vld [vmem:[%s0 + $0xa2] sm:$0xff]
  %v299 = vld [vmem:[%s0 + $0xb2] sm:$0xff]
  %v300 = vld [vmem:[%s0 + $0xc2] sm:$0xff]
  %v301 = vld [vmem:[%s0 + $0xd2] sm:$0xff]
  %v302 = vld [vmem:[%s0 + $0xe2] sm:$0xff]
  %v303 = vld [vmem:[%s0 + $0xf2] sm:$0xff]
  %s304 = scalar_lea.vmem %s1, 64
  %v305 = vld [vmem:[%s304] sm:$0xff]
  %v306 = vld [vmem:[%s304 + $0x8] sm:$0xff]
  %v307 = vld [vmem:[%s304 + $0x10] sm:$0xff]
  %v308 = vld [vmem:[%s304 + $0x18] sm:$0xff]
  %v310 = vsel %vm61, %v288, 0
  %v313 = vsel %vm61, %v289, 0
  %v316 = vsel %vm61, %v290, 0
  %v319 = vsel %vm61, %v291, 0
  %v322 = vsel %vm61, %v292, 0
  %v325 = vsel %vm61, %v293, 0
  %v328 = vsel %vm61, %v294, 0
  %v331 = vsel %vm61, %v295, 0
  %v334 = vsel %vm61, %v296, 0
  %v337 = vsel %vm61, %v297, 0
  %v340 = vsel %vm61, %v298, 0
  %v343 = vsel %vm61, %v299, 0
  %v346 = vsel %vm61, %v300, 0
  %v349 = vsel %vm61, %v301, 0
  %v352 = vsel %vm61, %v302, 0
  %v355 = vsel %vm61, %v303, 0
  %357 = vmatpush.msra.mxu0 0.0
  %358 = vmatpush.msra.mxu0 0.0
  %359 = vmatpush.msra.mxu0 0.0
  %360 = vmatpush.msra.mxu0 0.0
  %361 = vmatpush.msra.mxu0 0.0
  %362 = vmatpush.msra.mxu0 0.0
  %363 = vmatpush.msra.mxu0 0.0
  %364 = vmatpush.msra.mxu0 0.0
  %365 = vmatpush.msra.mxu0 0.0
  %366 = vmatpush.msra.mxu0 0.0
  %367 = vmatpush.msra.mxu0 0.0
  %368 = vmatpush.msra.mxu0 0.0
  %369 = vmatpush.msra.mxu0 %v308
  %370 = vmatpush.msra.mxu0 %v307
  %371 = vmatpush.msra.mxu0 %v306
  %372 = vmatpush.msra.mxu0 %v305
  %373 = vmatmul.f32.gmra.mxu0 %v310
  %v374 = vpop.f32.mrf.mxu0
  %v375 = vadd.f32 0.0, %v374
  %376 = vmatmul.f32.gmra.mxu0 %v313
  %v377 = vpop.f32.mrf.mxu0
  %v378 = vadd.f32 0.0, %v377
  %379 = vmatmul.f32.gmra.mxu0 %v316
  %v380 = vpop.f32.mrf.mxu0
  %v381 = vadd.f32 0.0, %v380
  %382 = vmatmul.f32.gmra.mxu0 %v319
  %v383 = vpop.f32.mrf.mxu0
  %v384 = vadd.f32 0.0, %v383
  %385 = vmatmul.f32.gmra.mxu0 %v322
  %v386 = vpop.f32.mrf.mxu0
  %v387 = vadd.f32 0.0, %v386
  %388 = vmatmul.f32.gmra.mxu0 %v325
  %v389 = vpop.f32.mrf.mxu0
  %v390 = vadd.f32 0.0, %v389
  %391 = vmatmul.f32.gmra.mxu0 %v328
  %v392 = vpop.f32.mrf.mxu0
  %v393 = vadd.f32 0.0, %v392
  %394 = vmatmul.f32.gmra.mxu0 %v331
  %v395 = vpop.f32.mrf.mxu0
  %v396 = vadd.f32 0.0, %v395
  %397 = vmatmul.f32.gmra.mxu0 %v334
  %v398 = vpop.f32.mrf.mxu0
  %v399 = vadd.f32 0.0, %v398
  %400 = vmatmul.f32.gmra.mxu0 %v337
  %v401 = vpop.f32.mrf.mxu0
  %v402 = vadd.f32 0.0, %v401
  %403 = vmatmul.f32.gmra.mxu0 %v340
  %v404 = vpop.f32.mrf.mxu0
  %v405 = vadd.f32 0.0, %v404
  %406 = vmatmul.f32.gmra.mxu0 %v343
  %v407 = vpop.f32.mrf.mxu0
  %v408 = vadd.f32 0.0, %v407
  %409 = vmatmul.f32.gmra.mxu0 %v346
  %v410 = vpop.f32.mrf.mxu0
  %v411 = vadd.f32 0.0, %v410
  %412 = vmatmul.f32.gmra.mxu0 %v349
  %v413 = vpop.f32.mrf.mxu0
  %v414 = vadd.f32 0.0, %v413
  %415 = vmatmul.f32.gmra.mxu0 %v352
  %v416 = vpop.f32.mrf.mxu0
  %v417 = vadd.f32 0.0, %v416
  %418 = vmatmul.f32.gmra.mxu0 %v355
  %v419 = vpop.f32.mrf.mxu0
  %v420 = vadd.f32 0.0, %v419
  %421 = vdwg.mxu0
  %v422 = vadd.f32 %v241, %v375
  %v423 = vadd.f32 %v244, %v378
  %v424 = vadd.f32 %v247, %v381
  %v425 = vadd.f32 %v250, %v384
  %v426 = vadd.f32 %v253, %v387
  %v427 = vadd.f32 %v256, %v390
  %v428 = vadd.f32 %v259, %v393
  %v429 = vadd.f32 %v262, %v396
  %v430 = vadd.f32 %v265, %v399
  %v431 = vadd.f32 %v268, %v402
  %v432 = vadd.f32 %v271, %v405
  %v433 = vadd.f32 %v274, %v408
  %v434 = vadd.f32 %v277, %v411
  %v435 = vadd.f32 %v280, %v414
  %v436 = vadd.f32 %v283, %v417
  %v437 = vadd.f32 %v286, %v420
  %v438 = vld [vmem:[%s2] sm:$0x1]
  %v440 = vperm.slane %v438, 0
  %v442 = vadd.f32 %v422, %v440
  %v443 = vadd.f32 %v423, %v440
  %v444 = vadd.f32 %v424, %v440
  %v445 = vadd.f32 %v425, %v440
  %v446 = vadd.f32 %v426, %v440
  %v447 = vadd.f32 %v427, %v440
  %v448 = vadd.f32 %v428, %v440
  %v449 = vadd.f32 %v429, %v440
  %v450 = vadd.f32 %v430, %v440
  %v451 = vadd.f32 %v431, %v440
  %v452 = vadd.f32 %v432, %v440
  %v453 = vadd.f32 %v433, %v440
  %v454 = vadd.f32 %v434, %v440
  %v455 = vadd.f32 %v435, %v440
  %v456 = vadd.f32 %v436, %v440
  %v457 = vadd.f32 %v437, %v440
  %v458 = vmax.f32 %v442, 0.0
  %v459 = vmax.f32 %v443, 0.0
  %v460 = vmax.f32 %v444, 0.0
  %v461 = vmax.f32 %v445, 0.0
  %v462 = vmax.f32 %v446, 0.0
  %v463 = vmax.f32 %v447, 0.0
  %v464 = vmax.f32 %v448, 0.0
  %v465 = vmax.f32 %v449, 0.0
  %v466 = vmax.f32 %v450, 0.0
  %v467 = vmax.f32 %v451, 0.0
  %v468 = vmax.f32 %v452, 0.0
  %v469 = vmax.f32 %v453, 0.0
  %v470 = vmax.f32 %v454, 0.0
  %v471 = vmax.f32 %v455, 0.0
  %v472 = vmax.f32 %v456, 0.0
  %v473 = vmax.f32 %v457, 0.0
  %vm474 = vcmask 130048
  %v475 = vsel %vm474, %v458, -inf
  %v476 = vrot.slane %v475, 4
  %v477 = vmax.f32 %v475, %v476
  %v478 = vrot.slane %v477, 2
  %v479 = vmax.f32 %v477, %v478
  %v480 = vrot.slane %v479, 1
  %v481 = vmax.f32 %v479, %v480
  %v482 = vsel %vm474, %v459, -inf
  %v483 = vrot.slane %v482, 4
  %v484 = vmax.f32 %v482, %v483
  %v485 = vrot.slane %v484, 2
  %v486 = vmax.f32 %v484, %v485
  %v487 = vrot.slane %v486, 1
  %v488 = vmax.f32 %v486, %v487
  %v489 = vsel %vm474, %v460, -inf
  %v490 = vrot.slane %v489, 4
  %v491 = vmax.f32 %v489, %v490
  %v492 = vrot.slane %v491, 2
  %v493 = vmax.f32 %v491, %v492
  %v494 = vrot.slane %v493, 1
  %v495 = vmax.f32 %v493, %v494
  %v496 = vsel %vm474, %v461, -inf
  %v497 = vrot.slane %v496, 4
  %v498 = vmax.f32 %v496, %v497
  %v499 = vrot.slane %v498, 2
  %v500 = vmax.f32 %v498, %v499
  %v501 = vrot.slane %v500, 1
  %v502 = vmax.f32 %v500, %v501
  %v503 = vsel %vm474, %v462, -inf
  %v504 = vrot.slane %v503, 4
  %v505 = vmax.f32 %v503, %v504
  %v506 = vrot.slane %v505, 2
  %v507 = vmax.f32 %v505, %v506
  %v508 = vrot.slane %v507, 1
  %v509 = vmax.f32 %v507, %v508
  %v510 = vsel %vm474, %v463, -inf
  %v511 = vrot.slane %v510, 4
  %v512 = vmax.f32 %v510, %v511
  %v513 = vrot.slane %v512, 2
  %v514 = vmax.f32 %v512, %v513
  %v515 = vrot.slane %v514, 1
  %v516 = vmax.f32 %v514, %v515
  %v517 = vsel %vm474, %v464, -inf
  %v518 = vrot.slane %v517, 4
  %v519 = vmax.f32 %v517, %v518
  %v520 = vrot.slane %v519, 2
  %v521 = vmax.f32 %v519, %v520
  %v522 = vrot.slane %v521, 1
  %v523 = vmax.f32 %v521, %v522
  %v524 = vsel %vm474, %v465, -inf
  %v525 = vrot.slane %v524, 4
  %v526 = vmax.f32 %v524, %v525
  %v527 = vrot.slane %v526, 2
  %v528 = vmax.f32 %v526, %v527
  %v529 = vrot.slane %v528, 1
  %v530 = vmax.f32 %v528, %v529
  %v531 = vsel %vm474, %v466, -inf
  %v532 = vrot.slane %v531, 4
  %v533 = vmax.f32 %v531, %v532
  %v534 = vrot.slane %v533, 2
  %v535 = vmax.f32 %v533, %v534
  %v536 = vrot.slane %v535, 1
  %v537 = vmax.f32 %v535, %v536
  %v538 = vsel %vm474, %v467, -inf
  %v539 = vrot.slane %v538, 4
  %v540 = vmax.f32 %v538, %v539
  %v541 = vrot.slane %v540, 2
  %v542 = vmax.f32 %v540, %v541
  %v543 = vrot.slane %v542, 1
  %v544 = vmax.f32 %v542, %v543
  %v545 = vsel %vm474, %v468, -inf
  %v546 = vrot.slane %v545, 4
  %v547 = vmax.f32 %v545, %v546
  %v548 = vrot.slane %v547, 2
  %v549 = vmax.f32 %v547, %v548
  %v550 = vrot.slane %v549, 1
  %v551 = vmax.f32 %v549, %v550
  %v552 = vsel %vm474, %v469, -inf
  %v553 = vrot.slane %v552, 4
  %v554 = vmax.f32 %v552, %v553
  %v555 = vrot.slane %v554, 2
  %v556 = vmax.f32 %v554, %v555
  %v557 = vrot.slane %v556, 1
  %v558 = vmax.f32 %v556, %v557
  %v559 = vsel %vm474, %v470, -inf
  %v560 = vrot.slane %v559, 4
  %v561 = vmax.f32 %v559, %v560
  %v562 = vrot.slane %v561, 2
  %v563 = vmax.f32 %v561, %v562
  %v564 = vrot.slane %v563, 1
  %v565 = vmax.f32 %v563, %v564
  %v566 = vsel %vm474, %v471, -inf
  %v567 = vrot.slane %v566, 4
  %v568 = vmax.f32 %v566, %v567
  %v569 = vrot.slane %v568, 2
  %v570 = vmax.f32 %v568, %v569
  %v571 = vrot.slane %v570, 1
  %v572 = vmax.f32 %v570, %v571
  %v573 = vsel %vm474, %v472, -inf
  %v574 = vrot.slane %v573, 4
  %v575 = vmax.f32 %v573, %v574
  %v576 = vrot.slane %v575, 2
  %v577 = vmax.f32 %v575, %v576
  %v578 = vrot.slane %v577, 1
  %v579 = vmax.f32 %v577, %v578
  %v580 = vsel %vm474, %v473, -inf
  %v581 = vrot.slane %v580, 4
  %v582 = vmax.f32 %v580, %v581
  %v583 = vrot.slane %v582, 2
  %v584 = vmax.f32 %v582, %v583
  %v585 = vrot.slane %v584, 1
  %v586 = vmax.f32 %v584, %v585
  %v587 = vld [vmem:[%s3] sm:$0xff]
  %v588 = vld [vmem:[%s3 + $0x8] sm:$0xff]
  %v589 = vld [vmem:[%s4] sm:$0x1]
  %v591 = vperm.slane %v589, 0
  %vm609 = vcmask 1041409
  %v610 = vsel %vm609, %v488, %v481
  %vm611 = vcmask 1042434
  %v612 = vsel %vm611, %v495, %v610
  %vm613 = vcmask 1043459
  %v614 = vsel %vm613, %v502, %v612
  %vm615 = vcmask 1044484
  %v616 = vsel %vm615, %v509, %v614
  %vm617 = vcmask 1045509
  %v618 = vsel %vm617, %v516, %v616
  %vm619 = vcmask 1046534
  %v620 = vsel %vm619, %v523, %v618
  %vm621 = vcmask 1047559
  %v622 = vsel %vm621, %v530, %v620
  %v623 = vsel %vm609, %v544, %v537
  %v624 = vsel %vm611, %v551, %v623
  %v625 = vsel %vm613, %v558, %v624
  %v626 = vsel %vm615, %v565, %v625
  %v627 = vsel %vm617, %v572, %v626
  %v628 = vsel %vm619, %v579, %v627
  %v629 = vsel %vm621, %v586, %v628
  %v630 = vsel %vm474, %v622, 0
  %v632 = vsel %vm474, %v629, 0
  %634 = vmatpush.msra.mxu0 0.0
  %635 = vmatpush.msra.mxu0 0.0
  %636 = vmatpush.msra.mxu0 0.0
  %637 = vmatpush.msra.mxu0 0.0
  %638 = vmatpush.msra.mxu0 0.0
  %639 = vmatpush.msra.mxu0 0.0
  %640 = vmatpush.msra.mxu0 0.0
  %641 = vmatpush.msra.mxu0 0.0
  %642 = vmatpush.msra.mxu0 0.0
  %643 = vmatpush.msra.mxu0 0.0
  %644 = vmatpush.msra.mxu0 0.0
  %645 = vmatpush.msra.mxu0 0.0
  %646 = vmatpush.msra.mxu0 0.0
  %647 = vmatpush.msra.mxu0 0.0
  %648 = vmatpush.msra.mxu0 %v588
  %649 = vmatpush.msra.mxu0 %v587
  %650 = vmatmul.f32.gmra.mxu0 %v630
  %v651 = vpop.f32.mrf.mxu0
  %v652 = vadd.f32 %v591, %v651
  %653 = vmatmul.f32.gmra.mxu0 %v632
  %v654 = vpop.f32.mrf.mxu0
  %v655 = vadd.f32 %v591, %v654
  %656 = vdwg.mxu0
  %v657 = vxor.u32 %v652, 2147483648
  %v658 = vxor.u32 %v655, 2147483648
  %v659 = vmul.f32 %v657, 1.442695
  %v660 = vpow.pop %v659
  %v661 = vmul.f32 %v658, 1.442695
  %v662 = vpow.pop %v661
  %v663 = vadd.f32 %v660, 1.0
  %v664 = vadd.f32 %v662, 1.0
  %v665 = vrcp.pop %v663
  %v666 = vmul.f32 %v663, %v665
  %v667 = vsub.f32 1.0, %v666
  %v668 = vmul.f32 %v665, %v667
  %v669 = vadd.f32 %v665, %v668
  %vm670 = vweird.f32 %v663
  %vm671 = vweird.f32 %v665
  %vm672 = vmor %vm670, %vm671
  %v673 = vsel %vm672, %v665, %v669
  %v674 = vand.u32 2147483647, %v663
  %vm675 = vcmp.eq.f32.partialorder %v674, 8.507059e+37
  %v676 = vand.u32 %v663, 2147483648
  %v677 = vor.u32 1.1754944e-38, %v676
  %v678 = vsel %vm675, %v677, %v673
  %v679 = vmul.f32 1.0, %v678
  %v680 = vrcp.pop %v664
  %v681 = vmul.f32 %v664, %v680
  %v682 = vsub.f32 1.0, %v681
  %v683 = vmul.f32 %v680, %v682
  %v684 = vadd.f32 %v680, %v683
  %vm685 = vweird.f32 %v664
  %vm686 = vweird.f32 %v680
  %vm687 = vmor %vm685, %vm686
  %v688 = vsel %vm687, %v680, %v684
  %v689 = vand.u32 2147483647, %v664
  %vm690 = vcmp.eq.f32.partialorder %v689, 8.507059e+37
  %v691 = vand.u32 %v664, 2147483648
  %v692 = vor.u32 1.1754944e-38, %v691
  %v693 = vsel %vm690, %v692, %v688
  %v694 = vmul.f32 1.0, %v693
  %vm695 = vcmp.lt.f32.partialorder %v679, 0.35
  %vm696 = vcmp.lt.f32.partialorder %v694, 0.35
  %v697 = vsel %vm695, 0.0, %v679
  %v698 = vsel %vm696, 0.0, %v694
  %vm699 = vcmask 64512
  %700 = vst.msk [vmem:[%s5] sm:$0xff] %vm699, %v697
  %701 = vst.msk [vmem:[%s5 + $0x8] sm:$0xff] %vm699, %v698
  // Predicated region
  $region22: #{controlnet_forward.4} parent=0 // pred_check
    _
  $region23: #{controlnet_forward.4} parent=0 // pred_check_branch
    %703 = sbr.rel (0) target = $region25
  $region24: #{controlnet_forward.4} parent=0 // pred_region
    _
  $region25: #{controlnet_forward.4} parent=0 // pred_fallthru
    _
  // Predicated region
  $region26: #{controlnet_forward.4} parent=0 // pred_check
    _
  $region27: #{controlnet_forward.4} parent=0 // pred_check_branch
    %705 = sbr.rel (0) target = $region29
  $region28: #{controlnet_forward.4} parent=0 // pred_region
    _
  $region29: #{controlnet_forward.4} parent=0 // pred_fallthru
    _

// kernel: controlnet_forward.3
$region0: #{controlnet_forward.3}
  #allocation0 [shape = 'u32[]', space=smem, size = 0x4, offset = 0x4, fixed_abs, tag = 'smem constant byte address 0x4 - core index']
  #allocation1 [shape = 'u32[72,128]{1,0:T(1,128)}', space=vmem, size = 0x9000, scoped, tag = 'internal scratch']
  %s0 = inlined_call_operand.vmem [shape: f32[16,8,96], index: 0, kind: input, shape index: {}]
  %s1 = inlined_call_operand.vmem [shape: f32[16,8], index: 1, kind: input, shape index: {}]
  %s2 = inlined_call_operand.vmem [shape: f32[32,96], index: 2, kind: input, shape index: {}]
  %s3 = inlined_call_operand.vmem [shape: f32[1,96], index: 3, kind: input, shape index: {}]
  %s4 = inlined_call_operand.vmem [shape: f32[16,8,32], index: 4, kind: output, shape index: {}]
  %s5 = sld [smem:[#allocation0]]
  $region26: #{controlnet_forward.3} parent=0
    _
  %s7 = ssub.s32 1, %s5
  %s8 = scalar_select 0, %s7, %s5
  // Predicated region
  $region2: #{controlnet_forward.3} parent=0 // pred_check
    _
  $region3: #{controlnet_forward.3} parent=0 // pred_check_branch
    %10 = sbr.rel (0) target = $region5
  $region4: #{controlnet_forward.3} parent=0 // pred_region
    _
  $region5: #{controlnet_forward.3} parent=0 // pred_fallthru
    _
  // Predicated region
  $region6: #{controlnet_forward.3} parent=0 // pred_check
    _
  $region7: #{controlnet_forward.3} parent=0 // pred_check_branch
    %12 = sbr.rel (0) target = $region9
  $region8: #{controlnet_forward.3} parent=0 // pred_region
    _
  $region9: #{controlnet_forward.3} parent=0 // pred_fallthru
    _
  // Predicated region
  $region10: #{controlnet_forward.3} parent=0 // pred_check
    _
  $region11: #{controlnet_forward.3} parent=0 // pred_check_branch
    %14 = sbr.rel (0) target = $region13
  $region12: #{controlnet_forward.3} parent=0 // pred_region
    _
  $region13: #{controlnet_forward.3} parent=0 // pred_fallthru
    _
  // Predicated region
  $region14: #{controlnet_forward.3} parent=0 // pred_check
    _
  $region15: #{controlnet_forward.3} parent=0 // pred_check_branch
    %16 = sbr.rel (0) target = $region17
  $region16: #{controlnet_forward.3} parent=0 // pred_region
    _
  $region17: #{controlnet_forward.3} parent=0 // pred_fallthru
    _
  %v17 = vld [vmem:[%s2] sm:$0xff]
  %v18 = vld [vmem:[%s2 + $0x8] sm:$0xff]
  %v19 = vld [vmem:[%s2 + $0x10] sm:$0xff]
  %v20 = vld [vmem:[%s2 + $0x18] sm:$0xff]
  %v21 = vld [vmem:[%s3] sm:$0x1]
  %v23 = vperm.slane %v21, 0
  %v25 = vlaneseq
  %v26 = vand.u32 %v25, 127
  %v27 = vld [vmem:[%s0] sm:$0x1]
  %v28 = vld [vmem:[%s0 + $0x8] sm:$0x1]
  %v29 = vld [vmem:[%s0 + $0x10] sm:$0x1]
  %v30 = vld [vmem:[%s0 + $0x18] sm:$0x1]
  %v31 = vld [vmem:[%s0 + $0x20] sm:$0x1]
  %v32 = vld [vmem:[%s0 + $0x28] sm:$0x1]
  %v33 = vld [vmem:[%s0 + $0x30] sm:$0x1]
  %v34 = vld [vmem:[%s0 + $0x38] sm:$0x1]
  %v35 = vld [vmem:[%s0 + $0x40] sm:$0x1]
  %v36 = vld [vmem:[%s0 + $0x48] sm:$0x1]
  %v37 = vld [vmem:[%s0 + $0x50] sm:$0x1]
  %v38 = vld [vmem:[%s0 + $0x58] sm:$0x1]
  %v39 = vld [vmem:[%s0 + $0x60] sm:$0x1]
  %v40 = vld [vmem:[%s0 + $0x68] sm:$0x1]
  %v41 = vld [vmem:[%s0 + $0x70] sm:$0x1]
  %v42 = vld [vmem:[%s0 + $0x78] sm:$0x1]
  %vm43 = vcmask 261120
  %v45 = vsel %vm43, 0.0, 0
  %47 = vmatpush.msra.mxu0 0.0
  %48 = vmatpush.msra.mxu0 0.0
  %49 = vmatpush.msra.mxu0 0.0
  %50 = vmatpush.msra.mxu0 0.0
  %51 = vmatpush.msra.mxu0 0.0
  %52 = vmatpush.msra.mxu0 0.0
  %53 = vmatpush.msra.mxu0 0.0
  %54 = vmatpush.msra.mxu0 0.0
  %55 = vmatpush.msra.mxu0 0.0
  %56 = vmatpush.msra.mxu0 0.0
  %57 = vmatpush.msra.mxu0 0.0
  %58 = vmatpush.msra.mxu0 0.0
  %59 = vmatpush.msra.mxu0 %v20
  %60 = vmatpush.msra.mxu0 %v19
  %61 = vmatpush.msra.mxu0 %v18
  %62 = vmatpush.msra.mxu0 %v17
  %63 = vmatmul.f32.gmra.mxu0 %v45
  %v64 = vpop.f32.mrf.mxu0
  %v65 = vadd.f32 %v23, %v64
  %66 = vmatmul.f32.gmra.mxu0 %v45
  %v67 = vpop.f32.mrf.mxu0
  %v68 = vadd.f32 %v23, %v67
  %69 = vdwg.mxu0
  %v72 = vrot.slane %v65, 1
  %v73 = vrot.slane %v65, 2
  %v74 = vrot.slane %v65, 3
  %v75 = vrot.slane %v65, 4
  %v76 = vrot.slane %v65, 5
  %v77 = vrot.slane %v65, 6
  %v78 = vrot.slane %v65, 7
  %v79 = vrot.slane %v68, 1
  %v80 = vrot.slane %v68, 2
  %v81 = vrot.slane %v68, 3
  %v82 = vrot.slane %v68, 4
  %v83 = vrot.slane %v68, 5
  %v84 = vrot.slane %v68, 6
  %v85 = vrot.slane %v68, 7
  %v102 = vadd.f32 %v27, %v65
  %v103 = vadd.f32 %v28, %v72
  %v104 = vadd.f32 %v29, %v73
  %v105 = vadd.f32 %v30, %v74
  %v106 = vadd.f32 %v31, %v75
  %v107 = vadd.f32 %v32, %v76
  %v108 = vadd.f32 %v33, %v77
  %v109 = vadd.f32 %v34, %v78
  %v110 = vadd.f32 %v35, %v68
  %v111 = vadd.f32 %v36, %v79
  %v112 = vadd.f32 %v37, %v80
  %v113 = vadd.f32 %v38, %v81
  %v114 = vadd.f32 %v39, %v82
  %v115 = vadd.f32 %v40, %v83
  %v116 = vadd.f32 %v41, %v84
  %v117 = vadd.f32 %v42, %v85
  %v118 = vxor.u32 %v102, 2147483648
  %v119 = vxor.u32 %v103, 2147483648
  %v120 = vxor.u32 %v104, 2147483648
  %v121 = vxor.u32 %v105, 2147483648
  %v122 = vxor.u32 %v106, 2147483648
  %v123 = vxor.u32 %v107, 2147483648
  %v124 = vxor.u32 %v108, 2147483648
  %v125 = vxor.u32 %v109, 2147483648
  %v126 = vxor.u32 %v110, 2147483648
  %v127 = vxor.u32 %v111, 2147483648
  %v128 = vxor.u32 %v112, 2147483648
  %v129 = vxor.u32 %v113, 2147483648
  %v130 = vxor.u32 %v114, 2147483648
  %v131 = vxor.u32 %v115, 2147483648
  %v132 = vxor.u32 %v116, 2147483648
  %v133 = vxor.u32 %v117, 2147483648
  %v134 = vmul.f32 %v118, 1.442695
  %v135 = vpow.pop %v134
  %v136 = vmul.f32 %v119, 1.442695
  %v137 = vpow.pop %v136
  %v138 = vmul.f32 %v120, 1.442695
  %v139 = vpow.pop %v138
  %v140 = vmul.f32 %v121, 1.442695
  %v141 = vpow.pop %v140
  %v142 = vmul.f32 %v122, 1.442695
  %v143 = vpow.pop %v142
  %v144 = vmul.f32 %v123, 1.442695
  %v145 = vpow.pop %v144
  %v146 = vmul.f32 %v124, 1.442695
  %v147 = vpow.pop %v146
  %v148 = vmul.f32 %v125, 1.442695
  %v149 = vpow.pop %v148
  %v150 = vmul.f32 %v126, 1.442695
  %v151 = vpow.pop %v150
  %v152 = vmul.f32 %v127, 1.442695
  %v153 = vpow.pop %v152
  %v154 = vmul.f32 %v128, 1.442695
  %v155 = vpow.pop %v154
  %v156 = vmul.f32 %v129, 1.442695
  %v157 = vpow.pop %v156
  %v158 = vmul.f32 %v130, 1.442695
  %v159 = vpow.pop %v158
  %v160 = vmul.f32 %v131, 1.442695
  %v161 = vpow.pop %v160
  %v162 = vmul.f32 %v132, 1.442695
  %v163 = vpow.pop %v162
  %v164 = vmul.f32 %v133, 1.442695
  %v165 = vpow.pop %v164
  %v166 = vadd.f32 %v135, 1.0
  %v167 = vadd.f32 %v137, 1.0
  %v168 = vadd.f32 %v139, 1.0
  %v169 = vadd.f32 %v141, 1.0
  %v170 = vadd.f32 %v143, 1.0
  %v171 = vadd.f32 %v145, 1.0
  %v172 = vadd.f32 %v147, 1.0
  %v173 = vadd.f32 %v149, 1.0
  %v174 = vadd.f32 %v151, 1.0
  %v175 = vadd.f32 %v153, 1.0
  %v176 = vadd.f32 %v155, 1.0
  %v177 = vadd.f32 %v157, 1.0
  %v178 = vadd.f32 %v159, 1.0
  %v179 = vadd.f32 %v161, 1.0
  %v180 = vadd.f32 %v163, 1.0
  %v181 = vadd.f32 %v165, 1.0
  %v182 = vrcp.pop %v166
  %v183 = vmul.f32 %v166, %v182
  %v184 = vsub.f32 1.0, %v183
  %v185 = vmul.f32 %v182, %v184
  %v186 = vadd.f32 %v182, %v185
  %vm187 = vweird.f32 %v166
  %vm188 = vweird.f32 %v182
  %vm189 = vmor %vm187, %vm188
  %v190 = vsel %vm189, %v182, %v186
  %v191 = vand.u32 2147483647, %v166
  %vm192 = vcmp.eq.f32.partialorder %v191, 8.507059e+37
  %v193 = vand.u32 %v166, 2147483648
  %v194 = vor.u32 1.1754944e-38, %v193
  %v195 = vsel %vm192, %v194, %v190
  %v196 = vmul.f32 1.0, %v195
  %v197 = vrcp.pop %v167
  %v198 = vmul.f32 %v167, %v197
  %v199 = vsub.f32 1.0, %v198
  %v200 = vmul.f32 %v197, %v199
  %v201 = vadd.f32 %v197, %v200
  %vm202 = vweird.f32 %v167
  %vm203 = vweird.f32 %v197
  %vm204 = vmor %vm202, %vm203
  %v205 = vsel %vm204, %v197, %v201
  %v206 = vand.u32 2147483647, %v167
  %vm207 = vcmp.eq.f32.partialorder %v206, 8.507059e+37
  %v208 = vand.u32 %v167, 2147483648
  %v209 = vor.u32 1.1754944e-38, %v208
  %v210 = vsel %vm207, %v209, %v205
  %v211 = vmul.f32 1.0, %v210
  %v212 = vrcp.pop %v168
  %v213 = vmul.f32 %v168, %v212
  %v214 = vsub.f32 1.0, %v213
  %v215 = vmul.f32 %v212, %v214
  %v216 = vadd.f32 %v212, %v215
  %vm217 = vweird.f32 %v168
  %vm218 = vweird.f32 %v212
  %vm219 = vmor %vm217, %vm218
  %v220 = vsel %vm219, %v212, %v216
  %v221 = vand.u32 2147483647, %v168
  %vm222 = vcmp.eq.f32.partialorder %v221, 8.507059e+37
  %v223 = vand.u32 %v168, 2147483648
  %v224 = vor.u32 1.1754944e-38, %v223
  %v225 = vsel %vm222, %v224, %v220
  %v226 = vmul.f32 1.0, %v225
  %v227 = vrcp.pop %v169
  %v228 = vmul.f32 %v169, %v227
  %v229 = vsub.f32 1.0, %v228
  %v230 = vmul.f32 %v227, %v229
  %v231 = vadd.f32 %v227, %v230
  %vm232 = vweird.f32 %v169
  %vm233 = vweird.f32 %v227
  %vm234 = vmor %vm232, %vm233
  %v235 = vsel %vm234, %v227, %v231
  %v236 = vand.u32 2147483647, %v169
  %vm237 = vcmp.eq.f32.partialorder %v236, 8.507059e+37
  %v238 = vand.u32 %v169, 2147483648
  %v239 = vor.u32 1.1754944e-38, %v238
  %v240 = vsel %vm237, %v239, %v235
  %v241 = vmul.f32 1.0, %v240
  %v242 = vrcp.pop %v170
  %v243 = vmul.f32 %v170, %v242
  %v244 = vsub.f32 1.0, %v243
  %v245 = vmul.f32 %v242, %v244
  %v246 = vadd.f32 %v242, %v245
  %vm247 = vweird.f32 %v170
  %vm248 = vweird.f32 %v242
  %vm249 = vmor %vm247, %vm248
  %v250 = vsel %vm249, %v242, %v246
  %v251 = vand.u32 2147483647, %v170
  %vm252 = vcmp.eq.f32.partialorder %v251, 8.507059e+37
  %v253 = vand.u32 %v170, 2147483648
  %v254 = vor.u32 1.1754944e-38, %v253
  %v255 = vsel %vm252, %v254, %v250
  %v256 = vmul.f32 1.0, %v255
  %v257 = vrcp.pop %v171
  %v258 = vmul.f32 %v171, %v257
  %v259 = vsub.f32 1.0, %v258
  %v260 = vmul.f32 %v257, %v259
  %v261 = vadd.f32 %v257, %v260
  %vm262 = vweird.f32 %v171
  %vm263 = vweird.f32 %v257
  %vm264 = vmor %vm262, %vm263
  %v265 = vsel %vm264, %v257, %v261
  %v266 = vand.u32 2147483647, %v171
  %vm267 = vcmp.eq.f32.partialorder %v266, 8.507059e+37
  %v268 = vand.u32 %v171, 2147483648
  %v269 = vor.u32 1.1754944e-38, %v268
  %v270 = vsel %vm267, %v269, %v265
  %v271 = vmul.f32 1.0, %v270
  %v272 = vrcp.pop %v172
  %v273 = vmul.f32 %v172, %v272
  %v274 = vsub.f32 1.0, %v273
  %v275 = vmul.f32 %v272, %v274
  %v276 = vadd.f32 %v272, %v275
  %vm277 = vweird.f32 %v172
  %vm278 = vweird.f32 %v272
  %vm279 = vmor %vm277, %vm278
  %v280 = vsel %vm279, %v272, %v276
  %v281 = vand.u32 2147483647, %v172
  %vm282 = vcmp.eq.f32.partialorder %v281, 8.507059e+37
  %v283 = vand.u32 %v172, 2147483648
  %v284 = vor.u32 1.1754944e-38, %v283
  %v285 = vsel %vm282, %v284, %v280
  %v286 = vmul.f32 1.0, %v285
  %v287 = vrcp.pop %v173
  %v288 = vmul.f32 %v173, %v287
  %v289 = vsub.f32 1.0, %v288
  %v290 = vmul.f32 %v287, %v289
  %v291 = vadd.f32 %v287, %v290
  %vm292 = vweird.f32 %v173
  %vm293 = vweird.f32 %v287
  %vm294 = vmor %vm292, %vm293
  %v295 = vsel %vm294, %v287, %v291
  %v296 = vand.u32 2147483647, %v173
  %vm297 = vcmp.eq.f32.partialorder %v296, 8.507059e+37
  %v298 = vand.u32 %v173, 2147483648
  %v299 = vor.u32 1.1754944e-38, %v298
  %v300 = vsel %vm297, %v299, %v295
  %v301 = vmul.f32 1.0, %v300
  %v302 = vrcp.pop %v174
  %v303 = vmul.f32 %v174, %v302
  %v304 = vsub.f32 1.0, %v303
  %v305 = vmul.f32 %v302, %v304
  %v306 = vadd.f32 %v302, %v305
  %vm307 = vweird.f32 %v174
  %vm308 = vweird.f32 %v302
  %vm309 = vmor %vm307, %vm308
  %v310 = vsel %vm309, %v302, %v306
  %v311 = vand.u32 2147483647, %v174
  %vm312 = vcmp.eq.f32.partialorder %v311, 8.507059e+37
  %v313 = vand.u32 %v174, 2147483648
  %v314 = vor.u32 1.1754944e-38, %v313
  %v315 = vsel %vm312, %v314, %v310
  %v316 = vmul.f32 1.0, %v315
  %v317 = vrcp.pop %v175
  %v318 = vmul.f32 %v175, %v317
  %v319 = vsub.f32 1.0, %v318
  %v320 = vmul.f32 %v317, %v319
  %v321 = vadd.f32 %v317, %v320
  %vm322 = vweird.f32 %v175
  %vm323 = vweird.f32 %v317
  %vm324 = vmor %vm322, %vm323
  %v325 = vsel %vm324, %v317, %v321
  %v326 = vand.u32 2147483647, %v175
  %vm327 = vcmp.eq.f32.partialorder %v326, 8.507059e+37
  %v328 = vand.u32 %v175, 2147483648
  %v329 = vor.u32 1.1754944e-38, %v328
  %v330 = vsel %vm327, %v329, %v325
  %v331 = vmul.f32 1.0, %v330
  %v332 = vrcp.pop %v176
  %v333 = vmul.f32 %v176, %v332
  %v334 = vsub.f32 1.0, %v333
  %v335 = vmul.f32 %v332, %v334
  %v336 = vadd.f32 %v332, %v335
  %vm337 = vweird.f32 %v176
  %vm338 = vweird.f32 %v332
  %vm339 = vmor %vm337, %vm338
  %v340 = vsel %vm339, %v332, %v336
  %v341 = vand.u32 2147483647, %v176
  %vm342 = vcmp.eq.f32.partialorder %v341, 8.507059e+37
  %v343 = vand.u32 %v176, 2147483648
  %v344 = vor.u32 1.1754944e-38, %v343
  %v345 = vsel %vm342, %v344, %v340
  %v346 = vmul.f32 1.0, %v345
  %v347 = vrcp.pop %v177
  %v348 = vmul.f32 %v177, %v347
  %v349 = vsub.f32 1.0, %v348
  %v350 = vmul.f32 %v347, %v349
  %v351 = vadd.f32 %v347, %v350
  %vm352 = vweird.f32 %v177
  %vm353 = vweird.f32 %v347
  %vm354 = vmor %vm352, %vm353
  %v355 = vsel %vm354, %v347, %v351
  %v356 = vand.u32 2147483647, %v177
  %vm357 = vcmp.eq.f32.partialorder %v356, 8.507059e+37
  %v358 = vand.u32 %v177, 2147483648
  %v359 = vor.u32 1.1754944e-38, %v358
  %v360 = vsel %vm357, %v359, %v355
  %v361 = vmul.f32 1.0, %v360
  %v362 = vrcp.pop %v178
  %v363 = vmul.f32 %v178, %v362
  %v364 = vsub.f32 1.0, %v363
  %v365 = vmul.f32 %v362, %v364
  %v366 = vadd.f32 %v362, %v365
  %vm367 = vweird.f32 %v178
  %vm368 = vweird.f32 %v362
  %vm369 = vmor %vm367, %vm368
  %v370 = vsel %vm369, %v362, %v366
  %v371 = vand.u32 2147483647, %v178
  %vm372 = vcmp.eq.f32.partialorder %v371, 8.507059e+37
  %v373 = vand.u32 %v178, 2147483648
  %v374 = vor.u32 1.1754944e-38, %v373
  %v375 = vsel %vm372, %v374, %v370
  %v376 = vmul.f32 1.0, %v375
  %v377 = vrcp.pop %v179
  %v378 = vmul.f32 %v179, %v377
  %v379 = vsub.f32 1.0, %v378
  %v380 = vmul.f32 %v377, %v379
  %v381 = vadd.f32 %v377, %v380
  %vm382 = vweird.f32 %v179
  %vm383 = vweird.f32 %v377
  %vm384 = vmor %vm382, %vm383
  %v385 = vsel %vm384, %v377, %v381
  %v386 = vand.u32 2147483647, %v179
  %vm387 = vcmp.eq.f32.partialorder %v386, 8.507059e+37
  %v388 = vand.u32 %v179, 2147483648
  %v389 = vor.u32 1.1754944e-38, %v388
  %v390 = vsel %vm387, %v389, %v385
  %v391 = vmul.f32 1.0, %v390
  %v392 = vrcp.pop %v180
  %v393 = vmul.f32 %v180, %v392
  %v394 = vsub.f32 1.0, %v393
  %v395 = vmul.f32 %v392, %v394
  %v396 = vadd.f32 %v392, %v395
  %vm397 = vweird.f32 %v180
  %vm398 = vweird.f32 %v392
  %vm399 = vmor %vm397, %vm398
  %v400 = vsel %vm399, %v392, %v396
  %v401 = vand.u32 2147483647, %v180
  %vm402 = vcmp.eq.f32.partialorder %v401, 8.507059e+37
  %v403 = vand.u32 %v180, 2147483648
  %v404 = vor.u32 1.1754944e-38, %v403
  %v405 = vsel %vm402, %v404, %v400
  %v406 = vmul.f32 1.0, %v405
  %v407 = vrcp.pop %v181
  %v408 = vmul.f32 %v181, %v407
  %v409 = vsub.f32 1.0, %v408
  %v410 = vmul.f32 %v407, %v409
  %v411 = vadd.f32 %v407, %v410
  %vm412 = vweird.f32 %v181
  %vm413 = vweird.f32 %v407
  %vm414 = vmor %vm412, %vm413
  %v415 = vsel %vm414, %v407, %v411
  %v416 = vand.u32 2147483647, %v181
  %vm417 = vcmp.eq.f32.partialorder %v416, 8.507059e+37
  %v418 = vand.u32 %v181, 2147483648
  %v419 = vor.u32 1.1754944e-38, %v418
  %v420 = vsel %vm417, %v419, %v415
  %v421 = vmul.f32 1.0, %v420
  %422 = vrot.lane.b32.xlu0 %v65, 64
  %v423 = vpop.permute.xlu0 %422
  %424 = vrot.lane.b32.xlu0 %v72, 64
  %v425 = vpop.permute.xlu0 %424
  %426 = vrot.lane.b32.xlu0 %v73, 64
  %v427 = vpop.permute.xlu0 %426
  %428 = vrot.lane.b32.xlu0 %v74, 64
  %v429 = vpop.permute.xlu0 %428
  %430 = vrot.lane.b32.xlu0 %v75, 64
  %v431 = vpop.permute.xlu0 %430
  %432 = vrot.lane.b32.xlu0 %v76, 64
  %v433 = vpop.permute.xlu0 %432
  %434 = vrot.lane.b32.xlu0 %v77, 64
  %v435 = vpop.permute.xlu0 %434
  %436 = vrot.lane.b32.xlu0 %v78, 64
  %v437 = vpop.permute.xlu0 %436
  %438 = vrot.lane.b32.xlu0 %v68, 64
  %v439 = vpop.permute.xlu0 %438
  %440 = vrot.lane.b32.xlu0 %v79, 64
  %v441 = vpop.permute.xlu0 %440
  %442 = vrot.lane.b32.xlu0 %v80, 64
  %v443 = vpop.permute.xlu0 %442
  %444 = vrot.lane.b32.xlu0 %v81, 64
  %v445 = vpop.permute.xlu0 %444
  %446 = vrot.lane.b32.xlu0 %v82, 64
  %v447 = vpop.permute.xlu0 %446
  %448 = vrot.lane.b32.xlu0 %v83, 64
  %v449 = vpop.permute.xlu0 %448
  %450 = vrot.lane.b32.xlu0 %v84, 64
  %v451 = vpop.permute.xlu0 %450
  %452 = vrot.lane.b32.xlu0 %v85, 64
  %v453 = vpop.permute.xlu0 %452
  %v470 = vmul.f32 %v196, %v423
  %v471 = vmul.f32 %v211, %v425
  %v472 = vmul.f32 %v226, %v427
  %v473 = vmul.f32 %v241, %v429
  %v474 = vmul.f32 %v256, %v431
  %v475 = vmul.f32 %v271, %v433
  %v476 = vmul.f32 %v286, %v435
  %v477 = vmul.f32 %v301, %v437
  %v478 = vmul.f32 %v316, %v439
  %v479 = vmul.f32 %v331, %v441
  %v480 = vmul.f32 %v346, %v443
  %v481 = vmul.f32 %v361, %v445
  %v482 = vmul.f32 %v376, %v447
  %v483 = vmul.f32 %v391, %v449
  %v484 = vmul.f32 %v406, %v451
  %v485 = vmul.f32 %v421, %v453
  %502 = vrot.lane.b32.xlu0 %v470, 64
  %v503 = vpop.permute.xlu0 %502
  %504 = vrot.lane.b32.xlu0 %v471, 64
  %v505 = vpop.permute.xlu0 %504
  %506 = vrot.lane.b32.xlu0 %v472, 64
  %v507 = vpop.permute.xlu0 %506
  %508 = vrot.lane.b32.xlu0 %v473, 64
  %v509 = vpop.permute.xlu0 %508
  %510 = vrot.lane.b32.xlu0 %v474, 64
  %v511 = vpop.permute.xlu0 %510
  %512 = vrot.lane.b32.xlu0 %v475, 64
  %v513 = vpop.permute.xlu0 %512
  %514 = vrot.lane.b32.xlu0 %v476, 64
  %v515 = vpop.permute.xlu0 %514
  %516 = vrot.lane.b32.xlu0 %v477, 64
  %v517 = vpop.permute.xlu0 %516
  %518 = vrot.lane.b32.xlu0 %v478, 64
  %v519 = vpop.permute.xlu0 %518
  %520 = vrot.lane.b32.xlu0 %v479, 64
  %v521 = vpop.permute.xlu0 %520
  %522 = vrot.lane.b32.xlu0 %v480, 64
  %v523 = vpop.permute.xlu0 %522
  %524 = vrot.lane.b32.xlu0 %v481, 64
  %v525 = vpop.permute.xlu0 %524
  %526 = vrot.lane.b32.xlu0 %v482, 64
  %v527 = vpop.permute.xlu0 %526
  %528 = vrot.lane.b32.xlu0 %v483, 64
  %v529 = vpop.permute.xlu0 %528
  %530 = vrot.lane.b32.xlu0 %v484, 64
  %v531 = vpop.permute.xlu0 %530
  %532 = vrot.lane.b32.xlu0 %v485, 64
  %v533 = vpop.permute.xlu0 %532
  %v550 = vadd.f32 %v27, %v503
  %v551 = vadd.f32 %v28, %v505
  %v552 = vadd.f32 %v29, %v507
  %v553 = vadd.f32 %v30, %v509
  %v554 = vadd.f32 %v31, %v511
  %v555 = vadd.f32 %v32, %v513
  %v556 = vadd.f32 %v33, %v515
  %v557 = vadd.f32 %v34, %v517
  %v558 = vadd.f32 %v35, %v519
  %v559 = vadd.f32 %v36, %v521
  %v560 = vadd.f32 %v37, %v523
  %v561 = vadd.f32 %v38, %v525
  %v562 = vadd.f32 %v39, %v527
  %v563 = vadd.f32 %v40, %v529
  %v564 = vadd.f32 %v41, %v531
  %v565 = vadd.f32 %v42, %v533
  %v566 = vtanh.pop %v550
  %v567 = vtanh.pop %v551
  %v568 = vtanh.pop %v552
  %v569 = vtanh.pop %v553
  %v570 = vtanh.pop %v554
  %v571 = vtanh.pop %v555
  %v572 = vtanh.pop %v556
  %v573 = vtanh.pop %v557
  %v574 = vtanh.pop %v558
  %v575 = vtanh.pop %v559
  %v576 = vtanh.pop %v560
  %v577 = vtanh.pop %v561
  %v578 = vtanh.pop %v562
  %v579 = vtanh.pop %v563
  %v580 = vtanh.pop %v564
  %v581 = vtanh.pop %v565
  %v582 = vsub.f32 1.0, %v196
  %v583 = vsub.f32 1.0, %v211
  %v584 = vsub.f32 1.0, %v226
  %v585 = vsub.f32 1.0, %v241
  %v586 = vsub.f32 1.0, %v256
  %v587 = vsub.f32 1.0, %v271
  %v588 = vsub.f32 1.0, %v286
  %v589 = vsub.f32 1.0, %v301
  %v590 = vsub.f32 1.0, %v316
  %v591 = vsub.f32 1.0, %v331
  %v592 = vsub.f32 1.0, %v346
  %v593 = vsub.f32 1.0, %v361
  %v594 = vsub.f32 1.0, %v376
  %v595 = vsub.f32 1.0, %v391
  %v596 = vsub.f32 1.0, %v406
  %v597 = vsub.f32 1.0, %v421
  %614 = vrot.lane.b32.xlu0 %v566, 96
  %v615 = vpop.permute.xlu0 %614
  %616 = vrot.lane.b32.xlu0 %v567, 96
  %v617 = vpop.permute.xlu0 %616
  %618 = vrot.lane.b32.xlu0 %v568, 96
  %v619 = vpop.permute.xlu0 %618
  %620 = vrot.lane.b32.xlu0 %v569, 96
  %v621 = vpop.permute.xlu0 %620
  %622 = vrot.lane.b32.xlu0 %v570, 96
  %v623 = vpop.permute.xlu0 %622
  %624 = vrot.lane.b32.xlu0 %v571, 96
  %v625 = vpop.permute.xlu0 %624
  %626 = vrot.lane.b32.xlu0 %v572, 96
  %v627 = vpop.permute.xlu0 %626
  %628 = vrot.lane.b32.xlu0 %v573, 96
  %v629 = vpop.permute.xlu0 %628
  %630 = vrot.lane.b32.xlu0 %v574, 96
  %v631 = vpop.permute.xlu0 %630
  %632 = vrot.lane.b32.xlu0 %v575, 96
  %v633 = vpop.permute.xlu0 %632
  %634 = vrot.lane.b32.xlu0 %v576, 96
  %v635 = vpop.permute.xlu0 %634
  %636 = vrot.lane.b32.xlu0 %v577, 96
  %v637 = vpop.permute.xlu0 %636
  %638 = vrot.lane.b32.xlu0 %v578, 96
  %v639 = vpop.permute.xlu0 %638
  %640 = vrot.lane.b32.xlu0 %v579, 96
  %v641 = vpop.permute.xlu0 %640
  %642 = vrot.lane.b32.xlu0 %v580, 96
  %v643 = vpop.permute.xlu0 %642
  %644 = vrot.lane.b32.xlu0 %v581, 96
  %v645 = vpop.permute.xlu0 %644
  %v662 = vmul.f32 %v582, %v615
  %v663 = vmul.f32 %v583, %v617
  %v664 = vmul.f32 %v584, %v619
  %v665 = vmul.f32 %v585, %v621
  %v666 = vmul.f32 %v586, %v623
  %v667 = vmul.f32 %v587, %v625
  %v668 = vmul.f32 %v588, %v627
  %v669 = vmul.f32 %v589, %v629
  %v670 = vmul.f32 %v590, %v631
  %v671 = vmul.f32 %v591, %v633
  %v672 = vmul.f32 %v592, %v635
  %v673 = vmul.f32 %v593, %v637
  %v674 = vmul.f32 %v594, %v639
  %v675 = vmul.f32 %v595, %v641
  %v676 = vmul.f32 %v596, %v643
  %v677 = vmul.f32 %v597, %v645
  %v678 = vmul.f32 %v196, 0.0
  %v679 = vmul.f32 %v211, 0.0
  %v680 = vmul.f32 %v226, 0.0
  %v681 = vmul.f32 %v241, 0.0
  %v682 = vmul.f32 %v256, 0.0
  %v683 = vmul.f32 %v271, 0.0
  %v684 = vmul.f32 %v286, 0.0
  %v685 = vmul.f32 %v301, 0.0
  %v686 = vmul.f32 %v316, 0.0
  %v687 = vmul.f32 %v331, 0.0
  %v688 = vmul.f32 %v346, 0.0
  %v689 = vmul.f32 %v361, 0.0
  %v690 = vmul.f32 %v376, 0.0
  %v691 = vmul.f32 %v391, 0.0
  %v692 = vmul.f32 %v406, 0.0
  %v693 = vmul.f32 %v421, 0.0
  %v694 = vadd.f32 %v662, %v678
  %v695 = vadd.f32 %v663, %v679
  %v696 = vadd.f32 %v664, %v680
  %v697 = vadd.f32 %v665, %v681
  %v698 = vadd.f32 %v666, %v682
  %v699 = vadd.f32 %v667, %v683
  %v700 = vadd.f32 %v668, %v684
  %v701 = vadd.f32 %v669, %v685
  %v702 = vadd.f32 %v670, %v686
  %v703 = vadd.f32 %v671, %v687
  %v704 = vadd.f32 %v672, %v688
  %v705 = vadd.f32 %v673, %v689
  %v706 = vadd.f32 %v674, %v690
  %v707 = vadd.f32 %v675, %v691
  %v708 = vadd.f32 %v676, %v692
  %v709 = vadd.f32 %v677, %v693
  %v710 = vld [vmem:[%s1] sm:$0xff]
  %v711 = vld [vmem:[%s1 + $0x8] sm:$0xff]
  %713 = vset.pattern.permute.xlu0 0
  %714 = vperm.xlu0 %713, %v710
  %v715 = vpop.permute.xlu0 %714
  %717 = vset.pattern.permute.xlu0 0
  %718 = vperm.xlu0 %717, %v711
  %v719 = vpop.permute.xlu0 %718
  %v720 = vrot.slane %v715, 1
  %v721 = vrot.slane %v715, 2
  %v722 = vrot.slane %v715, 3
  %v723 = vrot.slane %v715, 4
  %v724 = vrot.slane %v715, 5
  %v725 = vrot.slane %v715, 6
  %v726 = vrot.slane %v715, 7
  %v727 = vrot.slane %v719, 1
  %v728 = vrot.slane %v719, 2
  %v729 = vrot.slane %v719, 3
  %v730 = vrot.slane %v719, 4
  %v731 = vrot.slane %v719, 5
  %v732 = vrot.slane %v719, 6
  %v733 = vrot.slane %v719, 7
  %v750 = vmul.f32 %v694, %v715
  %v751 = vmul.f32 %v695, %v720
  %v752 = vmul.f32 %v696, %v721
  %v753 = vmul.f32 %v697, %v722
  %v754 = vmul.f32 %v698, %v723
  %v755 = vmul.f32 %v699, %v724
  %v756 = vmul.f32 %v700, %v725
  %v757 = vmul.f32 %v701, %v726
  %v758 = vmul.f32 %v702, %v719
  %v759 = vmul.f32 %v703, %v727
  %v760 = vmul.f32 %v704, %v728
  %v761 = vmul.f32 %v705, %v729
  %v762 = vmul.f32 %v706, %v730
  %v763 = vmul.f32 %v707, %v731
  %v764 = vmul.f32 %v708, %v732
  %v765 = vmul.f32 %v709, %v733
  %766 = vset.pattern.permute.xlu0 7
  %767 = vperm.xlu0 %766, %v710
  %v768 = vpop.permute.xlu0 %767
  %769 = vset.pattern.permute.xlu0 7
  %770 = vperm.xlu0 %769, %v711
  %v771 = vpop.permute.xlu0 %770
  %v772 = vrot.slane %v768, 1
  %v773 = vrot.slane %v768, 2
  %v774 = vrot.slane %v768, 3
  %v775 = vrot.slane %v768, 4
  %v776 = vrot.slane %v768, 5
  %v777 = vrot.slane %v768, 6
  %v778 = vrot.slane %v768, 7
  %v779 = vrot.slane %v771, 1
  %v780 = vrot.slane %v771, 2
  %v781 = vrot.slane %v771, 3
  %v782 = vrot.slane %v771, 4
  %v783 = vrot.slane %v771, 5
  %v784 = vrot.slane %v771, 6
  %v785 = vrot.slane %v771, 7
  %v802 = vmul.f32 %v694, %v768
  %v803 = vmul.f32 %v695, %v772
  %v804 = vmul.f32 %v696, %v773
  %v805 = vmul.f32 %v697, %v774
  %v806 = vmul.f32 %v698, %v775
  %v807 = vmul.f32 %v699, %v776
  %v808 = vmul.f32 %v700, %v777
  %v809 = vmul.f32 %v701, %v778
  %v810 = vmul.f32 %v702, %v771
  %v811 = vmul.f32 %v703, %v779
  %v812 = vmul.f32 %v704, %v780
  %v813 = vmul.f32 %v705, %v781
  %v814 = vmul.f32 %v706, %v782
  %v815 = vmul.f32 %v707, %v783
  %v816 = vmul.f32 %v708, %v784
  %v817 = vmul.f32 %v709, %v785
  %vm818 = vcmp.lt.s32.totalorder %v26, 16
  %v819 = vsel %vm818, 1, 0
  %vm820 = vcmp.eq.s32.totalorder %v819, 1
  %v821 = vsel %vm820, %v715, %v768
  %v822 = vsel %vm820, %v719, %v771
  %v839 = vrot.slane %v695, 7
  %vm840 = vcmask 1041409
  %v841 = vsel %vm840, %v839, %v694
  %v842 = vrot.slane %v696, 6
  %vm843 = vcmask 1042434
  %v844 = vsel %vm843, %v842, %v841
  %v845 = vrot.slane %v697, 5
  %vm846 = vcmask 1043459
  %v847 = vsel %vm846, %v845, %v844
  %v848 = vrot.slane %v698, 4
  %vm849 = vcmask 1044484
  %v850 = vsel %vm849, %v848, %v847
  %v851 = vrot.slane %v699, 3
  %vm852 = vcmask 1045509
  %v853 = vsel %vm852, %v851, %v850
  %v854 = vrot.slane %v700, 2
  %vm855 = vcmask 1046534
  %v856 = vsel %vm855, %v854, %v853
  %v857 = vrot.slane %v701, 1
  %vm858 = vcmask 1047559
  %v859 = vsel %vm858, %v857, %v856
  %v860 = vrot.slane %v703, 7
  %v861 = vsel %vm840, %v860, %v702
  %v862 = vrot.slane %v704, 6
  %v863 = vsel %vm843, %v862, %v861
  %v864 = vrot.slane %v705, 5
  %v865 = vsel %vm846, %v864, %v863
  %v866 = vrot.slane %v706, 4
  %v867 = vsel %vm849, %v866, %v865
  %v868 = vrot.slane %v707, 3
  %v869 = vsel %vm852, %v868, %v867
  %v870 = vrot.slane %v708, 2
  %v871 = vsel %vm855, %v870, %v869
  %v872 = vrot.slane %v709, 1
  %v873 = vsel %vm858, %v872, %v871
  %874 = vrot.lane.b32.xlu0 %v859, 96
  %v875 = vpop.permute.xlu0 %874
  %876 = vrot.lane.b32.xlu0 %v873, 96
  %v877 = vpop.permute.xlu0 %876
  %v880 = vmul.f32 %v821, %v875
  %v881 = vmul.f32 %v822, %v877
  %v882 = vadd.f32 %v880, 0.0
  %v883 = vadd.f32 %v881, 0.0
  %v884 = vld [vmem:[%s0 + $0x1] sm:$0x1]
  %v885 = vld [vmem:[%s0 + $0x9] sm:$0x1]
  %v886 = vld [vmem:[%s0 + $0x11] sm:$0x1]
  %v887 = vld [vmem:[%s0 + $0x19] sm:$0x1]
  %v888 = vld [vmem:[%s0 + $0x21] sm:$0x1]
  %v889 = vld [vmem:[%s0 + $0x29] sm:$0x1]
  %v890 = vld [vmem:[%s0 + $0x31] sm:$0x1]
  %v891 = vld [vmem:[%s0 + $0x39] sm:$0x1]
  %v892 = vld [vmem:[%s0 + $0x41] sm:$0x1]
  %v893 = vld [vmem:[%s0 + $0x49] sm:$0x1]
  %v894 = vld [vmem:[%s0 + $0x51] sm:$0x1]
  %v895 = vld [vmem:[%s0 + $0x59] sm:$0x1]
  %v896 = vld [vmem:[%s0 + $0x61] sm:$0x1]
  %v897 = vld [vmem:[%s0 + $0x69] sm:$0x1]
  %v898 = vld [vmem:[%s0 + $0x71] sm:$0x1]
  %v899 = vld [vmem:[%s0 + $0x79] sm:$0x1]
  %v901 = vsel %vm43, %v882, 0
  %v904 = vsel %vm43, %v883, 0
  %906 = vmatpush.msra.mxu0 0.0
  %907 = vmatpush.msra.mxu0 0.0
  %908 = vmatpush.msra.mxu0 0.0
  %909 = vmatpush.msra.mxu0 0.0
  %910 = vmatpush.msra.mxu0 0.0
  %911 = vmatpush.msra.mxu0 0.0
  %912 = vmatpush.msra.mxu0 0.0
  %913 = vmatpush.msra.mxu0 0.0
  %914 = vmatpush.msra.mxu0 0.0
  %915 = vmatpush.msra.mxu0 0.0
  %916 = vmatpush.msra.mxu0 0.0
  %917 = vmatpush.msra.mxu0 0.0
  %918 = vmatpush.msra.mxu0 %v20
  %919 = vmatpush.msra.mxu0 %v19
  %920 = vmatpush.msra.mxu0 %v18
  %921 = vmatpush.msra.mxu0 %v17
  %922 = vmatmul.f32.gmra.mxu0 %v901
  %v923 = vpop.f32.mrf.mxu0
  %v924 = vadd.f32 %v23, %v923
  %925 = vmatmul.f32.gmra.mxu0 %v904
  %v926 = vpop.f32.mrf.mxu0
  %v927 = vadd.f32 %v23, %v926
  %928 = vdwg.mxu0
  %v931 = vrot.slane %v924, 1
  %v932 = vrot.slane %v924, 2
  %v933 = vrot.slane %v924, 3
  %v934 = vrot.slane %v924, 4
  %v935 = vrot.slane %v924, 5
  %v936 = vrot.slane %v924, 6
  %v937 = vrot.slane %v924, 7
  %v938 = vrot.slane %v927, 1
  %v939 = vrot.slane %v927, 2
  %v940 = vrot.slane %v927, 3
  %v941 = vrot.slane %v927, 4
  %v942 = vrot.slane %v927, 5
  %v943 = vrot.slane %v927, 6
  %v944 = vrot.slane %v927, 7
  %v961 = vadd.f32 %v884, %v924
  %v962 = vadd.f32 %v885, %v931
  %v963 = vadd.f32 %v886, %v932
  %v964 = vadd.f32 %v887, %v933
  %v965 = vadd.f32 %v888, %v934
  %v966 = vadd.f32 %v889, %v935
  %v967 = vadd.f32 %v890, %v936
  %v968 = vadd.f32 %v891, %v937
  %v969 = vadd.f32 %v892, %v927
  %v970 = vadd.f32 %v893, %v938
  %v971 = vadd.f32 %v894, %v939
  %v972 = vadd.f32 %v895, %v940
  %v973 = vadd.f32 %v896, %v941
  %v974 = vadd.f32 %v897, %v942
  %v975 = vadd.f32 %v898, %v943
  %v976 = vadd.f32 %v899, %v944
  %v977 = vxor.u32 %v961, 2147483648
  %v978 = vxor.u32 %v962, 2147483648
  %v979 = vxor.u32 %v963, 2147483648
  %v980 = vxor.u32 %v964, 2147483648
  %v981 = vxor.u32 %v965, 2147483648
  %v982 = vxor.u32 %v966, 2147483648
  %v983 = vxor.u32 %v967, 2147483648
  %v984 = vxor.u32 %v968, 2147483648
  %v985 = vxor.u32 %v969, 2147483648
  %v986 = vxor.u32 %v970, 2147483648
  %v987 = vxor.u32 %v971, 2147483648
  %v988 = vxor.u32 %v972, 2147483648
  %v989 = vxor.u32 %v973, 2147483648
  %v990 = vxor.u32 %v974, 2147483648
  %v991 = vxor.u32 %v975, 2147483648
  %v992 = vxor.u32 %v976, 2147483648
  %v993 = vmul.f32 %v977, 1.442695
  %v994 = vpow.pop %v993
  %v995 = vmul.f32 %v978, 1.442695
  %v996 = vpow.pop %v995
  %v997 = vmul.f32 %v979, 1.442695
  %v998 = vpow.pop %v997
  %v999 = vmul.f32 %v980, 1.442695
  %v1000 = vpow.pop %v999
  %v1001 = vmul.f32 %v981, 1.442695
  %v1002 = vpow.pop %v1001
  %v1003 = vmul.f32 %v982, 1.442695
  %v1004 = vpow.pop %v1003
  %v1005 = vmul.f32 %v983, 1.442695
  %v1006 = vpow.pop %v1005
  %v1007 = vmul.f32 %v984, 1.442695
  %v1008 = vpow.pop %v1007
  %v1009 = vmul.f32 %v985, 1.442695
  %v1010 = vpow.pop %v1009
  %v1011 = vmul.f32 %v986, 1.442695
  %v1012 = vpow.pop %v1011
  %v1013 = vmul.f32 %v987, 1.442695
  %v1014 = vpow.pop %v1013
  %v1015 = vmul.f32 %v988, 1.442695
  %v1016 = vpow.pop %v1015
  %v1017 = vmul.f32 %v989, 1.442695
  %v1018 = vpow.pop %v1017
  %v1019 = vmul.f32 %v990, 1.442695
  %v1020 = vpow.pop %v1019
  %v1021 = vmul.f32 %v991, 1.442695
  %v1022 = vpow.pop %v1021
  %v1023 = vmul.f32 %v992, 1.442695
  %v1024 = vpow.pop %v1023
  %v1025 = vadd.f32 %v994, 1.0
  %v1026 = vadd.f32 %v996, 1.0
  %v1027 = vadd.f32 %v998, 1.0
  %v1028 = vadd.f32 %v1000, 1.0
  %v1029 = vadd.f32 %v1002, 1.0
  %v1030 = vadd.f32 %v1004, 1.0
  %v1031 = vadd.f32 %v1006, 1.0
  %v1032 = vadd.f32 %v1008, 1.0
  %v1033 = vadd.f32 %v1010, 1.0
  %v1034 = vadd.f32 %v1012, 1.0
  %v1035 = vadd.f32 %v1014, 1.0
  %v1036 = vadd.f32 %v1016, 1.0
  %v1037 = vadd.f32 %v1018, 1.0
  %v1038 = vadd.f32 %v1020, 1.0
  %v1039 = vadd.f32 %v1022, 1.0
  %v1040 = vadd.f32 %v1024, 1.0
  %v1041 = vrcp.pop %v1025
  %v1042 = vmul.f32 %v1025, %v1041
  %v1043 = vsub.f32 1.0, %v1042
  %v1044 = vmul.f32 %v1041, %v1043
  %v1045 = vadd.f32 %v1041, %v1044
  %vm1046 = vweird.f32 %v1025
  %vm1047 = vweird.f32 %v1041
  %vm1048 = vmor %vm1046, %vm1047
  %v1049 = vsel %vm1048, %v1041, %v1045
  %v1050 = vand.u32 2147483647, %v1025
  %vm1051 = vcmp.eq.f32.partialorder %v1050, 8.507059e+37
  %v1052 = vand.u32 %v1025, 2147483648
  %v1053 = vor.u32 1.1754944e-38, %v1052
  %v1054 = vsel %vm1051, %v1053, %v1049
  %v1055 = vmul.f32 1.0, %v1054
  %v1056 = vrcp.pop %v1026
  %v1057 = vmul.f32 %v1026, %v1056
  %v1058 = vsub.f32 1.0, %v1057
  %v1059 = vmul.f32 %v1056, %v1058
  %v1060 = vadd.f32 %v1056, %v1059
  %vm1061 = vweird.f32 %v1026
  %vm1062 = vweird.f32 %v1056
  %vm1063 = vmor %vm1061, %vm1062
  %v1064 = vsel %vm1063, %v1056, %v1060
  %v1065 = vand.u32 2147483647, %v1026
  %vm1066 = vcmp.eq.f32.partialorder %v1065, 8.507059e+37
  %v1067 = vand.u32 %v1026, 2147483648
  %v1068 = vor.u32 1.1754944e-38, %v1067
  %v1069 = vsel %vm1066, %v1068, %v1064
  %v1070 = vmul.f32 1.0, %v1069
  %v1071 = vrcp.pop %v1027
  %v1072 = vmul.f32 %v1027, %v1071
  %v1073 = vsub.f32 1.0, %v1072
  %v1074 = vmul.f32 %v1071, %v1073
  %v1075 = vadd.f32 %v1071, %v1074
  %vm1076 = vweird.f32 %v1027
  %vm1077 = vweird.f32 %v1071
  %vm1078 = vmor %vm1076, %vm1077
  %v1079 = vsel %vm1078, %v1071, %v1075
  %v1080 = vand.u32 2147483647, %v1027
  %vm1081 = vcmp.eq.f32.partialorder %v1080, 8.507059e+37
  %v1082 = vand.u32 %v1027, 2147483648
  %v1083 = vor.u32 1.1754944e-38, %v1082
  %v1084 = vsel %vm1081, %v1083, %v1079
  %v1085 = vmul.f32 1.0, %v1084
  %v1086 = vrcp.pop %v1028
  %v1087 = vmul.f32 %v1028, %v1086
  %v1088 = vsub.f32 1.0, %v1087
  %v1089 = vmul.f32 %v1086, %v1088
  %v1090 = vadd.f32 %v1086, %v1089
  %vm1091 = vweird.f32 %v1028
  %vm1092 = vweird.f32 %v1086
  %vm1093 = vmor %vm1091, %vm1092
  %v1094 = vsel %vm1093, %v1086, %v1090
  %v1095 = vand.u32 2147483647, %v1028
  %vm1096 = vcmp.eq.f32.partialorder %v1095, 8.507059e+37
  %v1097 = vand.u32 %v1028, 2147483648
  %v1098 = vor.u32 1.1754944e-38, %v1097
  %v1099 = vsel %vm1096, %v1098, %v1094
  %v1100 = vmul.f32 1.0, %v1099
  %v1101 = vrcp.pop %v1029
  %v1102 = vmul.f32 %v1029, %v1101
  %v1103 = vsub.f32 1.0, %v1102
  %v1104 = vmul.f32 %v1101, %v1103
  %v1105 = vadd.f32 %v1101, %v1104
  %vm1106 = vweird.f32 %v1029
  %vm1107 = vweird.f32 %v1101
  %vm1108 = vmor %vm1106, %vm1107
  %v1109 = vsel %vm1108, %v1101, %v1105
  %v1110 = vand.u32 2147483647, %v1029
  %vm1111 = vcmp.eq.f32.partialorder %v1110, 8.507059e+37
  %v1112 = vand.u32 %v1029, 2147483648
  %v1113 = vor.u32 1.1754944e-38, %v1112
  %v1114 = vsel %vm1111, %v1113, %v1109
  %v1115 = vmul.f32 1.0, %v1114
  %v1116 = vrcp.pop %v1030
  %v1117 = vmul.f32 %v1030, %v1116
  %v1118 = vsub.f32 1.0, %v1117
  %v1119 = vmul.f32 %v1116, %v1118
  %v1120 = vadd.f32 %v1116, %v1119
  %vm1121 = vweird.f32 %v1030
  %vm1122 = vweird.f32 %v1116
  %vm1123 = vmor %vm1121, %vm1122
  %v1124 = vsel %vm1123, %v1116, %v1120
  %v1125 = vand.u32 2147483647, %v1030
  %vm1126 = vcmp.eq.f32.partialorder %v1125, 8.507059e+37
  %v1127 = vand.u32 %v1030, 2147483648
  %v1128 = vor.u32 1.1754944e-38, %v1127
  %v1129 = vsel %vm1126, %v1128, %v1124
  %v1130 = vmul.f32 1.0, %v1129
  %v1131 = vrcp.pop %v1031
  %v1132 = vmul.f32 %v1031, %v1131
  %v1133 = vsub.f32 1.0, %v1132
  %v1134 = vmul.f32 %v1131, %v1133
  %v1135 = vadd.f32 %v1131, %v1134
  %vm1136 = vweird.f32 %v1031
  %vm1137 = vweird.f32 %v1131
  %vm1138 = vmor %vm1136, %vm1137
  %v1139 = vsel %vm1138, %v1131, %v1135
  %v1140 = vand.u32 2147483647, %v1031
  %vm1141 = vcmp.eq.f32.partialorder %v1140, 8.507059e+37
  %v1142 = vand.u32 %v1031, 2147483648
  %v1143 = vor.u32 1.1754944e-38, %v1142
  %v1144 = vsel %vm1141, %v1143, %v1139
  %v1145 = vmul.f32 1.0, %v1144
  %v1146 = vrcp.pop %v1032
  %v1147 = vmul.f32 %v1032, %v1146
  %v1148 = vsub.f32 1.0, %v1147
  %v1149 = vmul.f32 %v1146, %v1148
  %v1150 = vadd.f32 %v1146, %v1149
  %vm1151 = vweird.f32 %v1032
  %vm1152 = vweird.f32 %v1146
  %vm1153 = vmor %vm1151, %vm1152
  %v1154 = vsel %vm1153, %v1146, %v1150
  %v1155 = vand.u32 2147483647, %v1032
  %vm1156 = vcmp.eq.f32.partialorder %v1155, 8.507059e+37
  %v1157 = vand.u32 %v1032, 2147483648
  %v1158 = vor.u32 1.1754944e-38, %v1157
  %v1159 = vsel %vm1156, %v1158, %v1154
  %v1160 = vmul.f32 1.0, %v1159
  %v1161 = vrcp.pop %v1033
  %v1162 = vmul.f32 %v1033, %v1161
  %v1163 = vsub.f32 1.0, %v1162
  %v1164 = vmul.f32 %v1161, %v1163
  %v1165 = vadd.f32 %v1161, %v1164
  %vm1166 = vweird.f32 %v1033
  %vm1167 = vweird.f32 %v1161
  %vm1168 = vmor %vm1166, %vm1167
  %v1169 = vsel %vm1168, %v1161, %v1165
  %v1170 = vand.u32 2147483647, %v1033
  %vm1171 = vcmp.eq.f32.partialorder %v1170, 8.507059e+37
  %v1172 = vand.u32 %v1033, 2147483648
  %v1173 = vor.u32 1.1754944e-38, %v1172
  %v1174 = vsel %vm1171, %v1173, %v1169
  %v1175 = vmul.f32 1.0, %v1174
  %v1176 = vrcp.pop %v1034
  %v1177 = vmul.f32 %v1034, %v1176
  %v1178 = vsub.f32 1.0, %v1177
  %v1179 = vmul.f32 %v1176, %v1178
  %v1180 = vadd.f32 %v1176, %v1179
  %vm1181 = vweird.f32 %v1034
  %vm1182 = vweird.f32 %v1176
  %vm1183 = vmor %vm1181, %vm1182
  %v1184 = vsel %vm1183, %v1176, %v1180
  %v1185 = vand.u32 2147483647, %v1034
  %vm1186 = vcmp.eq.f32.partialorder %v1185, 8.507059e+37
  %v1187 = vand.u32 %v1034, 2147483648
  %v1188 = vor.u32 1.1754944e-38, %v1187
  %v1189 = vsel %vm1186, %v1188, %v1184
  %v1190 = vmul.f32 1.0, %v1189
  %v1191 = vrcp.pop %v1035
  %v1192 = vmul.f32 %v1035, %v1191
  %v1193 = vsub.f32 1.0, %v1192
  %v1194 = vmul.f32 %v1191, %v1193
  %v1195 = vadd.f32 %v1191, %v1194
  %vm1196 = vweird.f32 %v1035
  %vm1197 = vweird.f32 %v1191
  %vm1198 = vmor %vm1196, %vm1197
  %v1199 = vsel %vm1198, %v1191, %v1195
  %v1200 = vand.u32 2147483647, %v1035
  %vm1201 = vcmp.eq.f32.partialorder %v1200, 8.507059e+37
  %v1202 = vand.u32 %v1035, 2147483648
  %v1203 = vor.u32 1.1754944e-38, %v1202
  %v1204 = vsel %vm1201, %v1203, %v1199
  %v1205 = vmul.f32 1.0, %v1204
  %v1206 = vrcp.pop %v1036
  %v1207 = vmul.f32 %v1036, %v1206
  %v1208 = vsub.f32 1.0, %v1207
  %v1209 = vmul.f32 %v1206, %v1208
  %v1210 = vadd.f32 %v1206, %v1209
  %vm1211 = vweird.f32 %v1036
  %vm1212 = vweird.f32 %v1206
  %vm1213 = vmor %vm1211, %vm1212
  %v1214 = vsel %vm1213, %v1206, %v1210
  %v1215 = vand.u32 2147483647, %v1036
  %vm1216 = vcmp.eq.f32.partialorder %v1215, 8.507059e+37
  %v1217 = vand.u32 %v1036, 2147483648
  %v1218 = vor.u32 1.1754944e-38, %v1217
  %v1219 = vsel %vm1216, %v1218, %v1214
  %v1220 = vmul.f32 1.0, %v1219
  %v1221 = vrcp.pop %v1037
  %v1222 = vmul.f32 %v1037, %v1221
  %v1223 = vsub.f32 1.0, %v1222
  %v1224 = vmul.f32 %v1221, %v1223
  %v1225 = vadd.f32 %v1221, %v1224
  %vm1226 = vweird.f32 %v1037
  %vm1227 = vweird.f32 %v1221
  %vm1228 = vmor %vm1226, %vm1227
  %v1229 = vsel %vm1228, %v1221, %v1225
  %v1230 = vand.u32 2147483647, %v1037
  %vm1231 = vcmp.eq.f32.partialorder %v1230, 8.507059e+37
  %v1232 = vand.u32 %v1037, 2147483648
  %v1233 = vor.u32 1.1754944e-38, %v1232
  %v1234 = vsel %vm1231, %v1233, %v1229
  %v1235 = vmul.f32 1.0, %v1234
  %v1236 = vrcp.pop %v1038
  %v1237 = vmul.f32 %v1038, %v1236
  %v1238 = vsub.f32 1.0, %v1237
  %v1239 = vmul.f32 %v1236, %v1238
  %v1240 = vadd.f32 %v1236, %v1239
  %vm1241 = vweird.f32 %v1038
  %vm1242 = vweird.f32 %v1236
  %vm1243 = vmor %vm1241, %vm1242
  %v1244 = vsel %vm1243, %v1236, %v1240
  %v1245 = vand.u32 2147483647, %v1038
  %vm1246 = vcmp.eq.f32.partialorder %v1245, 8.507059e+37
  %v1247 = vand.u32 %v1038, 2147483648
  %v1248 = vor.u32 1.1754944e-38, %v1247
  %v1249 = vsel %vm1246, %v1248, %v1244
  %v1250 = vmul.f32 1.0, %v1249
  %v1251 = vrcp.pop %v1039
  %v1252 = vmul.f32 %v1039, %v1251
  %v1253 = vsub.f32 1.0, %v1252
  %v1254 = vmul.f32 %v1251, %v1253
  %v1255 = vadd.f32 %v1251, %v1254
  %vm1256 = vweird.f32 %v1039
  %vm1257 = vweird.f32 %v1251
  %vm1258 = vmor %vm1256, %vm1257
  %v1259 = vsel %vm1258, %v1251, %v1255
  %v1260 = vand.u32 2147483647, %v1039
  %vm1261 = vcmp.eq.f32.partialorder %v1260, 8.507059e+37
  %v1262 = vand.u32 %v1039, 2147483648
  %v1263 = vor.u32 1.1754944e-38, %v1262
  %v1264 = vsel %vm1261, %v1263, %v1259
  %v1265 = vmul.f32 1.0, %v1264
  %v1266 = vrcp.pop %v1040
  %v1267 = vmul.f32 %v1040, %v1266
  %v1268 = vsub.f32 1.0, %v1267
  %v1269 = vmul.f32 %v1266, %v1268
  %v1270 = vadd.f32 %v1266, %v1269
  %vm1271 = vweird.f32 %v1040
  %vm1272 = vweird.f32 %v1266
  %vm1273 = vmor %vm1271, %vm1272
  %v1274 = vsel %vm1273, %v1266, %v1270
  %v1275 = vand.u32 2147483647, %v1040
  %vm1276 = vcmp.eq.f32.partialorder %v1275, 8.507059e+37
  %v1277 = vand.u32 %v1040, 2147483648
  %v1278 = vor.u32 1.1754944e-38, %v1277
  %v1279 = vsel %vm1276, %v1278, %v1274
  %v1280 = vmul.f32 1.0, %v1279
  %1281 = vrot.lane.b32.xlu0 %v924, 64
  %v1282 = vpop.permute.xlu0 %1281
  %1283 = vrot.lane.b32.xlu0 %v931, 64
  %v1284 = vpop.permute.xlu0 %1283
  %1285 = vrot.lane.b32.xlu0 %v932, 64
  %v1286 = vpop.permute.xlu0 %1285
  %1287 = vrot.lane.b32.xlu0 %v933, 64
  %v1288 = vpop.permute.xlu0 %1287
  %1289 = vrot.lane.b32.xlu0 %v934, 64
  %v1290 = vpop.permute.xlu0 %1289
  %1291 = vrot.lane.b32.xlu0 %v935, 64
  %v1292 = vpop.permute.xlu0 %1291
  %1293 = vrot.lane.b32.xlu0 %v936, 64
  %v1294 = vpop.permute.xlu0 %1293
  %1295 = vrot.lane.b32.xlu0 %v937, 64
  %v1296 = vpop.permute.xlu0 %1295
  %1297 = vrot.lane.b32.xlu0 %v927, 64
  %v1298 = vpop.permute.xlu0 %1297
  %1299 = vrot.lane.b32.xlu0 %v938, 64
  %v1300 = vpop.permute.xlu0 %1299
  %1301 = vrot.lane.b32.xlu0 %v939, 64
  %v1302 = vpop.permute.xlu0 %1301
  %1303 = vrot.lane.b32.xlu0 %v940, 64
  %v1304 = vpop.permute.xlu0 %1303
  %1305 = vrot.lane.b32.xlu0 %v941, 64
  %v1306 = vpop.permute.xlu0 %1305
  %1307 = vrot.lane.b32.xlu0 %v942, 64
  %v1308 = vpop.permute.xlu0 %1307
  %1309 = vrot.lane.b32.xlu0 %v943, 64
  %v1310 = vpop.permute.xlu0 %1309
  %1311 = vrot.lane.b32.xlu0 %v944, 64
  %v1312 = vpop.permute.xlu0 %1311
  %v1329 = vmul.f32 %v1055, %v1282
  %v1330 = vmul.f32 %v1070, %v1284
  %v1331 = vmul.f32 %v1085, %v1286
  %v1332 = vmul.f32 %v1100, %v1288
  %v1333 = vmul.f32 %v1115, %v1290
  %v1334 = vmul.f32 %v1130, %v1292
  %v1335 = vmul.f32 %v1145, %v1294
  %v1336 = vmul.f32 %v1160, %v1296
  %v1337 = vmul.f32 %v1175, %v1298
  %v1338 = vmul.f32 %v1190, %v1300
  %v1339 = vmul.f32 %v1205, %v1302
  %v1340 = vmul.f32 %v1220, %v1304
  %v1341 = vmul.f32 %v1235, %v1306
  %v1342 = vmul.f32 %v1250, %v1308
  %v1343 = vmul.f32 %v1265, %v1310
  %v1344 = vmul.f32 %v1280, %v1312
  %1361 = vrot.lane.b32.xlu0 %v1329, 64
  %v1362 = vpop.permute.xlu0 %1361
  %1363 = vrot.lane.b32.xlu0 %v1330, 64
  %v1364 = vpop.permute.xlu0 %1363
  %1365 = vrot.lane.b32.xlu0 %v1331, 64
  %v1366 = vpop.permute.xlu0 %1365
  %1367 = vrot.lane.b32.xlu0 %v1332, 64
  %v1368 = vpop.permute.xlu0 %1367
  %1369 = vrot.lane.b32.xlu0 %v1333, 64
  %v1370 = vpop.permute.xlu0 %1369
  %1371 = vrot.lane.b32.xlu0 %v1334, 64
  %v1372 = vpop.permute.xlu0 %1371
  %1373 = vrot.lane.b32.xlu0 %v1335, 64
  %v1374 = vpop.permute.xlu0 %1373
  %1375 = vrot.lane.b32.xlu0 %v1336, 64
  %v1376 = vpop.permute.xlu0 %1375
  %1377 = vrot.lane.b32.xlu0 %v1337, 64
  %v1378 = vpop.permute.xlu0 %1377
  %1379 = vrot.lane.b32.xlu0 %v1338, 64
  %v1380 = vpop.permute.xlu0 %1379
  %1381 = vrot.lane.b32.xlu0 %v1339, 64
  %v1382 = vpop.permute.xlu0 %1381
  %1383 = vrot.lane.b32.xlu0 %v1340, 64
  %v1384 = vpop.permute.xlu0 %1383
  %1385 = vrot.lane.b32.xlu0 %v1341, 64
  %v1386 = vpop.permute.xlu0 %1385
  %1387 = vrot.lane.b32.xlu0 %v1342, 64
  %v1388 = vpop.permute.xlu0 %1387
  %1389 = vrot.lane.b32.xlu0 %v1343, 64
  %v1390 = vpop.permute.xlu0 %1389
  %1391 = vrot.lane.b32.xlu0 %v1344, 64
  %v1392 = vpop.permute.xlu0 %1391
  %v1409 = vadd.f32 %v884, %v1362
  %v1410 = vadd.f32 %v885, %v1364
  %v1411 = vadd.f32 %v886, %v1366
  %v1412 = vadd.f32 %v887, %v1368
  %v1413 = vadd.f32 %v888, %v1370
  %v1414 = vadd.f32 %v889, %v1372
  %v1415 = vadd.f32 %v890, %v1374
  %v1416 = vadd.f32 %v891, %v1376
  %v1417 = vadd.f32 %v892, %v1378
  %v1418 = vadd.f32 %v893, %v1380
  %v1419 = vadd.f32 %v894, %v1382
  %v1420 = vadd.f32 %v895, %v1384
  %v1421 = vadd.f32 %v896, %v1386
  %v1422 = vadd.f32 %v897, %v1388
  %v1423 = vadd.f32 %v898, %v1390
  %v1424 = vadd.f32 %v899, %v1392
  %v1425 = vtanh.pop %v1409
  %v1426 = vtanh.pop %v1410
  %v1427 = vtanh.pop %v1411
  %v1428 = vtanh.pop %v1412
  %v1429 = vtanh.pop %v1413
  %v1430 = vtanh.pop %v1414
  %v1431 = vtanh.pop %v1415
  %v1432 = vtanh.pop %v1416
  %v1433 = vtanh.pop %v1417
  %v1434 = vtanh.pop %v1418
  %v1435 = vtanh.pop %v1419
  %v1436 = vtanh.pop %v1420
  %v1437 = vtanh.pop %v1421
  %v1438 = vtanh.pop %v1422
  %v1439 = vtanh.pop %v1423
  %v1440 = vtanh.pop %v1424
  %v1441 = vsub.f32 1.0, %v1055
  %v1442 = vsub.f32 1.0, %v1070
  %v1443 = vsub.f32 1.0, %v1085
  %v1444 = vsub.f32 1.0, %v1100
  %v1445 = vsub.f32 1.0, %v1115
  %v1446 = vsub.f32 1.0, %v1130
  %v1447 = vsub.f32 1.0, %v1145
  %v1448 = vsub.f32 1.0, %v1160
  %v1449 = vsub.f32 1.0, %v1175
  %v1450 = vsub.f32 1.0, %v1190
  %v1451 = vsub.f32 1.0, %v1205
  %v1452 = vsub.f32 1.0, %v1220
  %v1453 = vsub.f32 1.0, %v1235
  %v1454 = vsub.f32 1.0, %v1250
  %v1455 = vsub.f32 1.0, %v1265
  %v1456 = vsub.f32 1.0, %v1280
  %1473 = vrot.lane.b32.xlu0 %v1425, 96
  %v1474 = vpop.permute.xlu0 %1473
  %1475 = vrot.lane.b32.xlu0 %v1426, 96
  %v1476 = vpop.permute.xlu0 %1475
  %1477 = vrot.lane.b32.xlu0 %v1427, 96
  %v1478 = vpop.permute.xlu0 %1477
  %1479 = vrot.lane.b32.xlu0 %v1428, 96
  %v1480 = vpop.permute.xlu0 %1479
  %1481 = vrot.lane.b32.xlu0 %v1429, 96
  %v1482 = vpop.permute.xlu0 %1481
  %1483 = vrot.lane.b32.xlu0 %v1430, 96
  %v1484 = vpop.permute.xlu0 %1483
  %1485 = vrot.lane.b32.xlu0 %v1431, 96
  %v1486 = vpop.permute.xlu0 %1485
  %1487 = vrot.lane.b32.xlu0 %v1432, 96
  %v1488 = vpop.permute.xlu0 %1487
  %1489 = vrot.lane.b32.xlu0 %v1433, 96
  %v1490 = vpop.permute.xlu0 %1489
  %1491 = vrot.lane.b32.xlu0 %v1434, 96
  %v1492 = vpop.permute.xlu0 %1491
  %1493 = vrot.lane.b32.xlu0 %v1435, 96
  %v1494 = vpop.permute.xlu0 %1493
  %1495 = vrot.lane.b32.xlu0 %v1436, 96
  %v1496 = vpop.permute.xlu0 %1495
  %1497 = vrot.lane.b32.xlu0 %v1437, 96
  %v1498 = vpop.permute.xlu0 %1497
  %1499 = vrot.lane.b32.xlu0 %v1438, 96
  %v1500 = vpop.permute.xlu0 %1499
  %1501 = vrot.lane.b32.xlu0 %v1439, 96
  %v1502 = vpop.permute.xlu0 %1501
  %1503 = vrot.lane.b32.xlu0 %v1440, 96
  %v1504 = vpop.permute.xlu0 %1503
  %v1521 = vmul.f32 %v1441, %v1474
  %v1522 = vmul.f32 %v1442, %v1476
  %v1523 = vmul.f32 %v1443, %v1478
  %v1524 = vmul.f32 %v1444, %v1480
  %v1525 = vmul.f32 %v1445, %v1482
  %v1526 = vmul.f32 %v1446, %v1484
  %v1527 = vmul.f32 %v1447, %v1486
  %v1528 = vmul.f32 %v1448, %v1488
  %v1529 = vmul.f32 %v1449, %v1490
  %v1530 = vmul.f32 %v1450, %v1492
  %v1531 = vmul.f32 %v1451, %v1494
  %v1532 = vmul.f32 %v1452, %v1496
  %v1533 = vmul.f32 %v1453, %v1498
  %v1534 = vmul.f32 %v1454, %v1500
  %v1535 = vmul.f32 %v1455, %v1502
  %v1536 = vmul.f32 %v1456, %v1504
  %v1537 = vrot.slane %v882, 1
  %v1538 = vrot.slane %v882, 2
  %v1539 = vrot.slane %v882, 3
  %v1540 = vrot.slane %v882, 4
  %v1541 = vrot.slane %v882, 5
  %v1542 = vrot.slane %v882, 6
  %v1543 = vrot.slane %v882, 7
  %v1544 = vrot.slane %v883, 1
  %v1545 = vrot.slane %v883, 2
  %v1546 = vrot.slane %v883, 3
  %v1547 = vrot.slane %v883, 4
  %v1548 = vrot.slane %v883, 5
  %v1549 = vrot.slane %v883, 6
  %v1550 = vrot.slane %v883, 7
  %1551 = vrot.lane.b32.xlu0 %v882, 32
  %v1552 = vpop.permute.xlu0 %1551
  %1553 = vrot.lane.b32.xlu0 %v1537, 32
  %v1554 = vpop.permute.xlu0 %1553
  %1555 = vrot.lane.b32.xlu0 %v1538, 32
  %v1556 = vpop.permute.xlu0 %1555
  %1557 = vrot.lane.b32.xlu0 %v1539, 32
  %v1558 = vpop.permute.xlu0 %1557
  %1559 = vrot.lane.b32.xlu0 %v1540, 32
  %v1560 = vpop.permute.xlu0 %1559
  %1561 = vrot.lane.b32.xlu0 %v1541, 32
  %v1562 = vpop.permute.xlu0 %1561
  %1563 = vrot.lane.b32.xlu0 %v1542, 32
  %v1564 = vpop.permute.xlu0 %1563
  %1565 = vrot.lane.b32.xlu0 %v1543, 32
  %v1566 = vpop.permute.xlu0 %1565
  %1567 = vrot.lane.b32.xlu0 %v883, 32
  %v1568 = vpop.permute.xlu0 %1567
  %1569 = vrot.lane.b32.xlu0 %v1544, 32
  %v1570 = vpop.permute.xlu0 %1569
  %1571 = vrot.lane.b32.xlu0 %v1545, 32
  %v1572 = vpop.permute.xlu0 %1571
  %1573 = vrot.lane.b32.xlu0 %v1546, 32
  %v1574 = vpop.permute.xlu0 %1573
  %1575 = vrot.lane.b32.xlu0 %v1547, 32
  %v1576 = vpop.permute.xlu0 %1575
  %1577 = vrot.lane.b32.xlu0 %v1548, 32
  %v1578 = vpop.permute.xlu0 %1577
  %1579 = vrot.lane.b32.xlu0 %v1549, 32
  %v1580 = vpop.permute.xlu0 %1579
  %1581 = vrot.lane.b32.xlu0 %v1550, 32
  %v1582 = vpop.permute.xlu0 %1581
  %v1599 = vmul.f32 %v1055, %v1552
  %v1600 = vmul.f32 %v1070, %v1554
  %v1601 = vmul.f32 %v1085, %v1556
  %v1602 = vmul.f32 %v1100, %v1558
  %v1603 = vmul.f32 %v1115, %v1560
  %v1604 = vmul.f32 %v1130, %v1562
  %v1605 = vmul.f32 %v1145, %v1564
  %v1606 = vmul.f32 %v1160, %v1566
  %v1607 = vmul.f32 %v1175, %v1568
  %v1608 = vmul.f32 %v1190, %v1570
  %v1609 = vmul.f32 %v1205, %v1572
  %v1610 = vmul.f32 %v1220, %v1574
  %v1611 = vmul.f32 %v1235, %v1576
  %v1612 = vmul.f32 %v1250, %v1578
  %v1613 = vmul.f32 %v1265, %v1580
  %v1614 = vmul.f32 %v1280, %v1582
  %v1615 = vadd.f32 %v1521, %v1599
  %v1616 = vadd.f32 %v1522, %v1600
  %v1617 = vadd.f32 %v1523, %v1601
  %v1618 = vadd.f32 %v1524, %v1602
  %v1619 = vadd.f32 %v1525, %v1603
  %v1620 = vadd.f32 %v1526, %v1604
  %v1621 = vadd.f32 %v1527, %v1605
  %v1622 = vadd.f32 %v1528, %v1606
  %v1623 = vadd.f32 %v1529, %v1607
  %v1624 = vadd.f32 %v1530, %v1608
  %v1625 = vadd.f32 %v1531, %v1609
  %v1626 = vadd.f32 %v1532, %v1610
  %v1627 = vadd.f32 %v1533, %v1611
  %v1628 = vadd.f32 %v1534, %v1612
  %v1629 = vadd.f32 %v1535, %v1613
  %v1630 = vadd.f32 %v1536, %v1614
  %1631 = vset.pattern.permute.xlu0 1
  %1632 = vperm.xlu0 %1631, %v710
  %v1633 = vpop.permute.xlu0 %1632
  %1634 = vset.pattern.permute.xlu0 1
  %1635 = vperm.xlu0 %1634, %v711
  %v1636 = vpop.permute.xlu0 %1635
  %v1637 = vrot.slane %v1633, 1
  %v1638 = vrot.slane %v1633, 2
  %v1639 = vrot.slane %v1633, 3
  %v1640 = vrot.slane %v1633, 4
  %v1641 = vrot.slane %v1633, 5
  %v1642 = vrot.slane %v1633, 6
  %v1643 = vrot.slane %v1633, 7
  %v1644 = vrot.slane %v1636, 1
  %v1645 = vrot.slane %v1636, 2
  %v1646 = vrot.slane %v1636, 3
  %v1647 = vrot.slane %v1636, 4
  %v1648 = vrot.slane %v1636, 5
  %v1649 = vrot.slane %v1636, 6
  %v1650 = vrot.slane %v1636, 7
  %v1667 = vmul.f32 %v1615, %v1633
  %v1668 = vmul.f32 %v1616, %v1637
  %v1669 = vmul.f32 %v1617, %v1638
  %v1670 = vmul.f32 %v1618, %v1639
  %v1671 = vmul.f32 %v1619, %v1640
  %v1672 = vmul.f32 %v1620, %v1641
  %v1673 = vmul.f32 %v1621, %v1642
  %v1674 = vmul.f32 %v1622, %v1643
  %v1675 = vmul.f32 %v1623, %v1636
  %v1676 = vmul.f32 %v1624, %v1644
  %v1677 = vmul.f32 %v1625, %v1645
  %v1678 = vmul.f32 %v1626, %v1646
  %v1679 = vmul.f32 %v1627, %v1647
  %v1680 = vmul.f32 %v1628, %v1648
  %v1681 = vmul.f32 %v1629, %v1649
  %v1682 = vmul.f32 %v1630, %v1650
  %1683 = vset.pattern.permute.xlu0 6
  %1684 = vperm.xlu0 %1683, %v710
  %v1685 = vpop.permute.xlu0 %1684
  %1686 = vset.pattern.permute.xlu0 6
  %1687 = vperm.xlu0 %1686, %v711
  %v1688 = vpop.permute.xlu0 %1687
  %v1689 = vrot.slane %v1685, 1
  %v1690 = vrot.slane %v1685, 2
  %v1691 = vrot.slane %v1685, 3
  %v1692 = vrot.slane %v1685, 4
  %v1693 = vrot.slane %v1685, 5
  %v1694 = vrot.slane %v1685, 6
  %v1695 = vrot.slane %v1685, 7
  %v1696 = vrot.slane %v1688, 1
  %v1697 = vrot.slane %v1688, 2
  %v1698 = vrot.slane %v1688, 3
  %v1699 = vrot.slane %v1688, 4
  %v1700 = vrot.slane %v1688, 5
  %v1701 = vrot.slane %v1688, 6
  %v1702 = vrot.slane %v1688, 7
  %v1719 = vmul.f32 %v1615, %v1685
  %v1720 = vmul.f32 %v1616, %v1689
  %v1721 = vmul.f32 %v1617, %v1690
  %v1722 = vmul.f32 %v1618, %v1691
  %v1723 = vmul.f32 %v1619, %v1692
  %v1724 = vmul.f32 %v1620, %v1693
  %v1725 = vmul.f32 %v1621, %v1694
  %v1726 = vmul.f32 %v1622, %v1695
  %v1727 = vmul.f32 %v1623, %v1688
  %v1728 = vmul.f32 %v1624, %v1696
  %v1729 = vmul.f32 %v1625, %v1697
  %v1730 = vmul.f32 %v1626, %v1698
  %v1731 = vmul.f32 %v1627, %v1699
  %v1732 = vmul.f32 %v1628, %v1700
  %v1733 = vmul.f32 %v1629, %v1701
  %v1734 = vmul.f32 %v1630, %v1702
  %v1735 = vsel %vm820, %v1633, %v1685
  %v1736 = vsel %vm820, %v1636, %v1688
  %v1737 = vsub.f32 %v1615, %v1552
  %v1738 = vsub.f32 %v1616, %v1554
  %v1739 = vsub.f32 %v1617, %v1556
  %v1740 = vsub.f32 %v1618, %v1558
  %v1741 = vsub.f32 %v1619, %v1560
  %v1742 = vsub.f32 %v1620, %v1562
  %v1743 = vsub.f32 %v1621, %v1564
  %v1744 = vsub.f32 %v1622, %v1566
  %v1745 = vsub.f32 %v1623, %v1568
  %v1746 = vsub.f32 %v1624, %v1570
  %v1747 = vsub.f32 %v1625, %v1572
  %v1748 = vsub.f32 %v1626, %v1574
  %v1749 = vsub.f32 %v1627, %v1576
  %v1750 = vsub.f32 %v1628, %v1578
  %v1751 = vsub.f32 %v1629, %v1580
  %v1752 = vsub.f32 %v1630, %v1582
  %v1769 = vrot.slane %v1738, 7
  %v1770 = vsel %vm840, %v1769, %v1737
  %v1771 = vrot.slane %v1739, 6
  %v1772 = vsel %vm843, %v1771, %v1770
  %v1773 = vrot.slane %v1740, 5
  %v1774 = vsel %vm846, %v1773, %v1772
  %v1775 = vrot.slane %v1741, 4
  %v1776 = vsel %vm849, %v1775, %v1774
  %v1777 = vrot.slane %v1742, 3
  %v1778 = vsel %vm852, %v1777, %v1776
  %v1779 = vrot.slane %v1743, 2
  %v1780 = vsel %vm855, %v1779, %v1778
  %v1781 = vrot.slane %v1744, 1
  %v1782 = vsel %vm858, %v1781, %v1780
  %v1783 = vrot.slane %v1746, 7
  %v1784 = vsel %vm840, %v1783, %v1745
  %v1785 = vrot.slane %v1747, 6
  %v1786 = vsel %vm843, %v1785, %v1784
  %v1787 = vrot.slane %v1748, 5
  %v1788 = vsel %vm846, %v1787, %v1786
  %v1789 = vrot.slane %v1749, 4
  %v1790 = vsel %vm849, %v1789, %v1788
  %v1791 = vrot.slane %v1750, 3
  %v1792 = vsel %vm852, %v1791, %v1790
  %v1793 = vrot.slane %v1751, 2
  %v1794 = vsel %vm855, %v1793, %v1792
  %v1795 = vrot.slane %v1752, 1
  %v1796 = vsel %vm858, %v1795, %v1794
  %1797 = vrot.lane.b32.xlu0 %v1782, 96
  %v1798 = vpop.permute.xlu0 %1797
  %1799 = vrot.lane.b32.xlu0 %v1796, 96
  %v1800 = vpop.permute.xlu0 %1799
  %v1803 = vmul.f32 %v1735, %v1798
  %v1804 = vmul.f32 %v1736, %v1800
  %v1805 = vadd.f32 %v882, %v1803
  %v1806 = vadd.f32 %v883, %v1804
  %v1807 = vld [vmem:[%s0 + $0x2] sm:$0x1]
  %v1808 = vld [vmem:[%s0 + $0xa] sm:$0x1]
  %v1809 = vld [vmem:[%s0 + $0x12] sm:$0x1]
  %v1810 = vld [vmem:[%s0 + $0x1a] sm:$0x1]
  %v1811 = vld [vmem:[%s0 + $0x22] sm:$0x1]
  %v1812 = vld [vmem:[%s0 + $0x2a] sm:$0x1]
  %v1813 = vld [vmem:[%s0 + $0x32] sm:$0x1]
  %v1814 = vld [vmem:[%s0 + $0x3a] sm:$0x1]
  %v1815 = vld [vmem:[%s0 + $0x42] sm:$0x1]
  %v1816 = vld [vmem:[%s0 + $0x4a] sm:$0x1]
  %v1817 = vld [vmem:[%s0 + $0x52] sm:$0x1]
  %v1818 = vld [vmem:[%s0 + $0x5a] sm:$0x1]
  %v1819 = vld [vmem:[%s0 + $0x62] sm:$0x1]
  %v1820 = vld [vmem:[%s0 + $0x6a] sm:$0x1]
  %v1821 = vld [vmem:[%s0 + $0x72] sm:$0x1]
  %v1822 = vld [vmem:[%s0 + $0x7a] sm:$0x1]
  %v1824 = vsel %vm43, %v1805, 0
  %v1827 = vsel %vm43, %v1806, 0
  %1829 = vmatpush.msra.mxu0 0.0
  %1830 = vmatpush.msra.mxu0 0.0
  %1831 = vmatpush.msra.mxu0 0.0
  %1832 = vmatpush.msra.mxu0 0.0
  %1833 = vmatpush.msra.mxu0 0.0
  %1834 = vmatpush.msra.mxu0 0.0
  %1835 = vmatpush.msra.mxu0 0.0
  %1836 = vmatpush.msra.mxu0 0.0
  %1837 = vmatpush.msra.mxu0 0.0
  %1838 = vmatpush.msra.mxu0 0.0
  %1839 = vmatpush.msra.mxu0 0.0
  %1840 = vmatpush.msra.mxu0 0.0
  %1841 = vmatpush.msra.mxu0 %v20
  %1842 = vmatpush.msra.mxu0 %v19
  %1843 = vmatpush.msra.mxu0 %v18
  %1844 = vmatpush.msra.mxu0 %v17
  %1845 = vmatmul.f32.gmra.mxu0 %v1824
  %v1846 = vpop.f32.mrf.mxu0
  %v1847 = vadd.f32 %v23, %v1846
  %1848 = vmatmul.f32.gmra.mxu0 %v1827
  %v1849 = vpop.f32.mrf.mxu0
  %v1850 = vadd.f32 %v23, %v1849
  %1851 = vdwg.mxu0
  %v1854 = vrot.slane %v1847, 1
  %v1855 = vrot.slane %v1847, 2
  %v1856 = vrot.slane %v1847, 3
  %v1857 = vrot.slane %v1847, 4
  %v1858 = vrot.slane %v1847, 5
  %v1859 = vrot.slane %v1847, 6
  %v1860 = vrot.slane %v1847, 7
  %v1861 = vrot.slane %v1850, 1
  %v1862 = vrot.slane %v1850, 2
  %v1863 = vrot.slane %v1850, 3
  %v1864 = vrot.slane %v1850, 4
  %v1865 = vrot.slane %v1850, 5
  %v1866 = vrot.slane %v1850, 6
  %v1867 = vrot.slane %v1850, 7
  %v1884 = vadd.f32 %v1807, %v1847
  %v1885 = vadd.f32 %v1808, %v1854
  %v1886 = vadd.f32 %v1809, %v1855
  %v1887 = vadd.f32 %v1810, %v1856
  %v1888 = vadd.f32 %v1811, %v1857
  %v1889 = vadd.f32 %v1812, %v1858
  %v1890 = vadd.f32 %v1813, %v1859
  %v1891 = vadd.f32 %v1814, %v1860
  %v1892 = vadd.f32 %v1815, %v1850
  %v1893 = vadd.f32 %v1816, %v1861
  %v1894 = vadd.f32 %v1817, %v1862
  %v1895 = vadd.f32 %v1818, %v1863
  %v1896 = vadd.f32 %v1819, %v1864
  %v1897 = vadd.f32 %v1820, %v1865
  %v1898 = vadd.f32 %v1821, %v1866
  %v1899 = vadd.f32 %v1822, %v1867
  %v1900 = vxor.u32 %v1884, 2147483648
  %v1901 = vxor.u32 %v1885, 2147483648
  %v1902 = vxor.u32 %v1886, 2147483648
  %v1903 = vxor.u32 %v1887, 2147483648
  %v1904 = vxor.u32 %v1888, 2147483648
  %v1905 = vxor.u32 %v1889, 2147483648
  %v1906 = vxor.u32 %v1890, 2147483648
  %v1907 = vxor.u32 %v1891, 2147483648
  %v1908 = vxor.u32 %v1892, 2147483648
  %v1909 = vxor.u32 %v1893, 2147483648
  %v1910 = vxor.u32 %v1894, 2147483648
  %v1911 = vxor.u32 %v1895, 2147483648
  %v1912 = vxor.u32 %v1896, 2147483648
  %v1913 = vxor.u32 %v1897, 2147483648
  %v1914 = vxor.u32 %v1898, 2147483648
  %v1915 = vxor.u32 %v1899, 2147483648
  %v1916 = vmul.f32 %v1900, 1.442695
  %v1917 = vpow.pop %v1916
  %v1918 = vmul.f32 %v1901, 1.442695
  %v1919 = vpow.pop %v1918
  %v1920 = vmul.f32 %v1902, 1.442695
  %v1921 = vpow.pop %v1920
  %v1922 = vmul.f32 %v1903, 1.442695
  %v1923 = vpow.pop %v1922
  %v1924 = vmul.f32 %v1904, 1.442695
  %v1925 = vpow.pop %v1924
  %v1926 = vmul.f32 %v1905, 1.442695
  %v1927 = vpow.pop %v1926
  %v1928 = vmul.f32 %v1906, 1.442695
  %v1929 = vpow.pop %v1928
  %v1930 = vmul.f32 %v1907, 1.442695
  %v1931 = vpow.pop %v1930
  %v1932 = vmul.f32 %v1908, 1.442695
  %v1933 = vpow.pop %v1932
  %v1934 = vmul.f32 %v1909, 1.442695
  %v1935 = vpow.pop %v1934
  %v1936 = vmul.f32 %v1910, 1.442695
  %v1937 = vpow.pop %v1936
  %v1938 = vmul.f32 %v1911, 1.442695
  %v1939 = vpow.pop %v1938
  %v1940 = vmul.f32 %v1912, 1.442695
  %v1941 = vpow.pop %v1940
  %v1942 = vmul.f32 %v1913, 1.442695
  %v1943 = vpow.pop %v1942
  %v1944 = vmul.f32 %v1914, 1.442695
  %v1945 = vpow.pop %v1944
  %v1946 = vmul.f32 %v1915, 1.442695
  %v1947 = vpow.pop %v1946
  %v1948 = vadd.f32 %v1917, 1.0
  %v1949 = vadd.f32 %v1919, 1.0
  %v1950 = vadd.f32 %v1921, 1.0
  %v1951 = vadd.f32 %v1923, 1.0
  %v1952 = vadd.f32 %v1925, 1.0
  %v1953 = vadd.f32 %v1927, 1.0
  %v1954 = vadd.f32 %v1929, 1.0
  %v1955 = vadd.f32 %v1931, 1.0
  %v1956 = vadd.f32 %v1933, 1.0
  %v1957 = vadd.f32 %v1935, 1.0
  %v1958 = vadd.f32 %v1937, 1.0
  %v1959 = vadd.f32 %v1939, 1.0
  %v1960 = vadd.f32 %v1941, 1.0
  %v1961 = vadd.f32 %v1943, 1.0
  %v1962 = vadd.f32 %v1945, 1.0
  %v1963 = vadd.f32 %v1947, 1.0
  %v1964 = vrcp.pop %v1948
  %v1965 = vmul.f32 %v1948, %v1964
  %v1966 = vsub.f32 1.0, %v1965
  %v1967 = vmul.f32 %v1964, %v1966
  %v1968 = vadd.f32 %v1964, %v1967
  %vm1969 = vweird.f32 %v1948
  %vm1970 = vweird.f32 %v1964
  %vm1971 = vmor %vm1969, %vm1970
  %v1972 = vsel %vm1971, %v1964, %v1968
  %v1973 = vand.u32 2147483647, %v1948
  %vm1974 = vcmp.eq.f32.partialorder %v1973, 8.507059e+37
  %v1975 = vand.u32 %v1948, 2147483648
  %v1976 = vor.u32 1.1754944e-38, %v1975
  %v1977 = vsel %vm1974, %v1976, %v1972
  %v1978 = vmul.f32 1.0, %v1977
  %v1979 = vrcp.pop %v1949
  %v1980 = vmul.f32 %v1949, %v1979
  %v1981 = vsub.f32 1.0, %v1980
  %v1982 = vmul.f32 %v1979, %v1981
  %v1983 = vadd.f32 %v1979, %v1982
  %vm1984 = vweird.f32 %v1949
  %vm1985 = vweird.f32 %v1979
  %vm1986 = vmor %vm1984, %vm1985
  %v1987 = vsel %vm1986, %v1979, %v1983
  %v1988 = vand.u32 2147483647, %v1949
  %vm1989 = vcmp.eq.f32.partialorder %v1988, 8.507059e+37
  %v1990 = vand.u32 %v1949, 2147483648
  %v1991 = vor.u32 1.1754944e-38, %v1990
  %v1992 = vsel %vm1989, %v1991, %v1987
  %v1993 = vmul.f32 1.0, %v1992
  %v1994 = vrcp.pop %v1950
  %v1995 = vmul.f32 %v1950, %v1994
  %v1996 = vsub.f32 1.0, %v1995
  %v1997 = vmul.f32 %v1994, %v1996
  %v1998 = vadd.f32 %v1994, %v1997
  %vm1999 = vweird.f32 %v1950
  %vm2000 = vweird.f32 %v1994
  %vm2001 = vmor %vm1999, %vm2000
  %v2002 = vsel %vm2001, %v1994, %v1998
  %v2003 = vand.u32 2147483647, %v1950
  %vm2004 = vcmp.eq.f32.partialorder %v2003, 8.507059e+37
  %v2005 = vand.u32 %v1950, 2147483648
  %v2006 = vor.u32 1.1754944e-38, %v2005
  %v2007 = vsel %vm2004, %v2006, %v2002
  %v2008 = vmul.f32 1.0, %v2007
  %v2009 = vrcp.pop %v1951
  %v2010 = vmul.f32 %v1951, %v2009
  %v2011 = vsub.f32 1.0, %v2010
  %v2012 = vmul.f32 %v2009, %v2011
  %v2013 = vadd.f32 %v2009, %v2012
  %vm2014 = vweird.f32 %v1951
  %vm2015 = vweird.f32 %v2009
  %vm2016 = vmor %vm2014, %vm2015
  %v2017 = vsel %vm2016, %v2009, %v2013
  %v2018 = vand.u32 2147483647, %v1951
  %vm2019 = vcmp.eq.f32.partialorder %v2018, 8.507059e+37
  %v2020 = vand.u32 %v1951, 2147483648
  %v2021 = vor.u32 1.1754944e-38, %v2020
  %v2022 = vsel %vm2019, %v2021, %v2017
  %v2023 = vmul.f32 1.0, %v2022
  %v2024 = vrcp.pop %v1952
  %v2025 = vmul.f32 %v1952, %v2024
  %v2026 = vsub.f32 1.0, %v2025
  %v2027 = vmul.f32 %v2024, %v2026
  %v2028 = vadd.f32 %v2024, %v2027
  %vm2029 = vweird.f32 %v1952
  %vm2030 = vweird.f32 %v2024
  %vm2031 = vmor %vm2029, %vm2030
  %v2032 = vsel %vm2031, %v2024, %v2028
  %v2033 = vand.u32 2147483647, %v1952
  %vm2034 = vcmp.eq.f32.partialorder %v2033, 8.507059e+37
  %v2035 = vand.u32 %v1952, 2147483648
  %v2036 = vor.u32 1.1754944e-38, %v2035
  %v2037 = vsel %vm2034, %v2036, %v2032
  %v2038 = vmul.f32 1.0, %v2037
  %v2039 = vrcp.pop %v1953
  %v2040 = vmul.f32 %v1953, %v2039
  %v2041 = vsub.f32 1.0, %v2040
  %v2042 = vmul.f32 %v2039, %v2041
  %v2043 = vadd.f32 %v2039, %v2042
  %vm2044 = vweird.f32 %v1953
  %vm2045 = vweird.f32 %v2039
  %vm2046 = vmor %vm2044, %vm2045
  %v2047 = vsel %vm2046, %v2039, %v2043
  %v2048 = vand.u32 2147483647, %v1953
  %vm2049 = vcmp.eq.f32.partialorder %v2048, 8.507059e+37
  %v2050 = vand.u32 %v1953, 2147483648
  %v2051 = vor.u32 1.1754944e-38, %v2050
  %v2052 = vsel %vm2049, %v2051, %v2047
  %v2053 = vmul.f32 1.0, %v2052
  %v2054 = vrcp.pop %v1954
  %v2055 = vmul.f32 %v1954, %v2054
  %v2056 = vsub.f32 1.0, %v2055
  %v2057 = vmul.f32 %v2054, %v2056
  %v2058 = vadd.f32 %v2054, %v2057
  %vm2059 = vweird.f32 %v1954
  %vm2060 = vweird.f32 %v2054
  %vm2061 = vmor %vm2059, %vm2060
  %v2062 = vsel %vm2061, %v2054, %v2058
  %v2063 = vand.u32 2147483647, %v1954
  %vm2064 = vcmp.eq.f32.partialorder %v2063, 8.507059e+37
  %v2065 = vand.u32 %v1954, 2147483648
  %v2066 = vor.u32 1.1754944e-38, %v2065
  %v2067 = vsel %vm2064, %v2066, %v2062
  %v2068 = vmul.f32 1.0, %v2067
  %v2069 = vrcp.pop %v1955
  %v2070 = vmul.f32 %v1955, %v2069
  %v2071 = vsub.f32 1.0, %v2070
  %v2072 = vmul.f32 %v2069, %v2071
  %v2073 = vadd.f32 %v2069, %v2072
  %vm2074 = vweird.f32 %v1955
  %vm2075 = vweird.f32 %v2069
  %vm2076 = vmor %vm2074, %vm2075
  %v2077 = vsel %vm2076, %v2069, %v2073
  %v2078 = vand.u32 2147483647, %v1955
  %vm2079 = vcmp.eq.f32.partialorder %v2078, 8.507059e+37
  %v2080 = vand.u32 %v1955, 2147483648
  %v2081 = vor.u32 1.1754944e-38, %v2080
  %v2082 = vsel %vm2079, %v2081, %v2077
  %v2083 = vmul.f32 1.0, %v2082
  %v2084 = vrcp.pop %v1956
  %v2085 = vmul.f32 %v1956, %v2084
  %v2086 = vsub.f32 1.0, %v2085
  %v2087 = vmul.f32 %v2084, %v2086
  %v2088 = vadd.f32 %v2084, %v2087
  %vm2089 = vweird.f32 %v1956
  %vm2090 = vweird.f32 %v2084
  %vm2091 = vmor %vm2089, %vm2090
  %v2092 = vsel %vm2091, %v2084, %v2088
  %v2093 = vand.u32 2147483647, %v1956
  %vm2094 = vcmp.eq.f32.partialorder %v2093, 8.507059e+37
  %v2095 = vand.u32 %v1956, 2147483648
  %v2096 = vor.u32 1.1754944e-38, %v2095
  %v2097 = vsel %vm2094, %v2096, %v2092
  %v2098 = vmul.f32 1.0, %v2097
  %v2099 = vrcp.pop %v1957
  %v2100 = vmul.f32 %v1957, %v2099
  %v2101 = vsub.f32 1.0, %v2100
  %v2102 = vmul.f32 %v2099, %v2101
  %v2103 = vadd.f32 %v2099, %v2102
  %vm2104 = vweird.f32 %v1957
  %vm2105 = vweird.f32 %v2099
  %vm2106 = vmor %vm2104, %vm2105
  %v2107 = vsel %vm2106, %v2099, %v2103
  %v2108 = vand.u32 2147483647, %v1957
  %vm2109 = vcmp.eq.f32.partialorder %v2108, 8.507059e+37
  %v2110 = vand.u32 %v1957, 2147483648
  %v2111 = vor.u32 1.1754944e-38, %v2110
  %v2112 = vsel %vm2109, %v2111, %v2107
  %v2113 = vmul.f32 1.0, %v2112
  %v2114 = vrcp.pop %v1958
  %v2115 = vmul.f32 %v1958, %v2114
  %v2116 = vsub.f32 1.0, %v2115
  %v2117 = vmul.f32 %v2114, %v2116
  %v2118 = vadd.f32 %v2114, %v2117
  %vm2119 = vweird.f32 %v1958
  %vm2120 = vweird.f32 %v2114
  %vm2121 = vmor %vm2119, %vm2120
  %v2122 = vsel %vm2121, %v2114, %v2118
  %v2123 = vand.u32 2147483647, %v1958
  %vm2124 = vcmp.eq.f32.partialorder %v2123, 8.507059e+37
  %v2125 = vand.u32 %v1958, 2147483648
  %v2126 = vor.u32 1.1754944e-38, %v2125
  %v2127 = vsel %vm2124, %v2126, %v2122
  %v2128 = vmul.f32 1.0, %v2127
  %v2129 = vrcp.pop %v1959
  %v2130 = vmul.f32 %v1959, %v2129
  %v2131 = vsub.f32 1.0, %v2130
  %v2132 = vmul.f32 %v2129, %v2131
  %v2133 = vadd.f32 %v2129, %v2132
  %vm2134 = vweird.f32 %v1959
  %vm2135 = vweird.f32 %v2129
  %vm2136 = vmor %vm2134, %vm2135
  %v2137 = vsel %vm2136, %v2129, %v2133
  %v2138 = vand.u32 2147483647, %v1959
  %vm2139 = vcmp.eq.f32.partialorder %v2138, 8.507059e+37
  %v2140 = vand.u32 %v1959, 2147483648
  %v2141 = vor.u32 1.1754944e-38, %v2140
  %v2142 = vsel %vm2139, %v2141, %v2137
  %v2143 = vmul.f32 1.0, %v2142
  %v2144 = vrcp.pop %v1960
  %v2145 = vmul.f32 %v1960, %v2144
  %v2146 = vsub.f32 1.0, %v2145
  %v2147 = vmul.f32 %v2144, %v2146
  %v2148 = vadd.f32 %v2144, %v2147
  %vm2149 = vweird.f32 %v1960
  %vm2150 = vweird.f32 %v2144
  %vm2151 = vmor %vm2149, %vm2150
  %v2152 = vsel %vm2151, %v2144, %v2148
  %v2153 = vand.u32 2147483647, %v1960
  %vm2154 = vcmp.eq.f32.partialorder %v2153, 8.507059e+37
  %v2155 = vand.u32 %v1960, 2147483648
  %v2156 = vor.u32 1.1754944e-38, %v2155
  %v2157 = vsel %vm2154, %v2156, %v2152
  %v2158 = vmul.f32 1.0, %v2157
  %v2159 = vrcp.pop %v1961
  %v2160 = vmul.f32 %v1961, %v2159
  %v2161 = vsub.f32 1.0, %v2160
  %v2162 = vmul.f32 %v2159, %v2161
  %v2163 = vadd.f32 %v2159, %v2162
  %vm2164 = vweird.f32 %v1961
  %vm2165 = vweird.f32 %v2159
  %vm2166 = vmor %vm2164, %vm2165
  %v2167 = vsel %vm2166, %v2159, %v2163
  %v2168 = vand.u32 2147483647, %v1961
  %vm2169 = vcmp.eq.f32.partialorder %v2168, 8.507059e+37
  %v2170 = vand.u32 %v1961, 2147483648
  %v2171 = vor.u32 1.1754944e-38, %v2170
  %v2172 = vsel %vm2169, %v2171, %v2167
  %v2173 = vmul.f32 1.0, %v2172
  %v2174 = vrcp.pop %v1962
  %v2175 = vmul.f32 %v1962, %v2174
  %v2176 = vsub.f32 1.0, %v2175
  %v2177 = vmul.f32 %v2174, %v2176
  %v2178 = vadd.f32 %v2174, %v2177
  %vm2179 = vweird.f32 %v1962
  %vm2180 = vweird.f32 %v2174
  %vm2181 = vmor %vm2179, %vm2180
  %v2182 = vsel %vm2181, %v2174, %v2178
  %v2183 = vand.u32 2147483647, %v1962
  %vm2184 = vcmp.eq.f32.partialorder %v2183, 8.507059e+37
  %v2185 = vand.u32 %v1962, 2147483648
  %v2186 = vor.u32 1.1754944e-38, %v2185
  %v2187 = vsel %vm2184, %v2186, %v2182
  %v2188 = vmul.f32 1.0, %v2187
  %v2189 = vrcp.pop %v1963
  %v2190 = vmul.f32 %v1963, %v2189
  %v2191 = vsub.f32 1.0, %v2190
  %v2192 = vmul.f32 %v2189, %v2191
  %v2193 = vadd.f32 %v2189, %v2192
  %vm2194 = vweird.f32 %v1963
  %vm2195 = vweird.f32 %v2189
  %vm2196 = vmor %vm2194, %vm2195
  %v2197 = vsel %vm2196, %v2189, %v2193
  %v2198 = vand.u32 2147483647, %v1963
  %vm2199 = vcmp.eq.f32.partialorder %v2198, 8.507059e+37
  %v2200 = vand.u32 %v1963, 2147483648
  %v2201 = vor.u32 1.1754944e-38, %v2200
  %v2202 = vsel %vm2199, %v2201, %v2197
  %v2203 = vmul.f32 1.0, %v2202
  %2204 = vrot.lane.b32.xlu0 %v1847, 64
  %v2205 = vpop.permute.xlu0 %2204
  %2206 = vrot.lane.b32.xlu0 %v1854, 64
  %v2207 = vpop.permute.xlu0 %2206
  %2208 = vrot.lane.b32.xlu0 %v1855, 64
  %v2209 = vpop.permute.xlu0 %2208
  %2210 = vrot.lane.b32.xlu0 %v1856, 64
  %v2211 = vpop.permute.xlu0 %2210
  %2212 = vrot.lane.b32.xlu0 %v1857, 64
  %v2213 = vpop.permute.xlu0 %2212
  %2214 = vrot.lane.b32.xlu0 %v1858, 64
  %v2215 = vpop.permute.xlu0 %2214
  %2216 = vrot.lane.b32.xlu0 %v1859, 64
  %v2217 = vpop.permute.xlu0 %2216
  %2218 = vrot.lane.b32.xlu0 %v1860, 64
  %v2219 = vpop.permute.xlu0 %2218
  %2220 = vrot.lane.b32.xlu0 %v1850, 64
  %v2221 = vpop.permute.xlu0 %2220
  %2222 = vrot.lane.b32.xlu0 %v1861, 64
  %v2223 = vpop.permute.xlu0 %2222
  %2224 = vrot.lane.b32.xlu0 %v1862, 64
  %v2225 = vpop.permute.xlu0 %2224
  %2226 = vrot.lane.b32.xlu0 %v1863, 64
  %v2227 = vpop.permute.xlu0 %2226
  %2228 = vrot.lane.b32.xlu0 %v1864, 64
  %v2229 = vpop.permute.xlu0 %2228
  %2230 = vrot.lane.b32.xlu0 %v1865, 64
  %v2231 = vpop.permute.xlu0 %2230
  %2232 = vrot.lane.b32.xlu0 %v1866, 64
  %v2233 = vpop.permute.xlu0 %2232
  %2234 = vrot.lane.b32.xlu0 %v1867, 64
  %v2235 = vpop.permute.xlu0 %2234
  %v2252 = vmul.f32 %v1978, %v2205
  %v2253 = vmul.f32 %v1993, %v2207
  %v2254 = vmul.f32 %v2008, %v2209
  %v2255 = vmul.f32 %v2023, %v2211
  %v2256 = vmul.f32 %v2038, %v2213
  %v2257 = vmul.f32 %v2053, %v2215
  %v2258 = vmul.f32 %v2068, %v2217
  %v2259 = vmul.f32 %v2083, %v2219
  %v2260 = vmul.f32 %v2098, %v2221
  %v2261 = vmul.f32 %v2113, %v2223
  %v2262 = vmul.f32 %v2128, %v2225
  %v2263 = vmul.f32 %v2143, %v2227
  %v2264 = vmul.f32 %v2158, %v2229
  %v2265 = vmul.f32 %v2173, %v2231
  %v2266 = vmul.f32 %v2188, %v2233
  %v2267 = vmul.f32 %v2203, %v2235
  %2284 = vrot.lane.b32.xlu0 %v2252, 64
  %v2285 = vpop.permute.xlu0 %2284
  %2286 = vrot.lane.b32.xlu0 %v2253, 64
  %v2287 = vpop.permute.xlu0 %2286
  %2288 = vrot.lane.b32.xlu0 %v2254, 64
  %v2289 = vpop.permute.xlu0 %2288
  %2290 = vrot.lane.b32.xlu0 %v2255, 64
  %v2291 = vpop.permute.xlu0 %2290
  %2292 = vrot.lane.b32.xlu0 %v2256, 64
  %v2293 = vpop.permute.xlu0 %2292
  %2294 = vrot.lane.b32.xlu0 %v2257, 64
  %v2295 = vpop.permute.xlu0 %2294
  %2296 = vrot.lane.b32.xlu0 %v2258, 64
  %v2297 = vpop.permute.xlu0 %2296
  %2298 = vrot.lane.b32.xlu0 %v2259, 64
  %v2299 = vpop.permute.xlu0 %2298
  %2300 = vrot.lane.b32.xlu0 %v2260, 64
  %v2301 = vpop.permute.xlu0 %2300
  %2302 = vrot.lane.b32.xlu0 %v2261, 64
  %v2303 = vpop.permute.xlu0 %2302
  %2304 = vrot.lane.b32.xlu0 %v2262, 64
  %v2305 = vpop.permute.xlu0 %2304
  %2306 = vrot.lane.b32.xlu0 %v2263, 64
  %v2307 = vpop.permute.xlu0 %2306
  %2308 = vrot.lane.b32.xlu0 %v2264, 64
  %v2309 = vpop.permute.xlu0 %2308
  %2310 = vrot.lane.b32.xlu0 %v2265, 64
  %v2311 = vpop.permute.xlu0 %2310
  %2312 = vrot.lane.b32.xlu0 %v2266, 64
  %v2313 = vpop.permute.xlu0 %2312
  %2314 = vrot.lane.b32.xlu0 %v2267, 64
  %v2315 = vpop.permute.xlu0 %2314
  %v2332 = vadd.f32 %v1807, %v2285
  %v2333 = vadd.f32 %v1808, %v2287
  %v2334 = vadd.f32 %v1809, %v2289
  %v2335 = vadd.f32 %v1810, %v2291
  %v2336 = vadd.f32 %v1811, %v2293
  %v2337 = vadd.f32 %v1812, %v2295
  %v2338 = vadd.f32 %v1813, %v2297
  %v2339 = vadd.f32 %v1814, %v2299
  %v2340 = vadd.f32 %v1815, %v2301
  %v2341 = vadd.f32 %v1816, %v2303
  %v2342 = vadd.f32 %v1817, %v2305
  %v2343 = vadd.f32 %v1818, %v2307
  %v2344 = vadd.f32 %v1819, %v2309
  %v2345 = vadd.f32 %v1820, %v2311
  %v2346 = vadd.f32 %v1821, %v2313
  %v2347 = vadd.f32 %v1822, %v2315
  %v2348 = vtanh.pop %v2332
  %v2349 = vtanh.pop %v2333
  %v2350 = vtanh.pop %v2334
  %v2351 = vtanh.pop %v2335
  %v2352 = vtanh.pop %v2336
  %v2353 = vtanh.pop %v2337
  %v2354 = vtanh.pop %v2338
  %v2355 = vtanh.pop %v2339
  %v2356 = vtanh.pop %v2340
  %v2357 = vtanh.pop %v2341
  %v2358 = vtanh.pop %v2342
  %v2359 = vtanh.pop %v2343
  %v2360 = vtanh.pop %v2344
  %v2361 = vtanh.pop %v2345
  %v2362 = vtanh.pop %v2346
  %v2363 = vtanh.pop %v2347
  %v2364 = vsub.f32 1.0, %v1978
  %v2365 = vsub.f32 1.0, %v1993
  %v2366 = vsub.f32 1.0, %v2008
  %v2367 = vsub.f32 1.0, %v2023
  %v2368 = vsub.f32 1.0, %v2038
  %v2369 = vsub.f32 1.0, %v2053
  %v2370 = vsub.f32 1.0, %v2068
  %v2371 = vsub.f32 1.0, %v2083
  %v2372 = vsub.f32 1.0, %v2098
  %v2373 = vsub.f32 1.0, %v2113
  %v2374 = vsub.f32 1.0, %v2128
  %v2375 = vsub.f32 1.0, %v2143
  %v2376 = vsub.f32 1.0, %v2158
  %v2377 = vsub.f32 1.0, %v2173
  %v2378 = vsub.f32 1.0, %v2188
  %v2379 = vsub.f32 1.0, %v2203
  %2396 = vrot.lane.b32.xlu0 %v2348, 96
  %v2397 = vpop.permute.xlu0 %2396
  %2398 = vrot.lane.b32.xlu0 %v2349, 96
  %v2399 = vpop.permute.xlu0 %2398
  %2400 = vrot.lane.b32.xlu0 %v2350, 96
  %v2401 = vpop.permute.xlu0 %2400
  %2402 = vrot.lane.b32.xlu0 %v2351, 96
  %v2403 = vpop.permute.xlu0 %2402
  %2404 = vrot.lane.b32.xlu0 %v2352, 96
  %v2405 = vpop.permute.xlu0 %2404
  %2406 = vrot.lane.b32.xlu0 %v2353, 96
  %v2407 = vpop.permute.xlu0 %2406
  %2408 = vrot.lane.b32.xlu0 %v2354, 96
  %v2409 = vpop.permute.xlu0 %2408
  %2410 = vrot.lane.b32.xlu0 %v2355, 96
  %v2411 = vpop.permute.xlu0 %2410
  %2412 = vrot.lane.b32.xlu0 %v2356, 96
  %v2413 = vpop.permute.xlu0 %2412
  %2414 = vrot.lane.b32.xlu0 %v2357, 96
  %v2415 = vpop.permute.xlu0 %2414
  %2416 = vrot.lane.b32.xlu0 %v2358, 96
  %v2417 = vpop.permute.xlu0 %2416
  %2418 = vrot.lane.b32.xlu0 %v2359, 96
  %v2419 = vpop.permute.xlu0 %2418
  %2420 = vrot.lane.b32.xlu0 %v2360, 96
  %v2421 = vpop.permute.xlu0 %2420
  %2422 = vrot.lane.b32.xlu0 %v2361, 96
  %v2423 = vpop.permute.xlu0 %2422
  %2424 = vrot.lane.b32.xlu0 %v2362, 96
  %v2425 = vpop.permute.xlu0 %2424
  %2426 = vrot.lane.b32.xlu0 %v2363, 96
  %v2427 = vpop.permute.xlu0 %2426
  %v2444 = vmul.f32 %v2364, %v2397
  %v2445 = vmul.f32 %v2365, %v2399
  %v2446 = vmul.f32 %v2366, %v2401
  %v2447 = vmul.f32 %v2367, %v2403
  %v2448 = vmul.f32 %v2368, %v2405
  %v2449 = vmul.f32 %v2369, %v2407
  %v2450 = vmul.f32 %v2370, %v2409
  %v2451 = vmul.f32 %v2371, %v2411
  %v2452 = vmul.f32 %v2372, %v2413
  %v2453 = vmul.f32 %v2373, %v2415
  %v2454 = vmul.f32 %v2374, %v2417
  %v2455 = vmul.f32 %v2375, %v2419
  %v2456 = vmul.f32 %v2376, %v2421
  %v2457 = vmul.f32 %v2377, %v2423
  %v2458 = vmul.f32 %v2378, %v2425
  %v2459 = vmul.f32 %v2379, %v2427
  %v2460 = vrot.slane %v1805, 1
  %v2461 = vrot.slane %v1805, 2
  %v2462 = vrot.slane %v1805, 3
  %v2463 = vrot.slane %v1805, 4
  %v2464 = vrot.slane %v1805, 5
  %v2465 = vrot.slane %v1805, 6
  %v2466 = vrot.slane %v1805, 7
  %v2467 = vrot.slane %v1806, 1
  %v2468 = vrot.slane %v1806, 2
  %v2469 = vrot.slane %v1806, 3
  %v2470 = vrot.slane %v1806, 4
  %v2471 = vrot.slane %v1806, 5
  %v2472 = vrot.slane %v1806, 6
  %v2473 = vrot.slane %v1806, 7
  %2474 = vrot.lane.b32.xlu0 %v1805, 32
  %v2475 = vpop.permute.xlu0 %2474
  %2476 = vrot.lane.b32.xlu0 %v2460, 32
  %v2477 = vpop.permute.xlu0 %2476
  %2478 = vrot.lane.b32.xlu0 %v2461, 32
  %v2479 = vpop.permute.xlu0 %2478
  %2480 = vrot.lane.b32.xlu0 %v2462, 32
  %v2481 = vpop.permute.xlu0 %2480
  %2482 = vrot.lane.b32.xlu0 %v2463, 32
  %v2483 = vpop.permute.xlu0 %2482
  %2484 = vrot.lane.b32.xlu0 %v2464, 32
  %v2485 = vpop.permute.xlu0 %2484
  %2486 = vrot.lane.b32.xlu0 %v2465, 32
  %v2487 = vpop.permute.xlu0 %2486
  %2488 = vrot.lane.b32.xlu0 %v2466, 32
  %v2489 = vpop.permute.xlu0 %2488
  %2490 = vrot.lane.b32.xlu0 %v1806, 32
  %v2491 = vpop.permute.xlu0 %2490
  %2492 = vrot.lane.b32.xlu0 %v2467, 32
  %v2493 = vpop.permute.xlu0 %2492
  %2494 = vrot.lane.b32.xlu0 %v2468, 32
  %v2495 = vpop.permute.xlu0 %2494
  %2496 = vrot.lane.b32.xlu0 %v2469, 32
  %v2497 = vpop.permute.xlu0 %2496
  %2498 = vrot.lane.b32.xlu0 %v2470, 32
  %v2499 = vpop.permute.xlu0 %2498
  %2500 = vrot.lane.b32.xlu0 %v2471, 32
  %v2501 = vpop.permute.xlu0 %2500
  %2502 = vrot.lane.b32.xlu0 %v2472, 32
  %v2503 = vpop.permute.xlu0 %2502
  %2504 = vrot.lane.b32.xlu0 %v2473, 32
  %v2505 = vpop.permute.xlu0 %2504
  %v2522 = vmul.f32 %v1978, %v2475
  %v2523 = vmul.f32 %v1993, %v2477
  %v2524 = vmul.f32 %v2008, %v2479
  %v2525 = vmul.f32 %v2023, %v2481
  %v2526 = vmul.f32 %v2038, %v2483
  %v2527 = vmul.f32 %v2053, %v2485
  %v2528 = vmul.f32 %v2068, %v2487
  %v2529 = vmul.f32 %v2083, %v2489
  %v2530 = vmul.f32 %v2098, %v2491
  %v2531 = vmul.f32 %v2113, %v2493
  %v2532 = vmul.f32 %v2128, %v2495
  %v2533 = vmul.f32 %v2143, %v2497
  %v2534 = vmul.f32 %v2158, %v2499
  %v2535 = vmul.f32 %v2173, %v2501
  %v2536 = vmul.f32 %v2188, %v2503
  %v2537 = vmul.f32 %v2203, %v2505
  %v2538 = vadd.f32 %v2444, %v2522
  %v2539 = vadd.f32 %v2445, %v2523
  %v2540 = vadd.f32 %v2446, %v2524
  %v2541 = vadd.f32 %v2447, %v2525
  %v2542 = vadd.f32 %v2448, %v2526
  %v2543 = vadd.f32 %v2449, %v2527
  %v2544 = vadd.f32 %v2450, %v2528
  %v2545 = vadd.f32 %v2451, %v2529
  %v2546 = vadd.f32 %v2452, %v2530
  %v2547 = vadd.f32 %v2453, %v2531
  %v2548 = vadd.f32 %v2454, %v2532
  %v2549 = vadd.f32 %v2455, %v2533
  %v2550 = vadd.f32 %v2456, %v2534
  %v2551 = vadd.f32 %v2457, %v2535
  %v2552 = vadd.f32 %v2458, %v2536
  %v2553 = vadd.f32 %v2459, %v2537
  %2554 = vset.pattern.permute.xlu0 2
  %2555 = vperm.xlu0 %2554, %v710
  %v2556 = vpop.permute.xlu0 %2555
  %2557 = vset.pattern.permute.xlu0 2
  %2558 = vperm.xlu0 %2557, %v711
  %v2559 = vpop.permute.xlu0 %2558
  %v2560 = vrot.slane %v2556, 1
  %v2561 = vrot.slane %v2556, 2
  %v2562 = vrot.slane %v2556, 3
  %v2563 = vrot.slane %v2556, 4
  %v2564 = vrot.slane %v2556, 5
  %v2565 = vrot.slane %v2556, 6
  %v2566 = vrot.slane %v2556, 7
  %v2567 = vrot.slane %v2559, 1
  %v2568 = vrot.slane %v2559, 2
  %v2569 = vrot.slane %v2559, 3
  %v2570 = vrot.slane %v2559, 4
  %v2571 = vrot.slane %v2559, 5
  %v2572 = vrot.slane %v2559, 6
  %v2573 = vrot.slane %v2559, 7
  %v2590 = vmul.f32 %v2538, %v2556
  %v2591 = vmul.f32 %v2539, %v2560
  %v2592 = vmul.f32 %v2540, %v2561
  %v2593 = vmul.f32 %v2541, %v2562
  %v2594 = vmul.f32 %v2542, %v2563
  %v2595 = vmul.f32 %v2543, %v2564
  %v2596 = vmul.f32 %v2544, %v2565
  %v2597 = vmul.f32 %v2545, %v2566
  %v2598 = vmul.f32 %v2546, %v2559
  %v2599 = vmul.f32 %v2547, %v2567
  %v2600 = vmul.f32 %v2548, %v2568
  %v2601 = vmul.f32 %v2549, %v2569
  %v2602 = vmul.f32 %v2550, %v2570
  %v2603 = vmul.f32 %v2551, %v2571
  %v2604 = vmul.f32 %v2552, %v2572
  %v2605 = vmul.f32 %v2553, %v2573
  %2606 = vset.pattern.permute.xlu0 5
  %2607 = vperm.xlu0 %2606, %v710
  %v2608 = vpop.permute.xlu0 %2607
  %2609 = vset.pattern.permute.xlu0 5
  %2610 = vperm.xlu0 %2609, %v711
  %v2611 = vpop.permute.xlu0 %2610
  %v2612 = vrot.slane %v2608, 1
  %v2613 = vrot.slane %v2608, 2
  %v2614 = vrot.slane %v2608, 3
  %v2615 = vrot.slane %v2608, 4
  %v2616 = vrot.slane %v2608, 5
  %v2617 = vrot.slane %v2608, 6
  %v2618 = vrot.slane %v2608, 7
  %v2619 = vrot.slane %v2611, 1
  %v2620 = vrot.slane %v2611, 2
  %v2621 = vrot.slane %v2611, 3
  %v2622 = vrot.slane %v2611, 4
  %v2623 = vrot.slane %v2611, 5
  %v2624 = vrot.slane %v2611, 6
  %v2625 = vrot.slane %v2611, 7
  %v2642 = vmul.f32 %v2538, %v2608
  %v2643 = vmul.f32 %v2539, %v2612
  %v2644 = vmul.f32 %v2540, %v2613
  %v2645 = vmul.f32 %v2541, %v2614
  %v2646 = vmul.f32 %v2542, %v2615
  %v2647 = vmul.f32 %v2543, %v2616
  %v2648 = vmul.f32 %v2544, %v2617
  %v2649 = vmul.f32 %v2545, %v2618
  %v2650 = vmul.f32 %v2546, %v2611
  %v2651 = vmul.f32 %v2547, %v2619
  %v2652 = vmul.f32 %v2548, %v2620
  %v2653 = vmul.f32 %v2549, %v2621
  %v2654 = vmul.f32 %v2550, %v2622
  %v2655 = vmul.f32 %v2551, %v2623
  %v2656 = vmul.f32 %v2552, %v2624
  %v2657 = vmul.f32 %v2553, %v2625
  %v2658 = vsel %vm820, %v2556, %v2608
  %v2659 = vsel %vm820, %v2559, %v2611
  %v2660 = vsub.f32 %v2538, %v2475
  %v2661 = vsub.f32 %v2539, %v2477
  %v2662 = vsub.f32 %v2540, %v2479
  %v2663 = vsub.f32 %v2541, %v2481
  %v2664 = vsub.f32 %v2542, %v2483
  %v2665 = vsub.f32 %v2543, %v2485
  %v2666 = vsub.f32 %v2544, %v2487
  %v2667 = vsub.f32 %v2545, %v2489
  %v2668 = vsub.f32 %v2546, %v2491
  %v2669 = vsub.f32 %v2547, %v2493
  %v2670 = vsub.f32 %v2548, %v2495
  %v2671 = vsub.f32 %v2549, %v2497
  %v2672 = vsub.f32 %v2550, %v2499
  %v2673 = vsub.f32 %v2551, %v2501
  %v2674 = vsub.f32 %v2552, %v2503
  %v2675 = vsub.f32 %v2553, %v2505
  %v2692 = vrot.slane %v2661, 7
  %v2693 = vsel %vm840, %v2692, %v2660
  %v2694 = vrot.slane %v2662, 6
  %v2695 = vsel %vm843, %v2694, %v2693
  %v2696 = vrot.slane %v2663, 5
  %v2697 = vsel %vm846, %v2696, %v2695
  %v2698 = vrot.slane %v2664, 4
  %v2699 = vsel %vm849, %v2698, %v2697
  %v2700 = vrot.slane %v2665, 3
  %v2701 = vsel %vm852, %v2700, %v2699
  %v2702 = vrot.slane %v2666, 2
  %v2703 = vsel %vm855, %v2702, %v2701
  %v2704 = vrot.slane %v2667, 1
  %v2705 = vsel %vm858, %v2704, %v2703
  %v2706 = vrot.slane %v2669, 7
  %v2707 = vsel %vm840, %v2706, %v2668
  %v2708 = vrot.slane %v2670, 6
  %v2709 = vsel %vm843, %v2708, %v2707
  %v2710 = vrot.slane %v2671, 5
  %v2711 = vsel %vm846, %v2710, %v2709
  %v2712 = vrot.slane %v2672, 4
  %v2713 = vsel %vm849, %v2712, %v2711
  %v2714 = vrot.slane %v2673, 3
  %v2715 = vsel %vm852, %v2714, %v2713
  %v2716 = vrot.slane %v2674, 2
  %v2717 = vsel %vm855, %v2716, %v2715
  %v2718 = vrot.slane %v2675, 1
  %v2719 = vsel %vm858, %v2718, %v2717
  %2720 = vrot.lane.b32.xlu0 %v2705, 96
  %v2721 = vpop.permute.xlu0 %2720
  %2722 = vrot.lane.b32.xlu0 %v2719, 96
  %v2723 = vpop.permute.xlu0 %2722
  %v2726 = vmul.f32 %v2658, %v2721
  %v2727 = vmul.f32 %v2659, %v2723
  %v2728 = vadd.f32 %v1805, %v2726
  %v2729 = vadd.f32 %v1806, %v2727
  %v2730 = vld [vmem:[%s0 + $0x3] sm:$0x1]
  %v2731 = vld [vmem:[%s0 + $0xb] sm:$0x1]
  %v2732 = vld [vmem:[%s0 + $0x13] sm:$0x1]
  %v2733 = vld [vmem:[%s0 + $0x1b] sm:$0x1]
  %v2734 = vld [vmem:[%s0 + $0x23] sm:$0x1]
  %v2735 = vld [vmem:[%s0 + $0x2b] sm:$0x1]
  %v2736 = vld [vmem:[%s0 + $0x33] sm:$0x1]
  %v2737 = vld [vmem:[%s0 + $0x3b] sm:$0x1]
  %v2738 = vld [vmem:[%s0 + $0x43] sm:$0x1]
  %v2739 = vld [vmem:[%s0 + $0x4b] sm:$0x1]
  %v2740 = vld [vmem:[%s0 + $0x53] sm:$0x1]
  %v2741 = vld [vmem:[%s0 + $0x5b] sm:$0x1]
  %v2742 = vld [vmem:[%s0 + $0x63] sm:$0x1]
  %v2743 = vld [vmem:[%s0 + $0x6b] sm:$0x1]
  %v2744 = vld [vmem:[%s0 + $0x73] sm:$0x1]
  %v2745 = vld [vmem:[%s0 + $0x7b] sm:$0x1]
  %v2747 = vsel %vm43, %v2728, 0
  %v2750 = vsel %vm43, %v2729, 0
  %2752 = vmatpush.msra.mxu0 0.0
  %2753 = vmatpush.msra.mxu0 0.0
  %2754 = vmatpush.msra.mxu0 0.0
  %2755 = vmatpush.msra.mxu0 0.0
  %2756 = vmatpush.msra.mxu0 0.0
  %2757 = vmatpush.msra.mxu0 0.0
  %2758 = vmatpush.msra.mxu0 0.0
  %2759 = vmatpush.msra.mxu0 0.0
  %2760 = vmatpush.msra.mxu0 0.0
  %2761 = vmatpush.msra.mxu0 0.0
  %2762 = vmatpush.msra.mxu0 0.0
  %2763 = vmatpush.msra.mxu0 0.0
  %2764 = vmatpush.msra.mxu0 %v20
  %2765 = vmatpush.msra.mxu0 %v19
  %2766 = vmatpush.msra.mxu0 %v18
  %2767 = vmatpush.msra.mxu0 %v17
  %2768 = vmatmul.f32.gmra.mxu0 %v2747
  %v2769 = vpop.f32.mrf.mxu0
  %v2770 = vadd.f32 %v23, %v2769
  %2771 = vmatmul.f32.gmra.mxu0 %v2750
  %v2772 = vpop.f32.mrf.mxu0
  %v2773 = vadd.f32 %v23, %v2772
  %2774 = vdwg.mxu0
  %v2777 = vrot.slane %v2770, 1
  %v2778 = vrot.slane %v2770, 2
  %v2779 = vrot.slane %v2770, 3
  %v2780 = vrot.slane %v2770, 4
  %v2781 = vrot.slane %v2770, 5
  %v2782 = vrot.slane %v2770, 6
  %v2783 = vrot.slane %v2770, 7
  %v2784 = vrot.slane %v2773, 1
  %v2785 = vrot.slane %v2773, 2
  %v2786 = vrot.slane %v2773, 3
  %v2787 = vrot.slane %v2773, 4
  %v2788 = vrot.slane %v2773, 5
  %v2789 = vrot.slane %v2773, 6
  %v2790 = vrot.slane %v2773, 7
  %v2807 = vadd.f32 %v2730, %v2770
  %v2808 = vadd.f32 %v2731, %v2777
  %v2809 = vadd.f32 %v2732, %v2778
  %v2810 = vadd.f32 %v2733, %v2779
  %v2811 = vadd.f32 %v2734, %v2780
  %v2812 = vadd.f32 %v2735, %v2781
  %v2813 = vadd.f32 %v2736, %v2782
  %v2814 = vadd.f32 %v2737, %v2783
  %v2815 = vadd.f32 %v2738, %v2773
  %v2816 = vadd.f32 %v2739, %v2784
  %v2817 = vadd.f32 %v2740, %v2785
  %v2818 = vadd.f32 %v2741, %v2786
  %v2819 = vadd.f32 %v2742, %v2787
  %v2820 = vadd.f32 %v2743, %v2788
  %v2821 = vadd.f32 %v2744, %v2789
  %v2822 = vadd.f32 %v2745, %v2790
  %v2823 = vxor.u32 %v2807, 2147483648
  %v2824 = vxor.u32 %v2808, 2147483648
  %v2825 = vxor.u32 %v2809, 2147483648
  %v2826 = vxor.u32 %v2810, 2147483648
  %v2827 = vxor.u32 %v2811, 2147483648
  %v2828 = vxor.u32 %v2812, 2147483648
  %v2829 = vxor.u32 %v2813, 2147483648
  %v2830 = vxor.u32 %v2814, 2147483648
  %v2831 = vxor.u32 %v2815, 2147483648
  %v2832 = vxor.u32 %v2816, 2147483648
  %v2833 = vxor.u32 %v2817, 2147483648
  %v2834 = vxor.u32 %v2818, 2147483648
  %v2835 = vxor.u32 %v2819, 2147483648
  %v2836 = vxor.u32 %v2820, 2147483648
  %v2837 = vxor.u32 %v2821, 2147483648
  %v2838 = vxor.u32 %v2822, 2147483648
  %v2839 = vmul.f32 %v2823, 1.442695
  %v2840 = vpow.pop %v2839
  %v2841 = vmul.f32 %v2824, 1.442695
  %v2842 = vpow.pop %v2841
  %v2843 = vmul.f32 %v2825, 1.442695
  %v2844 = vpow.pop %v2843
  %v2845 = vmul.f32 %v2826, 1.442695
  %v2846 = vpow.pop %v2845
  %v2847 = vmul.f32 %v2827, 1.442695
  %v2848 = vpow.pop %v2847
  %v2849 = vmul.f32 %v2828, 1.442695
  %v2850 = vpow.pop %v2849
  %v2851 = vmul.f32 %v2829, 1.442695
  %v2852 = vpow.pop %v2851
  %v2853 = vmul.f32 %v2830, 1.442695
  %v2854 = vpow.pop %v2853
  %v2855 = vmul.f32 %v2831, 1.442695
  %v2856 = vpow.pop %v2855
  %v2857 = vmul.f32 %v2832, 1.442695
  %v2858 = vpow.pop %v2857
  %v2859 = vmul.f32 %v2833, 1.442695
  %v2860 = vpow.pop %v2859
  %v2861 = vmul.f32 %v2834, 1.442695
  %v2862 = vpow.pop %v2861
  %v2863 = vmul.f32 %v2835, 1.442695
  %v2864 = vpow.pop %v2863
  %v2865 = vmul.f32 %v2836, 1.442695
  %v2866 = vpow.pop %v2865
  %v2867 = vmul.f32 %v2837, 1.442695
  %v2868 = vpow.pop %v2867
  %v2869 = vmul.f32 %v2838, 1.442695
  %v2870 = vpow.pop %v2869
  %v2871 = vadd.f32 %v2840, 1.0
  %v2872 = vadd.f32 %v2842, 1.0
  %v2873 = vadd.f32 %v2844, 1.0
  %v2874 = vadd.f32 %v2846, 1.0
  %v2875 = vadd.f32 %v2848, 1.0
  %v2876 = vadd.f32 %v2850, 1.0
  %v2877 = vadd.f32 %v2852, 1.0
  %v2878 = vadd.f32 %v2854, 1.0
  %v2879 = vadd.f32 %v2856, 1.0
  %v2880 = vadd.f32 %v2858, 1.0
  %v2881 = vadd.f32 %v2860, 1.0
  %v2882 = vadd.f32 %v2862, 1.0
  %v2883 = vadd.f32 %v2864, 1.0
  %v2884 = vadd.f32 %v2866, 1.0
  %v2885 = vadd.f32 %v2868, 1.0
  %v2886 = vadd.f32 %v2870, 1.0
  %v2887 = vrcp.pop %v2871
  %v2888 = vmul.f32 %v2871, %v2887
  %v2889 = vsub.f32 1.0, %v2888
  %v2890 = vmul.f32 %v2887, %v2889
  %v2891 = vadd.f32 %v2887, %v2890
  %vm2892 = vweird.f32 %v2871
  %vm2893 = vweird.f32 %v2887
  %vm2894 = vmor %vm2892, %vm2893
  %v2895 = vsel %vm2894, %v2887, %v2891
  %v2896 = vand.u32 2147483647, %v2871
  %vm2897 = vcmp.eq.f32.partialorder %v2896, 8.507059e+37
  %v2898 = vand.u32 %v2871, 2147483648
  %v2899 = vor.u32 1.1754944e-38, %v2898
  %v2900 = vsel %vm2897, %v2899, %v2895
  %v2901 = vmul.f32 1.0, %v2900
  %v2902 = vrcp.pop %v2872
  %v2903 = vmul.f32 %v2872, %v2902
  %v2904 = vsub.f32 1.0, %v2903
  %v2905 = vmul.f32 %v2902, %v2904
  %v2906 = vadd.f32 %v2902, %v2905
  %vm2907 = vweird.f32 %v2872
  %vm2908 = vweird.f32 %v2902
  %vm2909 = vmor %vm2907, %vm2908
  %v2910 = vsel %vm2909, %v2902, %v2906
  %v2911 = vand.u32 2147483647, %v2872
  %vm2912 = vcmp.eq.f32.partialorder %v2911, 8.507059e+37
  %v2913 = vand.u32 %v2872, 2147483648
  %v2914 = vor.u32 1.1754944e-38, %v2913
  %v2915 = vsel %vm2912, %v2914, %v2910
  %v2916 = vmul.f32 1.0, %v2915
  %v2917 = vrcp.pop %v2873
  %v2918 = vmul.f32 %v2873, %v2917
  %v2919 = vsub.f32 1.0, %v2918
  %v2920 = vmul.f32 %v2917, %v2919
  %v2921 = vadd.f32 %v2917, %v2920
  %vm2922 = vweird.f32 %v2873
  %vm2923 = vweird.f32 %v2917
  %vm2924 = vmor %vm2922, %vm2923
  %v2925 = vsel %vm2924, %v2917, %v2921
  %v2926 = vand.u32 2147483647, %v2873
  %vm2927 = vcmp.eq.f32.partialorder %v2926, 8.507059e+37
  %v2928 = vand.u32 %v2873, 2147483648
  %v2929 = vor.u32 1.1754944e-38, %v2928
  %v2930 = vsel %vm2927, %v2929, %v2925
  %v2931 = vmul.f32 1.0, %v2930
  %v2932 = vrcp.pop %v2874
  %v2933 = vmul.f32 %v2874, %v2932
  %v2934 = vsub.f32 1.0, %v2933
  %v2935 = vmul.f32 %v2932, %v2934
  %v2936 = vadd.f32 %v2932, %v2935
  %vm2937 = vweird.f32 %v2874
  %vm2938 = vweird.f32 %v2932
  %vm2939 = vmor %vm2937, %vm2938
  %v2940 = vsel %vm2939, %v2932, %v2936
  %v2941 = vand.u32 2147483647, %v2874
  %vm2942 = vcmp.eq.f32.partialorder %v2941, 8.507059e+37
  %v2943 = vand.u32 %v2874, 2147483648
  %v2944 = vor.u32 1.1754944e-38, %v2943
  %v2945 = vsel %vm2942, %v2944, %v2940
  %v2946 = vmul.f32 1.0, %v2945
  %v2947 = vrcp.pop %v2875
  %v2948 = vmul.f32 %v2875, %v2947
  %v2949 = vsub.f32 1.0, %v2948
  %v2950 = vmul.f32 %v2947, %v2949
  %v2951 = vadd.f32 %v2947, %v2950
  %vm2952 = vweird.f32 %v2875
  %vm2953 = vweird.f32 %v2947
  %vm2954 = vmor %vm2952, %vm2953
  %v2955 = vsel %vm2954, %v2947, %v2951
  %v2956 = vand.u32 2147483647, %v2875
  %vm2957 = vcmp.eq.f32.partialorder %v2956, 8.507059e+37
  %v2958 = vand.u32 %v2875, 2147483648
  %v2959 = vor.u32 1.1754944e-38, %v2958
  %v2960 = vsel %vm2957, %v2959, %v2955
  %v2961 = vmul.f32 1.0, %v2960
  %v2962 = vrcp.pop %v2876
  %v2963 = vmul.f32 %v2876, %v2962
  %v2964 = vsub.f32 1.0, %v2963
  %v2965 = vmul.f32 %v2962, %v2964
  %v2966 = vadd.f32 %v2962, %v2965
  %vm2967 = vweird.f32 %v2876
  %vm2968 = vweird.f32 %v2962
  %vm2969 = vmor %vm2967, %vm2968
  %v2970 = vsel %vm2969, %v2962, %v2966
  %v2971 = vand.u32 2147483647, %v2876
  %vm2972 = vcmp.eq.f32.partialorder %v2971, 8.507059e+37
  %v2973 = vand.u32 %v2876, 2147483648
  %v2974 = vor.u32 1.1754944e-38, %v2973
  %v2975 = vsel %vm2972, %v2974, %v2970
  %v2976 = vmul.f32 1.0, %v2975
  %v2977 = vrcp.pop %v2877
  %v2978 = vmul.f32 %v2877, %v2977
  %v2979 = vsub.f32 1.0, %v2978
  %v2980 = vmul.f32 %v2977, %v2979
  %v2981 = vadd.f32 %v2977, %v2980
  %vm2982 = vweird.f32 %v2877
  %vm2983 = vweird.f32 %v2977
  %vm2984 = vmor %vm2982, %vm2983
  %v2985 = vsel %vm2984, %v2977, %v2981
  %v2986 = vand.u32 2147483647, %v2877
  %vm2987 = vcmp.eq.f32.partialorder %v2986, 8.507059e+37
  %v2988 = vand.u32 %v2877, 2147483648
  %v2989 = vor.u32 1.1754944e-38, %v2988
  %v2990 = vsel %vm2987, %v2989, %v2985
  %v2991 = vmul.f32 1.0, %v2990
  %v2992 = vrcp.pop %v2878
  %v2993 = vmul.f32 %v2878, %v2992
  %v2994 = vsub.f32 1.0, %v2993
  %v2995 = vmul.f32 %v2992, %v2994
  %v2996 = vadd.f32 %v2992, %v2995
  %vm2997 = vweird.f32 %v2878
  %vm2998 = vweird.f32 %v2992
  %vm2999 = vmor %vm2997, %vm2998
  %v3000 = vsel %vm2999, %v2992, %v2996
  %v3001 = vand.u32 2147483647, %v2878
  %vm3002 = vcmp.eq.f32.partialorder %v3001, 8.507059e+37
  %v3003 = vand.u32 %v2878, 2147483648
  %v3004 = vor.u32 1.1754944e-38, %v3003
  %v3005 = vsel %vm3002, %v3004, %v3000
  %v3006 = vmul.f32 1.0, %v3005
  %v3007 = vrcp.pop %v2879
  %v3008 = vmul.f32 %v2879, %v3007
  %v3009 = vsub.f32 1.0, %v3008
  %v3010 = vmul.f32 %v3007, %v3009
  %v3011 = vadd.f32 %v3007, %v3010
  %vm3012 = vweird.f32 %v2879
  %vm3013 = vweird.f32 %v3007
  %vm3014 = vmor %vm3012, %vm3013
  %v3015 = vsel %vm3014, %v3007, %v3011
  %v3016 = vand.u32 2147483647, %v2879
  %vm3017 = vcmp.eq.f32.partialorder %v3016, 8.507059e+37
  %v3018 = vand.u32 %v2879, 2147483648
  %v3019 = vor.u32 1.1754944e-38, %v3018
  %v3020 = vsel %vm3017, %v3019, %v3015
  %v3021 = vmul.f32 1.0, %v3020
  %v3022 = vrcp.pop %v2880
  %v3023 = vmul.f32 %v2880, %v3022
  %v3024 = vsub.f32 1.0, %v3023
  %v3025 = vmul.f32 %v3022, %v3024
  %v3026 = vadd.f32 %v3022, %v3025
  %vm3027 = vweird.f32 %v2880
  %vm3028 = vweird.f32 %v3022
  %vm3029 = vmor %vm3027, %vm3028
  %v3030 = vsel %vm3029, %v3022, %v3026
  %v3031 = vand.u32 2147483647, %v2880
  %vm3032 = vcmp.eq.f32.partialorder %v3031, 8.507059e+37
  %v3033 = vand.u32 %v2880, 2147483648
  %v3034 = vor.u32 1.1754944e-38, %v3033
  %v3035 = vsel %vm3032, %v3034, %v3030
  %v3036 = vmul.f32 1.0, %v3035
  %v3037 = vrcp.pop %v2881
  %v3038 = vmul.f32 %v2881, %v3037
  %v3039 = vsub.f32 1.0, %v3038
  %v3040 = vmul.f32 %v3037, %v3039
  %v3041 = vadd.f32 %v3037, %v3040
  %vm3042 = vweird.f32 %v2881
  %vm3043 = vweird.f32 %v3037
  %vm3044 = vmor %vm3042, %vm3043
  %v3045 = vsel %vm3044, %v3037, %v3041
  %v3046 = vand.u32 2147483647, %v2881
  %vm3047 = vcmp.eq.f32.partialorder %v3046, 8.507059e+37
  %v3048 = vand.u32 %v2881, 2147483648
  %v3049 = vor.u32 1.1754944e-38, %v3048
  %v3050 = vsel %vm3047, %v3049, %v3045
  %v3051 = vmul.f32 1.0, %v3050
  %v3052 = vrcp.pop %v2882
  %v3053 = vmul.f32 %v2882, %v3052
  %v3054 = vsub.f32 1.0, %v3053
  %v3055 = vmul.f32 %v3052, %v3054
  %v3056 = vadd.f32 %v3052, %v3055
  %vm3057 = vweird.f32 %v2882
  %vm3058 = vweird.f32 %v3052
  %vm3059 = vmor %vm3057, %vm3058
  %v3060 = vsel %vm3059, %v3052, %v3056
  %v3061 = vand.u32 2147483647, %v2882
  %vm3062 = vcmp.eq.f32.partialorder %v3061, 8.507059e+37
  %v3063 = vand.u32 %v2882, 2147483648
  %v3064 = vor.u32 1.1754944e-38, %v3063
  %v3065 = vsel %vm3062, %v3064, %v3060
  %v3066 = vmul.f32 1.0, %v3065
  %v3067 = vrcp.pop %v2883
  %v3068 = vmul.f32 %v2883, %v3067
  %v3069 = vsub.f32 1.0, %v3068
  %v3070 = vmul.f32 %v3067, %v3069
  %v3071 = vadd.f32 %v3067, %v3070
  %vm3072 = vweird.f32 %v2883
  %vm3073 = vweird.f32 %v3067
  %vm3074 = vmor %vm3072, %vm3073
  %v3075 = vsel %vm3074, %v3067, %v3071
  %v3076 = vand.u32 2147483647, %v2883
  %vm3077 = vcmp.eq.f32.partialorder %v3076, 8.507059e+37
  %v3078 = vand.u32 %v2883, 2147483648
  %v3079 = vor.u32 1.1754944e-38, %v3078
  %v3080 = vsel %vm3077, %v3079, %v3075
  %v3081 = vmul.f32 1.0, %v3080
  %v3082 = vrcp.pop %v2884
  %v3083 = vmul.f32 %v2884, %v3082
  %v3084 = vsub.f32 1.0, %v3083
  %v3085 = vmul.f32 %v3082, %v3084
  %v3086 = vadd.f32 %v3082, %v3085
  %vm3087 = vweird.f32 %v2884
  %vm3088 = vweird.f32 %v3082
  %vm3089 = vmor %vm3087, %vm3088
  %v3090 = vsel %vm3089, %v3082, %v3086
  %v3091 = vand.u32 2147483647, %v2884
  %vm3092 = vcmp.eq.f32.partialorder %v3091, 8.507059e+37
  %v3093 = vand.u32 %v2884, 2147483648
  %v3094 = vor.u32 1.1754944e-38, %v3093
  %v3095 = vsel %vm3092, %v3094, %v3090
  %v3096 = vmul.f32 1.0, %v3095
  %v3097 = vrcp.pop %v2885
  %v3098 = vmul.f32 %v2885, %v3097
  %v3099 = vsub.f32 1.0, %v3098
  %v3100 = vmul.f32 %v3097, %v3099
  %v3101 = vadd.f32 %v3097, %v3100
  %vm3102 = vweird.f32 %v2885
  %vm3103 = vweird.f32 %v3097
  %vm3104 = vmor %vm3102, %vm3103
  %v3105 = vsel %vm3104, %v3097, %v3101
  %v3106 = vand.u32 2147483647, %v2885
  %vm3107 = vcmp.eq.f32.partialorder %v3106, 8.507059e+37
  %v3108 = vand.u32 %v2885, 2147483648
  %v3109 = vor.u32 1.1754944e-38, %v3108
  %v3110 = vsel %vm3107, %v3109, %v3105
  %v3111 = vmul.f32 1.0, %v3110
  %v3112 = vrcp.pop %v2886
  %v3113 = vmul.f32 %v2886, %v3112
  %v3114 = vsub.f32 1.0, %v3113
  %v3115 = vmul.f32 %v3112, %v3114
  %v3116 = vadd.f32 %v3112, %v3115
  %vm3117 = vweird.f32 %v2886
  %vm3118 = vweird.f32 %v3112
  %vm3119 = vmor %vm3117, %vm3118
  %v3120 = vsel %vm3119, %v3112, %v3116
  %v3121 = vand.u32 2147483647, %v2886
  %vm3122 = vcmp.eq.f32.partialorder %v3121, 8.507059e+37
  %v3123 = vand.u32 %v2886, 2147483648
  %v3124 = vor.u32 1.1754944e-38, %v3123
  %v3125 = vsel %vm3122, %v3124, %v3120
  %v3126 = vmul.f32 1.0, %v3125
  %3127 = vrot.lane.b32.xlu0 %v2770, 64
  %v3128 = vpop.permute.xlu0 %3127
  %3129 = vrot.lane.b32.xlu0 %v2777, 64
  %v3130 = vpop.permute.xlu0 %3129
  %3131 = vrot.lane.b32.xlu0 %v2778, 64
  %v3132 = vpop.permute.xlu0 %3131
  %3133 = vrot.lane.b32.xlu0 %v2779, 64
  %v3134 = vpop.permute.xlu0 %3133
  %3135 = vrot.lane.b32.xlu0 %v2780, 64
  %v3136 = vpop.permute.xlu0 %3135
  %3137 = vrot.lane.b32.xlu0 %v2781, 64
  %v3138 = vpop.permute.xlu0 %3137
  %3139 = vrot.lane.b32.xlu0 %v2782, 64
  %v3140 = vpop.permute.xlu0 %3139
  %3141 = vrot.lane.b32.xlu0 %v2783, 64
  %v3142 = vpop.permute.xlu0 %3141
  %3143 = vrot.lane.b32.xlu0 %v2773, 64
  %v3144 = vpop.permute.xlu0 %3143
  %3145 = vrot.lane.b32.xlu0 %v2784, 64
  %v3146 = vpop.permute.xlu0 %3145
  %3147 = vrot.lane.b32.xlu0 %v2785, 64
  %v3148 = vpop.permute.xlu0 %3147
  %3149 = vrot.lane.b32.xlu0 %v2786, 64
  %v3150 = vpop.permute.xlu0 %3149
  %3151 = vrot.lane.b32.xlu0 %v2787, 64
  %v3152 = vpop.permute.xlu0 %3151
  %3153 = vrot.lane.b32.xlu0 %v2788, 64
  %v3154 = vpop.permute.xlu0 %3153
  %3155 = vrot.lane.b32.xlu0 %v2789, 64
  %v3156 = vpop.permute.xlu0 %3155
  %3157 = vrot.lane.b32.xlu0 %v2790, 64
  %v3158 = vpop.permute.xlu0 %3157
  %v3175 = vmul.f32 %v2901, %v3128
  %v3176 = vmul.f32 %v2916, %v3130
  %v3177 = vmul.f32 %v2931, %v3132
  %v3178 = vmul.f32 %v2946, %v3134
  %v3179 = vmul.f32 %v2961, %v3136
  %v3180 = vmul.f32 %v2976, %v3138
  %v3181 = vmul.f32 %v2991, %v3140
  %v3182 = vmul.f32 %v3006, %v3142
  %v3183 = vmul.f32 %v3021, %v3144
  %v3184 = vmul.f32 %v3036, %v3146
  %v3185 = vmul.f32 %v3051, %v3148
  %v3186 = vmul.f32 %v3066, %v3150
  %v3187 = vmul.f32 %v3081, %v3152
  %v3188 = vmul.f32 %v3096, %v3154
  %v3189 = vmul.f32 %v3111, %v3156
  %v3190 = vmul.f32 %v3126, %v3158
  %3207 = vrot.lane.b32.xlu0 %v3175, 64
  %v3208 = vpop.permute.xlu0 %3207
  %3209 = vrot.lane.b32.xlu0 %v3176, 64
  %v3210 = vpop.permute.xlu0 %3209
  %3211 = vrot.lane.b32.xlu0 %v3177, 64
  %v3212 = vpop.permute.xlu0 %3211
  %3213 = vrot.lane.b32.xlu0 %v3178, 64
  %v3214 = vpop.permute.xlu0 %3213
  %3215 = vrot.lane.b32.xlu0 %v3179, 64
  %v3216 = vpop.permute.xlu0 %3215
  %3217 = vrot.lane.b32.xlu0 %v3180, 64
  %v3218 = vpop.permute.xlu0 %3217
  %3219 = vrot.lane.b32.xlu0 %v3181, 64
  %v3220 = vpop.permute.xlu0 %3219
  %3221 = vrot.lane.b32.xlu0 %v3182, 64
  %v3222 = vpop.permute.xlu0 %3221
  %3223 = vrot.lane.b32.xlu0 %v3183, 64
  %v3224 = vpop.permute.xlu0 %3223
  %3225 = vrot.lane.b32.xlu0 %v3184, 64
  %v3226 = vpop.permute.xlu0 %3225
  %3227 = vrot.lane.b32.xlu0 %v3185, 64
  %v3228 = vpop.permute.xlu0 %3227
  %3229 = vrot.lane.b32.xlu0 %v3186, 64
  %v3230 = vpop.permute.xlu0 %3229
  %3231 = vrot.lane.b32.xlu0 %v3187, 64
  %v3232 = vpop.permute.xlu0 %3231
  %3233 = vrot.lane.b32.xlu0 %v3188, 64
  %v3234 = vpop.permute.xlu0 %3233
  %3235 = vrot.lane.b32.xlu0 %v3189, 64
  %v3236 = vpop.permute.xlu0 %3235
  %3237 = vrot.lane.b32.xlu0 %v3190, 64
  %v3238 = vpop.permute.xlu0 %3237
  %v3255 = vadd.f32 %v2730, %v3208
  %v3256 = vadd.f32 %v2731, %v3210
  %v3257 = vadd.f32 %v2732, %v3212
  %v3258 = vadd.f32 %v2733, %v3214
  %v3259 = vadd.f32 %v2734, %v3216
  %v3260 = vadd.f32 %v2735, %v3218
  %v3261 = vadd.f32 %v2736, %v3220
  %v3262 = vadd.f32 %v2737, %v3222
  %v3263 = vadd.f32 %v2738, %v3224
  %v3264 = vadd.f32 %v2739, %v3226
  %v3265 = vadd.f32 %v2740, %v3228
  %v3266 = vadd.f32 %v2741, %v3230
  %v3267 = vadd.f32 %v2742, %v3232
  %v3268 = vadd.f32 %v2743, %v3234
  %v3269 = vadd.f32 %v2744, %v3236
  %v3270 = vadd.f32 %v2745, %v3238
  %v3271 = vtanh.pop %v3255
  %v3272 = vtanh.pop %v3256
  %v3273 = vtanh.pop %v3257
  %v3274 = vtanh.pop %v3258
  %v3275 = vtanh.pop %v3259
  %v3276 = vtanh.pop %v3260
  %v3277 = vtanh.pop %v3261
  %v3278 = vtanh.pop %v3262
  %v3279 = vtanh.pop %v3263
  %v3280 = vtanh.pop %v3264
  %v3281 = vtanh.pop %v3265
  %v3282 = vtanh.pop %v3266
  %v3283 = vtanh.pop %v3267
  %v3284 = vtanh.pop %v3268
  %v3285 = vtanh.pop %v3269
  %v3286 = vtanh.pop %v3270
  %v3287 = vsub.f32 1.0, %v2901
  %v3288 = vsub.f32 1.0, %v2916
  %v3289 = vsub.f32 1.0, %v2931
  %v3290 = vsub.f32 1.0, %v2946
  %v3291 = vsub.f32 1.0, %v2961
  %v3292 = vsub.f32 1.0, %v2976
  %v3293 = vsub.f32 1.0, %v2991
  %v3294 = vsub.f32 1.0, %v3006
  %v3295 = vsub.f32 1.0, %v3021
  %v3296 = vsub.f32 1.0, %v3036
  %v3297 = vsub.f32 1.0, %v3051
  %v3298 = vsub.f32 1.0, %v3066
  %v3299 = vsub.f32 1.0, %v3081
  %v3300 = vsub.f32 1.0, %v3096
  %v3301 = vsub.f32 1.0, %v3111
  %v3302 = vsub.f32 1.0, %v3126
  %3319 = vrot.lane.b32.xlu0 %v3271, 96
  %v3320 = vpop.permute.xlu0 %3319
  %3321 = vrot.lane.b32.xlu0 %v3272, 96
  %v3322 = vpop.permute.xlu0 %3321
  %3323 = vrot.lane.b32.xlu0 %v3273, 96
  %v3324 = vpop.permute.xlu0 %3323
  %3325 = vrot.lane.b32.xlu0 %v3274, 96
  %v3326 = vpop.permute.xlu0 %3325
  %3327 = vrot.lane.b32.xlu0 %v3275, 96
  %v3328 = vpop.permute.xlu0 %3327
  %3329 = vrot.lane.b32.xlu0 %v3276, 96
  %v3330 = vpop.permute.xlu0 %3329
  %3331 = vrot.lane.b32.xlu0 %v3277, 96
  %v3332 = vpop.permute.xlu0 %3331
  %3333 = vrot.lane.b32.xlu0 %v3278, 96
  %v3334 = vpop.permute.xlu0 %3333
  %3335 = vrot.lane.b32.xlu0 %v3279, 96
  %v3336 = vpop.permute.xlu0 %3335
  %3337 = vrot.lane.b32.xlu0 %v3280, 96
  %v3338 = vpop.permute.xlu0 %3337
  %3339 = vrot.lane.b32.xlu0 %v3281, 96
  %v3340 = vpop.permute.xlu0 %3339
  %3341 = vrot.lane.b32.xlu0 %v3282, 96
  %v3342 = vpop.permute.xlu0 %3341
  %3343 = vrot.lane.b32.xlu0 %v3283, 96
  %v3344 = vpop.permute.xlu0 %3343
  %3345 = vrot.lane.b32.xlu0 %v3284, 96
  %v3346 = vpop.permute.xlu0 %3345
  %3347 = vrot.lane.b32.xlu0 %v3285, 96
  %v3348 = vpop.permute.xlu0 %3347
  %3349 = vrot.lane.b32.xlu0 %v3286, 96
  %v3350 = vpop.permute.xlu0 %3349
  %v3367 = vmul.f32 %v3287, %v3320
  %v3368 = vmul.f32 %v3288, %v3322
  %v3369 = vmul.f32 %v3289, %v3324
  %v3370 = vmul.f32 %v3290, %v3326
  %v3371 = vmul.f32 %v3291, %v3328
  %v3372 = vmul.f32 %v3292, %v3330
  %v3373 = vmul.f32 %v3293, %v3332
  %v3374 = vmul.f32 %v3294, %v3334
  %v3375 = vmul.f32 %v3295, %v3336
  %v3376 = vmul.f32 %v3296, %v3338
  %v3377 = vmul.f32 %v3297, %v3340
  %v3378 = vmul.f32 %v3298, %v3342
  %v3379 = vmul.f32 %v3299, %v3344
  %v3380 = vmul.f32 %v3300, %v3346
  %v3381 = vmul.f32 %v3301, %v3348
  %v3382 = vmul.f32 %v3302, %v3350
  %v3383 = vrot.slane %v2728, 1
  %v3384 = vrot.slane %v2728, 2
  %v3385 = vrot.slane %v2728, 3
  %v3386 = vrot.slane %v2728, 4
  %v3387 = vrot.slane %v2728, 5
  %v3388 = vrot.slane %v2728, 6
  %v3389 = vrot.slane %v2728, 7
  %v3390 = vrot.slane %v2729, 1
  %v3391 = vrot.slane %v2729, 2
  %v3392 = vrot.slane %v2729, 3
  %v3393 = vrot.slane %v2729, 4
  %v3394 = vrot.slane %v2729, 5
  %v3395 = vrot.slane %v2729, 6
  %v3396 = vrot.slane %v2729, 7
  %3397 = vrot.lane.b32.xlu0 %v2728, 32
  %v3398 = vpop.permute.xlu0 %3397
  %3399 = vrot.lane.b32.xlu0 %v3383, 32
  %v3400 = vpop.permute.xlu0 %3399
  %3401 = vrot.lane.b32.xlu0 %v3384, 32
  %v3402 = vpop.permute.xlu0 %3401
  %3403 = vrot.lane.b32.xlu0 %v3385, 32
  %v3404 = vpop.permute.xlu0 %3403
  %3405 = vrot.lane.b32.xlu0 %v3386, 32
  %v3406 = vpop.permute.xlu0 %3405
  %3407 = vrot.lane.b32.xlu0 %v3387, 32
  %v3408 = vpop.permute.xlu0 %3407
  %3409 = vrot.lane.b32.xlu0 %v3388, 32
  %v3410 = vpop.permute.xlu0 %3409
  %3411 = vrot.lane.b32.xlu0 %v3389, 32
  %v3412 = vpop.permute.xlu0 %3411
  %3413 = vrot.lane.b32.xlu0 %v2729, 32
  %v3414 = vpop.permute.xlu0 %3413
  %3415 = vrot.lane.b32.xlu0 %v3390, 32
  %v3416 = vpop.permute.xlu0 %3415
  %3417 = vrot.lane.b32.xlu0 %v3391, 32
  %v3418 = vpop.permute.xlu0 %3417
  %3419 = vrot.lane.b32.xlu0 %v3392, 32
  %v3420 = vpop.permute.xlu0 %3419
  %3421 = vrot.lane.b32.xlu0 %v3393, 32
  %v3422 = vpop.permute.xlu0 %3421
  %3423 = vrot.lane.b32.xlu0 %v3394, 32
  %v3424 = vpop.permute.xlu0 %3423
  %3425 = vrot.lane.b32.xlu0 %v3395, 32
  %v3426 = vpop.permute.xlu0 %3425
  %3427 = vrot.lane.b32.xlu0 %v3396, 32
  %v3428 = vpop.permute.xlu0 %3427
  %v3445 = vmul.f32 %v2901, %v3398
  %v3446 = vmul.f32 %v2916, %v3400
  %v3447 = vmul.f32 %v2931, %v3402
  %v3448 = vmul.f32 %v2946, %v3404
  %v3449 = vmul.f32 %v2961, %v3406
  %v3450 = vmul.f32 %v2976, %v3408
  %v3451 = vmul.f32 %v2991, %v3410
  %v3452 = vmul.f32 %v3006, %v3412
  %v3453 = vmul.f32 %v3021, %v3414
  %v3454 = vmul.f32 %v3036, %v3416
  %v3455 = vmul.f32 %v3051, %v3418
  %v3456 = vmul.f32 %v3066, %v3420
  %v3457 = vmul.f32 %v3081, %v3422
  %v3458 = vmul.f32 %v3096, %v3424
  %v3459 = vmul.f32 %v3111, %v3426
  %v3460 = vmul.f32 %v3126, %v3428
  %v3461 = vadd.f32 %v3367, %v3445
  %v3462 = vadd.f32 %v3368, %v3446
  %v3463 = vadd.f32 %v3369, %v3447
  %v3464 = vadd.f32 %v3370, %v3448
  %v3465 = vadd.f32 %v3371, %v3449
  %v3466 = vadd.f32 %v3372, %v3450
  %v3467 = vadd.f32 %v3373, %v3451
  %v3468 = vadd.f32 %v3374, %v3452
  %v3469 = vadd.f32 %v3375, %v3453
  %v3470 = vadd.f32 %v3376, %v3454
  %v3471 = vadd.f32 %v3377, %v3455
  %v3472 = vadd.f32 %v3378, %v3456
  %v3473 = vadd.f32 %v3379, %v3457
  %v3474 = vadd.f32 %v3380, %v3458
  %v3475 = vadd.f32 %v3381, %v3459
  %v3476 = vadd.f32 %v3382, %v3460
  %3477 = vset.pattern.permute.xlu0 3
  %3478 = vperm.xlu0 %3477, %v710
  %v3479 = vpop.permute.xlu0 %3478
  %3480 = vset.pattern.permute.xlu0 3
  %3481 = vperm.xlu0 %3480, %v711
  %v3482 = vpop.permute.xlu0 %3481
  %v3483 = vrot.slane %v3479, 1
  %v3484 = vrot.slane %v3479, 2
  %v3485 = vrot.slane %v3479, 3
  %v3486 = vrot.slane %v3479, 4
  %v3487 = vrot.slane %v3479, 5
  %v3488 = vrot.slane %v3479, 6
  %v3489 = vrot.slane %v3479, 7
  %v3490 = vrot.slane %v3482, 1
  %v3491 = vrot.slane %v3482, 2
  %v3492 = vrot.slane %v3482, 3
  %v3493 = vrot.slane %v3482, 4
  %v3494 = vrot.slane %v3482, 5
  %v3495 = vrot.slane %v3482, 6
  %v3496 = vrot.slane %v3482, 7
  %v3513 = vmul.f32 %v3461, %v3479
  %v3514 = vmul.f32 %v3462, %v3483
  %v3515 = vmul.f32 %v3463, %v3484
  %v3516 = vmul.f32 %v3464, %v3485
  %v3517 = vmul.f32 %v3465, %v3486
  %v3518 = vmul.f32 %v3466, %v3487
  %v3519 = vmul.f32 %v3467, %v3488
  %v3520 = vmul.f32 %v3468, %v3489
  %v3521 = vmul.f32 %v3469, %v3482
  %v3522 = vmul.f32 %v3470, %v3490
  %v3523 = vmul.f32 %v3471, %v3491
  %v3524 = vmul.f32 %v3472, %v3492
  %v3525 = vmul.f32 %v3473, %v3493
  %v3526 = vmul.f32 %v3474, %v3494
  %v3527 = vmul.f32 %v3475, %v3495
  %v3528 = vmul.f32 %v3476, %v3496
  %3529 = vset.pattern.permute.xlu0 4
  %3530 = vperm.xlu0 %3529, %v710
  %v3531 = vpop.permute.xlu0 %3530
  %3532 = vset.pattern.permute.xlu0 4
  %3533 = vperm.xlu0 %3532, %v711
  %v3534 = vpop.permute.xlu0 %3533
  %v3535 = vrot.slane %v3531, 1
  %v3536 = vrot.slane %v3531, 2
  %v3537 = vrot.slane %v3531, 3
  %v3538 = vrot.slane %v3531, 4
  %v3539 = vrot.slane %v3531, 5
  %v3540 = vrot.slane %v3531, 6
  %v3541 = vrot.slane %v3531, 7
  %v3542 = vrot.slane %v3534, 1
  %v3543 = vrot.slane %v3534, 2
  %v3544 = vrot.slane %v3534, 3
  %v3545 = vrot.slane %v3534, 4
  %v3546 = vrot.slane %v3534, 5
  %v3547 = vrot.slane %v3534, 6
  %v3548 = vrot.slane %v3534, 7
  %v3565 = vmul.f32 %v3461, %v3531
  %v3566 = vmul.f32 %v3462, %v3535
  %v3567 = vmul.f32 %v3463, %v3536
  %v3568 = vmul.f32 %v3464, %v3537
  %v3569 = vmul.f32 %v3465, %v3538
  %v3570 = vmul.f32 %v3466, %v3539
  %v3571 = vmul.f32 %v3467, %v3540
  %v3572 = vmul.f32 %v3468, %v3541
  %v3573 = vmul.f32 %v3469, %v3534
  %v3574 = vmul.f32 %v3470, %v3542
  %v3575 = vmul.f32 %v3471, %v3543
  %v3576 = vmul.f32 %v3472, %v3544
  %v3577 = vmul.f32 %v3473, %v3545
  %v3578 = vmul.f32 %v3474, %v3546
  %v3579 = vmul.f32 %v3475, %v3547
  %v3580 = vmul.f32 %v3476, %v3548
  %v3581 = vsel %vm820, %v3479, %v3531
  %v3582 = vsel %vm820, %v3482, %v3534
  %v3583 = vsub.f32 %v3461, %v3398
  %v3584 = vsub.f32 %v3462, %v3400
  %v3585 = vsub.f32 %v3463, %v3402
  %v3586 = vsub.f32 %v3464, %v3404
  %v3587 = vsub.f32 %v3465, %v3406
  %v3588 = vsub.f32 %v3466, %v3408
  %v3589 = vsub.f32 %v3467, %v3410
  %v3590 = vsub.f32 %v3468, %v3412
  %v3591 = vsub.f32 %v3469, %v3414
  %v3592 = vsub.f32 %v3470, %v3416
  %v3593 = vsub.f32 %v3471, %v3418
  %v3594 = vsub.f32 %v3472, %v3420
  %v3595 = vsub.f32 %v3473, %v3422
  %v3596 = vsub.f32 %v3474, %v3424
  %v3597 = vsub.f32 %v3475, %v3426
  %v3598 = vsub.f32 %v3476, %v3428
  %v3615 = vrot.slane %v3584, 7
  %v3616 = vsel %vm840, %v3615, %v3583
  %v3617 = vrot.slane %v3585, 6
  %v3618 = vsel %vm843, %v3617, %v3616
  %v3619 = vrot.slane %v3586, 5
  %v3620 = vsel %vm846, %v3619, %v3618
  %v3621 = vrot.slane %v3587, 4
  %v3622 = vsel %vm849, %v3621, %v3620
  %v3623 = vrot.slane %v3588, 3
  %v3624 = vsel %vm852, %v3623, %v3622
  %v3625 = vrot.slane %v3589, 2
  %v3626 = vsel %vm855, %v3625, %v3624
  %v3627 = vrot.slane %v3590, 1
  %v3628 = vsel %vm858, %v3627, %v3626
  %v3629 = vrot.slane %v3592, 7
  %v3630 = vsel %vm840, %v3629, %v3591
  %v3631 = vrot.slane %v3593, 6
  %v3632 = vsel %vm843, %v3631, %v3630
  %v3633 = vrot.slane %v3594, 5
  %v3634 = vsel %vm846, %v3633, %v3632
  %v3635 = vrot.slane %v3595, 4
  %v3636 = vsel %vm849, %v3635, %v3634
  %v3637 = vrot.slane %v3596, 3
  %v3638 = vsel %vm852, %v3637, %v3636
  %v3639 = vrot.slane %v3597, 2
  %v3640 = vsel %vm855, %v3639, %v3638
  %v3641 = vrot.slane %v3598, 1
  %v3642 = vsel %vm858, %v3641, %v3640
  %3643 = vrot.lane.b32.xlu0 %v3628, 96
  %v3644 = vpop.permute.xlu0 %3643
  %3645 = vrot.lane.b32.xlu0 %v3642, 96
  %v3646 = vpop.permute.xlu0 %3645
  %v3649 = vmul.f32 %v3581, %v3644
  %v3650 = vmul.f32 %v3582, %v3646
  %v3651 = vadd.f32 %v2728, %v3649
  %v3652 = vadd.f32 %v2729, %v3650
  %v3653 = vld [vmem:[%s0 + $0x4] sm:$0x1]
  %v3654 = vld [vmem:[%s0 + $0xc] sm:$0x1]
  %v3655 = vld [vmem:[%s0 + $0x14] sm:$0x1]
  %v3656 = vld [vmem:[%s0 + $0x1c] sm:$0x1]
  %v3657 = vld [vmem:[%s0 + $0x24] sm:$0x1]
  %v3658 = vld [vmem:[%s0 + $0x2c] sm:$0x1]
  %v3659 = vld [vmem:[%s0 + $0x34] sm:$0x1]
  %v3660 = vld [vmem:[%s0 + $0x3c] sm:$0x1]
  %v3661 = vld [vmem:[%s0 + $0x44] sm:$0x1]
  %v3662 = vld [vmem:[%s0 + $0x4c] sm:$0x1]
  %v3663 = vld [vmem:[%s0 + $0x54] sm:$0x1]
  %v3664 = vld [vmem:[%s0 + $0x5c] sm:$0x1]
  %v3665 = vld [vmem:[%s0 + $0x64] sm:$0x1]
  %v3666 = vld [vmem:[%s0 + $0x6c] sm:$0x1]
  %v3667 = vld [vmem:[%s0 + $0x74] sm:$0x1]
  %v3668 = vld [vmem:[%s0 + $0x7c] sm:$0x1]
  %v3670 = vsel %vm43, %v3651, 0
  %v3673 = vsel %vm43, %v3652, 0
  %3675 = vmatpush.msra.mxu0 0.0
  %3676 = vmatpush.msra.mxu0 0.0
  %3677 = vmatpush.msra.mxu0 0.0
  %3678 = vmatpush.msra.mxu0 0.0
  %3679 = vmatpush.msra.mxu0 0.0
  %3680 = vmatpush.msra.mxu0 0.0
  %3681 = vmatpush.msra.mxu0 0.0
  %3682 = vmatpush.msra.mxu0 0.0
  %3683 = vmatpush.msra.mxu0 0.0
  %3684 = vmatpush.msra.mxu0 0.0
  %3685 = vmatpush.msra.mxu0 0.0
  %3686 = vmatpush.msra.mxu0 0.0
  %3687 = vmatpush.msra.mxu0 %v20
  %3688 = vmatpush.msra.mxu0 %v19
  %3689 = vmatpush.msra.mxu0 %v18
  %3690 = vmatpush.msra.mxu0 %v17
  %3691 = vmatmul.f32.gmra.mxu0 %v3670
  %v3692 = vpop.f32.mrf.mxu0
  %v3693 = vadd.f32 %v23, %v3692
  %3694 = vmatmul.f32.gmra.mxu0 %v3673
  %v3695 = vpop.f32.mrf.mxu0
  %v3696 = vadd.f32 %v23, %v3695
  %3697 = vdwg.mxu0
  %v3700 = vrot.slane %v3693, 1
  %v3701 = vrot.slane %v3693, 2
  %v3702 = vrot.slane %v3693, 3
  %v3703 = vrot.slane %v3693, 4
  %v3704 = vrot.slane %v3693, 5
  %v3705 = vrot.slane %v3693, 6
  %v3706 = vrot.slane %v3693, 7
  %v3707 = vrot.slane %v3696, 1
  %v3708 = vrot.slane %v3696, 2
  %v3709 = vrot.slane %v3696, 3
  %v3710 = vrot.slane %v3696, 4
  %v3711 = vrot.slane %v3696, 5
  %v3712 = vrot.slane %v3696, 6
  %v3713 = vrot.slane %v3696, 7
  %v3730 = vadd.f32 %v3653, %v3693
  %v3731 = vadd.f32 %v3654, %v3700
  %v3732 = vadd.f32 %v3655, %v3701
  %v3733 = vadd.f32 %v3656, %v3702
  %v3734 = vadd.f32 %v3657, %v3703
  %v3735 = vadd.f32 %v3658, %v3704
  %v3736 = vadd.f32 %v3659, %v3705
  %v3737 = vadd.f32 %v3660, %v3706
  %v3738 = vadd.f32 %v3661, %v3696
  %v3739 = vadd.f32 %v3662, %v3707
  %v3740 = vadd.f32 %v3663, %v3708
  %v3741 = vadd.f32 %v3664, %v3709
  %v3742 = vadd.f32 %v3665, %v3710
  %v3743 = vadd.f32 %v3666, %v3711
  %v3744 = vadd.f32 %v3667, %v3712
  %v3745 = vadd.f32 %v3668, %v3713
  %v3746 = vxor.u32 %v3730, 2147483648
  %v3747 = vxor.u32 %v3731, 2147483648
  %v3748 = vxor.u32 %v3732, 2147483648
  %v3749 = vxor.u32 %v3733, 2147483648
  %v3750 = vxor.u32 %v3734, 2147483648
  %v3751 = vxor.u32 %v3735, 2147483648
  %v3752 = vxor.u32 %v3736, 2147483648
  %v3753 = vxor.u32 %v3737, 2147483648
  %v3754 = vxor.u32 %v3738, 2147483648
  %v3755 = vxor.u32 %v3739, 2147483648
  %v3756 = vxor.u32 %v3740, 2147483648
  %v3757 = vxor.u32 %v3741, 2147483648
  %v3758 = vxor.u32 %v3742, 2147483648
  %v3759 = vxor.u32 %v3743, 2147483648
  %v3760 = vxor.u32 %v3744, 2147483648
  %v3761 = vxor.u32 %v3745, 2147483648
  %v3762 = vmul.f32 %v3746, 1.442695
  %v3763 = vpow.pop %v3762
  %v3764 = vmul.f32 %v3747, 1.442695
  %v3765 = vpow.pop %v3764
  %v3766 = vmul.f32 %v3748, 1.442695
  %v3767 = vpow.pop %v3766
  %v3768 = vmul.f32 %v3749, 1.442695
  %v3769 = vpow.pop %v3768
  %v3770 = vmul.f32 %v3750, 1.442695
  %v3771 = vpow.pop %v3770
  %v3772 = vmul.f32 %v3751, 1.442695
  %v3773 = vpow.pop %v3772
  %v3774 = vmul.f32 %v3752, 1.442695
  %v3775 = vpow.pop %v3774
  %v3776 = vmul.f32 %v3753, 1.442695
  %v3777 = vpow.pop %v3776
  %v3778 = vmul.f32 %v3754, 1.442695
  %v3779 = vpow.pop %v3778
  %v3780 = vmul.f32 %v3755, 1.442695
  %v3781 = vpow.pop %v3780
  %v3782 = vmul.f32 %v3756, 1.442695
  %v3783 = vpow.pop %v3782
  %v3784 = vmul.f32 %v3757, 1.442695
  %v3785 = vpow.pop %v3784
  %v3786 = vmul.f32 %v3758, 1.442695
  %v3787 = vpow.pop %v3786
  %v3788 = vmul.f32 %v3759, 1.442695
  %v3789 = vpow.pop %v3788
  %v3790 = vmul.f32 %v3760, 1.442695
  %v3791 = vpow.pop %v3790
  %v3792 = vmul.f32 %v3761, 1.442695
  %v3793 = vpow.pop %v3792
  %v3794 = vadd.f32 %v3763, 1.0
  %v3795 = vadd.f32 %v3765, 1.0
  %v3796 = vadd.f32 %v3767, 1.0
  %v3797 = vadd.f32 %v3769, 1.0
  %v3798 = vadd.f32 %v3771, 1.0
  %v3799 = vadd.f32 %v3773, 1.0
  %v3800 = vadd.f32 %v3775, 1.0
  %v3801 = vadd.f32 %v3777, 1.0
  %v3802 = vadd.f32 %v3779, 1.0
  %v3803 = vadd.f32 %v3781, 1.0
  %v3804 = vadd.f32 %v3783, 1.0
  %v3805 = vadd.f32 %v3785, 1.0
  %v3806 = vadd.f32 %v3787, 1.0
  %v3807 = vadd.f32 %v3789, 1.0
  %v3808 = vadd.f32 %v3791, 1.0
  %v3809 = vadd.f32 %v3793, 1.0
  %v3810 = vrcp.pop %v3794
  %v3811 = vmul.f32 %v3794, %v3810
  %v3812 = vsub.f32 1.0, %v3811
  %v3813 = vmul.f32 %v3810, %v3812
  %v3814 = vadd.f32 %v3810, %v3813
  %vm3815 = vweird.f32 %v3794
  %vm3816 = vweird.f32 %v3810
  %vm3817 = vmor %vm3815, %vm3816
  %v3818 = vsel %vm3817, %v3810, %v3814
  %v3819 = vand.u32 2147483647, %v3794
  %vm3820 = vcmp.eq.f32.partialorder %v3819, 8.507059e+37
  %v3821 = vand.u32 %v3794, 2147483648
  %v3822 = vor.u32 1.1754944e-38, %v3821
  %v3823 = vsel %vm3820, %v3822, %v3818
  %v3824 = vmul.f32 1.0, %v3823
  %v3825 = vrcp.pop %v3795
  %v3826 = vmul.f32 %v3795, %v3825
  %v3827 = vsub.f32 1.0, %v3826
  %v3828 = vmul.f32 %v3825, %v3827
  %v3829 = vadd.f32 %v3825, %v3828
  %vm3830 = vweird.f32 %v3795
  %vm3831 = vweird.f32 %v3825
  %vm3832 = vmor %vm3830, %vm3831
  %v3833 = vsel %vm3832, %v3825, %v3829
  %v3834 = vand.u32 2147483647, %v3795
  %vm3835 = vcmp.eq.f32.partialorder %v3834, 8.507059e+37
  %v3836 = vand.u32 %v3795, 2147483648
  %v3837 = vor.u32 1.1754944e-38, %v3836
  %v3838 = vsel %vm3835, %v3837, %v3833
  %v3839 = vmul.f32 1.0, %v3838
  %v3840 = vrcp.pop %v3796
  %v3841 = vmul.f32 %v3796, %v3840
  %v3842 = vsub.f32 1.0, %v3841
  %v3843 = vmul.f32 %v3840, %v3842
  %v3844 = vadd.f32 %v3840, %v3843
  %vm3845 = vweird.f32 %v3796
  %vm3846 = vweird.f32 %v3840
  %vm3847 = vmor %vm3845, %vm3846
  %v3848 = vsel %vm3847, %v3840, %v3844
  %v3849 = vand.u32 2147483647, %v3796
  %vm3850 = vcmp.eq.f32.partialorder %v3849, 8.507059e+37
  %v3851 = vand.u32 %v3796, 2147483648
  %v3852 = vor.u32 1.1754944e-38, %v3851
  %v3853 = vsel %vm3850, %v3852, %v3848
  %v3854 = vmul.f32 1.0, %v3853
  %v3855 = vrcp.pop %v3797
  %v3856 = vmul.f32 %v3797, %v3855
  %v3857 = vsub.f32 1.0, %v3856
  %v3858 = vmul.f32 %v3855, %v3857
  %v3859 = vadd.f32 %v3855, %v3858
  %vm3860 = vweird.f32 %v3797
  %vm3861 = vweird.f32 %v3855
  %vm3862 = vmor %vm3860, %vm3861
  %v3863 = vsel %vm3862, %v3855, %v3859
  %v3864 = vand.u32 2147483647, %v3797
  %vm3865 = vcmp.eq.f32.partialorder %v3864, 8.507059e+37
  %v3866 = vand.u32 %v3797, 2147483648
  %v3867 = vor.u32 1.1754944e-38, %v3866
  %v3868 = vsel %vm3865, %v3867, %v3863
  %v3869 = vmul.f32 1.0, %v3868
  %v3870 = vrcp.pop %v3798
  %v3871 = vmul.f32 %v3798, %v3870
  %v3872 = vsub.f32 1.0, %v3871
  %v3873 = vmul.f32 %v3870, %v3872
  %v3874 = vadd.f32 %v3870, %v3873
  %vm3875 = vweird.f32 %v3798
  %vm3876 = vweird.f32 %v3870
  %vm3877 = vmor %vm3875, %vm3876
  %v3878 = vsel %vm3877, %v3870, %v3874
  %v3879 = vand.u32 2147483647, %v3798
  %vm3880 = vcmp.eq.f32.partialorder %v3879, 8.507059e+37
  %v3881 = vand.u32 %v3798, 2147483648
  %v3882 = vor.u32 1.1754944e-38, %v3881
  %v3883 = vsel %vm3880, %v3882, %v3878
  %v3884 = vmul.f32 1.0, %v3883
  %v3885 = vrcp.pop %v3799
  %v3886 = vmul.f32 %v3799, %v3885
  %v3887 = vsub.f32 1.0, %v3886
  %v3888 = vmul.f32 %v3885, %v3887
  %v3889 = vadd.f32 %v3885, %v3888
  %vm3890 = vweird.f32 %v3799
  %vm3891 = vweird.f32 %v3885
  %vm3892 = vmor %vm3890, %vm3891
  %v3893 = vsel %vm3892, %v3885, %v3889
  %v3894 = vand.u32 2147483647, %v3799
  %vm3895 = vcmp.eq.f32.partialorder %v3894, 8.507059e+37
  %v3896 = vand.u32 %v3799, 2147483648
  %v3897 = vor.u32 1.1754944e-38, %v3896
  %v3898 = vsel %vm3895, %v3897, %v3893
  %v3899 = vmul.f32 1.0, %v3898
  %v3900 = vrcp.pop %v3800
  %v3901 = vmul.f32 %v3800, %v3900
  %v3902 = vsub.f32 1.0, %v3901
  %v3903 = vmul.f32 %v3900, %v3902
  %v3904 = vadd.f32 %v3900, %v3903
  %vm3905 = vweird.f32 %v3800
  %vm3906 = vweird.f32 %v3900
  %vm3907 = vmor %vm3905, %vm3906
  %v3908 = vsel %vm3907, %v3900, %v3904
  %v3909 = vand.u32 2147483647, %v3800
  %vm3910 = vcmp.eq.f32.partialorder %v3909, 8.507059e+37
  %v3911 = vand.u32 %v3800, 2147483648
  %v3912 = vor.u32 1.1754944e-38, %v3911
  %v3913 = vsel %vm3910, %v3912, %v3908
  %v3914 = vmul.f32 1.0, %v3913
  %v3915 = vrcp.pop %v3801
  %v3916 = vmul.f32 %v3801, %v3915
  %v3917 = vsub.f32 1.0, %v3916
  %v3918 = vmul.f32 %v3915, %v3917
  %v3919 = vadd.f32 %v3915, %v3918
  %vm3920 = vweird.f32 %v3801
  %vm3921 = vweird.f32 %v3915
  %vm3922 = vmor %vm3920, %vm3921
  %v3923 = vsel %vm3922, %v3915, %v3919
  %v3924 = vand.u32 2147483647, %v3801
  %vm3925 = vcmp.eq.f32.partialorder %v3924, 8.507059e+37
  %v3926 = vand.u32 %v3801, 2147483648
  %v3927 = vor.u32 1.1754944e-38, %v3926
  %v3928 = vsel %vm3925, %v3927, %v3923
  %v3929 = vmul.f32 1.0, %v3928
  %v3930 = vrcp.pop %v3802
  %v3931 = vmul.f32 %v3802, %v3930
  %v3932 = vsub.f32 1.0, %v3931
  %v3933 = vmul.f32 %v3930, %v3932
  %v3934 = vadd.f32 %v3930, %v3933
  %vm3935 = vweird.f32 %v3802
  %vm3936 = vweird.f32 %v3930
  %vm3937 = vmor %vm3935, %vm3936
  %v3938 = vsel %vm3937, %v3930, %v3934
  %v3939 = vand.u32 2147483647, %v3802
  %vm3940 = vcmp.eq.f32.partialorder %v3939, 8.507059e+37
  %v3941 = vand.u32 %v3802, 2147483648
  %v3942 = vor.u32 1.1754944e-38, %v3941
  %v3943 = vsel %vm3940, %v3942, %v3938
  %v3944 = vmul.f32 1.0, %v3943
  %v3945 = vrcp.pop %v3803
  %v3946 = vmul.f32 %v3803, %v3945
  %v3947 = vsub.f32 1.0, %v3946
  %v3948 = vmul.f32 %v3945, %v3947
  %v3949 = vadd.f32 %v3945, %v3948
  %vm3950 = vweird.f32 %v3803
  %vm3951 = vweird.f32 %v3945
  %vm3952 = vmor %vm3950, %vm3951
  %v3953 = vsel %vm3952, %v3945, %v3949
  %v3954 = vand.u32 2147483647, %v3803
  %vm3955 = vcmp.eq.f32.partialorder %v3954, 8.507059e+37
  %v3956 = vand.u32 %v3803, 2147483648
  %v3957 = vor.u32 1.1754944e-38, %v3956
  %v3958 = vsel %vm3955, %v3957, %v3953
  %v3959 = vmul.f32 1.0, %v3958
  %v3960 = vrcp.pop %v3804
  %v3961 = vmul.f32 %v3804, %v3960
  %v3962 = vsub.f32 1.0, %v3961
  %v3963 = vmul.f32 %v3960, %v3962
  %v3964 = vadd.f32 %v3960, %v3963
  %vm3965 = vweird.f32 %v3804
  %vm3966 = vweird.f32 %v3960
  %vm3967 = vmor %vm3965, %vm3966
  %v3968 = vsel %vm3967, %v3960, %v3964
  %v3969 = vand.u32 2147483647, %v3804
  %vm3970 = vcmp.eq.f32.partialorder %v3969, 8.507059e+37
  %v3971 = vand.u32 %v3804, 2147483648
  %v3972 = vor.u32 1.1754944e-38, %v3971
  %v3973 = vsel %vm3970, %v3972, %v3968
  %v3974 = vmul.f32 1.0, %v3973
  %v3975 = vrcp.pop %v3805
  %v3976 = vmul.f32 %v3805, %v3975
  %v3977 = vsub.f32 1.0, %v3976
  %v3978 = vmul.f32 %v3975, %v3977
  %v3979 = vadd.f32 %v3975, %v3978
  %vm3980 = vweird.f32 %v3805
  %vm3981 = vweird.f32 %v3975
  %vm3982 = vmor %vm3980, %vm3981
  %v3983 = vsel %vm3982, %v3975, %v3979
  %v3984 = vand.u32 2147483647, %v3805
  %vm3985 = vcmp.eq.f32.partialorder %v3984, 8.507059e+37
  %v3986 = vand.u32 %v3805, 2147483648
  %v3987 = vor.u32 1.1754944e-38, %v3986
  %v3988 = vsel %vm3985, %v3987, %v3983
  %v3989 = vmul.f32 1.0, %v3988
  %v3990 = vrcp.pop %v3806
  %v3991 = vmul.f32 %v3806, %v3990
  %v3992 = vsub.f32 1.0, %v3991
  %v3993 = vmul.f32 %v3990, %v3992
  %v3994 = vadd.f32 %v3990, %v3993
  %vm3995 = vweird.f32 %v3806
  %vm3996 = vweird.f32 %v3990
  %vm3997 = vmor %vm3995, %vm3996
  %v3998 = vsel %vm3997, %v3990, %v3994
  %v3999 = vand.u32 2147483647, %v3806
  %vm4000 = vcmp.eq.f32.partialorder %v3999, 8.507059e+37
  %v4001 = vand.u32 %v3806, 2147483648
  %v4002 = vor.u32 1.1754944e-38, %v4001
  %v4003 = vsel %vm4000, %v4002, %v3998
  %v4004 = vmul.f32 1.0, %v4003
  %v4005 = vrcp.pop %v3807
  %v4006 = vmul.f32 %v3807, %v4005
  %v4007 = vsub.f32 1.0, %v4006
  %v4008 = vmul.f32 %v4005, %v4007
  %v4009 = vadd.f32 %v4005, %v4008
  %vm4010 = vweird.f32 %v3807
  %vm4011 = vweird.f32 %v4005
  %vm4012 = vmor %vm4010, %vm4011
  %v4013 = vsel %vm4012, %v4005, %v4009
  %v4014 = vand.u32 2147483647, %v3807
  %vm4015 = vcmp.eq.f32.partialorder %v4014, 8.507059e+37
  %v4016 = vand.u32 %v3807, 2147483648
  %v4017 = vor.u32 1.1754944e-38, %v4016
  %v4018 = vsel %vm4015, %v4017, %v4013
  %v4019 = vmul.f32 1.0, %v4018
  %v4020 = vrcp.pop %v3808
  %v4021 = vmul.f32 %v3808, %v4020
  %v4022 = vsub.f32 1.0, %v4021
  %v4023 = vmul.f32 %v4020, %v4022
  %v4024 = vadd.f32 %v4020, %v4023
  %vm4025 = vweird.f32 %v3808
  %vm4026 = vweird.f32 %v4020
  %vm4027 = vmor %vm4025, %vm4026
  %v4028 = vsel %vm4027, %v4020, %v4024
  %v4029 = vand.u32 2147483647, %v3808
  %vm4030 = vcmp.eq.f32.partialorder %v4029, 8.507059e+37
  %v4031 = vand.u32 %v3808, 2147483648
  %v4032 = vor.u32 1.1754944e-38, %v4031
  %v4033 = vsel %vm4030, %v4032, %v4028
  %v4034 = vmul.f32 1.0, %v4033
  %v4035 = vrcp.pop %v3809
  %v4036 = vmul.f32 %v3809, %v4035
  %v4037 = vsub.f32 1.0, %v4036
  %v4038 = vmul.f32 %v4035, %v4037
  %v4039 = vadd.f32 %v4035, %v4038
  %vm4040 = vweird.f32 %v3809
  %vm4041 = vweird.f32 %v4035
  %vm4042 = vmor %vm4040, %vm4041
  %v4043 = vsel %vm4042, %v4035, %v4039
  %v4044 = vand.u32 2147483647, %v3809
  %vm4045 = vcmp.eq.f32.partialorder %v4044, 8.507059e+37
  %v4046 = vand.u32 %v3809, 2147483648
  %v4047 = vor.u32 1.1754944e-38, %v4046
  %v4048 = vsel %vm4045, %v4047, %v4043
  %v4049 = vmul.f32 1.0, %v4048
  %4050 = vrot.lane.b32.xlu0 %v3693, 64
  %v4051 = vpop.permute.xlu0 %4050
  %4052 = vrot.lane.b32.xlu0 %v3700, 64
  %v4053 = vpop.permute.xlu0 %4052
  %4054 = vrot.lane.b32.xlu0 %v3701, 64
  %v4055 = vpop.permute.xlu0 %4054
  %4056 = vrot.lane.b32.xlu0 %v3702, 64
  %v4057 = vpop.permute.xlu0 %4056
  %4058 = vrot.lane.b32.xlu0 %v3703, 64
  %v4059 = vpop.permute.xlu0 %4058
  %4060 = vrot.lane.b32.xlu0 %v3704, 64
  %v4061 = vpop.permute.xlu0 %4060
  %4062 = vrot.lane.b32.xlu0 %v3705, 64
  %v4063 = vpop.permute.xlu0 %4062
  %4064 = vrot.lane.b32.xlu0 %v3706, 64
  %v4065 = vpop.permute.xlu0 %4064
  %4066 = vrot.lane.b32.xlu0 %v3696, 64
  %v4067 = vpop.permute.xlu0 %4066
  %4068 = vrot.lane.b32.xlu0 %v3707, 64
  %v4069 = vpop.permute.xlu0 %4068
  %4070 = vrot.lane.b32.xlu0 %v3708, 64
  %v4071 = vpop.permute.xlu0 %4070
  %4072 = vrot.lane.b32.xlu0 %v3709, 64
  %v4073 = vpop.permute.xlu0 %4072
  %4074 = vrot.lane.b32.xlu0 %v3710, 64
  %v4075 = vpop.permute.xlu0 %4074
  %4076 = vrot.lane.b32.xlu0 %v3711, 64
  %v4077 = vpop.permute.xlu0 %4076
  %4078 = vrot.lane.b32.xlu0 %v3712, 64
  %v4079 = vpop.permute.xlu0 %4078
  %4080 = vrot.lane.b32.xlu0 %v3713, 64
  %v4081 = vpop.permute.xlu0 %4080
  %v4098 = vmul.f32 %v3824, %v4051
  %v4099 = vmul.f32 %v3839, %v4053
  %v4100 = vmul.f32 %v3854, %v4055
  %v4101 = vmul.f32 %v3869, %v4057
  %v4102 = vmul.f32 %v3884, %v4059
  %v4103 = vmul.f32 %v3899, %v4061
  %v4104 = vmul.f32 %v3914, %v4063
  %v4105 = vmul.f32 %v3929, %v4065
  %v4106 = vmul.f32 %v3944, %v4067
  %v4107 = vmul.f32 %v3959, %v4069
  %v4108 = vmul.f32 %v3974, %v4071
  %v4109 = vmul.f32 %v3989, %v4073
  %v4110 = vmul.f32 %v4004, %v4075
  %v4111 = vmul.f32 %v4019, %v4077
  %v4112 = vmul.f32 %v4034, %v4079
  %v4113 = vmul.f32 %v4049, %v4081
  %4130 = vrot.lane.b32.xlu0 %v4098, 64
  %v4131 = vpop.permute.xlu0 %4130
  %4132 = vrot.lane.b32.xlu0 %v4099, 64
  %v4133 = vpop.permute.xlu0 %4132
  %4134 = vrot.lane.b32.xlu0 %v4100, 64
  %v4135 = vpop.permute.xlu0 %4134
  %4136 = vrot.lane.b32.xlu0 %v4101, 64
  %v4137 = vpop.permute.xlu0 %4136
  %4138 = vrot.lane.b32.xlu0 %v4102, 64
  %v4139 = vpop.permute.xlu0 %4138
  %4140 = vrot.lane.b32.xlu0 %v4103, 64
  %v4141 = vpop.permute.xlu0 %4140
  %4142 = vrot.lane.b32.xlu0 %v4104, 64
  %v4143 = vpop.permute.xlu0 %4142
  %4144 = vrot.lane.b32.xlu0 %v4105, 64
  %v4145 = vpop.permute.xlu0 %4144
  %4146 = vrot.lane.b32.xlu0 %v4106, 64
  %v4147 = vpop.permute.xlu0 %4146
  %4148 = vrot.lane.b32.xlu0 %v4107, 64
  %v4149 = vpop.permute.xlu0 %4148
  %4150 = vrot.lane.b32.xlu0 %v4108, 64
  %v4151 = vpop.permute.xlu0 %4150
  %4152 = vrot.lane.b32.xlu0 %v4109, 64
  %v4153 = vpop.permute.xlu0 %4152
  %4154 = vrot.lane.b32.xlu0 %v4110, 64
  %v4155 = vpop.permute.xlu0 %4154
  %4156 = vrot.lane.b32.xlu0 %v4111, 64
  %v4157 = vpop.permute.xlu0 %4156
  %4158 = vrot.lane.b32.xlu0 %v4112, 64
  %v4159 = vpop.permute.xlu0 %4158
  %4160 = vrot.lane.b32.xlu0 %v4113, 64
  %v4161 = vpop.permute.xlu0 %4160
  %v4178 = vadd.f32 %v3653, %v4131
  %v4179 = vadd.f32 %v3654, %v4133
  %v4180 = vadd.f32 %v3655, %v4135
  %v4181 = vadd.f32 %v3656, %v4137
  %v4182 = vadd.f32 %v3657, %v4139
  %v4183 = vadd.f32 %v3658, %v4141
  %v4184 = vadd.f32 %v3659, %v4143
  %v4185 = vadd.f32 %v3660, %v4145
  %v4186 = vadd.f32 %v3661, %v4147
  %v4187 = vadd.f32 %v3662, %v4149
  %v4188 = vadd.f32 %v3663, %v4151
  %v4189 = vadd.f32 %v3664, %v4153
  %v4190 = vadd.f32 %v3665, %v4155
  %v4191 = vadd.f32 %v3666, %v4157
  %v4192 = vadd.f32 %v3667, %v4159
  %v4193 = vadd.f32 %v3668, %v4161
  %v4194 = vtanh.pop %v4178
  %v4195 = vtanh.pop %v4179
  %v4196 = vtanh.pop %v4180
  %v4197 = vtanh.pop %v4181
  %v4198 = vtanh.pop %v4182
  %v4199 = vtanh.pop %v4183
  %v4200 = vtanh.pop %v4184
  %v4201 = vtanh.pop %v4185
  %v4202 = vtanh.pop %v4186
  %v4203 = vtanh.pop %v4187
  %v4204 = vtanh.pop %v4188
  %v4205 = vtanh.pop %v4189
  %v4206 = vtanh.pop %v4190
  %v4207 = vtanh.pop %v4191
  %v4208 = vtanh.pop %v4192
  %v4209 = vtanh.pop %v4193
  %v4210 = vsub.f32 1.0, %v3824
  %v4211 = vsub.f32 1.0, %v3839
  %v4212 = vsub.f32 1.0, %v3854
  %v4213 = vsub.f32 1.0, %v3869
  %v4214 = vsub.f32 1.0, %v3884
  %v4215 = vsub.f32 1.0, %v3899
  %v4216 = vsub.f32 1.0, %v3914
  %v4217 = vsub.f32 1.0, %v3929
  %v4218 = vsub.f32 1.0, %v3944
  %v4219 = vsub.f32 1.0, %v3959
  %v4220 = vsub.f32 1.0, %v3974
  %v4221 = vsub.f32 1.0, %v3989
  %v4222 = vsub.f32 1.0, %v4004
  %v4223 = vsub.f32 1.0, %v4019
  %v4224 = vsub.f32 1.0, %v4034
  %v4225 = vsub.f32 1.0, %v4049
  %4242 = vrot.lane.b32.xlu0 %v4194, 96
  %v4243 = vpop.permute.xlu0 %4242
  %4244 = vrot.lane.b32.xlu0 %v4195, 96
  %v4245 = vpop.permute.xlu0 %4244
  %4246 = vrot.lane.b32.xlu0 %v4196, 96
  %v4247 = vpop.permute.xlu0 %4246
  %4248 = vrot.lane.b32.xlu0 %v4197, 96
  %v4249 = vpop.permute.xlu0 %4248
  %4250 = vrot.lane.b32.xlu0 %v4198, 96
  %v4251 = vpop.permute.xlu0 %4250
  %4252 = vrot.lane.b32.xlu0 %v4199, 96
  %v4253 = vpop.permute.xlu0 %4252
  %4254 = vrot.lane.b32.xlu0 %v4200, 96
  %v4255 = vpop.permute.xlu0 %4254
  %4256 = vrot.lane.b32.xlu0 %v4201, 96
  %v4257 = vpop.permute.xlu0 %4256
  %4258 = vrot.lane.b32.xlu0 %v4202, 96
  %v4259 = vpop.permute.xlu0 %4258
  %4260 = vrot.lane.b32.xlu0 %v4203, 96
  %v4261 = vpop.permute.xlu0 %4260
  %4262 = vrot.lane.b32.xlu0 %v4204, 96
  %v4263 = vpop.permute.xlu0 %4262
  %4264 = vrot.lane.b32.xlu0 %v4205, 96
  %v4265 = vpop.permute.xlu0 %4264
  %4266 = vrot.lane.b32.xlu0 %v4206, 96
  %v4267 = vpop.permute.xlu0 %4266
  %4268 = vrot.lane.b32.xlu0 %v4207, 96
  %v4269 = vpop.permute.xlu0 %4268
  %4270 = vrot.lane.b32.xlu0 %v4208, 96
  %v4271 = vpop.permute.xlu0 %4270
  %4272 = vrot.lane.b32.xlu0 %v4209, 96
  %v4273 = vpop.permute.xlu0 %4272
  %v4290 = vmul.f32 %v4210, %v4243
  %v4291 = vmul.f32 %v4211, %v4245
  %v4292 = vmul.f32 %v4212, %v4247
  %v4293 = vmul.f32 %v4213, %v4249
  %v4294 = vmul.f32 %v4214, %v4251
  %v4295 = vmul.f32 %v4215, %v4253
  %v4296 = vmul.f32 %v4216, %v4255
  %v4297 = vmul.f32 %v4217, %v4257
  %v4298 = vmul.f32 %v4218, %v4259
  %v4299 = vmul.f32 %v4219, %v4261
  %v4300 = vmul.f32 %v4220, %v4263
  %v4301 = vmul.f32 %v4221, %v4265
  %v4302 = vmul.f32 %v4222, %v4267
  %v4303 = vmul.f32 %v4223, %v4269
  %v4304 = vmul.f32 %v4224, %v4271
  %v4305 = vmul.f32 %v4225, %v4273
  %v4306 = vrot.slane %v3651, 1
  %v4307 = vrot.slane %v3651, 2
  %v4308 = vrot.slane %v3651, 3
  %v4309 = vrot.slane %v3651, 4
  %v4310 = vrot.slane %v3651, 5
  %v4311 = vrot.slane %v3651, 6
  %v4312 = vrot.slane %v3651, 7
  %v4313 = vrot.slane %v3652, 1
  %v4314 = vrot.slane %v3652, 2
  %v4315 = vrot.slane %v3652, 3
  %v4316 = vrot.slane %v3652, 4
  %v4317 = vrot.slane %v3652, 5
  %v4318 = vrot.slane %v3652, 6
  %v4319 = vrot.slane %v3652, 7
  %4320 = vrot.lane.b32.xlu0 %v3651, 32
  %v4321 = vpop.permute.xlu0 %4320
  %4322 = vrot.lane.b32.xlu0 %v4306, 32
  %v4323 = vpop.permute.xlu0 %4322
  %4324 = vrot.lane.b32.xlu0 %v4307, 32
  %v4325 = vpop.permute.xlu0 %4324
  %4326 = vrot.lane.b32.xlu0 %v4308, 32
  %v4327 = vpop.permute.xlu0 %4326
  %4328 = vrot.lane.b32.xlu0 %v4309, 32
  %v4329 = vpop.permute.xlu0 %4328
  %4330 = vrot.lane.b32.xlu0 %v4310, 32
  %v4331 = vpop.permute.xlu0 %4330
  %4332 = vrot.lane.b32.xlu0 %v4311, 32
  %v4333 = vpop.permute.xlu0 %4332
  %4334 = vrot.lane.b32.xlu0 %v4312, 32
  %v4335 = vpop.permute.xlu0 %4334
  %4336 = vrot.lane.b32.xlu0 %v3652, 32
  %v4337 = vpop.permute.xlu0 %4336
  %4338 = vrot.lane.b32.xlu0 %v4313, 32
  %v4339 = vpop.permute.xlu0 %4338
  %4340 = vrot.lane.b32.xlu0 %v4314, 32
  %v4341 = vpop.permute.xlu0 %4340
  %4342 = vrot.lane.b32.xlu0 %v4315, 32
  %v4343 = vpop.permute.xlu0 %4342
  %4344 = vrot.lane.b32.xlu0 %v4316, 32
  %v4345 = vpop.permute.xlu0 %4344
  %4346 = vrot.lane.b32.xlu0 %v4317, 32
  %v4347 = vpop.permute.xlu0 %4346
  %4348 = vrot.lane.b32.xlu0 %v4318, 32
  %v4349 = vpop.permute.xlu0 %4348
  %4350 = vrot.lane.b32.xlu0 %v4319, 32
  %v4351 = vpop.permute.xlu0 %4350
  %v4368 = vmul.f32 %v3824, %v4321
  %v4369 = vmul.f32 %v3839, %v4323
  %v4370 = vmul.f32 %v3854, %v4325
  %v4371 = vmul.f32 %v3869, %v4327
  %v4372 = vmul.f32 %v3884, %v4329
  %v4373 = vmul.f32 %v3899, %v4331
  %v4374 = vmul.f32 %v3914, %v4333
  %v4375 = vmul.f32 %v3929, %v4335
  %v4376 = vmul.f32 %v3944, %v4337
  %v4377 = vmul.f32 %v3959, %v4339
  %v4378 = vmul.f32 %v3974, %v4341
  %v4379 = vmul.f32 %v3989, %v4343
  %v4380 = vmul.f32 %v4004, %v4345
  %v4381 = vmul.f32 %v4019, %v4347
  %v4382 = vmul.f32 %v4034, %v4349
  %v4383 = vmul.f32 %v4049, %v4351
  %v4384 = vadd.f32 %v4290, %v4368
  %v4385 = vadd.f32 %v4291, %v4369
  %v4386 = vadd.f32 %v4292, %v4370
  %v4387 = vadd.f32 %v4293, %v4371
  %v4388 = vadd.f32 %v4294, %v4372
  %v4389 = vadd.f32 %v4295, %v4373
  %v4390 = vadd.f32 %v4296, %v4374
  %v4391 = vadd.f32 %v4297, %v4375
  %v4392 = vadd.f32 %v4298, %v4376
  %v4393 = vadd.f32 %v4299, %v4377
  %v4394 = vadd.f32 %v4300, %v4378
  %v4395 = vadd.f32 %v4301, %v4379
  %v4396 = vadd.f32 %v4302, %v4380
  %v4397 = vadd.f32 %v4303, %v4381
  %v4398 = vadd.f32 %v4304, %v4382
  %v4399 = vadd.f32 %v4305, %v4383
  %v4400 = vmul.f32 %v4384, %v3531
  %v4401 = vmul.f32 %v4385, %v3535
  %v4402 = vmul.f32 %v4386, %v3536
  %v4403 = vmul.f32 %v4387, %v3537
  %v4404 = vmul.f32 %v4388, %v3538
  %v4405 = vmul.f32 %v4389, %v3539
  %v4406 = vmul.f32 %v4390, %v3540
  %v4407 = vmul.f32 %v4391, %v3541
  %v4408 = vmul.f32 %v4392, %v3534
  %v4409 = vmul.f32 %v4393, %v3542
  %v4410 = vmul.f32 %v4394, %v3543
  %v4411 = vmul.f32 %v4395, %v3544
  %v4412 = vmul.f32 %v4396, %v3545
  %v4413 = vmul.f32 %v4397, %v3546
  %v4414 = vmul.f32 %v4398, %v3547
  %v4415 = vmul.f32 %v4399, %v3548
  %v4416 = vmul.f32 %v4384, %v3479
  %v4417 = vmul.f32 %v4385, %v3483
  %v4418 = vmul.f32 %v4386, %v3484
  %v4419 = vmul.f32 %v4387, %v3485
  %v4420 = vmul.f32 %v4388, %v3486
  %v4421 = vmul.f32 %v4389, %v3487
  %v4422 = vmul.f32 %v4390, %v3488
  %v4423 = vmul.f32 %v4391, %v3489
  %v4424 = vmul.f32 %v4392, %v3482
  %v4425 = vmul.f32 %v4393, %v3490
  %v4426 = vmul.f32 %v4394, %v3491
  %v4427 = vmul.f32 %v4395, %v3492
  %v4428 = vmul.f32 %v4396, %v3493
  %v4429 = vmul.f32 %v4397, %v3494
  %v4430 = vmul.f32 %v4398, %v3495
  %v4431 = vmul.f32 %v4399, %v3496
  %v4432 = vsel %vm820, %v3531, %v3479
  %v4433 = vsel %vm820, %v3534, %v3482
  %v4434 = vsub.f32 %v4384, %v4321
  %v4435 = vsub.f32 %v4385, %v4323
  %v4436 = vsub.f32 %v4386, %v4325
  %v4437 = vsub.f32 %v4387, %v4327
  %v4438 = vsub.f32 %v4388, %v4329
  %v4439 = vsub.f32 %v4389, %v4331
  %v4440 = vsub.f32 %v4390, %v4333
  %v4441 = vsub.f32 %v4391, %v4335
  %v4442 = vsub.f32 %v4392, %v4337
  %v4443 = vsub.f32 %v4393, %v4339
  %v4444 = vsub.f32 %v4394, %v4341
  %v4445 = vsub.f32 %v4395, %v4343
  %v4446 = vsub.f32 %v4396, %v4345
  %v4447 = vsub.f32 %v4397, %v4347
  %v4448 = vsub.f32 %v4398, %v4349
  %v4449 = vsub.f32 %v4399, %v4351
  %v4466 = vrot.slane %v4435, 7
  %v4467 = vsel %vm840, %v4466, %v4434
  %v4468 = vrot.slane %v4436, 6
  %v4469 = vsel %vm843, %v4468, %v4467
  %v4470 = vrot.slane %v4437, 5
  %v4471 = vsel %vm846, %v4470, %v4469
  %v4472 = vrot.slane %v4438, 4
  %v4473 = vsel %vm849, %v4472, %v4471
  %v4474 = vrot.slane %v4439, 3
  %v4475 = vsel %vm852, %v4474, %v4473
  %v4476 = vrot.slane %v4440, 2
  %v4477 = vsel %vm855, %v4476, %v4475
  %v4478 = vrot.slane %v4441, 1
  %v4479 = vsel %vm858, %v4478, %v4477
  %v4480 = vrot.slane %v4443, 7
  %v4481 = vsel %vm840, %v4480, %v4442
  %v4482 = vrot.slane %v4444, 6
  %v4483 = vsel %vm843, %v4482, %v4481
  %v4484 = vrot.slane %v4445, 5
  %v4485 = vsel %vm846, %v4484, %v4483
  %v4486 = vrot.slane %v4446, 4
  %v4487 = vsel %vm849, %v4486, %v4485
  %v4488 = vrot.slane %v4447, 3
  %v4489 = vsel %vm852, %v4488, %v4487
  %v4490 = vrot.slane %v4448, 2
  %v4491 = vsel %vm855, %v4490, %v4489
  %v4492 = vrot.slane %v4449, 1
  %v4493 = vsel %vm858, %v4492, %v4491
  %4494 = vrot.lane.b32.xlu0 %v4479, 96
  %v4495 = vpop.permute.xlu0 %4494
  %4496 = vrot.lane.b32.xlu0 %v4493, 96
  %v4497 = vpop.permute.xlu0 %4496
  %v4500 = vmul.f32 %v4432, %v4495
  %v4501 = vmul.f32 %v4433, %v4497
  %v4502 = vadd.f32 %v3651, %v4500
  %v4503 = vadd.f32 %v3652, %v4501
  %v4504 = vld [vmem:[%s0 + $0x5] sm:$0x1]
  %v4505 = vld [vmem:[%s0 + $0xd] sm:$0x1]
  %v4506 = vld [vmem:[%s0 + $0x15] sm:$0x1]
  %v4507 = vld [vmem:[%s0 + $0x1d] sm:$0x1]
  %v4508 = vld [vmem:[%s0 + $0x25] sm:$0x1]
  %v4509 = vld [vmem:[%s0 + $0x2d] sm:$0x1]
  %v4510 = vld [vmem:[%s0 + $0x35] sm:$0x1]
  %v4511 = vld [vmem:[%s0 + $0x3d] sm:$0x1]
  %v4512 = vld [vmem:[%s0 + $0x45] sm:$0x1]
  %v4513 = vld [vmem:[%s0 + $0x4d] sm:$0x1]
  %v4514 = vld [vmem:[%s0 + $0x55] sm:$0x1]
  %v4515 = vld [vmem:[%s0 + $0x5d] sm:$0x1]
  %v4516 = vld [vmem:[%s0 + $0x65] sm:$0x1]
  %v4517 = vld [vmem:[%s0 + $0x6d] sm:$0x1]
  %v4518 = vld [vmem:[%s0 + $0x75] sm:$0x1]
  %v4519 = vld [vmem:[%s0 + $0x7d] sm:$0x1]
  %v4521 = vsel %vm43, %v4502, 0
  %v4524 = vsel %vm43, %v4503, 0
  %4526 = vmatpush.msra.mxu0 0.0
  %4527 = vmatpush.msra.mxu0 0.0
  %4528 = vmatpush.msra.mxu0 0.0
  %4529 = vmatpush.msra.mxu0 0.0
  %4530 = vmatpush.msra.mxu0 0.0
  %4531 = vmatpush.msra.mxu0 0.0
  %4532 = vmatpush.msra.mxu0 0.0
  %4533 = vmatpush.msra.mxu0 0.0
  %4534 = vmatpush.msra.mxu0 0.0
  %4535 = vmatpush.msra.mxu0 0.0
  %4536 = vmatpush.msra.mxu0 0.0
  %4537 = vmatpush.msra.mxu0 0.0
  %4538 = vmatpush.msra.mxu0 %v20
  %4539 = vmatpush.msra.mxu0 %v19
  %4540 = vmatpush.msra.mxu0 %v18
  %4541 = vmatpush.msra.mxu0 %v17
  %4542 = vmatmul.f32.gmra.mxu0 %v4521
  %v4543 = vpop.f32.mrf.mxu0
  %v4544 = vadd.f32 %v23, %v4543
  %4545 = vmatmul.f32.gmra.mxu0 %v4524
  %v4546 = vpop.f32.mrf.mxu0
  %v4547 = vadd.f32 %v23, %v4546
  %4548 = vdwg.mxu0
  %v4551 = vrot.slane %v4544, 1
  %v4552 = vrot.slane %v4544, 2
  %v4553 = vrot.slane %v4544, 3
  %v4554 = vrot.slane %v4544, 4
  %v4555 = vrot.slane %v4544, 5
  %v4556 = vrot.slane %v4544, 6
  %v4557 = vrot.slane %v4544, 7
  %v4558 = vrot.slane %v4547, 1
  %v4559 = vrot.slane %v4547, 2
  %v4560 = vrot.slane %v4547, 3
  %v4561 = vrot.slane %v4547, 4
  %v4562 = vrot.slane %v4547, 5
  %v4563 = vrot.slane %v4547, 6
  %v4564 = vrot.slane %v4547, 7
  %v4581 = vadd.f32 %v4504, %v4544
  %v4582 = vadd.f32 %v4505, %v4551
  %v4583 = vadd.f32 %v4506, %v4552
  %v4584 = vadd.f32 %v4507, %v4553
  %v4585 = vadd.f32 %v4508, %v4554
  %v4586 = vadd.f32 %v4509, %v4555
  %v4587 = vadd.f32 %v4510, %v4556
  %v4588 = vadd.f32 %v4511, %v4557
  %v4589 = vadd.f32 %v4512, %v4547
  %v4590 = vadd.f32 %v4513, %v4558
  %v4591 = vadd.f32 %v4514, %v4559
  %v4592 = vadd.f32 %v4515, %v4560
  %v4593 = vadd.f32 %v4516, %v4561
  %v4594 = vadd.f32 %v4517, %v4562
  %v4595 = vadd.f32 %v4518, %v4563
  %v4596 = vadd.f32 %v4519, %v4564
  %v4597 = vxor.u32 %v4581, 2147483648
  %v4598 = vxor.u32 %v4582, 2147483648
  %v4599 = vxor.u32 %v4583, 2147483648
  %v4600 = vxor.u32 %v4584, 2147483648
  %v4601 = vxor.u32 %v4585, 2147483648
  %v4602 = vxor.u32 %v4586, 2147483648
  %v4603 = vxor.u32 %v4587, 2147483648
  %v4604 = vxor.u32 %v4588, 2147483648
  %v4605 = vxor.u32 %v4589, 2147483648
  %v4606 = vxor.u32 %v4590, 2147483648
  %v4607 = vxor.u32 %v4591, 2147483648
  %v4608 = vxor.u32 %v4592, 2147483648
  %v4609 = vxor.u32 %v4593, 2147483648
  %v4610 = vxor.u32 %v4594, 2147483648
  %v4611 = vxor.u32 %v4595, 2147483648
  %v4612 = vxor.u32 %v4596, 2147483648
  %v4613 = vmul.f32 %v4597, 1.442695
  %v4614 = vpow.pop %v4613
  %v4615 = vmul.f32 %v4598, 1.442695
  %v4616 = vpow.pop %v4615
  %v4617 = vmul.f32 %v4599, 1.442695
  %v4618 = vpow.pop %v4617
  %v4619 = vmul.f32 %v4600, 1.442695
  %v4620 = vpow.pop %v4619
  %v4621 = vmul.f32 %v4601, 1.442695
  %v4622 = vpow.pop %v4621
  %v4623 = vmul.f32 %v4602, 1.442695
  %v4624 = vpow.pop %v4623
  %v4625 = vmul.f32 %v4603, 1.442695
  %v4626 = vpow.pop %v4625
  %v4627 = vmul.f32 %v4604, 1.442695
  %v4628 = vpow.pop %v4627
  %v4629 = vmul.f32 %v4605, 1.442695
  %v4630 = vpow.pop %v4629
  %v4631 = vmul.f32 %v4606, 1.442695
  %v4632 = vpow.pop %v4631
  %v4633 = vmul.f32 %v4607, 1.442695
  %v4634 = vpow.pop %v4633
  %v4635 = vmul.f32 %v4608, 1.442695
  %v4636 = vpow.pop %v4635
  %v4637 = vmul.f32 %v4609, 1.442695
  %v4638 = vpow.pop %v4637
  %v4639 = vmul.f32 %v4610, 1.442695
  %v4640 = vpow.pop %v4639
  %v4641 = vmul.f32 %v4611, 1.442695
  %v4642 = vpow.pop %v4641
  %v4643 = vmul.f32 %v4612, 1.442695
  %v4644 = vpow.pop %v4643
  %v4645 = vadd.f32 %v4614, 1.0
  %v4646 = vadd.f32 %v4616, 1.0
  %v4647 = vadd.f32 %v4618, 1.0
  %v4648 = vadd.f32 %v4620, 1.0
  %v4649 = vadd.f32 %v4622, 1.0
  %v4650 = vadd.f32 %v4624, 1.0
  %v4651 = vadd.f32 %v4626, 1.0
  %v4652 = vadd.f32 %v4628, 1.0
  %v4653 = vadd.f32 %v4630, 1.0
  %v4654 = vadd.f32 %v4632, 1.0
  %v4655 = vadd.f32 %v4634, 1.0
  %v4656 = vadd.f32 %v4636, 1.0
  %v4657 = vadd.f32 %v4638, 1.0
  %v4658 = vadd.f32 %v4640, 1.0
  %v4659 = vadd.f32 %v4642, 1.0
  %v4660 = vadd.f32 %v4644, 1.0
  %v4661 = vrcp.pop %v4645
  %v4662 = vmul.f32 %v4645, %v4661
  %v4663 = vsub.f32 1.0, %v4662
  %v4664 = vmul.f32 %v4661, %v4663
  %v4665 = vadd.f32 %v4661, %v4664
  %vm4666 = vweird.f32 %v4645
  %vm4667 = vweird.f32 %v4661
  %vm4668 = vmor %vm4666, %vm4667
  %v4669 = vsel %vm4668, %v4661, %v4665
  %v4670 = vand.u32 2147483647, %v4645
  %vm4671 = vcmp.eq.f32.partialorder %v4670, 8.507059e+37
  %v4672 = vand.u32 %v4645, 2147483648
  %v4673 = vor.u32 1.1754944e-38, %v4672
  %v4674 = vsel %vm4671, %v4673, %v4669
  %v4675 = vmul.f32 1.0, %v4674
  %v4676 = vrcp.pop %v4646
  %v4677 = vmul.f32 %v4646, %v4676
  %v4678 = vsub.f32 1.0, %v4677
  %v4679 = vmul.f32 %v4676, %v4678
  %v4680 = vadd.f32 %v4676, %v4679
  %vm4681 = vweird.f32 %v4646
  %vm4682 = vweird.f32 %v4676
  %vm4683 = vmor %vm4681, %vm4682
  %v4684 = vsel %vm4683, %v4676, %v4680
  %v4685 = vand.u32 2147483647, %v4646
  %vm4686 = vcmp.eq.f32.partialorder %v4685, 8.507059e+37
  %v4687 = vand.u32 %v4646, 2147483648
  %v4688 = vor.u32 1.1754944e-38, %v4687
  %v4689 = vsel %vm4686, %v4688, %v4684
  %v4690 = vmul.f32 1.0, %v4689
  %v4691 = vrcp.pop %v4647
  %v4692 = vmul.f32 %v4647, %v4691
  %v4693 = vsub.f32 1.0, %v4692
  %v4694 = vmul.f32 %v4691, %v4693
  %v4695 = vadd.f32 %v4691, %v4694
  %vm4696 = vweird.f32 %v4647
  %vm4697 = vweird.f32 %v4691
  %vm4698 = vmor %vm4696, %vm4697
  %v4699 = vsel %vm4698, %v4691, %v4695
  %v4700 = vand.u32 2147483647, %v4647
  %vm4701 = vcmp.eq.f32.partialorder %v4700, 8.507059e+37
  %v4702 = vand.u32 %v4647, 2147483648
  %v4703 = vor.u32 1.1754944e-38, %v4702
  %v4704 = vsel %vm4701, %v4703, %v4699
  %v4705 = vmul.f32 1.0, %v4704
  %v4706 = vrcp.pop %v4648
  %v4707 = vmul.f32 %v4648, %v4706
  %v4708 = vsub.f32 1.0, %v4707
  %v4709 = vmul.f32 %v4706, %v4708
  %v4710 = vadd.f32 %v4706, %v4709
  %vm4711 = vweird.f32 %v4648
  %vm4712 = vweird.f32 %v4706
  %vm4713 = vmor %vm4711, %vm4712
  %v4714 = vsel %vm4713, %v4706, %v4710
  %v4715 = vand.u32 2147483647, %v4648
  %vm4716 = vcmp.eq.f32.partialorder %v4715, 8.507059e+37
  %v4717 = vand.u32 %v4648, 2147483648
  %v4718 = vor.u32 1.1754944e-38, %v4717
  %v4719 = vsel %vm4716, %v4718, %v4714
  %v4720 = vmul.f32 1.0, %v4719
  %v4721 = vrcp.pop %v4649
  %v4722 = vmul.f32 %v4649, %v4721
  %v4723 = vsub.f32 1.0, %v4722
  %v4724 = vmul.f32 %v4721, %v4723
  %v4725 = vadd.f32 %v4721, %v4724
  %vm4726 = vweird.f32 %v4649
  %vm4727 = vweird.f32 %v4721
  %vm4728 = vmor %vm4726, %vm4727
  %v4729 = vsel %vm4728, %v4721, %v4725
  %v4730 = vand.u32 2147483647, %v4649
  %vm4731 = vcmp.eq.f32.partialorder %v4730, 8.507059e+37
  %v4732 = vand.u32 %v4649, 2147483648
  %v4733 = vor.u32 1.1754944e-38, %v4732
  %v4734 = vsel %vm4731, %v4733, %v4729
  %v4735 = vmul.f32 1.0, %v4734
  %v4736 = vrcp.pop %v4650
  %v4737 = vmul.f32 %v4650, %v4736
  %v4738 = vsub.f32 1.0, %v4737
  %v4739 = vmul.f32 %v4736, %v4738
  %v4740 = vadd.f32 %v4736, %v4739
  %vm4741 = vweird.f32 %v4650
  %vm4742 = vweird.f32 %v4736
  %vm4743 = vmor %vm4741, %vm4742
  %v4744 = vsel %vm4743, %v4736, %v4740
  %v4745 = vand.u32 2147483647, %v4650
  %vm4746 = vcmp.eq.f32.partialorder %v4745, 8.507059e+37
  %v4747 = vand.u32 %v4650, 2147483648
  %v4748 = vor.u32 1.1754944e-38, %v4747
  %v4749 = vsel %vm4746, %v4748, %v4744
  %v4750 = vmul.f32 1.0, %v4749
  %v4751 = vrcp.pop %v4651
  %v4752 = vmul.f32 %v4651, %v4751
  %v4753 = vsub.f32 1.0, %v4752
  %v4754 = vmul.f32 %v4751, %v4753
  %v4755 = vadd.f32 %v4751, %v4754
  %vm4756 = vweird.f32 %v4651
  %vm4757 = vweird.f32 %v4751
  %vm4758 = vmor %vm4756, %vm4757
  %v4759 = vsel %vm4758, %v4751, %v4755
  %v4760 = vand.u32 2147483647, %v4651
  %vm4761 = vcmp.eq.f32.partialorder %v4760, 8.507059e+37
  %v4762 = vand.u32 %v4651, 2147483648
  %v4763 = vor.u32 1.1754944e-38, %v4762
  %v4764 = vsel %vm4761, %v4763, %v4759
  %v4765 = vmul.f32 1.0, %v4764
  %v4766 = vrcp.pop %v4652
  %v4767 = vmul.f32 %v4652, %v4766
  %v4768 = vsub.f32 1.0, %v4767
  %v4769 = vmul.f32 %v4766, %v4768
  %v4770 = vadd.f32 %v4766, %v4769
  %vm4771 = vweird.f32 %v4652
  %vm4772 = vweird.f32 %v4766
  %vm4773 = vmor %vm4771, %vm4772
  %v4774 = vsel %vm4773, %v4766, %v4770
  %v4775 = vand.u32 2147483647, %v4652
  %vm4776 = vcmp.eq.f32.partialorder %v4775, 8.507059e+37
  %v4777 = vand.u32 %v4652, 2147483648
  %v4778 = vor.u32 1.1754944e-38, %v4777
  %v4779 = vsel %vm4776, %v4778, %v4774
  %v4780 = vmul.f32 1.0, %v4779
  %v4781 = vrcp.pop %v4653
  %v4782 = vmul.f32 %v4653, %v4781
  %v4783 = vsub.f32 1.0, %v4782
  %v4784 = vmul.f32 %v4781, %v4783
  %v4785 = vadd.f32 %v4781, %v4784
  %vm4786 = vweird.f32 %v4653
  %vm4787 = vweird.f32 %v4781
  %vm4788 = vmor %vm4786, %vm4787
  %v4789 = vsel %vm4788, %v4781, %v4785
  %v4790 = vand.u32 2147483647, %v4653
  %vm4791 = vcmp.eq.f32.partialorder %v4790, 8.507059e+37
  %v4792 = vand.u32 %v4653, 2147483648
  %v4793 = vor.u32 1.1754944e-38, %v4792
  %v4794 = vsel %vm4791, %v4793, %v4789
  %v4795 = vmul.f32 1.0, %v4794
  %v4796 = vrcp.pop %v4654
  %v4797 = vmul.f32 %v4654, %v4796
  %v4798 = vsub.f32 1.0, %v4797
  %v4799 = vmul.f32 %v4796, %v4798
  %v4800 = vadd.f32 %v4796, %v4799
  %vm4801 = vweird.f32 %v4654
  %vm4802 = vweird.f32 %v4796
  %vm4803 = vmor %vm4801, %vm4802
  %v4804 = vsel %vm4803, %v4796, %v4800
  %v4805 = vand.u32 2147483647, %v4654
  %vm4806 = vcmp.eq.f32.partialorder %v4805, 8.507059e+37
  %v4807 = vand.u32 %v4654, 2147483648
  %v4808 = vor.u32 1.1754944e-38, %v4807
  %v4809 = vsel %vm4806, %v4808, %v4804
  %v4810 = vmul.f32 1.0, %v4809
  %v4811 = vrcp.pop %v4655
  %v4812 = vmul.f32 %v4655, %v4811
  %v4813 = vsub.f32 1.0, %v4812
  %v4814 = vmul.f32 %v4811, %v4813
  %v4815 = vadd.f32 %v4811, %v4814
  %vm4816 = vweird.f32 %v4655
  %vm4817 = vweird.f32 %v4811
  %vm4818 = vmor %vm4816, %vm4817
  %v4819 = vsel %vm4818, %v4811, %v4815
  %v4820 = vand.u32 2147483647, %v4655
  %vm4821 = vcmp.eq.f32.partialorder %v4820, 8.507059e+37
  %v4822 = vand.u32 %v4655, 2147483648
  %v4823 = vor.u32 1.1754944e-38, %v4822
  %v4824 = vsel %vm4821, %v4823, %v4819
  %v4825 = vmul.f32 1.0, %v4824
  %v4826 = vrcp.pop %v4656
  %v4827 = vmul.f32 %v4656, %v4826
  %v4828 = vsub.f32 1.0, %v4827
  %v4829 = vmul.f32 %v4826, %v4828
  %v4830 = vadd.f32 %v4826, %v4829
  %vm4831 = vweird.f32 %v4656
  %vm4832 = vweird.f32 %v4826
  %vm4833 = vmor %vm4831, %vm4832
  %v4834 = vsel %vm4833, %v4826, %v4830
  %v4835 = vand.u32 2147483647, %v4656
  %vm4836 = vcmp.eq.f32.partialorder %v4835, 8.507059e+37
  %v4837 = vand.u32 %v4656, 2147483648
  %v4838 = vor.u32 1.1754944e-38, %v4837
  %v4839 = vsel %vm4836, %v4838, %v4834
  %v4840 = vmul.f32 1.0, %v4839
  %v4841 = vrcp.pop %v4657
  %v4842 = vmul.f32 %v4657, %v4841
  %v4843 = vsub.f32 1.0, %v4842
  %v4844 = vmul.f32 %v4841, %v4843
  %v4845 = vadd.f32 %v4841, %v4844
  %vm4846 = vweird.f32 %v4657
  %vm4847 = vweird.f32 %v4841
  %vm4848 = vmor %vm4846, %vm4847
  %v4849 = vsel %vm4848, %v4841, %v4845
  %v4850 = vand.u32 2147483647, %v4657
  %vm4851 = vcmp.eq.f32.partialorder %v4850, 8.507059e+37
  %v4852 = vand.u32 %v4657, 2147483648
  %v4853 = vor.u32 1.1754944e-38, %v4852
  %v4854 = vsel %vm4851, %v4853, %v4849
  %v4855 = vmul.f32 1.0, %v4854
  %v4856 = vrcp.pop %v4658
  %v4857 = vmul.f32 %v4658, %v4856
  %v4858 = vsub.f32 1.0, %v4857
  %v4859 = vmul.f32 %v4856, %v4858
  %v4860 = vadd.f32 %v4856, %v4859
  %vm4861 = vweird.f32 %v4658
  %vm4862 = vweird.f32 %v4856
  %vm4863 = vmor %vm4861, %vm4862
  %v4864 = vsel %vm4863, %v4856, %v4860
  %v4865 = vand.u32 2147483647, %v4658
  %vm4866 = vcmp.eq.f32.partialorder %v4865, 8.507059e+37
  %v4867 = vand.u32 %v4658, 2147483648
  %v4868 = vor.u32 1.1754944e-38, %v4867
  %v4869 = vsel %vm4866, %v4868, %v4864
  %v4870 = vmul.f32 1.0, %v4869
  %v4871 = vrcp.pop %v4659
  %v4872 = vmul.f32 %v4659, %v4871
  %v4873 = vsub.f32 1.0, %v4872
  %v4874 = vmul.f32 %v4871, %v4873
  %v4875 = vadd.f32 %v4871, %v4874
  %vm4876 = vweird.f32 %v4659
  %vm4877 = vweird.f32 %v4871
  %vm4878 = vmor %vm4876, %vm4877
  %v4879 = vsel %vm4878, %v4871, %v4875
  %v4880 = vand.u32 2147483647, %v4659
  %vm4881 = vcmp.eq.f32.partialorder %v4880, 8.507059e+37
  %v4882 = vand.u32 %v4659, 2147483648
  %v4883 = vor.u32 1.1754944e-38, %v4882
  %v4884 = vsel %vm4881, %v4883, %v4879
  %v4885 = vmul.f32 1.0, %v4884
  %v4886 = vrcp.pop %v4660
  %v4887 = vmul.f32 %v4660, %v4886
  %v4888 = vsub.f32 1.0, %v4887
  %v4889 = vmul.f32 %v4886, %v4888
  %v4890 = vadd.f32 %v4886, %v4889
  %vm4891 = vweird.f32 %v4660
  %vm4892 = vweird.f32 %v4886
  %vm4893 = vmor %vm4891, %vm4892
  %v4894 = vsel %vm4893, %v4886, %v4890
  %v4895 = vand.u32 2147483647, %v4660
  %vm4896 = vcmp.eq.f32.partialorder %v4895, 8.507059e+37
  %v4897 = vand.u32 %v4660, 2147483648
  %v4898 = vor.u32 1.1754944e-38, %v4897
  %v4899 = vsel %vm4896, %v4898, %v4894
  %v4900 = vmul.f32 1.0, %v4899
  %4901 = vrot.lane.b32.xlu0 %v4544, 64
  %v4902 = vpop.permute.xlu0 %4901
  %4903 = vrot.lane.b32.xlu0 %v4551, 64
  %v4904 = vpop.permute.xlu0 %4903
  %4905 = vrot.lane.b32.xlu0 %v4552, 64
  %v4906 = vpop.permute.xlu0 %4905
  %4907 = vrot.lane.b32.xlu0 %v4553, 64
  %v4908 = vpop.permute.xlu0 %4907
  %4909 = vrot.lane.b32.xlu0 %v4554, 64
  %v4910 = vpop.permute.xlu0 %4909
  %4911 = vrot.lane.b32.xlu0 %v4555, 64
  %v4912 = vpop.permute.xlu0 %4911
  %4913 = vrot.lane.b32.xlu0 %v4556, 64
  %v4914 = vpop.permute.xlu0 %4913
  %4915 = vrot.lane.b32.xlu0 %v4557, 64
  %v4916 = vpop.permute.xlu0 %4915
  %4917 = vrot.lane.b32.xlu0 %v4547, 64
  %v4918 = vpop.permute.xlu0 %4917
  %4919 = vrot.lane.b32.xlu0 %v4558, 64
  %v4920 = vpop.permute.xlu0 %4919
  %4921 = vrot.lane.b32.xlu0 %v4559, 64
  %v4922 = vpop.permute.xlu0 %4921
  %4923 = vrot.lane.b32.xlu0 %v4560, 64
  %v4924 = vpop.permute.xlu0 %4923
  %4925 = vrot.lane.b32.xlu0 %v4561, 64
  %v4926 = vpop.permute.xlu0 %4925
  %4927 = vrot.lane.b32.xlu0 %v4562, 64
  %v4928 = vpop.permute.xlu0 %4927
  %4929 = vrot.lane.b32.xlu0 %v4563, 64
  %v4930 = vpop.permute.xlu0 %4929
  %4931 = vrot.lane.b32.xlu0 %v4564, 64
  %v4932 = vpop.permute.xlu0 %4931
  %v4949 = vmul.f32 %v4675, %v4902
  %v4950 = vmul.f32 %v4690, %v4904
  %v4951 = vmul.f32 %v4705, %v4906
  %v4952 = vmul.f32 %v4720, %v4908
  %v4953 = vmul.f32 %v4735, %v4910
  %v4954 = vmul.f32 %v4750, %v4912
  %v4955 = vmul.f32 %v4765, %v4914
  %v4956 = vmul.f32 %v4780, %v4916
  %v4957 = vmul.f32 %v4795, %v4918
  %v4958 = vmul.f32 %v4810, %v4920
  %v4959 = vmul.f32 %v4825, %v4922
  %v4960 = vmul.f32 %v4840, %v4924
  %v4961 = vmul.f32 %v4855, %v4926
  %v4962 = vmul.f32 %v4870, %v4928
  %v4963 = vmul.f32 %v4885, %v4930
  %v4964 = vmul.f32 %v4900, %v4932
  %4981 = vrot.lane.b32.xlu0 %v4949, 64
  %v4982 = vpop.permute.xlu0 %4981
  %4983 = vrot.lane.b32.xlu0 %v4950, 64
  %v4984 = vpop.permute.xlu0 %4983
  %4985 = vrot.lane.b32.xlu0 %v4951, 64
  %v4986 = vpop.permute.xlu0 %4985
  %4987 = vrot.lane.b32.xlu0 %v4952, 64
  %v4988 = vpop.permute.xlu0 %4987
  %4989 = vrot.lane.b32.xlu0 %v4953, 64
  %v4990 = vpop.permute.xlu0 %4989
  %4991 = vrot.lane.b32.xlu0 %v4954, 64
  %v4992 = vpop.permute.xlu0 %4991
  %4993 = vrot.lane.b32.xlu0 %v4955, 64
  %v4994 = vpop.permute.xlu0 %4993
  %4995 = vrot.lane.b32.xlu0 %v4956, 64
  %v4996 = vpop.permute.xlu0 %4995
  %4997 = vrot.lane.b32.xlu0 %v4957, 64
  %v4998 = vpop.permute.xlu0 %4997
  %4999 = vrot.lane.b32.xlu0 %v4958, 64
  %v5000 = vpop.permute.xlu0 %4999
  %5001 = vrot.lane.b32.xlu0 %v4959, 64
  %v5002 = vpop.permute.xlu0 %5001
  %5003 = vrot.lane.b32.xlu0 %v4960, 64
  %v5004 = vpop.permute.xlu0 %5003
  %5005 = vrot.lane.b32.xlu0 %v4961, 64
  %v5006 = vpop.permute.xlu0 %5005
  %5007 = vrot.lane.b32.xlu0 %v4962, 64
  %v5008 = vpop.permute.xlu0 %5007
  %5009 = vrot.lane.b32.xlu0 %v4963, 64
  %v5010 = vpop.permute.xlu0 %5009
  %5011 = vrot.lane.b32.xlu0 %v4964, 64
  %v5012 = vpop.permute.xlu0 %5011
  %v5029 = vadd.f32 %v4504, %v4982
  %v5030 = vadd.f32 %v4505, %v4984
  %v5031 = vadd.f32 %v4506, %v4986
  %v5032 = vadd.f32 %v4507, %v4988
  %v5033 = vadd.f32 %v4508, %v4990
  %v5034 = vadd.f32 %v4509, %v4992
  %v5035 = vadd.f32 %v4510, %v4994
  %v5036 = vadd.f32 %v4511, %v4996
  %v5037 = vadd.f32 %v4512, %v4998
  %v5038 = vadd.f32 %v4513, %v5000
  %v5039 = vadd.f32 %v4514, %v5002
  %v5040 = vadd.f32 %v4515, %v5004
  %v5041 = vadd.f32 %v4516, %v5006
  %v5042 = vadd.f32 %v4517, %v5008
  %v5043 = vadd.f32 %v4518, %v5010
  %v5044 = vadd.f32 %v4519, %v5012
  %v5045 = vtanh.pop %v5029
  %v5046 = vtanh.pop %v5030
  %v5047 = vtanh.pop %v5031
  %v5048 = vtanh.pop %v5032
  %v5049 = vtanh.pop %v5033
  %v5050 = vtanh.pop %v5034
  %v5051 = vtanh.pop %v5035
  %v5052 = vtanh.pop %v5036
  %v5053 = vtanh.pop %v5037
  %v5054 = vtanh.pop %v5038
  %v5055 = vtanh.pop %v5039
  %v5056 = vtanh.pop %v5040
  %v5057 = vtanh.pop %v5041
  %v5058 = vtanh.pop %v5042
  %v5059 = vtanh.pop %v5043
  %v5060 = vtanh.pop %v5044
  %v5061 = vsub.f32 1.0, %v4675
  %v5062 = vsub.f32 1.0, %v4690
  %v5063 = vsub.f32 1.0, %v4705
  %v5064 = vsub.f32 1.0, %v4720
  %v5065 = vsub.f32 1.0, %v4735
  %v5066 = vsub.f32 1.0, %v4750
  %v5067 = vsub.f32 1.0, %v4765
  %v5068 = vsub.f32 1.0, %v4780
  %v5069 = vsub.f32 1.0, %v4795
  %v5070 = vsub.f32 1.0, %v4810
  %v5071 = vsub.f32 1.0, %v4825
  %v5072 = vsub.f32 1.0, %v4840
  %v5073 = vsub.f32 1.0, %v4855
  %v5074 = vsub.f32 1.0, %v4870
  %v5075 = vsub.f32 1.0, %v4885
  %v5076 = vsub.f32 1.0, %v4900
  %5093 = vrot.lane.b32.xlu0 %v5045, 96
  %v5094 = vpop.permute.xlu0 %5093
  %5095 = vrot.lane.b32.xlu0 %v5046, 96
  %v5096 = vpop.permute.xlu0 %5095
  %5097 = vrot.lane.b32.xlu0 %v5047, 96
  %v5098 = vpop.permute.xlu0 %5097
  %5099 = vrot.lane.b32.xlu0 %v5048, 96
  %v5100 = vpop.permute.xlu0 %5099
  %5101 = vrot.lane.b32.xlu0 %v5049, 96
  %v5102 = vpop.permute.xlu0 %5101
  %5103 = vrot.lane.b32.xlu0 %v5050, 96
  %v5104 = vpop.permute.xlu0 %5103
  %5105 = vrot.lane.b32.xlu0 %v5051, 96
  %v5106 = vpop.permute.xlu0 %5105
  %5107 = vrot.lane.b32.xlu0 %v5052, 96
  %v5108 = vpop.permute.xlu0 %5107
  %5109 = vrot.lane.b32.xlu0 %v5053, 96
  %v5110 = vpop.permute.xlu0 %5109
  %5111 = vrot.lane.b32.xlu0 %v5054, 96
  %v5112 = vpop.permute.xlu0 %5111
  %5113 = vrot.lane.b32.xlu0 %v5055, 96
  %v5114 = vpop.permute.xlu0 %5113
  %5115 = vrot.lane.b32.xlu0 %v5056, 96
  %v5116 = vpop.permute.xlu0 %5115
  %5117 = vrot.lane.b32.xlu0 %v5057, 96
  %v5118 = vpop.permute.xlu0 %5117
  %5119 = vrot.lane.b32.xlu0 %v5058, 96
  %v5120 = vpop.permute.xlu0 %5119
  %5121 = vrot.lane.b32.xlu0 %v5059, 96
  %v5122 = vpop.permute.xlu0 %5121
  %5123 = vrot.lane.b32.xlu0 %v5060, 96
  %v5124 = vpop.permute.xlu0 %5123
  %v5141 = vmul.f32 %v5061, %v5094
  %v5142 = vmul.f32 %v5062, %v5096
  %v5143 = vmul.f32 %v5063, %v5098
  %v5144 = vmul.f32 %v5064, %v5100
  %v5145 = vmul.f32 %v5065, %v5102
  %v5146 = vmul.f32 %v5066, %v5104
  %v5147 = vmul.f32 %v5067, %v5106
  %v5148 = vmul.f32 %v5068, %v5108
  %v5149 = vmul.f32 %v5069, %v5110
  %v5150 = vmul.f32 %v5070, %v5112
  %v5151 = vmul.f32 %v5071, %v5114
  %v5152 = vmul.f32 %v5072, %v5116
  %v5153 = vmul.f32 %v5073, %v5118
  %v5154 = vmul.f32 %v5074, %v5120
  %v5155 = vmul.f32 %v5075, %v5122
  %v5156 = vmul.f32 %v5076, %v5124
  %v5157 = vrot.slane %v4502, 1
  %v5158 = vrot.slane %v4502, 2
  %v5159 = vrot.slane %v4502, 3
  %v5160 = vrot.slane %v4502, 4
  %v5161 = vrot.slane %v4502, 5
  %v5162 = vrot.slane %v4502, 6
  %v5163 = vrot.slane %v4502, 7
  %v5164 = vrot.slane %v4503, 1
  %v5165 = vrot.slane %v4503, 2
  %v5166 = vrot.slane %v4503, 3
  %v5167 = vrot.slane %v4503, 4
  %v5168 = vrot.slane %v4503, 5
  %v5169 = vrot.slane %v4503, 6
  %v5170 = vrot.slane %v4503, 7
  %5171 = vrot.lane.b32.xlu0 %v4502, 32
  %v5172 = vpop.permute.xlu0 %5171
  %5173 = vrot.lane.b32.xlu0 %v5157, 32
  %v5174 = vpop.permute.xlu0 %5173
  %5175 = vrot.lane.b32.xlu0 %v5158, 32
  %v5176 = vpop.permute.xlu0 %5175
  %5177 = vrot.lane.b32.xlu0 %v5159, 32
  %v5178 = vpop.permute.xlu0 %5177
  %5179 = vrot.lane.b32.xlu0 %v5160, 32
  %v5180 = vpop.permute.xlu0 %5179
  %5181 = vrot.lane.b32.xlu0 %v5161, 32
  %v5182 = vpop.permute.xlu0 %5181
  %5183 = vrot.lane.b32.xlu0 %v5162, 32
  %v5184 = vpop.permute.xlu0 %5183
  %5185 = vrot.lane.b32.xlu0 %v5163, 32
  %v5186 = vpop.permute.xlu0 %5185
  %5187 = vrot.lane.b32.xlu0 %v4503, 32
  %v5188 = vpop.permute.xlu0 %5187
  %5189 = vrot.lane.b32.xlu0 %v5164, 32
  %v5190 = vpop.permute.xlu0 %5189
  %5191 = vrot.lane.b32.xlu0 %v5165, 32
  %v5192 = vpop.permute.xlu0 %5191
  %5193 = vrot.lane.b32.xlu0 %v5166, 32
  %v5194 = vpop.permute.xlu0 %5193
  %5195 = vrot.lane.b32.xlu0 %v5167, 32
  %v5196 = vpop.permute.xlu0 %5195
  %5197 = vrot.lane.b32.xlu0 %v5168, 32
  %v5198 = vpop.permute.xlu0 %5197
  %5199 = vrot.lane.b32.xlu0 %v5169, 32
  %v5200 = vpop.permute.xlu0 %5199
  %5201 = vrot.lane.b32.xlu0 %v5170, 32
  %v5202 = vpop.permute.xlu0 %5201
  %v5219 = vmul.f32 %v4675, %v5172
  %v5220 = vmul.f32 %v4690, %v5174
  %v5221 = vmul.f32 %v4705, %v5176
  %v5222 = vmul.f32 %v4720, %v5178
  %v5223 = vmul.f32 %v4735, %v5180
  %v5224 = vmul.f32 %v4750, %v5182
  %v5225 = vmul.f32 %v4765, %v5184
  %v5226 = vmul.f32 %v4780, %v5186
  %v5227 = vmul.f32 %v4795, %v5188
  %v5228 = vmul.f32 %v4810, %v5190
  %v5229 = vmul.f32 %v4825, %v5192
  %v5230 = vmul.f32 %v4840, %v5194
  %v5231 = vmul.f32 %v4855, %v5196
  %v5232 = vmul.f32 %v4870, %v5198
  %v5233 = vmul.f32 %v4885, %v5200
  %v5234 = vmul.f32 %v4900, %v5202
  %v5235 = vadd.f32 %v5141, %v5219
  %v5236 = vadd.f32 %v5142, %v5220
  %v5237 = vadd.f32 %v5143, %v5221
  %v5238 = vadd.f32 %v5144, %v5222
  %v5239 = vadd.f32 %v5145, %v5223
  %v5240 = vadd.f32 %v5146, %v5224
  %v5241 = vadd.f32 %v5147, %v5225
  %v5242 = vadd.f32 %v5148, %v5226
  %v5243 = vadd.f32 %v5149, %v5227
  %v5244 = vadd.f32 %v5150, %v5228
  %v5245 = vadd.f32 %v5151, %v5229
  %v5246 = vadd.f32 %v5152, %v5230
  %v5247 = vadd.f32 %v5153, %v5231
  %v5248 = vadd.f32 %v5154, %v5232
  %v5249 = vadd.f32 %v5155, %v5233
  %v5250 = vadd.f32 %v5156, %v5234
  %v5251 = vmul.f32 %v5235, %v2608
  %v5252 = vmul.f32 %v5236, %v2612
  %v5253 = vmul.f32 %v5237, %v2613
  %v5254 = vmul.f32 %v5238, %v2614
  %v5255 = vmul.f32 %v5239, %v2615
  %v5256 = vmul.f32 %v5240, %v2616
  %v5257 = vmul.f32 %v5241, %v2617
  %v5258 = vmul.f32 %v5242, %v2618
  %v5259 = vmul.f32 %v5243, %v2611
  %v5260 = vmul.f32 %v5244, %v2619
  %v5261 = vmul.f32 %v5245, %v2620
  %v5262 = vmul.f32 %v5246, %v2621
  %v5263 = vmul.f32 %v5247, %v2622
  %v5264 = vmul.f32 %v5248, %v2623
  %v5265 = vmul.f32 %v5249, %v2624
  %v5266 = vmul.f32 %v5250, %v2625
  %v5267 = vmul.f32 %v5235, %v2556
  %v5268 = vmul.f32 %v5236, %v2560
  %v5269 = vmul.f32 %v5237, %v2561
  %v5270 = vmul.f32 %v5238, %v2562
  %v5271 = vmul.f32 %v5239, %v2563
  %v5272 = vmul.f32 %v5240, %v2564
  %v5273 = vmul.f32 %v5241, %v2565
  %v5274 = vmul.f32 %v5242, %v2566
  %v5275 = vmul.f32 %v5243, %v2559
  %v5276 = vmul.f32 %v5244, %v2567
  %v5277 = vmul.f32 %v5245, %v2568
  %v5278 = vmul.f32 %v5246, %v2569
  %v5279 = vmul.f32 %v5247, %v2570
  %v5280 = vmul.f32 %v5248, %v2571
  %v5281 = vmul.f32 %v5249, %v2572
  %v5282 = vmul.f32 %v5250, %v2573
  %v5283 = vsel %vm820, %v2608, %v2556
  %v5284 = vsel %vm820, %v2611, %v2559
  %v5285 = vsub.f32 %v5235, %v5172
  %v5286 = vsub.f32 %v5236, %v5174
  %v5287 = vsub.f32 %v5237, %v5176
  %v5288 = vsub.f32 %v5238, %v5178
  %v5289 = vsub.f32 %v5239, %v5180
  %v5290 = vsub.f32 %v5240, %v5182
  %v5291 = vsub.f32 %v5241, %v5184
  %v5292 = vsub.f32 %v5242, %v5186
  %v5293 = vsub.f32 %v5243, %v5188
  %v5294 = vsub.f32 %v5244, %v5190
  %v5295 = vsub.f32 %v5245, %v5192
  %v5296 = vsub.f32 %v5246, %v5194
  %v5297 = vsub.f32 %v5247, %v5196
  %v5298 = vsub.f32 %v5248, %v5198
  %v5299 = vsub.f32 %v5249, %v5200
  %v5300 = vsub.f32 %v5250, %v5202
  %v5317 = vrot.slane %v5286, 7
  %v5318 = vsel %vm840, %v5317, %v5285
  %v5319 = vrot.slane %v5287, 6
  %v5320 = vsel %vm843, %v5319, %v5318
  %v5321 = vrot.slane %v5288, 5
  %v5322 = vsel %vm846, %v5321, %v5320
  %v5323 = vrot.slane %v5289, 4
  %v5324 = vsel %vm849, %v5323, %v5322
  %v5325 = vrot.slane %v5290, 3
  %v5326 = vsel %vm852, %v5325, %v5324
  %v5327 = vrot.slane %v5291, 2
  %v5328 = vsel %vm855, %v5327, %v5326
  %v5329 = vrot.slane %v5292, 1
  %v5330 = vsel %vm858, %v5329, %v5328
  %v5331 = vrot.slane %v5294, 7
  %v5332 = vsel %vm840, %v5331, %v5293
  %v5333 = vrot.slane %v5295, 6
  %v5334 = vsel %vm843, %v5333, %v5332
  %v5335 = vrot.slane %v5296, 5
  %v5336 = vsel %vm846, %v5335, %v5334
  %v5337 = vrot.slane %v5297, 4
  %v5338 = vsel %vm849, %v5337, %v5336
  %v5339 = vrot.slane %v5298, 3
  %v5340 = vsel %vm852, %v5339, %v5338
  %v5341 = vrot.slane %v5299, 2
  %v5342 = vsel %vm855, %v5341, %v5340
  %v5343 = vrot.slane %v5300, 1
  %v5344 = vsel %vm858, %v5343, %v5342
  %5345 = vrot.lane.b32.xlu0 %v5330, 96
  %v5346 = vpop.permute.xlu0 %5345
  %5347 = vrot.lane.b32.xlu0 %v5344, 96
  %v5348 = vpop.permute.xlu0 %5347
  %v5351 = vmul.f32 %v5283, %v5346
  %v5352 = vmul.f32 %v5284, %v5348
  %v5353 = vadd.f32 %v4502, %v5351
  %v5354 = vadd.f32 %v4503, %v5352
  %v5355 = vld [vmem:[%s0 + $0x6] sm:$0x1]
  %v5356 = vld [vmem:[%s0 + $0xe] sm:$0x1]
  %v5357 = vld [vmem:[%s0 + $0x16] sm:$0x1]
  %v5358 = vld [vmem:[%s0 + $0x1e] sm:$0x1]
  %v5359 = vld [vmem:[%s0 + $0x26] sm:$0x1]
  %v5360 = vld [vmem:[%s0 + $0x2e] sm:$0x1]
  %v5361 = vld [vmem:[%s0 + $0x36] sm:$0x1]
  %v5362 = vld [vmem:[%s0 + $0x3e] sm:$0x1]
  %v5363 = vld [vmem:[%s0 + $0x46] sm:$0x1]
  %v5364 = vld [vmem:[%s0 + $0x4e] sm:$0x1]
  %v5365 = vld [vmem:[%s0 + $0x56] sm:$0x1]
  %v5366 = vld [vmem:[%s0 + $0x5e] sm:$0x1]
  %v5367 = vld [vmem:[%s0 + $0x66] sm:$0x1]
  %v5368 = vld [vmem:[%s0 + $0x6e] sm:$0x1]
  %v5369 = vld [vmem:[%s0 + $0x76] sm:$0x1]
  %v5370 = vld [vmem:[%s0 + $0x7e] sm:$0x1]
  %v5372 = vsel %vm43, %v5353, 0
  %v5375 = vsel %vm43, %v5354, 0
  %5377 = vmatpush.msra.mxu0 0.0
  %5378 = vmatpush.msra.mxu0 0.0
  %5379 = vmatpush.msra.mxu0 0.0
  %5380 = vmatpush.msra.mxu0 0.0
  %5381 = vmatpush.msra.mxu0 0.0
  %5382 = vmatpush.msra.mxu0 0.0
  %5383 = vmatpush.msra.mxu0 0.0
  %5384 = vmatpush.msra.mxu0 0.0
  %5385 = vmatpush.msra.mxu0 0.0
  %5386 = vmatpush.msra.mxu0 0.0
  %5387 = vmatpush.msra.mxu0 0.0
  %5388 = vmatpush.msra.mxu0 0.0
  %5389 = vmatpush.msra.mxu0 %v20
  %5390 = vmatpush.msra.mxu0 %v19
  %5391 = vmatpush.msra.mxu0 %v18
  %5392 = vmatpush.msra.mxu0 %v17
  %5393 = vmatmul.f32.gmra.mxu0 %v5372
  %v5394 = vpop.f32.mrf.mxu0
  %v5395 = vadd.f32 %v23, %v5394
  %5396 = vmatmul.f32.gmra.mxu0 %v5375
  %v5397 = vpop.f32.mrf.mxu0
  %v5398 = vadd.f32 %v23, %v5397
  %5399 = vdwg.mxu0
  %v5402 = vrot.slane %v5395, 1
  %v5403 = vrot.slane %v5395, 2
  %v5404 = vrot.slane %v5395, 3
  %v5405 = vrot.slane %v5395, 4
  %v5406 = vrot.slane %v5395, 5
  %v5407 = vrot.slane %v5395, 6
  %v5408 = vrot.slane %v5395, 7
  %v5409 = vrot.slane %v5398, 1
  %v5410 = vrot.slane %v5398, 2
  %v5411 = vrot.slane %v5398, 3
  %v5412 = vrot.slane %v5398, 4
  %v5413 = vrot.slane %v5398, 5
  %v5414 = vrot.slane %v5398, 6
  %v5415 = vrot.slane %v5398, 7
  %v5432 = vadd.f32 %v5355, %v5395
  %v5433 = vadd.f32 %v5356, %v5402
  %v5434 = vadd.f32 %v5357, %v5403
  %v5435 = vadd.f32 %v5358, %v5404
  %v5436 = vadd.f32 %v5359, %v5405
  %v5437 = vadd.f32 %v5360, %v5406
  %v5438 = vadd.f32 %v5361, %v5407
  %v5439 = vadd.f32 %v5362, %v5408
  %v5440 = vadd.f32 %v5363, %v5398
  %v5441 = vadd.f32 %v5364, %v5409
  %v5442 = vadd.f32 %v5365, %v5410
  %v5443 = vadd.f32 %v5366, %v5411
  %v5444 = vadd.f32 %v5367, %v5412
  %v5445 = vadd.f32 %v5368, %v5413
  %v5446 = vadd.f32 %v5369, %v5414
  %v5447 = vadd.f32 %v5370, %v5415
  %v5448 = vxor.u32 %v5432, 2147483648
  %v5449 = vxor.u32 %v5433, 2147483648
  %v5450 = vxor.u32 %v5434, 2147483648
  %v5451 = vxor.u32 %v5435, 2147483648
  %v5452 = vxor.u32 %v5436, 2147483648
  %v5453 = vxor.u32 %v5437, 2147483648
  %v5454 = vxor.u32 %v5438, 2147483648
  %v5455 = vxor.u32 %v5439, 2147483648
  %v5456 = vxor.u32 %v5440, 2147483648
  %v5457 = vxor.u32 %v5441, 2147483648
  %v5458 = vxor.u32 %v5442, 2147483648
  %v5459 = vxor.u32 %v5443, 2147483648
  %v5460 = vxor.u32 %v5444, 2147483648
  %v5461 = vxor.u32 %v5445, 2147483648
  %v5462 = vxor.u32 %v5446, 2147483648
  %v5463 = vxor.u32 %v5447, 2147483648
  %v5464 = vmul.f32 %v5448, 1.442695
  %v5465 = vpow.pop %v5464
  %v5466 = vmul.f32 %v5449, 1.442695
  %v5467 = vpow.pop %v5466
  %v5468 = vmul.f32 %v5450, 1.442695
  %v5469 = vpow.pop %v5468
  %v5470 = vmul.f32 %v5451, 1.442695
  %v5471 = vpow.pop %v5470
  %v5472 = vmul.f32 %v5452, 1.442695
  %v5473 = vpow.pop %v5472
  %v5474 = vmul.f32 %v5453, 1.442695
  %v5475 = vpow.pop %v5474
  %v5476 = vmul.f32 %v5454, 1.442695
  %v5477 = vpow.pop %v5476
  %v5478 = vmul.f32 %v5455, 1.442695
  %v5479 = vpow.pop %v5478
  %v5480 = vmul.f32 %v5456, 1.442695
  %v5481 = vpow.pop %v5480
  %v5482 = vmul.f32 %v5457, 1.442695
  %v5483 = vpow.pop %v5482
  %v5484 = vmul.f32 %v5458, 1.442695
  %v5485 = vpow.pop %v5484
  %v5486 = vmul.f32 %v5459, 1.442695
  %v5487 = vpow.pop %v5486
  %v5488 = vmul.f32 %v5460, 1.442695
  %v5489 = vpow.pop %v5488
  %v5490 = vmul.f32 %v5461, 1.442695
  %v5491 = vpow.pop %v5490
  %v5492 = vmul.f32 %v5462, 1.442695
  %v5493 = vpow.pop %v5492
  %v5494 = vmul.f32 %v5463, 1.442695
  %v5495 = vpow.pop %v5494
  %v5496 = vadd.f32 %v5465, 1.0
  %v5497 = vadd.f32 %v5467, 1.0
  %v5498 = vadd.f32 %v5469, 1.0
  %v5499 = vadd.f32 %v5471, 1.0
  %v5500 = vadd.f32 %v5473, 1.0
  %v5501 = vadd.f32 %v5475, 1.0
  %v5502 = vadd.f32 %v5477, 1.0
  %v5503 = vadd.f32 %v5479, 1.0
  %v5504 = vadd.f32 %v5481, 1.0
  %v5505 = vadd.f32 %v5483, 1.0
  %v5506 = vadd.f32 %v5485, 1.0
  %v5507 = vadd.f32 %v5487, 1.0
  %v5508 = vadd.f32 %v5489, 1.0
  %v5509 = vadd.f32 %v5491, 1.0
  %v5510 = vadd.f32 %v5493, 1.0
  %v5511 = vadd.f32 %v5495, 1.0
  %v5512 = vrcp.pop %v5496
  %v5513 = vmul.f32 %v5496, %v5512
  %v5514 = vsub.f32 1.0, %v5513
  %v5515 = vmul.f32 %v5512, %v5514
  %v5516 = vadd.f32 %v5512, %v5515
  %vm5517 = vweird.f32 %v5496
  %vm5518 = vweird.f32 %v5512
  %vm5519 = vmor %vm5517, %vm5518
  %v5520 = vsel %vm5519, %v5512, %v5516
  %v5521 = vand.u32 2147483647, %v5496
  %vm5522 = vcmp.eq.f32.partialorder %v5521, 8.507059e+37
  %v5523 = vand.u32 %v5496, 2147483648
  %v5524 = vor.u32 1.1754944e-38, %v5523
  %v5525 = vsel %vm5522, %v5524, %v5520
  %v5526 = vmul.f32 1.0, %v5525
  %v5527 = vrcp.pop %v5497
  %v5528 = vmul.f32 %v5497, %v5527
  %v5529 = vsub.f32 1.0, %v5528
  %v5530 = vmul.f32 %v5527, %v5529
  %v5531 = vadd.f32 %v5527, %v5530
  %vm5532 = vweird.f32 %v5497
  %vm5533 = vweird.f32 %v5527
  %vm5534 = vmor %vm5532, %vm5533
  %v5535 = vsel %vm5534, %v5527, %v5531
  %v5536 = vand.u32 2147483647, %v5497
  %vm5537 = vcmp.eq.f32.partialorder %v5536, 8.507059e+37
  %v5538 = vand.u32 %v5497, 2147483648
  %v5539 = vor.u32 1.1754944e-38, %v5538
  %v5540 = vsel %vm5537, %v5539, %v5535
  %v5541 = vmul.f32 1.0, %v5540
  %v5542 = vrcp.pop %v5498
  %v5543 = vmul.f32 %v5498, %v5542
  %v5544 = vsub.f32 1.0, %v5543
  %v5545 = vmul.f32 %v5542, %v5544
  %v5546 = vadd.f32 %v5542, %v5545
  %vm5547 = vweird.f32 %v5498
  %vm5548 = vweird.f32 %v5542
  %vm5549 = vmor %vm5547, %vm5548
  %v5550 = vsel %vm5549, %v5542, %v5546
  %v5551 = vand.u32 2147483647, %v5498
  %vm5552 = vcmp.eq.f32.partialorder %v5551, 8.507059e+37
  %v5553 = vand.u32 %v5498, 2147483648
  %v5554 = vor.u32 1.1754944e-38, %v5553
  %v5555 = vsel %vm5552, %v5554, %v5550
  %v5556 = vmul.f32 1.0, %v5555
  %v5557 = vrcp.pop %v5499
  %v5558 = vmul.f32 %v5499, %v5557
  %v5559 = vsub.f32 1.0, %v5558
  %v5560 = vmul.f32 %v5557, %v5559
  %v5561 = vadd.f32 %v5557, %v5560
  %vm5562 = vweird.f32 %v5499
  %vm5563 = vweird.f32 %v5557
  %vm5564 = vmor %vm5562, %vm5563
  %v5565 = vsel %vm5564, %v5557, %v5561
  %v5566 = vand.u32 2147483647, %v5499
  %vm5567 = vcmp.eq.f32.partialorder %v5566, 8.507059e+37
  %v5568 = vand.u32 %v5499, 2147483648
  %v5569 = vor.u32 1.1754944e-38, %v5568
  %v5570 = vsel %vm5567, %v5569, %v5565
  %v5571 = vmul.f32 1.0, %v5570
  %v5572 = vrcp.pop %v5500
  %v5573 = vmul.f32 %v5500, %v5572
  %v5574 = vsub.f32 1.0, %v5573
  %v5575 = vmul.f32 %v5572, %v5574
  %v5576 = vadd.f32 %v5572, %v5575
  %vm5577 = vweird.f32 %v5500
  %vm5578 = vweird.f32 %v5572
  %vm5579 = vmor %vm5577, %vm5578
  %v5580 = vsel %vm5579, %v5572, %v5576
  %v5581 = vand.u32 2147483647, %v5500
  %vm5582 = vcmp.eq.f32.partialorder %v5581, 8.507059e+37
  %v5583 = vand.u32 %v5500, 2147483648
  %v5584 = vor.u32 1.1754944e-38, %v5583
  %v5585 = vsel %vm5582, %v5584, %v5580
  %v5586 = vmul.f32 1.0, %v5585
  %v5587 = vrcp.pop %v5501
  %v5588 = vmul.f32 %v5501, %v5587
  %v5589 = vsub.f32 1.0, %v5588
  %v5590 = vmul.f32 %v5587, %v5589
  %v5591 = vadd.f32 %v5587, %v5590
  %vm5592 = vweird.f32 %v5501
  %vm5593 = vweird.f32 %v5587
  %vm5594 = vmor %vm5592, %vm5593
  %v5595 = vsel %vm5594, %v5587, %v5591
  %v5596 = vand.u32 2147483647, %v5501
  %vm5597 = vcmp.eq.f32.partialorder %v5596, 8.507059e+37
  %v5598 = vand.u32 %v5501, 2147483648
  %v5599 = vor.u32 1.1754944e-38, %v5598
  %v5600 = vsel %vm5597, %v5599, %v5595
  %v5601 = vmul.f32 1.0, %v5600
  %v5602 = vrcp.pop %v5502
  %v5603 = vmul.f32 %v5502, %v5602
  %v5604 = vsub.f32 1.0, %v5603
  %v5605 = vmul.f32 %v5602, %v5604
  %v5606 = vadd.f32 %v5602, %v5605
  %vm5607 = vweird.f32 %v5502
  %vm5608 = vweird.f32 %v5602
  %vm5609 = vmor %vm5607, %vm5608
  %v5610 = vsel %vm5609, %v5602, %v5606
  %v5611 = vand.u32 2147483647, %v5502
  %vm5612 = vcmp.eq.f32.partialorder %v5611, 8.507059e+37
  %v5613 = vand.u32 %v5502, 2147483648
  %v5614 = vor.u32 1.1754944e-38, %v5613
  %v5615 = vsel %vm5612, %v5614, %v5610
  %v5616 = vmul.f32 1.0, %v5615
  %v5617 = vrcp.pop %v5503
  %v5618 = vmul.f32 %v5503, %v5617
  %v5619 = vsub.f32 1.0, %v5618
  %v5620 = vmul.f32 %v5617, %v5619
  %v5621 = vadd.f32 %v5617, %v5620
  %vm5622 = vweird.f32 %v5503
  %vm5623 = vweird.f32 %v5617
  %vm5624 = vmor %vm5622, %vm5623
  %v5625 = vsel %vm5624, %v5617, %v5621
  %v5626 = vand.u32 2147483647, %v5503
  %vm5627 = vcmp.eq.f32.partialorder %v5626, 8.507059e+37
  %v5628 = vand.u32 %v5503, 2147483648
  %v5629 = vor.u32 1.1754944e-38, %v5628
  %v5630 = vsel %vm5627, %v5629, %v5625
  %v5631 = vmul.f32 1.0, %v5630
  %v5632 = vrcp.pop %v5504
  %v5633 = vmul.f32 %v5504, %v5632
  %v5634 = vsub.f32 1.0, %v5633
  %v5635 = vmul.f32 %v5632, %v5634
  %v5636 = vadd.f32 %v5632, %v5635
  %vm5637 = vweird.f32 %v5504
  %vm5638 = vweird.f32 %v5632
  %vm5639 = vmor %vm5637, %vm5638
  %v5640 = vsel %vm5639, %v5632, %v5636
  %v5641 = vand.u32 2147483647, %v5504
  %vm5642 = vcmp.eq.f32.partialorder %v5641, 8.507059e+37
  %v5643 = vand.u32 %v5504, 2147483648
  %v5644 = vor.u32 1.1754944e-38, %v5643
  %v5645 = vsel %vm5642, %v5644, %v5640
  %v5646 = vmul.f32 1.0, %v5645
  %v5647 = vrcp.pop %v5505
  %v5648 = vmul.f32 %v5505, %v5647
  %v5649 = vsub.f32 1.0, %v5648
  %v5650 = vmul.f32 %v5647, %v5649
  %v5651 = vadd.f32 %v5647, %v5650
  %vm5652 = vweird.f32 %v5505
  %vm5653 = vweird.f32 %v5647
  %vm5654 = vmor %vm5652, %vm5653
  %v5655 = vsel %vm5654, %v5647, %v5651
  %v5656 = vand.u32 2147483647, %v5505
  %vm5657 = vcmp.eq.f32.partialorder %v5656, 8.507059e+37
  %v5658 = vand.u32 %v5505, 2147483648
  %v5659 = vor.u32 1.1754944e-38, %v5658
  %v5660 = vsel %vm5657, %v5659, %v5655
  %v5661 = vmul.f32 1.0, %v5660
  %v5662 = vrcp.pop %v5506
  %v5663 = vmul.f32 %v5506, %v5662
  %v5664 = vsub.f32 1.0, %v5663
  %v5665 = vmul.f32 %v5662, %v5664
  %v5666 = vadd.f32 %v5662, %v5665
  %vm5667 = vweird.f32 %v5506
  %vm5668 = vweird.f32 %v5662
  %vm5669 = vmor %vm5667, %vm5668
  %v5670 = vsel %vm5669, %v5662, %v5666
  %v5671 = vand.u32 2147483647, %v5506
  %vm5672 = vcmp.eq.f32.partialorder %v5671, 8.507059e+37
  %v5673 = vand.u32 %v5506, 2147483648
  %v5674 = vor.u32 1.1754944e-38, %v5673
  %v5675 = vsel %vm5672, %v5674, %v5670
  %v5676 = vmul.f32 1.0, %v5675
  %v5677 = vrcp.pop %v5507
  %v5678 = vmul.f32 %v5507, %v5677
  %v5679 = vsub.f32 1.0, %v5678
  %v5680 = vmul.f32 %v5677, %v5679
  %v5681 = vadd.f32 %v5677, %v5680
  %vm5682 = vweird.f32 %v5507
  %vm5683 = vweird.f32 %v5677
  %vm5684 = vmor %vm5682, %vm5683
  %v5685 = vsel %vm5684, %v5677, %v5681
  %v5686 = vand.u32 2147483647, %v5507
  %vm5687 = vcmp.eq.f32.partialorder %v5686, 8.507059e+37
  %v5688 = vand.u32 %v5507, 2147483648
  %v5689 = vor.u32 1.1754944e-38, %v5688
  %v5690 = vsel %vm5687, %v5689, %v5685
  %v5691 = vmul.f32 1.0, %v5690
  %v5692 = vrcp.pop %v5508
  %v5693 = vmul.f32 %v5508, %v5692
  %v5694 = vsub.f32 1.0, %v5693
  %v5695 = vmul.f32 %v5692, %v5694
  %v5696 = vadd.f32 %v5692, %v5695
  %vm5697 = vweird.f32 %v5508
  %vm5698 = vweird.f32 %v5692
  %vm5699 = vmor %vm5697, %vm5698
  %v5700 = vsel %vm5699, %v5692, %v5696
  %v5701 = vand.u32 2147483647, %v5508
  %vm5702 = vcmp.eq.f32.partialorder %v5701, 8.507059e+37
  %v5703 = vand.u32 %v5508, 2147483648
  %v5704 = vor.u32 1.1754944e-38, %v5703
  %v5705 = vsel %vm5702, %v5704, %v5700
  %v5706 = vmul.f32 1.0, %v5705
  %v5707 = vrcp.pop %v5509
  %v5708 = vmul.f32 %v5509, %v5707
  %v5709 = vsub.f32 1.0, %v5708
  %v5710 = vmul.f32 %v5707, %v5709
  %v5711 = vadd.f32 %v5707, %v5710
  %vm5712 = vweird.f32 %v5509
  %vm5713 = vweird.f32 %v5707
  %vm5714 = vmor %vm5712, %vm5713
  %v5715 = vsel %vm5714, %v5707, %v5711
  %v5716 = vand.u32 2147483647, %v5509
  %vm5717 = vcmp.eq.f32.partialorder %v5716, 8.507059e+37
  %v5718 = vand.u32 %v5509, 2147483648
  %v5719 = vor.u32 1.1754944e-38, %v5718
  %v5720 = vsel %vm5717, %v5719, %v5715
  %v5721 = vmul.f32 1.0, %v5720
  %v5722 = vrcp.pop %v5510
  %v5723 = vmul.f32 %v5510, %v5722
  %v5724 = vsub.f32 1.0, %v5723
  %v5725 = vmul.f32 %v5722, %v5724
  %v5726 = vadd.f32 %v5722, %v5725
  %vm5727 = vweird.f32 %v5510
  %vm5728 = vweird.f32 %v5722
  %vm5729 = vmor %vm5727, %vm5728
  %v5730 = vsel %vm5729, %v5722, %v5726
  %v5731 = vand.u32 2147483647, %v5510
  %vm5732 = vcmp.eq.f32.partialorder %v5731, 8.507059e+37
  %v5733 = vand.u32 %v5510, 2147483648
  %v5734 = vor.u32 1.1754944e-38, %v5733
  %v5735 = vsel %vm5732, %v5734, %v5730
  %v5736 = vmul.f32 1.0, %v5735
  %v5737 = vrcp.pop %v5511
  %v5738 = vmul.f32 %v5511, %v5737
  %v5739 = vsub.f32 1.0, %v5738
  %v5740 = vmul.f32 %v5737, %v5739
  %v5741 = vadd.f32 %v5737, %v5740
  %vm5742 = vweird.f32 %v5511
  %vm5743 = vweird.f32 %v5737
  %vm5744 = vmor %vm5742, %vm5743
  %v5745 = vsel %vm5744, %v5737, %v5741
  %v5746 = vand.u32 2147483647, %v5511
  %vm5747 = vcmp.eq.f32.partialorder %v5746, 8.507059e+37
  %v5748 = vand.u32 %v5511, 2147483648
  %v5749 = vor.u32 1.1754944e-38, %v5748
  %v5750 = vsel %vm5747, %v5749, %v5745
  %v5751 = vmul.f32 1.0, %v5750
  %5752 = vrot.lane.b32.xlu0 %v5395, 64
  %v5753 = vpop.permute.xlu0 %5752
  %5754 = vrot.lane.b32.xlu0 %v5402, 64
  %v5755 = vpop.permute.xlu0 %5754
  %5756 = vrot.lane.b32.xlu0 %v5403, 64
  %v5757 = vpop.permute.xlu0 %5756
  %5758 = vrot.lane.b32.xlu0 %v5404, 64
  %v5759 = vpop.permute.xlu0 %5758
  %5760 = vrot.lane.b32.xlu0 %v5405, 64
  %v5761 = vpop.permute.xlu0 %5760
  %5762 = vrot.lane.b32.xlu0 %v5406, 64
  %v5763 = vpop.permute.xlu0 %5762
  %5764 = vrot.lane.b32.xlu0 %v5407, 64
  %v5765 = vpop.permute.xlu0 %5764
  %5766 = vrot.lane.b32.xlu0 %v5408, 64
  %v5767 = vpop.permute.xlu0 %5766
  %5768 = vrot.lane.b32.xlu0 %v5398, 64
  %v5769 = vpop.permute.xlu0 %5768
  %5770 = vrot.lane.b32.xlu0 %v5409, 64
  %v5771 = vpop.permute.xlu0 %5770
  %5772 = vrot.lane.b32.xlu0 %v5410, 64
  %v5773 = vpop.permute.xlu0 %5772
  %5774 = vrot.lane.b32.xlu0 %v5411, 64
  %v5775 = vpop.permute.xlu0 %5774
  %5776 = vrot.lane.b32.xlu0 %v5412, 64
  %v5777 = vpop.permute.xlu0 %5776
  %5778 = vrot.lane.b32.xlu0 %v5413, 64
  %v5779 = vpop.permute.xlu0 %5778
  %5780 = vrot.lane.b32.xlu0 %v5414, 64
  %v5781 = vpop.permute.xlu0 %5780
  %5782 = vrot.lane.b32.xlu0 %v5415, 64
  %v5783 = vpop.permute.xlu0 %5782
  %v5800 = vmul.f32 %v5526, %v5753
  %v5801 = vmul.f32 %v5541, %v5755
  %v5802 = vmul.f32 %v5556, %v5757
  %v5803 = vmul.f32 %v5571, %v5759
  %v5804 = vmul.f32 %v5586, %v5761
  %v5805 = vmul.f32 %v5601, %v5763
  %v5806 = vmul.f32 %v5616, %v5765
  %v5807 = vmul.f32 %v5631, %v5767
  %v5808 = vmul.f32 %v5646, %v5769
  %v5809 = vmul.f32 %v5661, %v5771
  %v5810 = vmul.f32 %v5676, %v5773
  %v5811 = vmul.f32 %v5691, %v5775
  %v5812 = vmul.f32 %v5706, %v5777
  %v5813 = vmul.f32 %v5721, %v5779
  %v5814 = vmul.f32 %v5736, %v5781
  %v5815 = vmul.f32 %v5751, %v5783
  %5832 = vrot.lane.b32.xlu0 %v5800, 64
  %v5833 = vpop.permute.xlu0 %5832
  %5834 = vrot.lane.b32.xlu0 %v5801, 64
  %v5835 = vpop.permute.xlu0 %5834
  %5836 = vrot.lane.b32.xlu0 %v5802, 64
  %v5837 = vpop.permute.xlu0 %5836
  %5838 = vrot.lane.b32.xlu0 %v5803, 64
  %v5839 = vpop.permute.xlu0 %5838
  %5840 = vrot.lane.b32.xlu0 %v5804, 64
  %v5841 = vpop.permute.xlu0 %5840
  %5842 = vrot.lane.b32.xlu0 %v5805, 64
  %v5843 = vpop.permute.xlu0 %5842
  %5844 = vrot.lane.b32.xlu0 %v5806, 64
  %v5845 = vpop.permute.xlu0 %5844
  %5846 = vrot.lane.b32.xlu0 %v5807, 64
  %v5847 = vpop.permute.xlu0 %5846
  %5848 = vrot.lane.b32.xlu0 %v5808, 64
  %v5849 = vpop.permute.xlu0 %5848
  %5850 = vrot.lane.b32.xlu0 %v5809, 64
  %v5851 = vpop.permute.xlu0 %5850
  %5852 = vrot.lane.b32.xlu0 %v5810, 64
  %v5853 = vpop.permute.xlu0 %5852
  %5854 = vrot.lane.b32.xlu0 %v5811, 64
  %v5855 = vpop.permute.xlu0 %5854
  %5856 = vrot.lane.b32.xlu0 %v5812, 64
  %v5857 = vpop.permute.xlu0 %5856
  %5858 = vrot.lane.b32.xlu0 %v5813, 64
  %v5859 = vpop.permute.xlu0 %5858
  %5860 = vrot.lane.b32.xlu0 %v5814, 64
  %v5861 = vpop.permute.xlu0 %5860
  %5862 = vrot.lane.b32.xlu0 %v5815, 64
  %v5863 = vpop.permute.xlu0 %5862
  %v5880 = vadd.f32 %v5355, %v5833
  %v5881 = vadd.f32 %v5356, %v5835
  %v5882 = vadd.f32 %v5357, %v5837
  %v5883 = vadd.f32 %v5358, %v5839
  %v5884 = vadd.f32 %v5359, %v5841
  %v5885 = vadd.f32 %v5360, %v5843
  %v5886 = vadd.f32 %v5361, %v5845
  %v5887 = vadd.f32 %v5362, %v5847
  %v5888 = vadd.f32 %v5363, %v5849
  %v5889 = vadd.f32 %v5364, %v5851
  %v5890 = vadd.f32 %v5365, %v5853
  %v5891 = vadd.f32 %v5366, %v5855
  %v5892 = vadd.f32 %v5367, %v5857
  %v5893 = vadd.f32 %v5368, %v5859
  %v5894 = vadd.f32 %v5369, %v5861
  %v5895 = vadd.f32 %v5370, %v5863
  %v5896 = vtanh.pop %v5880
  %v5897 = vtanh.pop %v5881
  %v5898 = vtanh.pop %v5882
  %v5899 = vtanh.pop %v5883
  %v5900 = vtanh.pop %v5884
  %v5901 = vtanh.pop %v5885
  %v5902 = vtanh.pop %v5886
  %v5903 = vtanh.pop %v5887
  %v5904 = vtanh.pop %v5888
  %v5905 = vtanh.pop %v5889
  %v5906 = vtanh.pop %v5890
  %v5907 = vtanh.pop %v5891
  %v5908 = vtanh.pop %v5892
  %v5909 = vtanh.pop %v5893
  %v5910 = vtanh.pop %v5894
  %v5911 = vtanh.pop %v5895
  %v5912 = vsub.f32 1.0, %v5526
  %v5913 = vsub.f32 1.0, %v5541
  %v5914 = vsub.f32 1.0, %v5556
  %v5915 = vsub.f32 1.0, %v5571
  %v5916 = vsub.f32 1.0, %v5586
  %v5917 = vsub.f32 1.0, %v5601
  %v5918 = vsub.f32 1.0, %v5616
  %v5919 = vsub.f32 1.0, %v5631
  %v5920 = vsub.f32 1.0, %v5646
  %v5921 = vsub.f32 1.0, %v5661
  %v5922 = vsub.f32 1.0, %v5676
  %v5923 = vsub.f32 1.0, %v5691
  %v5924 = vsub.f32 1.0, %v5706
  %v5925 = vsub.f32 1.0, %v5721
  %v5926 = vsub.f32 1.0, %v5736
  %v5927 = vsub.f32 1.0, %v5751
  %5944 = vrot.lane.b32.xlu0 %v5896, 96
  %v5945 = vpop.permute.xlu0 %5944
  %5946 = vrot.lane.b32.xlu0 %v5897, 96
  %v5947 = vpop.permute.xlu0 %5946
  %5948 = vrot.lane.b32.xlu0 %v5898, 96
  %v5949 = vpop.permute.xlu0 %5948
  %5950 = vrot.lane.b32.xlu0 %v5899, 96
  %v5951 = vpop.permute.xlu0 %5950
  %5952 = vrot.lane.b32.xlu0 %v5900, 96
  %v5953 = vpop.permute.xlu0 %5952
  %5954 = vrot.lane.b32.xlu0 %v5901, 96
  %v5955 = vpop.permute.xlu0 %5954
  %5956 = vrot.lane.b32.xlu0 %v5902, 96
  %v5957 = vpop.permute.xlu0 %5956
  %5958 = vrot.lane.b32.xlu0 %v5903, 96
  %v5959 = vpop.permute.xlu0 %5958
  %5960 = vrot.lane.b32.xlu0 %v5904, 96
  %v5961 = vpop.permute.xlu0 %5960
  %5962 = vrot.lane.b32.xlu0 %v5905, 96
  %v5963 = vpop.permute.xlu0 %5962
  %5964 = vrot.lane.b32.xlu0 %v5906, 96
  %v5965 = vpop.permute.xlu0 %5964
  %5966 = vrot.lane.b32.xlu0 %v5907, 96
  %v5967 = vpop.permute.xlu0 %5966
  %5968 = vrot.lane.b32.xlu0 %v5908, 96
  %v5969 = vpop.permute.xlu0 %5968
  %5970 = vrot.lane.b32.xlu0 %v5909, 96
  %v5971 = vpop.permute.xlu0 %5970
  %5972 = vrot.lane.b32.xlu0 %v5910, 96
  %v5973 = vpop.permute.xlu0 %5972
  %5974 = vrot.lane.b32.xlu0 %v5911, 96
  %v5975 = vpop.permute.xlu0 %5974
  %v5992 = vmul.f32 %v5912, %v5945
  %v5993 = vmul.f32 %v5913, %v5947
  %v5994 = vmul.f32 %v5914, %v5949
  %v5995 = vmul.f32 %v5915, %v5951
  %v5996 = vmul.f32 %v5916, %v5953
  %v5997 = vmul.f32 %v5917, %v5955
  %v5998 = vmul.f32 %v5918, %v5957
  %v5999 = vmul.f32 %v5919, %v5959
  %v6000 = vmul.f32 %v5920, %v5961
  %v6001 = vmul.f32 %v5921, %v5963
  %v6002 = vmul.f32 %v5922, %v5965
  %v6003 = vmul.f32 %v5923, %v5967
  %v6004 = vmul.f32 %v5924, %v5969
  %v6005 = vmul.f32 %v5925, %v5971
  %v6006 = vmul.f32 %v5926, %v5973
  %v6007 = vmul.f32 %v5927, %v5975
  %v6008 = vrot.slane %v5353, 1
  %v6009 = vrot.slane %v5353, 2
  %v6010 = vrot.slane %v5353, 3
  %v6011 = vrot.slane %v5353, 4
  %v6012 = vrot.slane %v5353, 5
  %v6013 = vrot.slane %v5353, 6
  %v6014 = vrot.slane %v5353, 7
  %v6015 = vrot.slane %v5354, 1
  %v6016 = vrot.slane %v5354, 2
  %v6017 = vrot.slane %v5354, 3
  %v6018 = vrot.slane %v5354, 4
  %v6019 = vrot.slane %v5354, 5
  %v6020 = vrot.slane %v5354, 6
  %v6021 = vrot.slane %v5354, 7
  %6022 = vrot.lane.b32.xlu0 %v5353, 32
  %v6023 = vpop.permute.xlu0 %6022
  %6024 = vrot.lane.b32.xlu0 %v6008, 32
  %v6025 = vpop.permute.xlu0 %6024
  %6026 = vrot.lane.b32.xlu0 %v6009, 32
  %v6027 = vpop.permute.xlu0 %6026
  %6028 = vrot.lane.b32.xlu0 %v6010, 32
  %v6029 = vpop.permute.xlu0 %6028
  %6030 = vrot.lane.b32.xlu0 %v6011, 32
  %v6031 = vpop.permute.xlu0 %6030
  %6032 = vrot.lane.b32.xlu0 %v6012, 32
  %v6033 = vpop.permute.xlu0 %6032
  %6034 = vrot.lane.b32.xlu0 %v6013, 32
  %v6035 = vpop.permute.xlu0 %6034
  %6036 = vrot.lane.b32.xlu0 %v6014, 32
  %v6037 = vpop.permute.xlu0 %6036
  %6038 = vrot.lane.b32.xlu0 %v5354, 32
  %v6039 = vpop.permute.xlu0 %6038
  %6040 = vrot.lane.b32.xlu0 %v6015, 32
  %v6041 = vpop.permute.xlu0 %6040
  %6042 = vrot.lane.b32.xlu0 %v6016, 32
  %v6043 = vpop.permute.xlu0 %6042
  %6044 = vrot.lane.b32.xlu0 %v6017, 32
  %v6045 = vpop.permute.xlu0 %6044
  %6046 = vrot.lane.b32.xlu0 %v6018, 32
  %v6047 = vpop.permute.xlu0 %6046
  %6048 = vrot.lane.b32.xlu0 %v6019, 32
  %v6049 = vpop.permute.xlu0 %6048
  %6050 = vrot.lane.b32.xlu0 %v6020, 32
  %v6051 = vpop.permute.xlu0 %6050
  %6052 = vrot.lane.b32.xlu0 %v6021, 32
  %v6053 = vpop.permute.xlu0 %6052
  %v6070 = vmul.f32 %v5526, %v6023
  %v6071 = vmul.f32 %v5541, %v6025
  %v6072 = vmul.f32 %v5556, %v6027
  %v6073 = vmul.f32 %v5571, %v6029
  %v6074 = vmul.f32 %v5586, %v6031
  %v6075 = vmul.f32 %v5601, %v6033
  %v6076 = vmul.f32 %v5616, %v6035
  %v6077 = vmul.f32 %v5631, %v6037
  %v6078 = vmul.f32 %v5646, %v6039
  %v6079 = vmul.f32 %v5661, %v6041
  %v6080 = vmul.f32 %v5676, %v6043
  %v6081 = vmul.f32 %v5691, %v6045
  %v6082 = vmul.f32 %v5706, %v6047
  %v6083 = vmul.f32 %v5721, %v6049
  %v6084 = vmul.f32 %v5736, %v6051
  %v6085 = vmul.f32 %v5751, %v6053
  %v6086 = vadd.f32 %v5992, %v6070
  %v6087 = vadd.f32 %v5993, %v6071
  %v6088 = vadd.f32 %v5994, %v6072
  %v6089 = vadd.f32 %v5995, %v6073
  %v6090 = vadd.f32 %v5996, %v6074
  %v6091 = vadd.f32 %v5997, %v6075
  %v6092 = vadd.f32 %v5998, %v6076
  %v6093 = vadd.f32 %v5999, %v6077
  %v6094 = vadd.f32 %v6000, %v6078
  %v6095 = vadd.f32 %v6001, %v6079
  %v6096 = vadd.f32 %v6002, %v6080
  %v6097 = vadd.f32 %v6003, %v6081
  %v6098 = vadd.f32 %v6004, %v6082
  %v6099 = vadd.f32 %v6005, %v6083
  %v6100 = vadd.f32 %v6006, %v6084
  %v6101 = vadd.f32 %v6007, %v6085
  %v6102 = vmul.f32 %v6086, %v1685
  %v6103 = vmul.f32 %v6087, %v1689
  %v6104 = vmul.f32 %v6088, %v1690
  %v6105 = vmul.f32 %v6089, %v1691
  %v6106 = vmul.f32 %v6090, %v1692
  %v6107 = vmul.f32 %v6091, %v1693
  %v6108 = vmul.f32 %v6092, %v1694
  %v6109 = vmul.f32 %v6093, %v1695
  %v6110 = vmul.f32 %v6094, %v1688
  %v6111 = vmul.f32 %v6095, %v1696
  %v6112 = vmul.f32 %v6096, %v1697
  %v6113 = vmul.f32 %v6097, %v1698
  %v6114 = vmul.f32 %v6098, %v1699
  %v6115 = vmul.f32 %v6099, %v1700
  %v6116 = vmul.f32 %v6100, %v1701
  %v6117 = vmul.f32 %v6101, %v1702
  %v6118 = vmul.f32 %v6086, %v1633
  %v6119 = vmul.f32 %v6087, %v1637
  %v6120 = vmul.f32 %v6088, %v1638
  %v6121 = vmul.f32 %v6089, %v1639
  %v6122 = vmul.f32 %v6090, %v1640
  %v6123 = vmul.f32 %v6091, %v1641
  %v6124 = vmul.f32 %v6092, %v1642
  %v6125 = vmul.f32 %v6093, %v1643
  %v6126 = vmul.f32 %v6094, %v1636
  %v6127 = vmul.f32 %v6095, %v1644
  %v6128 = vmul.f32 %v6096, %v1645
  %v6129 = vmul.f32 %v6097, %v1646
  %v6130 = vmul.f32 %v6098, %v1647
  %v6131 = vmul.f32 %v6099, %v1648
  %v6132 = vmul.f32 %v6100, %v1649
  %v6133 = vmul.f32 %v6101, %v1650
  %v6134 = vsel %vm820, %v1685, %v1633
  %v6135 = vsel %vm820, %v1688, %v1636
  %v6136 = vsub.f32 %v6086, %v6023
  %v6137 = vsub.f32 %v6087, %v6025
  %v6138 = vsub.f32 %v6088, %v6027
  %v6139 = vsub.f32 %v6089, %v6029
  %v6140 = vsub.f32 %v6090, %v6031
  %v6141 = vsub.f32 %v6091, %v6033
  %v6142 = vsub.f32 %v6092, %v6035
  %v6143 = vsub.f32 %v6093, %v6037
  %v6144 = vsub.f32 %v6094, %v6039
  %v6145 = vsub.f32 %v6095, %v6041
  %v6146 = vsub.f32 %v6096, %v6043
  %v6147 = vsub.f32 %v6097, %v6045
  %v6148 = vsub.f32 %v6098, %v6047
  %v6149 = vsub.f32 %v6099, %v6049
  %v6150 = vsub.f32 %v6100, %v6051
  %v6151 = vsub.f32 %v6101, %v6053
  %v6168 = vrot.slane %v6137, 7
  %v6169 = vsel %vm840, %v6168, %v6136
  %v6170 = vrot.slane %v6138, 6
  %v6171 = vsel %vm843, %v6170, %v6169
  %v6172 = vrot.slane %v6139, 5
  %v6173 = vsel %vm846, %v6172, %v6171
  %v6174 = vrot.slane %v6140, 4
  %v6175 = vsel %vm849, %v6174, %v6173
  %v6176 = vrot.slane %v6141, 3
  %v6177 = vsel %vm852, %v6176, %v6175
  %v6178 = vrot.slane %v6142, 2
  %v6179 = vsel %vm855, %v6178, %v6177
  %v6180 = vrot.slane %v6143, 1
  %v6181 = vsel %vm858, %v6180, %v6179
  %v6182 = vrot.slane %v6145, 7
  %v6183 = vsel %vm840, %v6182, %v6144
  %v6184 = vrot.slane %v6146, 6
  %v6185 = vsel %vm843, %v6184, %v6183
  %v6186 = vrot.slane %v6147, 5
  %v6187 = vsel %vm846, %v6186, %v6185
  %v6188 = vrot.slane %v6148, 4
  %v6189 = vsel %vm849, %v6188, %v6187
  %v6190 = vrot.slane %v6149, 3
  %v6191 = vsel %vm852, %v6190, %v6189
  %v6192 = vrot.slane %v6150, 2
  %v6193 = vsel %vm855, %v6192, %v6191
  %v6194 = vrot.slane %v6151, 1
  %v6195 = vsel %vm858, %v6194, %v6193
  %6196 = vrot.lane.b32.xlu0 %v6181, 96
  %v6197 = vpop.permute.xlu0 %6196
  %6198 = vrot.lane.b32.xlu0 %v6195, 96
  %v6199 = vpop.permute.xlu0 %6198
  %v6202 = vmul.f32 %v6134, %v6197
  %v6203 = vmul.f32 %v6135, %v6199
  %v6204 = vadd.f32 %v5353, %v6202
  %v6205 = vadd.f32 %v5354, %v6203
  %v6206 = vld [vmem:[%s0 + $0x7] sm:$0x1]
  %v6207 = vld [vmem:[%s0 + $0xf] sm:$0x1]
  %v6208 = vld [vmem:[%s0 + $0x17] sm:$0x1]
  %v6209 = vld [vmem:[%s0 + $0x1f] sm:$0x1]
  %v6210 = vld [vmem:[%s0 + $0x27] sm:$0x1]
  %v6211 = vld [vmem:[%s0 + $0x2f] sm:$0x1]
  %v6212 = vld [vmem:[%s0 + $0x37] sm:$0x1]
  %v6213 = vld [vmem:[%s0 + $0x3f] sm:$0x1]
  %v6214 = vld [vmem:[%s0 + $0x47] sm:$0x1]
  %v6215 = vld [vmem:[%s0 + $0x4f] sm:$0x1]
  %v6216 = vld [vmem:[%s0 + $0x57] sm:$0x1]
  %v6217 = vld [vmem:[%s0 + $0x5f] sm:$0x1]
  %v6218 = vld [vmem:[%s0 + $0x67] sm:$0x1]
  %v6219 = vld [vmem:[%s0 + $0x6f] sm:$0x1]
  %v6220 = vld [vmem:[%s0 + $0x77] sm:$0x1]
  %v6221 = vld [vmem:[%s0 + $0x7f] sm:$0x1]
  %v6223 = vsel %vm43, %v6204, 0
  %v6226 = vsel %vm43, %v6205, 0
  %6228 = vmatpush.msra.mxu0 0.0
  %6229 = vmatpush.msra.mxu0 0.0
  %6230 = vmatpush.msra.mxu0 0.0
  %6231 = vmatpush.msra.mxu0 0.0
  %6232 = vmatpush.msra.mxu0 0.0
  %6233 = vmatpush.msra.mxu0 0.0
  %6234 = vmatpush.msra.mxu0 0.0
  %6235 = vmatpush.msra.mxu0 0.0
  %6236 = vmatpush.msra.mxu0 0.0
  %6237 = vmatpush.msra.mxu0 0.0
  %6238 = vmatpush.msra.mxu0 0.0
  %6239 = vmatpush.msra.mxu0 0.0
  %6240 = vmatpush.msra.mxu0 %v20
  %6241 = vmatpush.msra.mxu0 %v19
  %6242 = vmatpush.msra.mxu0 %v18
  %6243 = vmatpush.msra.mxu0 %v17
  %6244 = vmatmul.f32.gmra.mxu0 %v6223
  %v6245 = vpop.f32.mrf.mxu0
  %v6246 = vadd.f32 %v23, %v6245
  %6247 = vmatmul.f32.gmra.mxu0 %v6226
  %v6248 = vpop.f32.mrf.mxu0
  %v6249 = vadd.f32 %v23, %v6248
  %6250 = vdwg.mxu0
  %v6253 = vrot.slane %v6246, 1
  %v6254 = vrot.slane %v6246, 2
  %v6255 = vrot.slane %v6246, 3
  %v6256 = vrot.slane %v6246, 4
  %v6257 = vrot.slane %v6246, 5
  %v6258 = vrot.slane %v6246, 6
  %v6259 = vrot.slane %v6246, 7
  %v6260 = vrot.slane %v6249, 1
  %v6261 = vrot.slane %v6249, 2
  %v6262 = vrot.slane %v6249, 3
  %v6263 = vrot.slane %v6249, 4
  %v6264 = vrot.slane %v6249, 5
  %v6265 = vrot.slane %v6249, 6
  %v6266 = vrot.slane %v6249, 7
  %v6283 = vadd.f32 %v6206, %v6246
  %v6284 = vadd.f32 %v6207, %v6253
  %v6285 = vadd.f32 %v6208, %v6254
  %v6286 = vadd.f32 %v6209, %v6255
  %v6287 = vadd.f32 %v6210, %v6256
  %v6288 = vadd.f32 %v6211, %v6257
  %v6289 = vadd.f32 %v6212, %v6258
  %v6290 = vadd.f32 %v6213, %v6259
  %v6291 = vadd.f32 %v6214, %v6249
  %v6292 = vadd.f32 %v6215, %v6260
  %v6293 = vadd.f32 %v6216, %v6261
  %v6294 = vadd.f32 %v6217, %v6262
  %v6295 = vadd.f32 %v6218, %v6263
  %v6296 = vadd.f32 %v6219, %v6264
  %v6297 = vadd.f32 %v6220, %v6265
  %v6298 = vadd.f32 %v6221, %v6266
  %v6299 = vxor.u32 %v6283, 2147483648
  %v6300 = vxor.u32 %v6284, 2147483648
  %v6301 = vxor.u32 %v6285, 2147483648
  %v6302 = vxor.u32 %v6286, 2147483648
  %v6303 = vxor.u32 %v6287, 2147483648
  %v6304 = vxor.u32 %v6288, 2147483648
  %v6305 = vxor.u32 %v6289, 2147483648
  %v6306 = vxor.u32 %v6290, 2147483648
  %v6307 = vxor.u32 %v6291, 2147483648
  %v6308 = vxor.u32 %v6292, 2147483648
  %v6309 = vxor.u32 %v6293, 2147483648
  %v6310 = vxor.u32 %v6294, 2147483648
  %v6311 = vxor.u32 %v6295, 2147483648
  %v6312 = vxor.u32 %v6296, 2147483648
  %v6313 = vxor.u32 %v6297, 2147483648
  %v6314 = vxor.u32 %v6298, 2147483648
  %v6315 = vmul.f32 %v6299, 1.442695
  %v6316 = vpow.pop %v6315
  %v6317 = vmul.f32 %v6300, 1.442695
  %v6318 = vpow.pop %v6317
  %v6319 = vmul.f32 %v6301, 1.442695
  %v6320 = vpow.pop %v6319
  %v6321 = vmul.f32 %v6302, 1.442695
  %v6322 = vpow.pop %v6321
  %v6323 = vmul.f32 %v6303, 1.442695
  %v6324 = vpow.pop %v6323
  %v6325 = vmul.f32 %v6304, 1.442695
  %v6326 = vpow.pop %v6325
  %v6327 = vmul.f32 %v6305, 1.442695
  %v6328 = vpow.pop %v6327
  %v6329 = vmul.f32 %v6306, 1.442695
  %v6330 = vpow.pop %v6329
  %v6331 = vmul.f32 %v6307, 1.442695
  %v6332 = vpow.pop %v6331
  %v6333 = vmul.f32 %v6308, 1.442695
  %v6334 = vpow.pop %v6333
  %v6335 = vmul.f32 %v6309, 1.442695
  %v6336 = vpow.pop %v6335
  %v6337 = vmul.f32 %v6310, 1.442695
  %v6338 = vpow.pop %v6337
  %v6339 = vmul.f32 %v6311, 1.442695
  %v6340 = vpow.pop %v6339
  %v6341 = vmul.f32 %v6312, 1.442695
  %v6342 = vpow.pop %v6341
  %v6343 = vmul.f32 %v6313, 1.442695
  %v6344 = vpow.pop %v6343
  %v6345 = vmul.f32 %v6314, 1.442695
  %v6346 = vpow.pop %v6345
  %v6347 = vadd.f32 %v6316, 1.0
  %v6348 = vadd.f32 %v6318, 1.0
  %v6349 = vadd.f32 %v6320, 1.0
  %v6350 = vadd.f32 %v6322, 1.0
  %v6351 = vadd.f32 %v6324, 1.0
  %v6352 = vadd.f32 %v6326, 1.0
  %v6353 = vadd.f32 %v6328, 1.0
  %v6354 = vadd.f32 %v6330, 1.0
  %v6355 = vadd.f32 %v6332, 1.0
  %v6356 = vadd.f32 %v6334, 1.0
  %v6357 = vadd.f32 %v6336, 1.0
  %v6358 = vadd.f32 %v6338, 1.0
  %v6359 = vadd.f32 %v6340, 1.0
  %v6360 = vadd.f32 %v6342, 1.0
  %v6361 = vadd.f32 %v6344, 1.0
  %v6362 = vadd.f32 %v6346, 1.0
  %v6363 = vrcp.pop %v6347
  %v6364 = vmul.f32 %v6347, %v6363
  %v6365 = vsub.f32 1.0, %v6364
  %v6366 = vmul.f32 %v6363, %v6365
  %v6367 = vadd.f32 %v6363, %v6366
  %vm6368 = vweird.f32 %v6347
  %vm6369 = vweird.f32 %v6363
  %vm6370 = vmor %vm6368, %vm6369
  %v6371 = vsel %vm6370, %v6363, %v6367
  %v6372 = vand.u32 2147483647, %v6347
  %vm6373 = vcmp.eq.f32.partialorder %v6372, 8.507059e+37
  %v6374 = vand.u32 %v6347, 2147483648
  %v6375 = vor.u32 1.1754944e-38, %v6374
  %v6376 = vsel %vm6373, %v6375, %v6371
  %v6377 = vmul.f32 1.0, %v6376
  %v6378 = vrcp.pop %v6348
  %v6379 = vmul.f32 %v6348, %v6378
  %v6380 = vsub.f32 1.0, %v6379
  %v6381 = vmul.f32 %v6378, %v6380
  %v6382 = vadd.f32 %v6378, %v6381
  %vm6383 = vweird.f32 %v6348
  %vm6384 = vweird.f32 %v6378
  %vm6385 = vmor %vm6383, %vm6384
  %v6386 = vsel %vm6385, %v6378, %v6382
  %v6387 = vand.u32 2147483647, %v6348
  %vm6388 = vcmp.eq.f32.partialorder %v6387, 8.507059e+37
  %v6389 = vand.u32 %v6348, 2147483648
  %v6390 = vor.u32 1.1754944e-38, %v6389
  %v6391 = vsel %vm6388, %v6390, %v6386
  %v6392 = vmul.f32 1.0, %v6391
  %v6393 = vrcp.pop %v6349
  %v6394 = vmul.f32 %v6349, %v6393
  %v6395 = vsub.f32 1.0, %v6394
  %v6396 = vmul.f32 %v6393, %v6395
  %v6397 = vadd.f32 %v6393, %v6396
  %vm6398 = vweird.f32 %v6349
  %vm6399 = vweird.f32 %v6393
  %vm6400 = vmor %vm6398, %vm6399
  %v6401 = vsel %vm6400, %v6393, %v6397
  %v6402 = vand.u32 2147483647, %v6349
  %vm6403 = vcmp.eq.f32.partialorder %v6402, 8.507059e+37
  %v6404 = vand.u32 %v6349, 2147483648
  %v6405 = vor.u32 1.1754944e-38, %v6404
  %v6406 = vsel %vm6403, %v6405, %v6401
  %v6407 = vmul.f32 1.0, %v6406
  %v6408 = vrcp.pop %v6350
  %v6409 = vmul.f32 %v6350, %v6408
  %v6410 = vsub.f32 1.0, %v6409
  %v6411 = vmul.f32 %v6408, %v6410
  %v6412 = vadd.f32 %v6408, %v6411
  %vm6413 = vweird.f32 %v6350
  %vm6414 = vweird.f32 %v6408
  %vm6415 = vmor %vm6413, %vm6414
  %v6416 = vsel %vm6415, %v6408, %v6412
  %v6417 = vand.u32 2147483647, %v6350
  %vm6418 = vcmp.eq.f32.partialorder %v6417, 8.507059e+37
  %v6419 = vand.u32 %v6350, 2147483648
  %v6420 = vor.u32 1.1754944e-38, %v6419
  %v6421 = vsel %vm6418, %v6420, %v6416
  %v6422 = vmul.f32 1.0, %v6421
  %v6423 = vrcp.pop %v6351
  %v6424 = vmul.f32 %v6351, %v6423
  %v6425 = vsub.f32 1.0, %v6424
  %v6426 = vmul.f32 %v6423, %v6425
  %v6427 = vadd.f32 %v6423, %v6426
  %vm6428 = vweird.f32 %v6351
  %vm6429 = vweird.f32 %v6423
  %vm6430 = vmor %vm6428, %vm6429
  %v6431 = vsel %vm6430, %v6423, %v6427
  %v6432 = vand.u32 2147483647, %v6351
  %vm6433 = vcmp.eq.f32.partialorder %v6432, 8.507059e+37
  %v6434 = vand.u32 %v6351, 2147483648
  %v6435 = vor.u32 1.1754944e-38, %v6434
  %v6436 = vsel %vm6433, %v6435, %v6431
  %v6437 = vmul.f32 1.0, %v6436
  %v6438 = vrcp.pop %v6352
  %v6439 = vmul.f32 %v6352, %v6438
  %v6440 = vsub.f32 1.0, %v6439
  %v6441 = vmul.f32 %v6438, %v6440
  %v6442 = vadd.f32 %v6438, %v6441
  %vm6443 = vweird.f32 %v6352
  %vm6444 = vweird.f32 %v6438
  %vm6445 = vmor %vm6443, %vm6444
  %v6446 = vsel %vm6445, %v6438, %v6442
  %v6447 = vand.u32 2147483647, %v6352
  %vm6448 = vcmp.eq.f32.partialorder %v6447, 8.507059e+37
  %v6449 = vand.u32 %v6352, 2147483648
  %v6450 = vor.u32 1.1754944e-38, %v6449
  %v6451 = vsel %vm6448, %v6450, %v6446
  %v6452 = vmul.f32 1.0, %v6451
  %v6453 = vrcp.pop %v6353
  %v6454 = vmul.f32 %v6353, %v6453
  %v6455 = vsub.f32 1.0, %v6454
  %v6456 = vmul.f32 %v6453, %v6455
  %v6457 = vadd.f32 %v6453, %v6456
  %vm6458 = vweird.f32 %v6353
  %vm6459 = vweird.f32 %v6453
  %vm6460 = vmor %vm6458, %vm6459
  %v6461 = vsel %vm6460, %v6453, %v6457
  %v6462 = vand.u32 2147483647, %v6353
  %vm6463 = vcmp.eq.f32.partialorder %v6462, 8.507059e+37
  %v6464 = vand.u32 %v6353, 2147483648
  %v6465 = vor.u32 1.1754944e-38, %v6464
  %v6466 = vsel %vm6463, %v6465, %v6461
  %v6467 = vmul.f32 1.0, %v6466
  %v6468 = vrcp.pop %v6354
  %v6469 = vmul.f32 %v6354, %v6468
  %v6470 = vsub.f32 1.0, %v6469
  %v6471 = vmul.f32 %v6468, %v6470
  %v6472 = vadd.f32 %v6468, %v6471
  %vm6473 = vweird.f32 %v6354
  %vm6474 = vweird.f32 %v6468
  %vm6475 = vmor %vm6473, %vm6474
  %v6476 = vsel %vm6475, %v6468, %v6472
  %v6477 = vand.u32 2147483647, %v6354
  %vm6478 = vcmp.eq.f32.partialorder %v6477, 8.507059e+37
  %v6479 = vand.u32 %v6354, 2147483648
  %v6480 = vor.u32 1.1754944e-38, %v6479
  %v6481 = vsel %vm6478, %v6480, %v6476
  %v6482 = vmul.f32 1.0, %v6481
  %v6483 = vrcp.pop %v6355
  %v6484 = vmul.f32 %v6355, %v6483
  %v6485 = vsub.f32 1.0, %v6484
  %v6486 = vmul.f32 %v6483, %v6485
  %v6487 = vadd.f32 %v6483, %v6486
  %vm6488 = vweird.f32 %v6355
  %vm6489 = vweird.f32 %v6483
  %vm6490 = vmor %vm6488, %vm6489
  %v6491 = vsel %vm6490, %v6483, %v6487
  %v6492 = vand.u32 2147483647, %v6355
  %vm6493 = vcmp.eq.f32.partialorder %v6492, 8.507059e+37
  %v6494 = vand.u32 %v6355, 2147483648
  %v6495 = vor.u32 1.1754944e-38, %v6494
  %v6496 = vsel %vm6493, %v6495, %v6491
  %v6497 = vmul.f32 1.0, %v6496
  %v6498 = vrcp.pop %v6356
  %v6499 = vmul.f32 %v6356, %v6498
  %v6500 = vsub.f32 1.0, %v6499
  %v6501 = vmul.f32 %v6498, %v6500
  %v6502 = vadd.f32 %v6498, %v6501
  %vm6503 = vweird.f32 %v6356
  %vm6504 = vweird.f32 %v6498
  %vm6505 = vmor %vm6503, %vm6504
  %v6506 = vsel %vm6505, %v6498, %v6502
  %v6507 = vand.u32 2147483647, %v6356
  %vm6508 = vcmp.eq.f32.partialorder %v6507, 8.507059e+37
  %v6509 = vand.u32 %v6356, 2147483648
  %v6510 = vor.u32 1.1754944e-38, %v6509
  %v6511 = vsel %vm6508, %v6510, %v6506
  %v6512 = vmul.f32 1.0, %v6511
  %v6513 = vrcp.pop %v6357
  %v6514 = vmul.f32 %v6357, %v6513
  %v6515 = vsub.f32 1.0, %v6514
  %v6516 = vmul.f32 %v6513, %v6515
  %v6517 = vadd.f32 %v6513, %v6516
  %vm6518 = vweird.f32 %v6357
  %vm6519 = vweird.f32 %v6513
  %vm6520 = vmor %vm6518, %vm6519
  %v6521 = vsel %vm6520, %v6513, %v6517
  %v6522 = vand.u32 2147483647, %v6357
  %vm6523 = vcmp.eq.f32.partialorder %v6522, 8.507059e+37
  %v6524 = vand.u32 %v6357, 2147483648
  %v6525 = vor.u32 1.1754944e-38, %v6524
  %v6526 = vsel %vm6523, %v6525, %v6521
  %v6527 = vmul.f32 1.0, %v6526
  %v6528 = vrcp.pop %v6358
  %v6529 = vmul.f32 %v6358, %v6528
  %v6530 = vsub.f32 1.0, %v6529
  %v6531 = vmul.f32 %v6528, %v6530
  %v6532 = vadd.f32 %v6528, %v6531
  %vm6533 = vweird.f32 %v6358
  %vm6534 = vweird.f32 %v6528
  %vm6535 = vmor %vm6533, %vm6534
  %v6536 = vsel %vm6535, %v6528, %v6532
  %v6537 = vand.u32 2147483647, %v6358
  %vm6538 = vcmp.eq.f32.partialorder %v6537, 8.507059e+37
  %v6539 = vand.u32 %v6358, 2147483648
  %v6540 = vor.u32 1.1754944e-38, %v6539
  %v6541 = vsel %vm6538, %v6540, %v6536
  %v6542 = vmul.f32 1.0, %v6541
  %v6543 = vrcp.pop %v6359
  %v6544 = vmul.f32 %v6359, %v6543
  %v6545 = vsub.f32 1.0, %v6544
  %v6546 = vmul.f32 %v6543, %v6545
  %v6547 = vadd.f32 %v6543, %v6546
  %vm6548 = vweird.f32 %v6359
  %vm6549 = vweird.f32 %v6543
  %vm6550 = vmor %vm6548, %vm6549
  %v6551 = vsel %vm6550, %v6543, %v6547
  %v6552 = vand.u32 2147483647, %v6359
  %vm6553 = vcmp.eq.f32.partialorder %v6552, 8.507059e+37
  %v6554 = vand.u32 %v6359, 2147483648
  %v6555 = vor.u32 1.1754944e-38, %v6554
  %v6556 = vsel %vm6553, %v6555, %v6551
  %v6557 = vmul.f32 1.0, %v6556
  %v6558 = vrcp.pop %v6360
  %v6559 = vmul.f32 %v6360, %v6558
  %v6560 = vsub.f32 1.0, %v6559
  %v6561 = vmul.f32 %v6558, %v6560
  %v6562 = vadd.f32 %v6558, %v6561
  %vm6563 = vweird.f32 %v6360
  %vm6564 = vweird.f32 %v6558
  %vm6565 = vmor %vm6563, %vm6564
  %v6566 = vsel %vm6565, %v6558, %v6562
  %v6567 = vand.u32 2147483647, %v6360
  %vm6568 = vcmp.eq.f32.partialorder %v6567, 8.507059e+37
  %v6569 = vand.u32 %v6360, 2147483648
  %v6570 = vor.u32 1.1754944e-38, %v6569
  %v6571 = vsel %vm6568, %v6570, %v6566
  %v6572 = vmul.f32 1.0, %v6571
  %v6573 = vrcp.pop %v6361
  %v6574 = vmul.f32 %v6361, %v6573
  %v6575 = vsub.f32 1.0, %v6574
  %v6576 = vmul.f32 %v6573, %v6575
  %v6577 = vadd.f32 %v6573, %v6576
  %vm6578 = vweird.f32 %v6361
  %vm6579 = vweird.f32 %v6573
  %vm6580 = vmor %vm6578, %vm6579
  %v6581 = vsel %vm6580, %v6573, %v6577
  %v6582 = vand.u32 2147483647, %v6361
  %vm6583 = vcmp.eq.f32.partialorder %v6582, 8.507059e+37
  %v6584 = vand.u32 %v6361, 2147483648
  %v6585 = vor.u32 1.1754944e-38, %v6584
  %v6586 = vsel %vm6583, %v6585, %v6581
  %v6587 = vmul.f32 1.0, %v6586
  %v6588 = vrcp.pop %v6362
  %v6589 = vmul.f32 %v6362, %v6588
  %v6590 = vsub.f32 1.0, %v6589
  %v6591 = vmul.f32 %v6588, %v6590
  %v6592 = vadd.f32 %v6588, %v6591
  %vm6593 = vweird.f32 %v6362
  %vm6594 = vweird.f32 %v6588
  %vm6595 = vmor %vm6593, %vm6594
  %v6596 = vsel %vm6595, %v6588, %v6592
  %v6597 = vand.u32 2147483647, %v6362
  %vm6598 = vcmp.eq.f32.partialorder %v6597, 8.507059e+37
  %v6599 = vand.u32 %v6362, 2147483648
  %v6600 = vor.u32 1.1754944e-38, %v6599
  %v6601 = vsel %vm6598, %v6600, %v6596
  %v6602 = vmul.f32 1.0, %v6601
  %6603 = vrot.lane.b32.xlu0 %v6246, 64
  %v6604 = vpop.permute.xlu0 %6603
  %6605 = vrot.lane.b32.xlu0 %v6253, 64
  %v6606 = vpop.permute.xlu0 %6605
  %6607 = vrot.lane.b32.xlu0 %v6254, 64
  %v6608 = vpop.permute.xlu0 %6607
  %6609 = vrot.lane.b32.xlu0 %v6255, 64
  %v6610 = vpop.permute.xlu0 %6609
  %6611 = vrot.lane.b32.xlu0 %v6256, 64
  %v6612 = vpop.permute.xlu0 %6611
  %6613 = vrot.lane.b32.xlu0 %v6257, 64
  %v6614 = vpop.permute.xlu0 %6613
  %6615 = vrot.lane.b32.xlu0 %v6258, 64
  %v6616 = vpop.permute.xlu0 %6615
  %6617 = vrot.lane.b32.xlu0 %v6259, 64
  %v6618 = vpop.permute.xlu0 %6617
  %6619 = vrot.lane.b32.xlu0 %v6249, 64
  %v6620 = vpop.permute.xlu0 %6619
  %6621 = vrot.lane.b32.xlu0 %v6260, 64
  %v6622 = vpop.permute.xlu0 %6621
  %6623 = vrot.lane.b32.xlu0 %v6261, 64
  %v6624 = vpop.permute.xlu0 %6623
  %6625 = vrot.lane.b32.xlu0 %v6262, 64
  %v6626 = vpop.permute.xlu0 %6625
  %6627 = vrot.lane.b32.xlu0 %v6263, 64
  %v6628 = vpop.permute.xlu0 %6627
  %6629 = vrot.lane.b32.xlu0 %v6264, 64
  %v6630 = vpop.permute.xlu0 %6629
  %6631 = vrot.lane.b32.xlu0 %v6265, 64
  %v6632 = vpop.permute.xlu0 %6631
  %6633 = vrot.lane.b32.xlu0 %v6266, 64
  %v6634 = vpop.permute.xlu0 %6633
  %v6651 = vmul.f32 %v6377, %v6604
  %v6652 = vmul.f32 %v6392, %v6606
  %v6653 = vmul.f32 %v6407, %v6608
  %v6654 = vmul.f32 %v6422, %v6610
  %v6655 = vmul.f32 %v6437, %v6612
  %v6656 = vmul.f32 %v6452, %v6614
  %v6657 = vmul.f32 %v6467, %v6616
  %v6658 = vmul.f32 %v6482, %v6618
  %v6659 = vmul.f32 %v6497, %v6620
  %v6660 = vmul.f32 %v6512, %v6622
  %v6661 = vmul.f32 %v6527, %v6624
  %v6662 = vmul.f32 %v6542, %v6626
  %v6663 = vmul.f32 %v6557, %v6628
  %v6664 = vmul.f32 %v6572, %v6630
  %v6665 = vmul.f32 %v6587, %v6632
  %v6666 = vmul.f32 %v6602, %v6634
  %6683 = vrot.lane.b32.xlu0 %v6651, 64
  %v6684 = vpop.permute.xlu0 %6683
  %6685 = vrot.lane.b32.xlu0 %v6652, 64
  %v6686 = vpop.permute.xlu0 %6685
  %6687 = vrot.lane.b32.xlu0 %v6653, 64
  %v6688 = vpop.permute.xlu0 %6687
  %6689 = vrot.lane.b32.xlu0 %v6654, 64
  %v6690 = vpop.permute.xlu0 %6689
  %6691 = vrot.lane.b32.xlu0 %v6655, 64
  %v6692 = vpop.permute.xlu0 %6691
  %6693 = vrot.lane.b32.xlu0 %v6656, 64
  %v6694 = vpop.permute.xlu0 %6693
  %6695 = vrot.lane.b32.xlu0 %v6657, 64
  %v6696 = vpop.permute.xlu0 %6695
  %6697 = vrot.lane.b32.xlu0 %v6658, 64
  %v6698 = vpop.permute.xlu0 %6697
  %6699 = vrot.lane.b32.xlu0 %v6659, 64
  %v6700 = vpop.permute.xlu0 %6699
  %6701 = vrot.lane.b32.xlu0 %v6660, 64
  %v6702 = vpop.permute.xlu0 %6701
  %6703 = vrot.lane.b32.xlu0 %v6661, 64
  %v6704 = vpop.permute.xlu0 %6703
  %6705 = vrot.lane.b32.xlu0 %v6662, 64
  %v6706 = vpop.permute.xlu0 %6705
  %6707 = vrot.lane.b32.xlu0 %v6663, 64
  %v6708 = vpop.permute.xlu0 %6707
  %6709 = vrot.lane.b32.xlu0 %v6664, 64
  %v6710 = vpop.permute.xlu0 %6709
  %6711 = vrot.lane.b32.xlu0 %v6665, 64
  %v6712 = vpop.permute.xlu0 %6711
  %6713 = vrot.lane.b32.xlu0 %v6666, 64
  %v6714 = vpop.permute.xlu0 %6713
  %v6731 = vadd.f32 %v6206, %v6684
  %v6732 = vadd.f32 %v6207, %v6686
  %v6733 = vadd.f32 %v6208, %v6688
  %v6734 = vadd.f32 %v6209, %v6690
  %v6735 = vadd.f32 %v6210, %v6692
  %v6736 = vadd.f32 %v6211, %v6694
  %v6737 = vadd.f32 %v6212, %v6696
  %v6738 = vadd.f32 %v6213, %v6698
  %v6739 = vadd.f32 %v6214, %v6700
  %v6740 = vadd.f32 %v6215, %v6702
  %v6741 = vadd.f32 %v6216, %v6704
  %v6742 = vadd.f32 %v6217, %v6706
  %v6743 = vadd.f32 %v6218, %v6708
  %v6744 = vadd.f32 %v6219, %v6710
  %v6745 = vadd.f32 %v6220, %v6712
  %v6746 = vadd.f32 %v6221, %v6714
  %v6747 = vtanh.pop %v6731
  %v6748 = vtanh.pop %v6732
  %v6749 = vtanh.pop %v6733
  %v6750 = vtanh.pop %v6734
  %v6751 = vtanh.pop %v6735
  %v6752 = vtanh.pop %v6736
  %v6753 = vtanh.pop %v6737
  %v6754 = vtanh.pop %v6738
  %v6755 = vtanh.pop %v6739
  %v6756 = vtanh.pop %v6740
  %v6757 = vtanh.pop %v6741
  %v6758 = vtanh.pop %v6742
  %v6759 = vtanh.pop %v6743
  %v6760 = vtanh.pop %v6744
  %v6761 = vtanh.pop %v6745
  %v6762 = vtanh.pop %v6746
  %v6763 = vsub.f32 1.0, %v6377
  %v6764 = vsub.f32 1.0, %v6392
  %v6765 = vsub.f32 1.0, %v6407
  %v6766 = vsub.f32 1.0, %v6422
  %v6767 = vsub.f32 1.0, %v6437
  %v6768 = vsub.f32 1.0, %v6452
  %v6769 = vsub.f32 1.0, %v6467
  %v6770 = vsub.f32 1.0, %v6482
  %v6771 = vsub.f32 1.0, %v6497
  %v6772 = vsub.f32 1.0, %v6512
  %v6773 = vsub.f32 1.0, %v6527
  %v6774 = vsub.f32 1.0, %v6542
  %v6775 = vsub.f32 1.0, %v6557
  %v6776 = vsub.f32 1.0, %v6572
  %v6777 = vsub.f32 1.0, %v6587
  %v6778 = vsub.f32 1.0, %v6602
  %6795 = vrot.lane.b32.xlu0 %v6747, 96
  %v6796 = vpop.permute.xlu0 %6795
  %6797 = vrot.lane.b32.xlu0 %v6748, 96
  %v6798 = vpop.permute.xlu0 %6797
  %6799 = vrot.lane.b32.xlu0 %v6749, 96
  %v6800 = vpop.permute.xlu0 %6799
  %6801 = vrot.lane.b32.xlu0 %v6750, 96
  %v6802 = vpop.permute.xlu0 %6801
  %6803 = vrot.lane.b32.xlu0 %v6751, 96
  %v6804 = vpop.permute.xlu0 %6803
  %6805 = vrot.lane.b32.xlu0 %v6752, 96
  %v6806 = vpop.permute.xlu0 %6805
  %6807 = vrot.lane.b32.xlu0 %v6753, 96
  %v6808 = vpop.permute.xlu0 %6807
  %6809 = vrot.lane.b32.xlu0 %v6754, 96
  %v6810 = vpop.permute.xlu0 %6809
  %6811 = vrot.lane.b32.xlu0 %v6755, 96
  %v6812 = vpop.permute.xlu0 %6811
  %6813 = vrot.lane.b32.xlu0 %v6756, 96
  %v6814 = vpop.permute.xlu0 %6813
  %6815 = vrot.lane.b32.xlu0 %v6757, 96
  %v6816 = vpop.permute.xlu0 %6815
  %6817 = vrot.lane.b32.xlu0 %v6758, 96
  %v6818 = vpop.permute.xlu0 %6817
  %6819 = vrot.lane.b32.xlu0 %v6759, 96
  %v6820 = vpop.permute.xlu0 %6819
  %6821 = vrot.lane.b32.xlu0 %v6760, 96
  %v6822 = vpop.permute.xlu0 %6821
  %6823 = vrot.lane.b32.xlu0 %v6761, 96
  %v6824 = vpop.permute.xlu0 %6823
  %6825 = vrot.lane.b32.xlu0 %v6762, 96
  %v6826 = vpop.permute.xlu0 %6825
  %v6843 = vmul.f32 %v6763, %v6796
  %v6844 = vmul.f32 %v6764, %v6798
  %v6845 = vmul.f32 %v6765, %v6800
  %v6846 = vmul.f32 %v6766, %v6802
  %v6847 = vmul.f32 %v6767, %v6804
  %v6848 = vmul.f32 %v6768, %v6806
  %v6849 = vmul.f32 %v6769, %v6808
  %v6850 = vmul.f32 %v6770, %v6810
  %v6851 = vmul.f32 %v6771, %v6812
  %v6852 = vmul.f32 %v6772, %v6814
  %v6853 = vmul.f32 %v6773, %v6816
  %v6854 = vmul.f32 %v6774, %v6818
  %v6855 = vmul.f32 %v6775, %v6820
  %v6856 = vmul.f32 %v6776, %v6822
  %v6857 = vmul.f32 %v6777, %v6824
  %v6858 = vmul.f32 %v6778, %v6826
  %v6859 = vrot.slane %v6204, 1
  %v6860 = vrot.slane %v6204, 2
  %v6861 = vrot.slane %v6204, 3
  %v6862 = vrot.slane %v6204, 4
  %v6863 = vrot.slane %v6204, 5
  %v6864 = vrot.slane %v6204, 6
  %v6865 = vrot.slane %v6204, 7
  %v6866 = vrot.slane %v6205, 1
  %v6867 = vrot.slane %v6205, 2
  %v6868 = vrot.slane %v6205, 3
  %v6869 = vrot.slane %v6205, 4
  %v6870 = vrot.slane %v6205, 5
  %v6871 = vrot.slane %v6205, 6
  %v6872 = vrot.slane %v6205, 7
  %6873 = vrot.lane.b32.xlu0 %v6204, 32
  %v6874 = vpop.permute.xlu0 %6873
  %6875 = vrot.lane.b32.xlu0 %v6859, 32
  %v6876 = vpop.permute.xlu0 %6875
  %6877 = vrot.lane.b32.xlu0 %v6860, 32
  %v6878 = vpop.permute.xlu0 %6877
  %6879 = vrot.lane.b32.xlu0 %v6861, 32
  %v6880 = vpop.permute.xlu0 %6879
  %6881 = vrot.lane.b32.xlu0 %v6862, 32
  %v6882 = vpop.permute.xlu0 %6881
  %6883 = vrot.lane.b32.xlu0 %v6863, 32
  %v6884 = vpop.permute.xlu0 %6883
  %6885 = vrot.lane.b32.xlu0 %v6864, 32
  %v6886 = vpop.permute.xlu0 %6885
  %6887 = vrot.lane.b32.xlu0 %v6865, 32
  %v6888 = vpop.permute.xlu0 %6887
  %6889 = vrot.lane.b32.xlu0 %v6205, 32
  %v6890 = vpop.permute.xlu0 %6889
  %6891 = vrot.lane.b32.xlu0 %v6866, 32
  %v6892 = vpop.permute.xlu0 %6891
  %6893 = vrot.lane.b32.xlu0 %v6867, 32
  %v6894 = vpop.permute.xlu0 %6893
  %6895 = vrot.lane.b32.xlu0 %v6868, 32
  %v6896 = vpop.permute.xlu0 %6895
  %6897 = vrot.lane.b32.xlu0 %v6869, 32
  %v6898 = vpop.permute.xlu0 %6897
  %6899 = vrot.lane.b32.xlu0 %v6870, 32
  %v6900 = vpop.permute.xlu0 %6899
  %6901 = vrot.lane.b32.xlu0 %v6871, 32
  %v6902 = vpop.permute.xlu0 %6901
  %6903 = vrot.lane.b32.xlu0 %v6872, 32
  %v6904 = vpop.permute.xlu0 %6903
  %v6921 = vmul.f32 %v6377, %v6874
  %v6922 = vmul.f32 %v6392, %v6876
  %v6923 = vmul.f32 %v6407, %v6878
  %v6924 = vmul.f32 %v6422, %v6880
  %v6925 = vmul.f32 %v6437, %v6882
  %v6926 = vmul.f32 %v6452, %v6884
  %v6927 = vmul.f32 %v6467, %v6886
  %v6928 = vmul.f32 %v6482, %v6888
  %v6929 = vmul.f32 %v6497, %v6890
  %v6930 = vmul.f32 %v6512, %v6892
  %v6931 = vmul.f32 %v6527, %v6894
  %v6932 = vmul.f32 %v6542, %v6896
  %v6933 = vmul.f32 %v6557, %v6898
  %v6934 = vmul.f32 %v6572, %v6900
  %v6935 = vmul.f32 %v6587, %v6902
  %v6936 = vmul.f32 %v6602, %v6904
  %v6937 = vadd.f32 %v6843, %v6921
  %v6938 = vadd.f32 %v6844, %v6922
  %v6939 = vadd.f32 %v6845, %v6923
  %v6940 = vadd.f32 %v6846, %v6924
  %v6941 = vadd.f32 %v6847, %v6925
  %v6942 = vadd.f32 %v6848, %v6926
  %v6943 = vadd.f32 %v6849, %v6927
  %v6944 = vadd.f32 %v6850, %v6928
  %v6945 = vadd.f32 %v6851, %v6929
  %v6946 = vadd.f32 %v6852, %v6930
  %v6947 = vadd.f32 %v6853, %v6931
  %v6948 = vadd.f32 %v6854, %v6932
  %v6949 = vadd.f32 %v6855, %v6933
  %v6950 = vadd.f32 %v6856, %v6934
  %v6951 = vadd.f32 %v6857, %v6935
  %v6952 = vadd.f32 %v6858, %v6936
  %v6953 = vmul.f32 %v6937, %v768
  %v6954 = vmul.f32 %v6938, %v772
  %v6955 = vmul.f32 %v6939, %v773
  %v6956 = vmul.f32 %v6940, %v774
  %v6957 = vmul.f32 %v6941, %v775
  %v6958 = vmul.f32 %v6942, %v776
  %v6959 = vmul.f32 %v6943, %v777
  %v6960 = vmul.f32 %v6944, %v778
  %v6961 = vmul.f32 %v6945, %v771
  %v6962 = vmul.f32 %v6946, %v779
  %v6963 = vmul.f32 %v6947, %v780
  %v6964 = vmul.f32 %v6948, %v781
  %v6965 = vmul.f32 %v6949, %v782
  %v6966 = vmul.f32 %v6950, %v783
  %v6967 = vmul.f32 %v6951, %v784
  %v6968 = vmul.f32 %v6952, %v785
  %v6969 = vmul.f32 %v6937, %v715
  %v6970 = vmul.f32 %v6938, %v720
  %v6971 = vmul.f32 %v6939, %v721
  %v6972 = vmul.f32 %v6940, %v722
  %v6973 = vmul.f32 %v6941, %v723
  %v6974 = vmul.f32 %v6942, %v724
  %v6975 = vmul.f32 %v6943, %v725
  %v6976 = vmul.f32 %v6944, %v726
  %v6977 = vmul.f32 %v6945, %v719
  %v6978 = vmul.f32 %v6946, %v727
  %v6979 = vmul.f32 %v6947, %v728
  %v6980 = vmul.f32 %v6948, %v729
  %v6981 = vmul.f32 %v6949, %v730
  %v6982 = vmul.f32 %v6950, %v731
  %v6983 = vmul.f32 %v6951, %v732
  %v6984 = vmul.f32 %v6952, %v733
  %v7001 = vrot.slane %v751, 7
  %v7002 = vsel %vm840, %v7001, %v750
  %v7003 = vrot.slane %v752, 6
  %v7004 = vsel %vm843, %v7003, %v7002
  %v7005 = vrot.slane %v753, 5
  %v7006 = vsel %vm846, %v7005, %v7004
  %v7007 = vrot.slane %v754, 4
  %v7008 = vsel %vm849, %v7007, %v7006
  %v7009 = vrot.slane %v755, 3
  %v7010 = vsel %vm852, %v7009, %v7008
  %v7011 = vrot.slane %v756, 2
  %v7012 = vsel %vm855, %v7011, %v7010
  %v7013 = vrot.slane %v757, 1
  %v7014 = vsel %vm858, %v7013, %v7012
  %v7015 = vrot.slane %v759, 7
  %v7016 = vsel %vm840, %v7015, %v758
  %v7017 = vrot.slane %v760, 6
  %v7018 = vsel %vm843, %v7017, %v7016
  %v7019 = vrot.slane %v761, 5
  %v7020 = vsel %vm846, %v7019, %v7018
  %v7021 = vrot.slane %v762, 4
  %v7022 = vsel %vm849, %v7021, %v7020
  %v7023 = vrot.slane %v763, 3
  %v7024 = vsel %vm852, %v7023, %v7022
  %v7025 = vrot.slane %v764, 2
  %v7026 = vsel %vm855, %v7025, %v7024
  %v7027 = vrot.slane %v765, 1
  %v7028 = vsel %vm858, %v7027, %v7026
  %7029 = vrot.lane.b32.xlu0 %v7014, 96
  %v7030 = vpop.permute.xlu0 %7029
  %7031 = vrot.lane.b32.xlu0 %v7028, 96
  %v7032 = vpop.permute.xlu0 %7031
  %v7051 = vrot.slane %v6970, 7
  %v7052 = vsel %vm840, %v7051, %v6969
  %v7053 = vrot.slane %v6971, 6
  %v7054 = vsel %vm843, %v7053, %v7052
  %v7055 = vrot.slane %v6972, 5
  %v7056 = vsel %vm846, %v7055, %v7054
  %v7057 = vrot.slane %v6973, 4
  %v7058 = vsel %vm849, %v7057, %v7056
  %v7059 = vrot.slane %v6974, 3
  %v7060 = vsel %vm852, %v7059, %v7058
  %v7061 = vrot.slane %v6975, 2
  %v7062 = vsel %vm855, %v7061, %v7060
  %v7063 = vrot.slane %v6976, 1
  %v7064 = vsel %vm858, %v7063, %v7062
  %v7065 = vrot.slane %v6978, 7
  %v7066 = vsel %vm840, %v7065, %v6977
  %v7067 = vrot.slane %v6979, 6
  %v7068 = vsel %vm843, %v7067, %v7066
  %v7069 = vrot.slane %v6980, 5
  %v7070 = vsel %vm846, %v7069, %v7068
  %v7071 = vrot.slane %v6981, 4
  %v7072 = vsel %vm849, %v7071, %v7070
  %v7073 = vrot.slane %v6982, 3
  %v7074 = vsel %vm852, %v7073, %v7072
  %v7075 = vrot.slane %v6983, 2
  %v7076 = vsel %vm855, %v7075, %v7074
  %v7077 = vrot.slane %v6984, 1
  %v7078 = vsel %vm858, %v7077, %v7076
  %7079 = vrot.lane.b32.xlu0 %v7064, 96
  %v7080 = vpop.permute.xlu0 %7079
  %7081 = vrot.lane.b32.xlu0 %v7078, 96
  %v7082 = vpop.permute.xlu0 %7081
  %vm7085 = vcmask 130048
  %v7086 = vsel %vm7085, %v7030, %v7080
  %v7087 = vsel %vm7085, %v7032, %v7082
  %v7090 = vrot.slane %v7086, 1
  %v7091 = vrot.slane %v7086, 2
  %v7092 = vrot.slane %v7086, 3
  %v7093 = vrot.slane %v7086, 4
  %v7094 = vrot.slane %v7086, 5
  %v7095 = vrot.slane %v7086, 6
  %v7096 = vrot.slane %v7086, 7
  %v7097 = vrot.slane %v7087, 1
  %v7098 = vrot.slane %v7087, 2
  %v7099 = vrot.slane %v7087, 3
  %v7100 = vrot.slane %v7087, 4
  %v7101 = vrot.slane %v7087, 5
  %v7102 = vrot.slane %v7087, 6
  %v7103 = vrot.slane %v7087, 7
  %vm7118 = vcmask 253952
  %7119 = vst.msk [vmem:[%s4] sm:$0x1] %vm7118, %v7086
  %7120 = vst.msk [vmem:[%s4 + $0x8] sm:$0x1] %vm7118, %v7090
  %7121 = vst.msk [vmem:[%s4 + $0x10] sm:$0x1] %vm7118, %v7091
  %7122 = vst.msk [vmem:[%s4 + $0x18] sm:$0x1] %vm7118, %v7092
  %7123 = vst.msk [vmem:[%s4 + $0x20] sm:$0x1] %vm7118, %v7093
  %7124 = vst.msk [vmem:[%s4 + $0x28] sm:$0x1] %vm7118, %v7094
  %7125 = vst.msk [vmem:[%s4 + $0x30] sm:$0x1] %vm7118, %v7095
  %7126 = vst.msk [vmem:[%s4 + $0x38] sm:$0x1] %vm7118, %v7096
  %7127 = vst.msk [vmem:[%s4 + $0x40] sm:$0x1] %vm7118, %v7087
  %7128 = vst.msk [vmem:[%s4 + $0x48] sm:$0x1] %vm7118, %v7097
  %7129 = vst.msk [vmem:[%s4 + $0x50] sm:$0x1] %vm7118, %v7098
  %7130 = vst.msk [vmem:[%s4 + $0x58] sm:$0x1] %vm7118, %v7099
  %7131 = vst.msk [vmem:[%s4 + $0x60] sm:$0x1] %vm7118, %v7100
  %7132 = vst.msk [vmem:[%s4 + $0x68] sm:$0x1] %vm7118, %v7101
  %7133 = vst.msk [vmem:[%s4 + $0x70] sm:$0x1] %vm7118, %v7102
  %7134 = vst.msk [vmem:[%s4 + $0x78] sm:$0x1] %vm7118, %v7103
  %v7151 = vrot.slane %v1668, 7
  %v7152 = vsel %vm840, %v7151, %v1667
  %v7153 = vrot.slane %v1669, 6
  %v7154 = vsel %vm843, %v7153, %v7152
  %v7155 = vrot.slane %v1670, 5
  %v7156 = vsel %vm846, %v7155, %v7154
  %v7157 = vrot.slane %v1671, 4
  %v7158 = vsel %vm849, %v7157, %v7156
  %v7159 = vrot.slane %v1672, 3
  %v7160 = vsel %vm852, %v7159, %v7158
  %v7161 = vrot.slane %v1673, 2
  %v7162 = vsel %vm855, %v7161, %v7160
  %v7163 = vrot.slane %v1674, 1
  %v7164 = vsel %vm858, %v7163, %v7162
  %v7165 = vrot.slane %v1676, 7
  %v7166 = vsel %vm840, %v7165, %v1675
  %v7167 = vrot.slane %v1677, 6
  %v7168 = vsel %vm843, %v7167, %v7166
  %v7169 = vrot.slane %v1678, 5
  %v7170 = vsel %vm846, %v7169, %v7168
  %v7171 = vrot.slane %v1679, 4
  %v7172 = vsel %vm849, %v7171, %v7170
  %v7173 = vrot.slane %v1680, 3
  %v7174 = vsel %vm852, %v7173, %v7172
  %v7175 = vrot.slane %v1681, 2
  %v7176 = vsel %vm855, %v7175, %v7174
  %v7177 = vrot.slane %v1682, 1
  %v7178 = vsel %vm858, %v7177, %v7176
  %7179 = vrot.lane.b32.xlu0 %v7164, 96
  %v7180 = vpop.permute.xlu0 %7179
  %7181 = vrot.lane.b32.xlu0 %v7178, 96
  %v7182 = vpop.permute.xlu0 %7181
  %v7201 = vrot.slane %v6119, 7
  %v7202 = vsel %vm840, %v7201, %v6118
  %v7203 = vrot.slane %v6120, 6
  %v7204 = vsel %vm843, %v7203, %v7202
  %v7205 = vrot.slane %v6121, 5
  %v7206 = vsel %vm846, %v7205, %v7204
  %v7207 = vrot.slane %v6122, 4
  %v7208 = vsel %vm849, %v7207, %v7206
  %v7209 = vrot.slane %v6123, 3
  %v7210 = vsel %vm852, %v7209, %v7208
  %v7211 = vrot.slane %v6124, 2
  %v7212 = vsel %vm855, %v7211, %v7210
  %v7213 = vrot.slane %v6125, 1
  %v7214 = vsel %vm858, %v7213, %v7212
  %v7215 = vrot.slane %v6127, 7
  %v7216 = vsel %vm840, %v7215, %v6126
  %v7217 = vrot.slane %v6128, 6
  %v7218 = vsel %vm843, %v7217, %v7216
  %v7219 = vrot.slane %v6129, 5
  %v7220 = vsel %vm846, %v7219, %v7218
  %v7221 = vrot.slane %v6130, 4
  %v7222 = vsel %vm849, %v7221, %v7220
  %v7223 = vrot.slane %v6131, 3
  %v7224 = vsel %vm852, %v7223, %v7222
  %v7225 = vrot.slane %v6132, 2
  %v7226 = vsel %vm855, %v7225, %v7224
  %v7227 = vrot.slane %v6133, 1
  %v7228 = vsel %vm858, %v7227, %v7226
  %7229 = vrot.lane.b32.xlu0 %v7214, 96
  %v7230 = vpop.permute.xlu0 %7229
  %7231 = vrot.lane.b32.xlu0 %v7228, 96
  %v7232 = vpop.permute.xlu0 %7231
  %v7235 = vsel %vm7085, %v7180, %v7230
  %v7236 = vsel %vm7085, %v7182, %v7232
  %v7239 = vrot.slane %v7235, 1
  %v7240 = vrot.slane %v7235, 2
  %v7241 = vrot.slane %v7235, 3
  %v7242 = vrot.slane %v7235, 4
  %v7243 = vrot.slane %v7235, 5
  %v7244 = vrot.slane %v7235, 6
  %v7245 = vrot.slane %v7235, 7
  %v7246 = vrot.slane %v7236, 1
  %v7247 = vrot.slane %v7236, 2
  %v7248 = vrot.slane %v7236, 3
  %v7249 = vrot.slane %v7236, 4
  %v7250 = vrot.slane %v7236, 5
  %v7251 = vrot.slane %v7236, 6
  %v7252 = vrot.slane %v7236, 7
  %7267 = vst.msk [vmem:[%s4 + $0x1] sm:$0x1] %vm7118, %v7235
  %7268 = vst.msk [vmem:[%s4 + $0x9] sm:$0x1] %vm7118, %v7239
  %7269 = vst.msk [vmem:[%s4 + $0x11] sm:$0x1] %vm7118, %v7240
  %7270 = vst.msk [vmem:[%s4 + $0x19] sm:$0x1] %vm7118, %v7241
  %7271 = vst.msk [vmem:[%s4 + $0x21] sm:$0x1] %vm7118, %v7242
  %7272 = vst.msk [vmem:[%s4 + $0x29] sm:$0x1] %vm7118, %v7243
  %7273 = vst.msk [vmem:[%s4 + $0x31] sm:$0x1] %vm7118, %v7244
  %7274 = vst.msk [vmem:[%s4 + $0x39] sm:$0x1] %vm7118, %v7245
  %7275 = vst.msk [vmem:[%s4 + $0x41] sm:$0x1] %vm7118, %v7236
  %7276 = vst.msk [vmem:[%s4 + $0x49] sm:$0x1] %vm7118, %v7246
  %7277 = vst.msk [vmem:[%s4 + $0x51] sm:$0x1] %vm7118, %v7247
  %7278 = vst.msk [vmem:[%s4 + $0x59] sm:$0x1] %vm7118, %v7248
  %7279 = vst.msk [vmem:[%s4 + $0x61] sm:$0x1] %vm7118, %v7249
  %7280 = vst.msk [vmem:[%s4 + $0x69] sm:$0x1] %vm7118, %v7250
  %7281 = vst.msk [vmem:[%s4 + $0x71] sm:$0x1] %vm7118, %v7251
  %7282 = vst.msk [vmem:[%s4 + $0x79] sm:$0x1] %vm7118, %v7252
  %v7299 = vrot.slane %v2591, 7
  %v7300 = vsel %vm840, %v7299, %v2590
  %v7301 = vrot.slane %v2592, 6
  %v7302 = vsel %vm843, %v7301, %v7300
  %v7303 = vrot.slane %v2593, 5
  %v7304 = vsel %vm846, %v7303, %v7302
  %v7305 = vrot.slane %v2594, 4
  %v7306 = vsel %vm849, %v7305, %v7304
  %v7307 = vrot.slane %v2595, 3
  %v7308 = vsel %vm852, %v7307, %v7306
  %v7309 = vrot.slane %v2596, 2
  %v7310 = vsel %vm855, %v7309, %v7308
  %v7311 = vrot.slane %v2597, 1
  %v7312 = vsel %vm858, %v7311, %v7310
  %v7313 = vrot.slane %v2599, 7
  %v7314 = vsel %vm840, %v7313, %v2598
  %v7315 = vrot.slane %v2600, 6
  %v7316 = vsel %vm843, %v7315, %v7314
  %v7317 = vrot.slane %v2601, 5
  %v7318 = vsel %vm846, %v7317, %v7316
  %v7319 = vrot.slane %v2602, 4
  %v7320 = vsel %vm849, %v7319, %v7318
  %v7321 = vrot.slane %v2603, 3
  %v7322 = vsel %vm852, %v7321, %v7320
  %v7323 = vrot.slane %v2604, 2
  %v7324 = vsel %vm855, %v7323, %v7322
  %v7325 = vrot.slane %v2605, 1
  %v7326 = vsel %vm858, %v7325, %v7324
  %7327 = vrot.lane.b32.xlu0 %v7312, 96
  %v7328 = vpop.permute.xlu0 %7327
  %7329 = vrot.lane.b32.xlu0 %v7326, 96
  %v7330 = vpop.permute.xlu0 %7329
  %v7349 = vrot.slane %v5268, 7
  %v7350 = vsel %vm840, %v7349, %v5267
  %v7351 = vrot.slane %v5269, 6
  %v7352 = vsel %vm843, %v7351, %v7350
  %v7353 = vrot.slane %v5270, 5
  %v7354 = vsel %vm846, %v7353, %v7352
  %v7355 = vrot.slane %v5271, 4
  %v7356 = vsel %vm849, %v7355, %v7354
  %v7357 = vrot.slane %v5272, 3
  %v7358 = vsel %vm852, %v7357, %v7356
  %v7359 = vrot.slane %v5273, 2
  %v7360 = vsel %vm855, %v7359, %v7358
  %v7361 = vrot.slane %v5274, 1
  %v7362 = vsel %vm858, %v7361, %v7360
  %v7363 = vrot.slane %v5276, 7
  %v7364 = vsel %vm840, %v7363, %v5275
  %v7365 = vrot.slane %v5277, 6
  %v7366 = vsel %vm843, %v7365, %v7364
  %v7367 = vrot.slane %v5278, 5
  %v7368 = vsel %vm846, %v7367, %v7366
  %v7369 = vrot.slane %v5279, 4
  %v7370 = vsel %vm849, %v7369, %v7368
  %v7371 = vrot.slane %v5280, 3
  %v7372 = vsel %vm852, %v7371, %v7370
  %v7373 = vrot.slane %v5281, 2
  %v7374 = vsel %vm855, %v7373, %v7372
  %v7375 = vrot.slane %v5282, 1
  %v7376 = vsel %vm858, %v7375, %v7374
  %7377 = vrot.lane.b32.xlu0 %v7362, 96
  %v7378 = vpop.permute.xlu0 %7377
  %7379 = vrot.lane.b32.xlu0 %v7376, 96
  %v7380 = vpop.permute.xlu0 %7379
  %v7383 = vsel %vm7085, %v7328, %v7378
  %v7384 = vsel %vm7085, %v7330, %v7380
  %v7387 = vrot.slane %v7383, 1
  %v7388 = vrot.slane %v7383, 2
  %v7389 = vrot.slane %v7383, 3
  %v7390 = vrot.slane %v7383, 4
  %v7391 = vrot.slane %v7383, 5
  %v7392 = vrot.slane %v7383, 6
  %v7393 = vrot.slane %v7383, 7
  %v7394 = vrot.slane %v7384, 1
  %v7395 = vrot.slane %v7384, 2
  %v7396 = vrot.slane %v7384, 3
  %v7397 = vrot.slane %v7384, 4
  %v7398 = vrot.slane %v7384, 5
  %v7399 = vrot.slane %v7384, 6
  %v7400 = vrot.slane %v7384, 7
  %7415 = vst.msk [vmem:[%s4 + $0x2] sm:$0x1] %vm7118, %v7383
  %7416 = vst.msk [vmem:[%s4 + $0xa] sm:$0x1] %vm7118, %v7387
  %7417 = vst.msk [vmem:[%s4 + $0x12] sm:$0x1] %vm7118, %v7388
  %7418 = vst.msk [vmem:[%s4 + $0x1a] sm:$0x1] %vm7118, %v7389
  %7419 = vst.msk [vmem:[%s4 + $0x22] sm:$0x1] %vm7118, %v7390
  %7420 = vst.msk [vmem:[%s4 + $0x2a] sm:$0x1] %vm7118, %v7391
  %7421 = vst.msk [vmem:[%s4 + $0x32] sm:$0x1] %vm7118, %v7392
  %7422 = vst.msk [vmem:[%s4 + $0x3a] sm:$0x1] %vm7118, %v7393
  %7423 = vst.msk [vmem:[%s4 + $0x42] sm:$0x1] %vm7118, %v7384
  %7424 = vst.msk [vmem:[%s4 + $0x4a] sm:$0x1] %vm7118, %v7394
  %7425 = vst.msk [vmem:[%s4 + $0x52] sm:$0x1] %vm7118, %v7395
  %7426 = vst.msk [vmem:[%s4 + $0x5a] sm:$0x1] %vm7118, %v7396
  %7427 = vst.msk [vmem:[%s4 + $0x62] sm:$0x1] %vm7118, %v7397
  %7428 = vst.msk [vmem:[%s4 + $0x6a] sm:$0x1] %vm7118, %v7398
  %7429 = vst.msk [vmem:[%s4 + $0x72] sm:$0x1] %vm7118, %v7399
  %7430 = vst.msk [vmem:[%s4 + $0x7a] sm:$0x1] %vm7118, %v7400
  %v7447 = vrot.slane %v3514, 7
  %v7448 = vsel %vm840, %v7447, %v3513
  %v7449 = vrot.slane %v3515, 6
  %v7450 = vsel %vm843, %v7449, %v7448
  %v7451 = vrot.slane %v3516, 5
  %v7452 = vsel %vm846, %v7451, %v7450
  %v7453 = vrot.slane %v3517, 4
  %v7454 = vsel %vm849, %v7453, %v7452
  %v7455 = vrot.slane %v3518, 3
  %v7456 = vsel %vm852, %v7455, %v7454
  %v7457 = vrot.slane %v3519, 2
  %v7458 = vsel %vm855, %v7457, %v7456
  %v7459 = vrot.slane %v3520, 1
  %v7460 = vsel %vm858, %v7459, %v7458
  %v7461 = vrot.slane %v3522, 7
  %v7462 = vsel %vm840, %v7461, %v3521
  %v7463 = vrot.slane %v3523, 6
  %v7464 = vsel %vm843, %v7463, %v7462
  %v7465 = vrot.slane %v3524, 5
  %v7466 = vsel %vm846, %v7465, %v7464
  %v7467 = vrot.slane %v3525, 4
  %v7468 = vsel %vm849, %v7467, %v7466
  %v7469 = vrot.slane %v3526, 3
  %v7470 = vsel %vm852, %v7469, %v7468
  %v7471 = vrot.slane %v3527, 2
  %v7472 = vsel %vm855, %v7471, %v7470
  %v7473 = vrot.slane %v3528, 1
  %v7474 = vsel %vm858, %v7473, %v7472
  %7475 = vrot.lane.b32.xlu0 %v7460, 96
  %v7476 = vpop.permute.xlu0 %7475
  %7477 = vrot.lane.b32.xlu0 %v7474, 96
  %v7478 = vpop.permute.xlu0 %7477
  %v7497 = vrot.slane %v4417, 7
  %v7498 = vsel %vm840, %v7497, %v4416
  %v7499 = vrot.slane %v4418, 6
  %v7500 = vsel %vm843, %v7499, %v7498
  %v7501 = vrot.slane %v4419, 5
  %v7502 = vsel %vm846, %v7501, %v7500
  %v7503 = vrot.slane %v4420, 4
  %v7504 = vsel %vm849, %v7503, %v7502
  %v7505 = vrot.slane %v4421, 3
  %v7506 = vsel %vm852, %v7505, %v7504
  %v7507 = vrot.slane %v4422, 2
  %v7508 = vsel %vm855, %v7507, %v7506
  %v7509 = vrot.slane %v4423, 1
  %v7510 = vsel %vm858, %v7509, %v7508
  %v7511 = vrot.slane %v4425, 7
  %v7512 = vsel %vm840, %v7511, %v4424
  %v7513 = vrot.slane %v4426, 6
  %v7514 = vsel %vm843, %v7513, %v7512
  %v7515 = vrot.slane %v4427, 5
  %v7516 = vsel %vm846, %v7515, %v7514
  %v7517 = vrot.slane %v4428, 4
  %v7518 = vsel %vm849, %v7517, %v7516
  %v7519 = vrot.slane %v4429, 3
  %v7520 = vsel %vm852, %v7519, %v7518
  %v7521 = vrot.slane %v4430, 2
  %v7522 = vsel %vm855, %v7521, %v7520
  %v7523 = vrot.slane %v4431, 1
  %v7524 = vsel %vm858, %v7523, %v7522
  %7525 = vrot.lane.b32.xlu0 %v7510, 96
  %v7526 = vpop.permute.xlu0 %7525
  %7527 = vrot.lane.b32.xlu0 %v7524, 96
  %v7528 = vpop.permute.xlu0 %7527
  %v7531 = vsel %vm7085, %v7476, %v7526
  %v7532 = vsel %vm7085, %v7478, %v7528
  %v7535 = vrot.slane %v7531, 1
  %v7536 = vrot.slane %v7531, 2
  %v7537 = vrot.slane %v7531, 3
  %v7538 = vrot.slane %v7531, 4
  %v7539 = vrot.slane %v7531, 5
  %v7540 = vrot.slane %v7531, 6
  %v7541 = vrot.slane %v7531, 7
  %v7542 = vrot.slane %v7532, 1
  %v7543 = vrot.slane %v7532, 2
  %v7544 = vrot.slane %v7532, 3
  %v7545 = vrot.slane %v7532, 4
  %v7546 = vrot.slane %v7532, 5
  %v7547 = vrot.slane %v7532, 6
  %v7548 = vrot.slane %v7532, 7
  %7563 = vst.msk [vmem:[%s4 + $0x3] sm:$0x1] %vm7118, %v7531
  %7564 = vst.msk [vmem:[%s4 + $0xb] sm:$0x1] %vm7118, %v7535
  %7565 = vst.msk [vmem:[%s4 + $0x13] sm:$0x1] %vm7118, %v7536
  %7566 = vst.msk [vmem:[%s4 + $0x1b] sm:$0x1] %vm7118, %v7537
  %7567 = vst.msk [vmem:[%s4 + $0x23] sm:$0x1] %vm7118, %v7538
  %7568 = vst.msk [vmem:[%s4 + $0x2b] sm:$0x1] %vm7118, %v7539
  %7569 = vst.msk [vmem:[%s4 + $0x33] sm:$0x1] %vm7118, %v7540
  %7570 = vst.msk [vmem:[%s4 + $0x3b] sm:$0x1] %vm7118, %v7541
  %7571 = vst.msk [vmem:[%s4 + $0x43] sm:$0x1] %vm7118, %v7532
  %7572 = vst.msk [vmem:[%s4 + $0x4b] sm:$0x1] %vm7118, %v7542
  %7573 = vst.msk [vmem:[%s4 + $0x53] sm:$0x1] %vm7118, %v7543
  %7574 = vst.msk [vmem:[%s4 + $0x5b] sm:$0x1] %vm7118, %v7544
  %7575 = vst.msk [vmem:[%s4 + $0x63] sm:$0x1] %vm7118, %v7545
  %7576 = vst.msk [vmem:[%s4 + $0x6b] sm:$0x1] %vm7118, %v7546
  %7577 = vst.msk [vmem:[%s4 + $0x73] sm:$0x1] %vm7118, %v7547
  %7578 = vst.msk [vmem:[%s4 + $0x7b] sm:$0x1] %vm7118, %v7548
  %v7595 = vrot.slane %v4401, 7
  %v7596 = vsel %vm840, %v7595, %v4400
  %v7597 = vrot.slane %v4402, 6
  %v7598 = vsel %vm843, %v7597, %v7596
  %v7599 = vrot.slane %v4403, 5
  %v7600 = vsel %vm846, %v7599, %v7598
  %v7601 = vrot.slane %v4404, 4
  %v7602 = vsel %vm849, %v7601, %v7600
  %v7603 = vrot.slane %v4405, 3
  %v7604 = vsel %vm852, %v7603, %v7602
  %v7605 = vrot.slane %v4406, 2
  %v7606 = vsel %vm855, %v7605, %v7604
  %v7607 = vrot.slane %v4407, 1
  %v7608 = vsel %vm858, %v7607, %v7606
  %v7609 = vrot.slane %v4409, 7
  %v7610 = vsel %vm840, %v7609, %v4408
  %v7611 = vrot.slane %v4410, 6
  %v7612 = vsel %vm843, %v7611, %v7610
  %v7613 = vrot.slane %v4411, 5
  %v7614 = vsel %vm846, %v7613, %v7612
  %v7615 = vrot.slane %v4412, 4
  %v7616 = vsel %vm849, %v7615, %v7614
  %v7617 = vrot.slane %v4413, 3
  %v7618 = vsel %vm852, %v7617, %v7616
  %v7619 = vrot.slane %v4414, 2
  %v7620 = vsel %vm855, %v7619, %v7618
  %v7621 = vrot.slane %v4415, 1
  %v7622 = vsel %vm858, %v7621, %v7620
  %7623 = vrot.lane.b32.xlu0 %v7608, 96
  %v7624 = vpop.permute.xlu0 %7623
  %7625 = vrot.lane.b32.xlu0 %v7622, 96
  %v7626 = vpop.permute.xlu0 %7625
  %v7645 = vrot.slane %v3566, 7
  %v7646 = vsel %vm840, %v7645, %v3565
  %v7647 = vrot.slane %v3567, 6
  %v7648 = vsel %vm843, %v7647, %v7646
  %v7649 = vrot.slane %v3568, 5
  %v7650 = vsel %vm846, %v7649, %v7648
  %v7651 = vrot.slane %v3569, 4
  %v7652 = vsel %vm849, %v7651, %v7650
  %v7653 = vrot.slane %v3570, 3
  %v7654 = vsel %vm852, %v7653, %v7652
  %v7655 = vrot.slane %v3571, 2
  %v7656 = vsel %vm855, %v7655, %v7654
  %v7657 = vrot.slane %v3572, 1
  %v7658 = vsel %vm858, %v7657, %v7656
  %v7659 = vrot.slane %v3574, 7
  %v7660 = vsel %vm840, %v7659, %v3573
  %v7661 = vrot.slane %v3575, 6
  %v7662 = vsel %vm843, %v7661, %v7660
  %v7663 = vrot.slane %v3576, 5
  %v7664 = vsel %vm846, %v7663, %v7662
  %v7665 = vrot.slane %v3577, 4
  %v7666 = vsel %vm849, %v7665, %v7664
  %v7667 = vrot.slane %v3578, 3
  %v7668 = vsel %vm852, %v7667, %v7666
  %v7669 = vrot.slane %v3579, 2
  %v7670 = vsel %vm855, %v7669, %v7668
  %v7671 = vrot.slane %v3580, 1
  %v7672 = vsel %vm858, %v7671, %v7670
  %7673 = vrot.lane.b32.xlu0 %v7658, 96
  %v7674 = vpop.permute.xlu0 %7673
  %7675 = vrot.lane.b32.xlu0 %v7672, 96
  %v7676 = vpop.permute.xlu0 %7675
  %v7679 = vsel %vm7085, %v7624, %v7674
  %v7680 = vsel %vm7085, %v7626, %v7676
  %v7683 = vrot.slane %v7679, 1
  %v7684 = vrot.slane %v7679, 2
  %v7685 = vrot.slane %v7679, 3
  %v7686 = vrot.slane %v7679, 4
  %v7687 = vrot.slane %v7679, 5
  %v7688 = vrot.slane %v7679, 6
  %v7689 = vrot.slane %v7679, 7
  %v7690 = vrot.slane %v7680, 1
  %v7691 = vrot.slane %v7680, 2
  %v7692 = vrot.slane %v7680, 3
  %v7693 = vrot.slane %v7680, 4
  %v7694 = vrot.slane %v7680, 5
  %v7695 = vrot.slane %v7680, 6
  %v7696 = vrot.slane %v7680, 7
  %7711 = vst.msk [vmem:[%s4 + $0x4] sm:$0x1] %vm7118, %v7679
  %7712 = vst.msk [vmem:[%s4 + $0xc] sm:$0x1] %vm7118, %v7683
  %7713 = vst.msk [vmem:[%s4 + $0x14] sm:$0x1] %vm7118, %v7684
  %7714 = vst.msk [vmem:[%s4 + $0x1c] sm:$0x1] %vm7118, %v7685
  %7715 = vst.msk [vmem:[%s4 + $0x24] sm:$0x1] %vm7118, %v7686
  %7716 = vst.msk [vmem:[%s4 + $0x2c] sm:$0x1] %vm7118, %v7687
  %7717 = vst.msk [vmem:[%s4 + $0x34] sm:$0x1] %vm7118, %v7688
  %7718 = vst.msk [vmem:[%s4 + $0x3c] sm:$0x1] %vm7118, %v7689
  %7719 = vst.msk [vmem:[%s4 + $0x44] sm:$0x1] %vm7118, %v7680
  %7720 = vst.msk [vmem:[%s4 + $0x4c] sm:$0x1] %vm7118, %v7690
  %7721 = vst.msk [vmem:[%s4 + $0x54] sm:$0x1] %vm7118, %v7691
  %7722 = vst.msk [vmem:[%s4 + $0x5c] sm:$0x1] %vm7118, %v7692
  %7723 = vst.msk [vmem:[%s4 + $0x64] sm:$0x1] %vm7118, %v7693
  %7724 = vst.msk [vmem:[%s4 + $0x6c] sm:$0x1] %vm7118, %v7694
  %7725 = vst.msk [vmem:[%s4 + $0x74] sm:$0x1] %vm7118, %v7695
  %7726 = vst.msk [vmem:[%s4 + $0x7c] sm:$0x1] %vm7118, %v7696
  %v7743 = vrot.slane %v5252, 7
  %v7744 = vsel %vm840, %v7743, %v5251
  %v7745 = vrot.slane %v5253, 6
  %v7746 = vsel %vm843, %v7745, %v7744
  %v7747 = vrot.slane %v5254, 5
  %v7748 = vsel %vm846, %v7747, %v7746
  %v7749 = vrot.slane %v5255, 4
  %v7750 = vsel %vm849, %v7749, %v7748
  %v7751 = vrot.slane %v5256, 3
  %v7752 = vsel %vm852, %v7751, %v7750
  %v7753 = vrot.slane %v5257, 2
  %v7754 = vsel %vm855, %v7753, %v7752
  %v7755 = vrot.slane %v5258, 1
  %v7756 = vsel %vm858, %v7755, %v7754
  %v7757 = vrot.slane %v5260, 7
  %v7758 = vsel %vm840, %v7757, %v5259
  %v7759 = vrot.slane %v5261, 6
  %v7760 = vsel %vm843, %v7759, %v7758
  %v7761 = vrot.slane %v5262, 5
  %v7762 = vsel %vm846, %v7761, %v7760
  %v7763 = vrot.slane %v5263, 4
  %v7764 = vsel %vm849, %v7763, %v7762
  %v7765 = vrot.slane %v5264, 3
  %v7766 = vsel %vm852, %v7765, %v7764
  %v7767 = vrot.slane %v5265, 2
  %v7768 = vsel %vm855, %v7767, %v7766
  %v7769 = vrot.slane %v5266, 1
  %v7770 = vsel %vm858, %v7769, %v7768
  %7771 = vrot.lane.b32.xlu0 %v7756, 96
  %v7772 = vpop.permute.xlu0 %7771
  %7773 = vrot.lane.b32.xlu0 %v7770, 96
  %v7774 = vpop.permute.xlu0 %7773
  %v7793 = vrot.slane %v2643, 7
  %v7794 = vsel %vm840, %v7793, %v2642
  %v7795 = vrot.slane %v2644, 6
  %v7796 = vsel %vm843, %v7795, %v7794
  %v7797 = vrot.slane %v2645, 5
  %v7798 = vsel %vm846, %v7797, %v7796
  %v7799 = vrot.slane %v2646, 4
  %v7800 = vsel %vm849, %v7799, %v7798
  %v7801 = vrot.slane %v2647, 3
  %v7802 = vsel %vm852, %v7801, %v7800
  %v7803 = vrot.slane %v2648, 2
  %v7804 = vsel %vm855, %v7803, %v7802
  %v7805 = vrot.slane %v2649, 1
  %v7806 = vsel %vm858, %v7805, %v7804
  %v7807 = vrot.slane %v2651, 7
  %v7808 = vsel %vm840, %v7807, %v2650
  %v7809 = vrot.slane %v2652, 6
  %v7810 = vsel %vm843, %v7809, %v7808
  %v7811 = vrot.slane %v2653, 5
  %v7812 = vsel %vm846, %v7811, %v7810
  %v7813 = vrot.slane %v2654, 4
  %v7814 = vsel %vm849, %v7813, %v7812
  %v7815 = vrot.slane %v2655, 3
  %v7816 = vsel %vm852, %v7815, %v7814
  %v7817 = vrot.slane %v2656, 2
  %v7818 = vsel %vm855, %v7817, %v7816
  %v7819 = vrot.slane %v2657, 1
  %v7820 = vsel %vm858, %v7819, %v7818
  %7821 = vrot.lane.b32.xlu0 %v7806, 96
  %v7822 = vpop.permute.xlu0 %7821
  %7823 = vrot.lane.b32.xlu0 %v7820, 96
  %v7824 = vpop.permute.xlu0 %7823
  %v7827 = vsel %vm7085, %v7772, %v7822
  %v7828 = vsel %vm7085, %v7774, %v7824
  %v7831 = vrot.slane %v7827, 1
  %v7832 = vrot.slane %v7827, 2
  %v7833 = vrot.slane %v7827, 3
  %v7834 = vrot.slane %v7827, 4
  %v7835 = vrot.slane %v7827, 5
  %v7836 = vrot.slane %v7827, 6
  %v7837 = vrot.slane %v7827, 7
  %v7838 = vrot.slane %v7828, 1
  %v7839 = vrot.slane %v7828, 2
  %v7840 = vrot.slane %v7828, 3
  %v7841 = vrot.slane %v7828, 4
  %v7842 = vrot.slane %v7828, 5
  %v7843 = vrot.slane %v7828, 6
  %v7844 = vrot.slane %v7828, 7
  %7859 = vst.msk [vmem:[%s4 + $0x5] sm:$0x1] %vm7118, %v7827
  %7860 = vst.msk [vmem:[%s4 + $0xd] sm:$0x1] %vm7118, %v7831
  %7861 = vst.msk [vmem:[%s4 + $0x15] sm:$0x1] %vm7118, %v7832
  %7862 = vst.msk [vmem:[%s4 + $0x1d] sm:$0x1] %vm7118, %v7833
  %7863 = vst.msk [vmem:[%s4 + $0x25] sm:$0x1] %vm7118, %v7834
  %7864 = vst.msk [vmem:[%s4 + $0x2d] sm:$0x1] %vm7118, %v7835
  %7865 = vst.msk [vmem:[%s4 + $0x35] sm:$0x1] %vm7118, %v7836
  %7866 = vst.msk [vmem:[%s4 + $0x3d] sm:$0x1] %vm7118, %v7837
  %7867 = vst.msk [vmem:[%s4 + $0x45] sm:$0x1] %vm7118, %v7828
  %7868 = vst.msk [vmem:[%s4 + $0x4d] sm:$0x1] %vm7118, %v7838
  %7869 = vst.msk [vmem:[%s4 + $0x55] sm:$0x1] %vm7118, %v7839
  %7870 = vst.msk [vmem:[%s4 + $0x5d] sm:$0x1] %vm7118, %v7840
  %7871 = vst.msk [vmem:[%s4 + $0x65] sm:$0x1] %vm7118, %v7841
  %7872 = vst.msk [vmem:[%s4 + $0x6d] sm:$0x1] %vm7118, %v7842
  %7873 = vst.msk [vmem:[%s4 + $0x75] sm:$0x1] %vm7118, %v7843
  %7874 = vst.msk [vmem:[%s4 + $0x7d] sm:$0x1] %vm7118, %v7844
  %v7891 = vrot.slane %v6103, 7
  %v7892 = vsel %vm840, %v7891, %v6102
  %v7893 = vrot.slane %v6104, 6
  %v7894 = vsel %vm843, %v7893, %v7892
  %v7895 = vrot.slane %v6105, 5
  %v7896 = vsel %vm846, %v7895, %v7894
  %v7897 = vrot.slane %v6106, 4
  %v7898 = vsel %vm849, %v7897, %v7896
  %v7899 = vrot.slane %v6107, 3
  %v7900 = vsel %vm852, %v7899, %v7898
  %v7901 = vrot.slane %v6108, 2
  %v7902 = vsel %vm855, %v7901, %v7900
  %v7903 = vrot.slane %v6109, 1
  %v7904 = vsel %vm858, %v7903, %v7902
  %v7905 = vrot.slane %v6111, 7
  %v7906 = vsel %vm840, %v7905, %v6110
  %v7907 = vrot.slane %v6112, 6
  %v7908 = vsel %vm843, %v7907, %v7906
  %v7909 = vrot.slane %v6113, 5
  %v7910 = vsel %vm846, %v7909, %v7908
  %v7911 = vrot.slane %v6114, 4
  %v7912 = vsel %vm849, %v7911, %v7910
  %v7913 = vrot.slane %v6115, 3
  %v7914 = vsel %vm852, %v7913, %v7912
  %v7915 = vrot.slane %v6116, 2
  %v7916 = vsel %vm855, %v7915, %v7914
  %v7917 = vrot.slane %v6117, 1
  %v7918 = vsel %vm858, %v7917, %v7916
  %7919 = vrot.lane.b32.xlu0 %v7904, 96
  %v7920 = vpop.permute.xlu0 %7919
  %7921 = vrot.lane.b32.xlu0 %v7918, 96
  %v7922 = vpop.permute.xlu0 %7921
  %v7941 = vrot.slane %v1720, 7
  %v7942 = vsel %vm840, %v7941, %v1719
  %v7943 = vrot.slane %v1721, 6
  %v7944 = vsel %vm843, %v7943, %v7942
  %v7945 = vrot.slane %v1722, 5
  %v7946 = vsel %vm846, %v7945, %v7944
  %v7947 = vrot.slane %v1723, 4
  %v7948 = vsel %vm849, %v7947, %v7946
  %v7949 = vrot.slane %v1724, 3
  %v7950 = vsel %vm852, %v7949, %v7948
  %v7951 = vrot.slane %v1725, 2
  %v7952 = vsel %vm855, %v7951, %v7950
  %v7953 = vrot.slane %v1726, 1
  %v7954 = vsel %vm858, %v7953, %v7952
  %v7955 = vrot.slane %v1728, 7
  %v7956 = vsel %vm840, %v7955, %v1727
  %v7957 = vrot.slane %v1729, 6
  %v7958 = vsel %vm843, %v7957, %v7956
  %v7959 = vrot.slane %v1730, 5
  %v7960 = vsel %vm846, %v7959, %v7958
  %v7961 = vrot.slane %v1731, 4
  %v7962 = vsel %vm849, %v7961, %v7960
  %v7963 = vrot.slane %v1732, 3
  %v7964 = vsel %vm852, %v7963, %v7962
  %v7965 = vrot.slane %v1733, 2
  %v7966 = vsel %vm855, %v7965, %v7964
  %v7967 = vrot.slane %v1734, 1
  %v7968 = vsel %vm858, %v7967, %v7966
  %7969 = vrot.lane.b32.xlu0 %v7954, 96
  %v7970 = vpop.permute.xlu0 %7969
  %7971 = vrot.lane.b32.xlu0 %v7968, 96
  %v7972 = vpop.permute.xlu0 %7971
  %v7975 = vsel %vm7085, %v7920, %v7970
  %v7976 = vsel %vm7085, %v7922, %v7972
  %v7979 = vrot.slane %v7975, 1
  %v7980 = vrot.slane %v7975, 2
  %v7981 = vrot.slane %v7975, 3
  %v7982 = vrot.slane %v7975, 4
  %v7983 = vrot.slane %v7975, 5
  %v7984 = vrot.slane %v7975, 6
  %v7985 = vrot.slane %v7975, 7
  %v7986 = vrot.slane %v7976, 1
  %v7987 = vrot.slane %v7976, 2
  %v7988 = vrot.slane %v7976, 3
  %v7989 = vrot.slane %v7976, 4
  %v7990 = vrot.slane %v7976, 5
  %v7991 = vrot.slane %v7976, 6
  %v7992 = vrot.slane %v7976, 7
  %8007 = vst.msk [vmem:[%s4 + $0x6] sm:$0x1] %vm7118, %v7975
  %8008 = vst.msk [vmem:[%s4 + $0xe] sm:$0x1] %vm7118, %v7979
  %8009 = vst.msk [vmem:[%s4 + $0x16] sm:$0x1] %vm7118, %v7980
  %8010 = vst.msk [vmem:[%s4 + $0x1e] sm:$0x1] %vm7118, %v7981
  %8011 = vst.msk [vmem:[%s4 + $0x26] sm:$0x1] %vm7118, %v7982
  %8012 = vst.msk [vmem:[%s4 + $0x2e] sm:$0x1] %vm7118, %v7983
  %8013 = vst.msk [vmem:[%s4 + $0x36] sm:$0x1] %vm7118, %v7984
  %8014 = vst.msk [vmem:[%s4 + $0x3e] sm:$0x1] %vm7118, %v7985
  %8015 = vst.msk [vmem:[%s4 + $0x46] sm:$0x1] %vm7118, %v7976
  %8016 = vst.msk [vmem:[%s4 + $0x4e] sm:$0x1] %vm7118, %v7986
  %8017 = vst.msk [vmem:[%s4 + $0x56] sm:$0x1] %vm7118, %v7987
  %8018 = vst.msk [vmem:[%s4 + $0x5e] sm:$0x1] %vm7118, %v7988
  %8019 = vst.msk [vmem:[%s4 + $0x66] sm:$0x1] %vm7118, %v7989
  %8020 = vst.msk [vmem:[%s4 + $0x6e] sm:$0x1] %vm7118, %v7990
  %8021 = vst.msk [vmem:[%s4 + $0x76] sm:$0x1] %vm7118, %v7991
  %8022 = vst.msk [vmem:[%s4 + $0x7e] sm:$0x1] %vm7118, %v7992
  %v8039 = vrot.slane %v6954, 7
  %v8040 = vsel %vm840, %v8039, %v6953
  %v8041 = vrot.slane %v6955, 6
  %v8042 = vsel %vm843, %v8041, %v8040
  %v8043 = vrot.slane %v6956, 5
  %v8044 = vsel %vm846, %v8043, %v8042
  %v8045 = vrot.slane %v6957, 4
  %v8046 = vsel %vm849, %v8045, %v8044
  %v8047 = vrot.slane %v6958, 3
  %v8048 = vsel %vm852, %v8047, %v8046
  %v8049 = vrot.slane %v6959, 2
  %v8050 = vsel %vm855, %v8049, %v8048
  %v8051 = vrot.slane %v6960, 1
  %v8052 = vsel %vm858, %v8051, %v8050
  %v8053 = vrot.slane %v6962, 7
  %v8054 = vsel %vm840, %v8053, %v6961
  %v8055 = vrot.slane %v6963, 6
  %v8056 = vsel %vm843, %v8055, %v8054
  %v8057 = vrot.slane %v6964, 5
  %v8058 = vsel %vm846, %v8057, %v8056
  %v8059 = vrot.slane %v6965, 4
  %v8060 = vsel %vm849, %v8059, %v8058
  %v8061 = vrot.slane %v6966, 3
  %v8062 = vsel %vm852, %v8061, %v8060
  %v8063 = vrot.slane %v6967, 2
  %v8064 = vsel %vm855, %v8063, %v8062
  %v8065 = vrot.slane %v6968, 1
  %v8066 = vsel %vm858, %v8065, %v8064
  %8067 = vrot.lane.b32.xlu0 %v8052, 96
  %v8068 = vpop.permute.xlu0 %8067
  %8069 = vrot.lane.b32.xlu0 %v8066, 96
  %v8070 = vpop.permute.xlu0 %8069
  %v8089 = vrot.slane %v803, 7
  %v8090 = vsel %vm840, %v8089, %v802
  %v8091 = vrot.slane %v804, 6
  %v8092 = vsel %vm843, %v8091, %v8090
  %v8093 = vrot.slane %v805, 5
  %v8094 = vsel %vm846, %v8093, %v8092
  %v8095 = vrot.slane %v806, 4
  %v8096 = vsel %vm849, %v8095, %v8094
  %v8097 = vrot.slane %v807, 3
  %v8098 = vsel %vm852, %v8097, %v8096
  %v8099 = vrot.slane %v808, 2
  %v8100 = vsel %vm855, %v8099, %v8098
  %v8101 = vrot.slane %v809, 1
  %v8102 = vsel %vm858, %v8101, %v8100
  %v8103 = vrot.slane %v811, 7
  %v8104 = vsel %vm840, %v8103, %v810
  %v8105 = vrot.slane %v812, 6
  %v8106 = vsel %vm843, %v8105, %v8104
  %v8107 = vrot.slane %v813, 5
  %v8108 = vsel %vm846, %v8107, %v8106
  %v8109 = vrot.slane %v814, 4
  %v8110 = vsel %vm849, %v8109, %v8108
  %v8111 = vrot.slane %v815, 3
  %v8112 = vsel %vm852, %v8111, %v8110
  %v8113 = vrot.slane %v816, 2
  %v8114 = vsel %vm855, %v8113, %v8112
  %v8115 = vrot.slane %v817, 1
  %v8116 = vsel %vm858, %v8115, %v8114
  %8117 = vrot.lane.b32.xlu0 %v8102, 96
  %v8118 = vpop.permute.xlu0 %8117
  %8119 = vrot.lane.b32.xlu0 %v8116, 96
  %v8120 = vpop.permute.xlu0 %8119
  %v8123 = vsel %vm7085, %v8068, %v8118
  %v8124 = vsel %vm7085, %v8070, %v8120
  %v8127 = vrot.slane %v8123, 1
  %v8128 = vrot.slane %v8123, 2
  %v8129 = vrot.slane %v8123, 3
  %v8130 = vrot.slane %v8123, 4
  %v8131 = vrot.slane %v8123, 5
  %v8132 = vrot.slane %v8123, 6
  %v8133 = vrot.slane %v8123, 7
  %v8134 = vrot.slane %v8124, 1
  %v8135 = vrot.slane %v8124, 2
  %v8136 = vrot.slane %v8124, 3
  %v8137 = vrot.slane %v8124, 4
  %v8138 = vrot.slane %v8124, 5
  %v8139 = vrot.slane %v8124, 6
  %v8140 = vrot.slane %v8124, 7
  %8155 = vst.msk [vmem:[%s4 + $0x7] sm:$0x1] %vm7118, %v8123
  %8156 = vst.msk [vmem:[%s4 + $0xf] sm:$0x1] %vm7118, %v8127
  %8157 = vst.msk [vmem:[%s4 + $0x17] sm:$0x1] %vm7118, %v8128
  %8158 = vst.msk [vmem:[%s4 + $0x1f] sm:$0x1] %vm7118, %v8129
  %8159 = vst.msk [vmem:[%s4 + $0x27] sm:$0x1] %vm7118, %v8130
  %8160 = vst.msk [vmem:[%s4 + $0x2f] sm:$0x1] %vm7118, %v8131
  %8161 = vst.msk [vmem:[%s4 + $0x37] sm:$0x1] %vm7118, %v8132
  %8162 = vst.msk [vmem:[%s4 + $0x3f] sm:$0x1] %vm7118, %v8133
  %8163 = vst.msk [vmem:[%s4 + $0x47] sm:$0x1] %vm7118, %v8124
  %8164 = vst.msk [vmem:[%s4 + $0x4f] sm:$0x1] %vm7118, %v8134
  %8165 = vst.msk [vmem:[%s4 + $0x57] sm:$0x1] %vm7118, %v8135
  %8166 = vst.msk [vmem:[%s4 + $0x5f] sm:$0x1] %vm7118, %v8136
  %8167 = vst.msk [vmem:[%s4 + $0x67] sm:$0x1] %vm7118, %v8137
  %8168 = vst.msk [vmem:[%s4 + $0x6f] sm:$0x1] %vm7118, %v8138
  %8169 = vst.msk [vmem:[%s4 + $0x77] sm:$0x1] %vm7118, %v8139
  %8170 = vst.msk [vmem:[%s4 + $0x7f] sm:$0x1] %vm7118, %v8140
  // Predicated region
  $region18: #{controlnet_forward.3} parent=0 // pred_check
    _
  $region19: #{controlnet_forward.3} parent=0 // pred_check_branch
    %8172 = sbr.rel (0) target = $region21
  $region20: #{controlnet_forward.3} parent=0 // pred_region
    _
  $region21: #{controlnet_forward.3} parent=0 // pred_fallthru
    _
  // Predicated region
  $region22: #{controlnet_forward.3} parent=0 // pred_check
    _
  $region23: #{controlnet_forward.3} parent=0 // pred_check_branch
    %8174 = sbr.rel (0) target = $region25
  $region24: #{controlnet_forward.3} parent=0 // pred_region
    _
  $region25: #{controlnet_forward.3} parent=0 // pred_fallthru
    _

</llo_original>
